<compile_context>
chip_gen: v7x
topology: tpu7x:2x2x1
jax: 0.10.0
libtpu: 0.0.40
codegen_flags: <defaults>
</compile_context>

<pallas_src>
import functools
import math

import jax
import jax.numpy as jnp
from jax import lax
from jax.experimental import pallas as pl
from jax.experimental.pallas import tpu as pltpu

EPS = 1e-5            # nn.InstanceNorm2d default eps (affine=False)
LANE = 128            # GEMM N is zero-padded to a multiple of the lane width
ACC_BUDGET = 1 << 20  # per-phase f32 accumulator budget -> picks row-strip size


def _activate(x, act):
    if act == "lrelu":
        return jnp.where(x > 0, x, 0.2 * x)   # LeakyReLU(0.2)
    if act == "relu":
        return jnp.maximum(x, 0.0)
    if act == "tanh":
        return jnp.tanh(x)
    return x                                   # "linear"


def _round_up(v, m):
    return (v + m - 1) // m * m


def _pick_tho(ho, wout, cpad, nr):
    """Output rows per strip: largest power of two under the accumulator
    budget.  Spatial sizes in this network are powers of two, so tho | ho."""
    t = max(nr, ACC_BUDGET // (wout * cpad * 4))
    t = 1 << int(math.floor(math.log2(t)))
    t = min(t, ho)
    assert ho % t == 0, (ho, t)   # no silent tail-dropping (review item)
    assert t % nr == 0, (t, nr)
    return t


# ----------------------------- Pallas kernel ------------------------------- #

def _conv_kernel(*refs, tho, wout, cout, nr, nc, norm, act, use_bias, n_strips):
    """Implicit-GEMM stride-1 2x2-tap conv over one output row strip.

    refs = (x_main, x_halo, w, [bias], out, [ssum, ssq])
      x_main: (1, tho,      win, cin)    bf16   rows [r*tho, (r+1)*tho)
      x_halo: (1, nr,       win, cin)    bf16   rows [(r+1)*tho, (r+1)*tho+nr)
      w     : (nr, nc, 2, 2, cin, cpad)  bf16   per-phase 2x2 tap weights
      bias  : (1, cpad) f32              (only when use_bias)
      out   : norm   : (1, nr, nc, ho,  wout, cout)  VMEM-resident across strips
              no-norm: (1, nr, nc, tho, wout, cout)  per-strip block
      ssum/ssq: (1, cpad) f32 scratch    (only when norm)
    """
    x_ref, xh_ref, w_ref = refs[0], refs[1], refs[2]
    i = 3
    b_ref = None
    if use_bias:
        b_ref = refs[i]
        i += 1
    o_ref = refs[i]
    i += 1
    ssum = ssq = None
    if norm:
        ssum, ssq = refs[i], refs[i + 1]

    r = pl.program_id(1)
    cin = x_ref.shape[-1]
    cpad = w_ref.shape[-1]

    if norm:
        @pl.when(r == 0)
        def _():
            ssum[...] = jnp.zeros_like(ssum)
            ssq[...] = jnp.zeros_like(ssq)

    # strip + halo rows combined once so every shifted tap is a STATIC slice
    xcat = jnp.concatenate([x_ref[0], xh_ref[0]], axis=0)   # (tho+nr, win, cin)

    for pi in range(nr):          # sub-pixel output phase (row parity)
        for pj in range(nc):      # sub-pixel output phase (col parity)
            acc = jnp.zeros((tho * wout, cpad), jnp.float32)
            for kr in range(2):   # 2x2 taps
                for kc in range(2):
                    xs = xcat[pi + kr:pi + kr + tho,
                              pj + kc:pj + kc + wout, :]
                    acc = acc + jnp.dot(xs.reshape(tho * wout, cin),
                                        w_ref[pi, pj, kr, kc],
                                        preferred_element_type=jnp.float32)
            if norm:
                # incremental InstanceNorm statistics (f32, pre-rounding)
                ssum[...] += jnp.sum(acc, axis=0, keepdims=True)
                ssq[...] += jnp.sum(acc * acc, axis=0, keepdims=True)
                y = acc                     # pre-norm bias would be a no-op
            else:
                if use_bias:
                    acc = acc + b_ref[...]
                y = _activate(acc, act)
            y = y[:, :cout].reshape(tho, wout, cout).astype(o_ref.dtype)
            if norm:
                o_ref[0, pi, pj, pl.ds(r * tho, tho), :, :] = y
            else:
                o_ref[0, pi, pj, :, :, :] = y

    if norm:
        @pl.when(r == n_strips - 1)
        def _():
            n = float(nr * nc * n_strips * tho * wout)
            mean = ssum[...] * (1.0 / n)                       # (1, cpad)
            var = ssq[...] * (1.0 / n) - mean * mean
            inv = lax.rsqrt(var + EPS)
            mean_c = mean[:, :cout].reshape(1, 1, cout)
            inv_c = inv[:, :cout].reshape(1, 1, cout)
            for pi in range(nr):
                for pj in range(nc):
                    def body(s, carry, pi=pi, pj=pj):
                        v = o_ref[0, pi, pj, pl.ds(s * tho, tho), :, :]
                        v = (v.astype(jnp.float32) - mean_c) * inv_c
                        o_ref[0, pi, pj, pl.ds(s * tho, tho), :, :] = (
                            _activate(v, act).astype(o_ref.dtype))
                        return carry
                    lax.fori_loop(0, n_strips, body, 0)


def _conv_call(xin, w_k, bias, *, nr, nc, cout, norm, act):
    """xin: (B, rows, win, cin) bf16, already padded / space-to-depth'ed so the
    conv is a stride-1 2x2-tap conv producing (B, nr, nc, ho, wout, cout)."""
    B, rows, win, cin = xin.shape
    ho = rows - nr
    wout = win - nc
    cpad = w_k.shape[-1]
    assert w_k.shape == (nr, nc, 2, 2, cin, cpad)
    assert cpad % LANE == 0 and cpad >= cout
    assert not (norm and bias is not None)     # pre-norm bias is dropped

    tho = _pick_tho(ho, wout, cpad, nr)
    n_strips = ho // tho
    # pad rows so both the strip and the halo BlockSpecs tile the array exactly
    rows_padded = tho * (n_strips + 1)
    if rows < rows_padded:
        xin = jnp.pad(xin, ((0, 0), (0, rows_padded - rows), (0, 0), (0, 0)))

    use_bias = bias is not None
    in_specs = [
        pl.BlockSpec((1, tho, win, cin), lambda b, r: (b, r, 0, 0)),
        # 1-2 row halo: same array, element offset tho*(r+1)
        pl.BlockSpec((1, nr, win, cin),
                     lambda b, r: (b, (tho // nr) * (r + 1), 0, 0)),
        # constant weight block (index map is grid-invariant -> no re-DMA)
        pl.BlockSpec((nr, nc, 2, 2, cin, cpad),
                     lambda b, r: (0, 0, 0, 0, 0, 0)),
    ]
    args = [xin, xin, w_k]
    if use_bias:
        in_specs.append(pl.BlockSpec((1, cpad), lambda b, r: (0, 0)))
        args.append(bias)

    if norm:
        out_spec = pl.BlockSpec((1, nr, nc, ho, wout, cout),
                                lambda b, r: (b, 0, 0, 0, 0, 0))
        scratch = [pltpu.VMEM((1, cpad), jnp.float32),
                   pltpu.VMEM((1, cpad), jnp.float32)]
        dims = ("parallel", "arbitrary")   # resident output across strips
    else:
        out_spec = pl.BlockSpec((1, nr, nc, tho, wout, cout),
                                lambda b, r: (b, 0, 0, r, 0, 0))
        scratch = []
        dims = ("parallel", "parallel")    # independent strips -> megacore

    kernel = functools.partial(
        _conv_kernel, tho=tho, wout=wout, cout=cout, nr=nr, nc=nc,
        norm=norm, act=act, use_bias=use_bias, n_strips=n_strips)

    # VMEM bound derived from the actual block sizes (double-buffered inputs,
    # constant weight x2, resident/strip output, f32 accumulator + concat buf).
    blk = 2 * (tho + nr) * win * cin * 2 + 2 * nr * nc * 4 * cin * cpad * 2
    blk += (nr * nc * ho * wout * cout * 2 if norm
            else 2 * nr * nc * tho * wout * cout * 2)
    blk += 2 * tho * wout * cpad * 4 + (tho + nr) * win * cin * 2
    vmem_limit = min(56 * 2 ** 20, max(32 * 2 ** 20, 2 * blk))

    return pl.pallas_call(
        kernel,
        out_shape=jax.ShapeDtypeStruct((B, nr, nc, ho, wout, cout),
                                       jnp.bfloat16),
        grid_spec=pltpu.PrefetchScalarGridSpec(
            num_scalar_prefetch=0,
            grid=(B, n_strips),
            in_specs=in_specs,
            out_specs=out_spec,
            scratch_shapes=scratch),
        compiler_params=pltpu.CompilerParams(
            dimension_semantics=dims,
            vmem_limit_bytes=vmem_limit),
    )(*args)


# ------------------------------- layer glue -------------------------------- #

def downsample(x, w, b, apply_norm):
    """Conv2d(k=4, s=2, p=1) [+ InstanceNorm2d] + LeakyReLU(0.2).
    x: (B,H,W,Cin) bf16; w: (4,4,Cin,Cout) HWIO f32; b: (Cout,) or None."""
    B, H, W, Cin = x.shape
    Cout = w.shape[-1]
    cpad = _round_up(Cout, LANE)

    # pad-1 + space-to-depth(2): the stride-2 4x4 conv becomes a stride-1
    # 2x2-tap conv over 4*Cin channels (no im2col, no duplicated pixels).
    xp = jnp.pad(x, ((0, 0), (1, 1), (1, 1), (0, 0)))
    xs = xp.reshape(B, (H + 2) // 2, 2, (W + 2) // 2, 2, Cin)
    xs = xs.transpose(0, 1, 3, 2, 4, 5).reshape(
        B, (H + 2) // 2, (W + 2) // 2, 4 * Cin).astype(jnp.bfloat16)

    # w[2*KI+di, 2*KJ+dj, c, o] -> w_k[0, 0, KI, KJ, (2*di+dj)*Cin + c, o]
    wk = w.reshape(2, 2, 2, 2, Cin, Cout).transpose(0, 2, 1, 3, 4, 5)
    wk = wk.reshape(1, 1, 2, 2, 4 * Cin, Cout)
    wk = jnp.pad(wk, ((0, 0),) * 5 + ((0, cpad - Cout),)).astype(jnp.bfloat16)

    bias = None
    if not apply_norm:
        bias = jnp.pad(b, (0, cpad - Cout)).reshape(1, cpad).astype(jnp.float32)

    y = _conv_call(xs, wk, bias, nr=1, nc=1, cout=Cout,
                   norm=apply_norm, act="lrelu")
    return y.reshape(B, H // 2, W // 2, Cout)


def upsample(x, w_eq, b, norm=True, act="relu"):
    """ConvTranspose2d(k=4, s=2, p=1) [+ InstanceNorm2d] + act via 4-phase
    (sub-pixel) decomposition.  `w_eq` is the equivalent dense-conv weight
    (4,4,Cin,Cout); a real PyTorch ConvTranspose2d weight Wt (Cin,Cout,kh,kw)
    maps to it as w_eq[kh, kw, c, o] = Wt[c, o, 3-kh, 3-kw]."""
    B, H, W, Cin = x.shape
    Cout = w_eq.shape[-1]
    cpad = _round_up(Cout, LANE)

    xp = jnp.pad(x, ((0, 0), (1, 1), (1, 1), (0, 0))).astype(jnp.bfloat16)

    # w_eq[2*kr+di, 2*kc+dj, c, o] -> w_k[di, dj, kr, kc, c, o]
    wk = w_eq.reshape(2, 2, 2, 2, Cin, Cout).transpose(1, 3, 0, 2, 4, 5)
    wk = jnp.pad(wk, ((0, 0),) * 5 + ((0, cpad - Cout),)).astype(jnp.bfloat16)

    bias = None
    if not norm and b is not None:
        bias = jnp.pad(b, (0, cpad - Cout)).reshape(1, cpad).astype(jnp.float32)

    y = _conv_call(xp, wk, bias, nr=2, nc=2, cout=Cout, norm=norm, act=act)
    # interleave phases: y[b, di, dj, i, j, c] -> out[b, 2i+di, 2j+dj, c]
    return y.transpose(0, 3, 1, 4, 2, 5).reshape(B, 2 * H, 2 * W, Cout)


def init_params(key, f=8):
    """Synthetic weights with the shapes of GeneratorGAN(filter=f).  Up-conv
    weights are stored directly as the equivalent dense-conv weight (see
    `upsample`).  Biases of convs that feed InstanceNorm are created for
    shape fidelity but are mathematical no-ops and are not used."""
    down_io = [(3, f), (f, 2 * f), (2 * f, 4 * f), (4 * f, 8 * f),
               (8 * f, 8 * f), (8 * f, 8 * f), (8 * f, 8 * f)]
    up_io = [(8 * f, 8 * f), (16 * f, 8 * f), (16 * f, 8 * f),
             (16 * f, 4 * f), (8 * f, 2 * f), (4 * f, f)]
    params = {"down": [], "up": []}
    for cin, cout in down_io:
        key, k1, k2 = jax.random.split(key, 3)
        params["down"].append(
            (0.05 * jax.random.normal(k1, (4, 4, cin, cout), jnp.float32),
             0.05 * jax.random.normal(k2, (cout,), jnp.float32)))
    for cin, cout in up_io:
        key, k1, k2 = jax.random.split(key, 3)
        params["up"].append(
            (0.05 * jax.random.normal(k1, (4, 4, cin, cout), jnp.float32),
             0.05 * jax.random.normal(k2, (cout,), jnp.float32)))
    key, k1, k2 = jax.random.split(key, 3)
    params["last"] = (
        0.05 * jax.random.normal(k1, (4, 4, 2 * f, 3), jnp.float32),
        0.05 * jax.random.normal(k2, (3,), jnp.float32))
    return params


def generator_forward(params, x_nchw):
    x = jnp.transpose(x_nchw, (0, 2, 3, 1)).astype(jnp.bfloat16)  # NCHW->NHWC
    skips = []
    for i, (w, b) in enumerate(params["down"]):
        x = downsample(x, w, b if i == 0 else None, apply_norm=(i != 0))
        skips.append(x)
    skips = list(reversed(skips[:-1]))
    for (w, b), s in zip(params["up"], skips):
        x = upsample(x, w, None, norm=True, act="relu")
        # TODO(synk): nn.Dropout2d(0.5) on the first three upsamples is a
        # no-op in eval mode; training-mode stochastic channel dropout is not
        # implemented here.
        x = jnp.concatenate([x, s], axis=-1)       # torch.cat(dim=1) in NCHW
    w, b = params["last"]
    x = upsample(x, w, b, norm=False, act="tanh")
    return jnp.transpose(x.astype(jnp.float32), (0, 3, 1, 2))     # NHWC->NCHW


# ---------------------------------- main ----------------------------------- #

if __name__ == "__main__":
    key = jax.random.PRNGKey(0)
    pkey, xkey, ukey, uxkey = jax.random.split(key, 4)
    F = 8   # small "filter" for the synthetic test (PyTorch default is 64)
    params = init_params(pkey, f=F)

    # 7 stride-2 downsamples need spatial >= 128; 256 keeps the bottleneck 2x2
    # so every InstanceNorm sees more than one spatial element (as in pix2pix).
    x = jax.random.normal(xkey, (1, 3, 256, 256), jnp.float32)
    x_nhwc = jnp.transpose(x, (0, 2, 3, 1)).astype(jnp.bfloat16)

    # sanity 1: Downsample (stride-2 conv + bias + LeakyReLU) vs XLA conv
    w0, b0 = params["down"][0]
    w0b = w0.astype(jnp.bfloat16).astype(jnp.float32)
    ref = lax.conv_general_dilated(
        x_nhwc.astype(jnp.float32), w0b, (2, 2), [(1, 1), (1, 1)],
        dimension_numbers=("NHWC", "HWIO", "NHWC")) + b0
    ref = jnp.where(ref > 0, ref, 0.2 * ref)
    got = downsample(x_nhwc, w0, b0, apply_norm=False).astype(jnp.float32)
    assert jnp.allclose(got, ref, atol=2e-2, rtol=2e-2), \
        float(jnp.max(jnp.abs(got - ref)))

    # sanity 2: Upsample conv (4-phase ConvTranspose) vs XLA dilated conv
    xu = jax.random.normal(uxkey, (1, 8, 8, 16), jnp.float32)
    wu = 0.05 * jax.random.normal(ukey, (4, 4, 16, 8), jnp.float32)
    xub = xu.astype(jnp.bfloat16)
    wub = wu.astype(jnp.bfloat16).astype(jnp.float32)
    ref_u = lax.conv_general_dilated(
        xub.astype(jnp.float32), wub, (1, 1), [(2, 2), (2, 2)],
        lhs_dilation=(2, 2), dimension_numbers=("NHWC", "HWIO", "NHWC"))
    got_u = upsample(xub, wu, jnp.zeros((8,), jnp.float32),
                     norm=False, act="linear").astype(jnp.float32)
    assert jnp.allclose(got_u, ref_u, atol=2e-2, rtol=2e-2), \
        float(jnp.max(jnp.abs(got_u - ref_u)))

    out = jax.jit(generator_forward)(params, x)
    out = jax.block_until_ready(out)

    assert out.shape == (1, 3, 256, 256), out.shape
    assert bool(jnp.all(jnp.isfinite(out)))
    assert bool(jnp.all(jnp.abs(out) <= 1.0 + 1e-6))   # tanh output range
    print("KERNEL_OK")
</pallas_src>

<mosaic_0001>
module attributes {stable_mosaic.version = 11 : i64} {
  func.func @_conv_kernel(%arg0: i32, %arg1: i32, %arg2: memref<1x16x129x12xbf16, #tpu.memory_space<vmem>>, %arg3: memref<1x1x129x12xbf16, #tpu.memory_space<vmem>>, %arg4: memref<1x1x2x2x12x128xbf16, #tpu.memory_space<vmem>>, %arg5: memref<1x128xf32, #tpu.memory_space<vmem>>, %arg6: memref<1x1x1x16x128x8xbf16, #tpu.memory_space<vmem>>) attributes {dimension_semantics = [#tpu.dimension_semantics<parallel>, #tpu.dimension_semantics<parallel>], iteration_bounds = array<i64: 1, 8>, scalar_prefetch = 0 : i64, scratch_operands = 0 : i64, tpu.core_type = #tpu.core_type<tc>, window_params = [{transform_indices = @transform_0, window_bounds = array<i64: 1, 16, 129, 12>}, {transform_indices = @transform_1, window_bounds = array<i64: 1, 1, 129, 12>}, {pipeline_mode = #tpu.pipeline_mode<synchronous>, transform_indices = @transform_2, window_bounds = array<i64: 1, 1, 2, 2, 12, 128>}, {pipeline_mode = #tpu.pipeline_mode<synchronous>, transform_indices = @transform_3, window_bounds = array<i64: 1, 128>}, {transform_indices = @transform_4, window_bounds = array<i64: 1, 1, 1, 16, 128, 8>}]} {
    %c0 = arith.constant 0 : index
    %c0_0 = arith.constant 0 : index
    %c0_1 = arith.constant 0 : index
    %c0_2 = arith.constant 0 : index
    %0 = vector.load %arg2[%c0, %c0_0, %c0_1, %c0_2] : memref<1x16x129x12xbf16, #tpu.memory_space<vmem>>, vector<1x16x129x12xbf16>
    %1 = vector.shape_cast %0 : vector<1x16x129x12xbf16> to vector<16x129x12xbf16>
    %c0_3 = arith.constant 0 : index
    %c0_4 = arith.constant 0 : index
    %c0_5 = arith.constant 0 : index
    %c0_6 = arith.constant 0 : index
    %2 = vector.load %arg3[%c0_3, %c0_4, %c0_5, %c0_6] : memref<1x1x129x12xbf16, #tpu.memory_space<vmem>>, vector<1x1x129x12xbf16>
    %3 = vector.shape_cast %2 : vector<1x1x129x12xbf16> to vector<1x129x12xbf16>
    %4 = tpu.concatenate %1, %3 in 0 : vector<16x129x12xbf16>, vector<1x129x12xbf16> -> vector<17x129x12xbf16>
    %cst = arith.constant 0.000000e+00 : f32
    %5 = vector.broadcast %cst : f32 to vector<2048x128xf32>
    %6 = vector.extract_strided_slice %4 {offsets = [0, 0, 0], sizes = [16, 128, 12], strides = [1, 1, 1]} : vector<17x129x12xbf16> to vector<16x128x12xbf16>
    %7 = vector.shape_cast %6 : vector<16x128x12xbf16> to vector<2048x12xbf16>
    %c0_7 = arith.constant 0 : index
    %c0_8 = arith.constant 0 : index
    %c0_9 = arith.constant 0 : index
    %c0_10 = arith.constant 0 : index
    %c0_11 = arith.constant 0 : index
    %c0_12 = arith.constant 0 : index
    %8 = vector.load %arg4[%c0_7, %c0_8, %c0_9, %c0_10, %c0_11, %c0_12] : memref<1x1x2x2x12x128xbf16, #tpu.memory_space<vmem>>, vector<1x1x1x1x12x128xbf16>
    %9 = vector.shape_cast %8 : vector<1x1x1x1x12x128xbf16> to vector<12x128xbf16>
    %cst_13 = arith.constant dense<0.000000e+00> : vector<2048x128xf32>
    %10 = tpu.matmul %7, %9, %cst_13 {dimension_numbers = #tpu.dot_dimension_numbers<[1], [0], [0], [1], [0, 0, 1, 1], [], []>} : vector<2048x12xbf16>, vector<12x128xbf16>, vector<2048x128xf32> -> vector<2048x128xf32>
    %11 = arith.addf %5, %10 : vector<2048x128xf32>
    %12 = vector.extract_strided_slice %4 {offsets = [0, 1, 0], sizes = [16, 128, 12], strides = [1, 1, 1]} : vector<17x129x12xbf16> to vector<16x128x12xbf16>
    %13 = vector.shape_cast %12 : vector<16x128x12xbf16> to vector<2048x12xbf16>
    %c0_14 = arith.constant 0 : index
    %c0_15 = arith.constant 0 : index
    %c0_16 = arith.constant 0 : index
    %c1 = arith.constant 1 : index
    %c0_17 = arith.constant 0 : index
    %c0_18 = arith.constant 0 : index
    %14 = vector.load %arg4[%c0_14, %c0_15, %c0_16, %c1, %c0_17, %c0_18] : memref<1x1x2x2x12x128xbf16, #tpu.memory_space<vmem>>, vector<1x1x1x1x12x128xbf16>
    %15 = vector.shape_cast %14 : vector<1x1x1x1x12x128xbf16> to vector<12x128xbf16>
    %cst_19 = arith.constant dense<0.000000e+00> : vector<2048x128xf32>
    %16 = tpu.matmul %13, %15, %cst_19 {dimension_numbers = #tpu.dot_dimension_numbers<[1], [0], [0], [1], [0, 0, 1, 1], [], []>} : vector<2048x12xbf16>, vector<12x128xbf16>, vector<2048x128xf32> -> vector<2048x128xf32>
    %17 = arith.addf %11, %16 : vector<2048x128xf32>
    %18 = vector.extract_strided_slice %4 {offsets = [1, 0, 0], sizes = [16, 128, 12], strides = [1, 1, 1]} : vector<17x129x12xbf16> to vector<16x128x12xbf16>
    %19 = vector.shape_cast %18 : vector<16x128x12xbf16> to vector<2048x12xbf16>
    %c0_20 = arith.constant 0 : index
    %c0_21 = arith.constant 0 : index
    %c1_22 = arith.constant 1 : index
    %c0_23 = arith.constant 0 : index
    %c0_24 = arith.constant 0 : index
    %c0_25 = arith.constant 0 : index
    %20 = vector.load %arg4[%c0_20, %c0_21, %c1_22, %c0_23, %c0_24, %c0_25] : memref<1x1x2x2x12x128xbf16, #tpu.memory_space<vmem>>, vector<1x1x1x1x12x128xbf16>
    %21 = vector.shape_cast %20 : vector<1x1x1x1x12x128xbf16> to vector<12x128xbf16>
    %cst_26 = arith.constant dense<0.000000e+00> : vector<2048x128xf32>
    %22 = tpu.matmul %19, %21, %cst_26 {dimension_numbers = #tpu.dot_dimension_numbers<[1], [0], [0], [1], [0, 0, 1, 1], [], []>} : vector<2048x12xbf16>, vector<12x128xbf16>, vector<2048x128xf32> -> vector<2048x128xf32>
    %23 = arith.addf %17, %22 : vector<2048x128xf32>
    %24 = vector.extract_strided_slice %4 {offsets = [1, 1, 0], sizes = [16, 128, 12], strides = [1, 1, 1]} : vector<17x129x12xbf16> to vector<16x128x12xbf16>
    %25 = vector.shape_cast %24 : vector<16x128x12xbf16> to vector<2048x12xbf16>
    %c0_27 = arith.constant 0 : index
    %c0_28 = arith.constant 0 : index
    %c1_29 = arith.constant 1 : index
    %c1_30 = arith.constant 1 : index
    %c0_31 = arith.constant 0 : index
    %c0_32 = arith.constant 0 : index
    %26 = vector.load %arg4[%c0_27, %c0_28, %c1_29, %c1_30, %c0_31, %c0_32] : memref<1x1x2x2x12x128xbf16, #tpu.memory_space<vmem>>, vector<1x1x1x1x12x128xbf16>
    %27 = vector.shape_cast %26 : vector<1x1x1x1x12x128xbf16> to vector<12x128xbf16>
    %cst_33 = arith.constant dense<0.000000e+00> : vector<2048x128xf32>
    %28 = tpu.matmul %25, %27, %cst_33 {dimension_numbers = #tpu.dot_dimension_numbers<[1], [0], [0], [1], [0, 0, 1, 1], [], []>} : vector<2048x12xbf16>, vector<12x128xbf16>, vector<2048x128xf32> -> vector<2048x128xf32>
    %29 = arith.addf %23, %28 : vector<2048x128xf32>
    %c0_34 = arith.constant 0 : index
    %c0_35 = arith.constant 0 : index
    %30 = vector.load %arg5[%c0_34, %c0_35] : memref<1x128xf32, #tpu.memory_space<vmem>>, vector<1x128xf32>
    %31 = vector.broadcast %30 : vector<1x128xf32> to vector<2048x128xf32>
    %32 = arith.addf %29, %31 : vector<2048x128xf32>
    %cst_36 = arith.constant 0.000000e+00 : f32
    %33 = vector.broadcast %cst_36 : f32 to vector<2048x128xf32>
    %34 = arith.cmpf ogt, %32, %33 : vector<2048x128xf32>
    %cst_37 = arith.constant 2.000000e-01 : f32
    %35 = vector.broadcast %cst_37 : f32 to vector<2048x128xf32>
    %36 = arith.mulf %35, %32 : vector<2048x128xf32>
    %37 = arith.select %34, %32, %36 : vector<2048x128xi1>, vector<2048x128xf32>
    %38 = vector.extract_strided_slice %37 {offsets = [0, 0], sizes = [2048, 8], strides = [1, 1]} : vector<2048x128xf32> to vector<2048x8xf32>
    %39 = vector.shape_cast %38 : vector<2048x8xf32> to vector<16x128x8xf32>
    %40 = arith.truncf %39 : vector<16x128x8xf32> to vector<16x128x8xbf16>
    %c0_38 = arith.constant 0 : index
    %c0_39 = arith.constant 0 : index
    %c0_40 = arith.constant 0 : index
    %c0_41 = arith.constant 0 : index
    %c0_42 = arith.constant 0 : index
    %c0_43 = arith.constant 0 : index
    %41 = vector.load %arg6[%c0_38, %c0_39, %c0_40, %c0_41, %c0_42, %c0_43] : memref<1x1x1x16x128x8xbf16, #tpu.memory_space<vmem>>, vector<1x1x1x16x128x8xbf16>
    %42 = vector.shape_cast %41 : vector<1x1x1x16x128x8xbf16> to vector<16x128x8xbf16>
    %43 = vector.shape_cast %40 : vector<16x128x8xbf16> to vector<1x1x1x16x128x8xbf16>
    tpu.vector_store %arg6[%c0_38, %c0_39, %c0_40, %c0_41, %c0_42, %c0_43], %43 {strides = array<i32>} : memref<1x1x1x16x128x8xbf16, #tpu.memory_space<vmem>>, vector<1x1x1x16x128x8xbf16>,
    return
  }
  func.func @transform_0(%arg0: i32, %arg1: i32) -> (i32, i32, i32, i32) {
    %c0_i32 = arith.constant 0 : i32
    %c0_i32_0 = arith.constant 0 : i32
    %c0_i32_1 = arith.constant 0 : i32
    return %arg0, %arg1, %c0_i32, %c0_i32_0 : i32, i32, i32, i32
  }
  func.func @transform_1(%arg0: i32, %arg1: i32) -> (i32, i32, i32, i32) {
    %c1_i32 = arith.constant 1 : i32
    %0 = arith.addi %arg1, %c1_i32 : i32
    %c16_i32 = arith.constant 16 : i32
    %1 = arith.muli %c16_i32, %0 : i32
    %c0_i32 = arith.constant 0 : i32
    %c0_i32_0 = arith.constant 0 : i32
    %c0_i32_1 = arith.constant 0 : i32
    return %arg0, %1, %c0_i32, %c0_i32_0 : i32, i32, i32, i32
  }
  func.func @transform_2(%arg0: i32, %arg1: i32) -> (i32, i32, i32, i32, i32, i32) {
    %c0_i32 = arith.constant 0 : i32
    %c0_i32_0 = arith.constant 0 : i32
    %c0_i32_1 = arith.constant 0 : i32
    %c0_i32_2 = arith.constant 0 : i32
    %c0_i32_3 = arith.constant 0 : i32
    %c0_i32_4 = arith.constant 0 : i32
    %c0_i32_5 = arith.constant 0 : i32
    return %c0_i32, %c0_i32_0, %c0_i32_1, %c0_i32_2, %c0_i32_3, %c0_i32_4 : i32, i32, i32, i32, i32, i32
  }
  func.func @transform_3(%arg0: i32, %arg1: i32) -> (i32, i32) {
    %c0_i32 = arith.constant 0 : i32
    %c0_i32_0 = arith.constant 0 : i32
    %c0_i32_1 = arith.constant 0 : i32
    return %c0_i32, %c0_i32_0 : i32, i32
  }
  func.func @transform_4(%arg0: i32, %arg1: i32) -> (i32, i32, i32, i32, i32, i32) {
    %c0_i32 = arith.constant 0 : i32
    %c0_i32_0 = arith.constant 0 : i32
    %c0_i32_1 = arith.constant 0 : i32
    %c0_i32_2 = arith.constant 0 : i32
    %c0_i32_3 = arith.constant 0 : i32
    return %arg0, %c0_i32, %c0_i32_0, %arg1, %c0_i32_1, %c0_i32_2 : i32, i32, i32, i32, i32, i32
  }
}

</mosaic_0001>

<llo_original>
// kernel: tpu_custom_call.1
$region0: #{tpu_custom_call.1}
  #allocation0 [shape = 'u32[]', space=smem, size = 0x4, offset = 0x4, fixed_abs, tag = 'smem constant byte address 0x4 - core index']
  #allocation1 [shape = 'u32[144,128]{1,0:T(1,128)}', space=vmem, size = 0x12000, scoped, tag = 'internal scratch']
  %s0 = inlined_call_operand.vmem [shape: bf16[1,144,129,12], index: 0, kind: input, shape index: {}]
  %s1 = inlined_call_operand.vmem [shape: bf16[1,144,129,12], index: 1, kind: input, shape index: {}]
  %s2 = inlined_call_operand.vmem [shape: bf16[1,1,2,2,12,128], index: 2, kind: input, shape index: {}]
  %s3 = inlined_call_operand.vmem [shape: f32[1,128], index: 3, kind: input, shape index: {}]
  %s4 = inlined_call_operand.vmem [shape: bf16[1,1,1,128,128,8], index: 4, kind: output, shape index: {}]
  %s5 = sld [smem:[#allocation0]]
  $region49: #{tpu_custom_call.1} parent=0
    _
  %s7 = ssub.s32 1, %s5
  %s8 = scalar_select 0, %s7, %s5
  loop: start=0, step=1, limit=10
  $region2: #{tpu_custom_call.1} parent=0 // loop_pre_header
    _
  $region3: #{tpu_custom_call.1} parent=0 // loop_header
    %s10 = sphi 0, %s14
    %p11 = scmp.ge.s32.totalorder %s10, 10
    %s17 = sphi 0, %s29
    %s18 = sphi 0, %s25
    %s19 = sphi 0, %s17
    %s20 = sphi 0, %s18
    %s21 = sphi 0, %s19
    %s22 = sphi 0, %s20
    %s34 = sphi 0, %s36
    %s37 = sphi 0, %s34
    %s38 = sphi 0, %s37
    %s54 = sphi 0, %s38
    %s66 = sphi 0, %s68
    %s69 = sphi 0, %s66
    %s70 = sphi 0, %s69
    %s86 = sphi 0, %s70
    %s90 = sphi 0, %s90
    %s92 = sphi 0, %s90
    %s93 = sphi 0, %s92
    %s107 = sphi 0, %s93
    %s111 = sphi 0, %s111
    %s113 = sphi 0, %s111
    %s114 = sphi 0, %s113
    %s128 = sphi 0, %s114
    %s136 = sphi 0, %s138
    %s139 = sphi 0, %s136
    %s140 = sphi 0, %s139
    %s156 = sphi 0, %s140
  $region4: #{tpu_custom_call.1} parent=0 // loop_header_branch
    %13 = sbr.rel (%p11) target = $region8
  $region5: #{tpu_custom_call.1} parent=0 // loop_body
    %s15 = ssub.s32 %s10, 1
    %s16 = ssub.s32 %s10, 2
    %s23 = sadd.s32 1, %s18
    %p24 = scmp.ge.s32.totalorder %s23, 8
    %s25 = scalar_select %p24, 0, %s23
    %s26 = sadd.s32 1, %s17
    %s27 = scalar_select %p24, %s26, %s17
    %p28 = scmp.ge.s32.totalorder %s27, 1
    %s29 = scalar_select %p28, 0, %s27
    %s30 = ssub.s32 %s17, %s29
    %s31 = ssub.s32 %s18, %s25
    %s32 = sor.u32 %s30, %s31
    %p33 = scmp.eq.s32.totalorder %s32, 0
    %s35 = sadd.s32 %s34, 1
    %s36 = scalar_select %p33, %s34, %s35
    %p39 = pneg %p33
    %p40 = scmp.eq.s32.totalorder %s10, 7
    %p41 = por %p39, %p40
    %p42 = scmp.ne.s32.totalorder %s34, %s37
    %p43 = scmp.eq.s32.totalorder %s10, 0
    %p44 = por %p42, %p43
    %p45 = scmp.ne.s32.totalorder %s34, %s37
    %p46 = scmp.eq.s32.totalorder %s15, 7
    %p47 = por %p45, %p46
    %p48 = scmp.ne.s32.totalorder %s37, %s38
    %p49 = scmp.eq.s32.totalorder %s15, 0
    %p50 = por %p48, %p49
    %p51 = scmp.ne.s32.totalorder %s37, %s38
    %p52 = scmp.eq.s32.totalorder %s16, 7
    %p53 = por %p51, %p52
    %p55 = scmp.ne.s32.totalorder %s38, %s54
    %p56 = scmp.eq.s32.totalorder %s16, 0
    %p57 = por %p55, %p56
    %s58 = sadd.s32 %s18, 1
    %s59 = smul.u32 %s58, 16
    %s60 = sadd.s32 %s25, 1
    %s61 = smul.u32 %s60, 16
    %s62 = ssub.s32 %s17, %s29
    %s63 = ssub.s32 %s59, %s61
    %s64 = sor.u32 %s62, %s63
    %p65 = scmp.eq.s32.totalorder %s64, 0
    %s67 = sadd.s32 %s66, 1
    %s68 = scalar_select %p65, %s66, %s67
    %p71 = pneg %p65
    %p72 = scmp.eq.s32.totalorder %s10, 7
    %p73 = por %p71, %p72
    %p74 = scmp.ne.s32.totalorder %s66, %s69
    %p75 = scmp.eq.s32.totalorder %s10, 0
    %p76 = por %p74, %p75
    %p77 = scmp.ne.s32.totalorder %s66, %s69
    %p78 = scmp.eq.s32.totalorder %s15, 7
    %p79 = por %p77, %p78
    %p80 = scmp.ne.s32.totalorder %s69, %s70
    %p81 = scmp.eq.s32.totalorder %s15, 0
    %p82 = por %p80, %p81
    %p83 = scmp.ne.s32.totalorder %s69, %s70
    %p84 = scmp.eq.s32.totalorder %s16, 7
    %p85 = por %p83, %p84
    %p87 = scmp.ne.s32.totalorder %s70, %s86
    %p88 = scmp.eq.s32.totalorder %s16, 0
    %p89 = por %p87, %p88
    %s91 = sadd.s32 %s90, 1
    %p94 = scmp.eq.s32.totalorder %s10, 7
    %p95 = scmp.ne.s32.totalorder %s90, %s92
    %p96 = scmp.eq.s32.totalorder %s10, 0
    %p97 = por %p95, %p96
    %p98 = scmp.ne.s32.totalorder %s90, %s92
    %p99 = scmp.eq.s32.totalorder %s15, 7
    %p100 = por %p98, %p99
    %p101 = scmp.ne.s32.totalorder %s92, %s93
    %p102 = scmp.eq.s32.totalorder %s15, 0
    %p103 = por %p101, %p102
    %p104 = scmp.ne.s32.totalorder %s92, %s93
    %p105 = scmp.eq.s32.totalorder %s16, 7
    %p106 = por %p104, %p105
    %p108 = scmp.ne.s32.totalorder %s93, %s107
    %p109 = scmp.eq.s32.totalorder %s16, 0
    %p110 = por %p108, %p109
    %s112 = sadd.s32 %s111, 1
    %p115 = scmp.eq.s32.totalorder %s10, 7
    %p116 = scmp.ne.s32.totalorder %s111, %s113
    %p117 = scmp.eq.s32.totalorder %s10, 0
    %p118 = por %p116, %p117
    %p119 = scmp.ne.s32.totalorder %s111, %s113
    %p120 = scmp.eq.s32.totalorder %s15, 7
    %p121 = por %p119, %p120
    %p122 = scmp.ne.s32.totalorder %s113, %s114
    %p123 = scmp.eq.s32.totalorder %s15, 0
    %p124 = por %p122, %p123
    %p125 = scmp.ne.s32.totalorder %s113, %s114
    %p126 = scmp.eq.s32.totalorder %s16, 7
    %p127 = por %p125, %p126
    %p129 = scmp.ne.s32.totalorder %s114, %s128
    %p130 = scmp.eq.s32.totalorder %s16, 0
    %p131 = por %p129, %p130
    %s132 = ssub.s32 %s17, %s29
    %s133 = ssub.s32 %s18, %s25
    %s134 = sor.u32 %s132, %s133
    %p135 = scmp.eq.s32.totalorder %s134, 0
    %s137 = sadd.s32 %s136, 1
    %s138 = scalar_select %p135, %s136, %s137
    %p141 = pneg %p135
    %p142 = scmp.eq.s32.totalorder %s10, 7
    %p143 = por %p141, %p142
    %p144 = scmp.ne.s32.totalorder %s136, %s139
    %p145 = scmp.eq.s32.totalorder %s10, 0
    %p146 = por %p144, %p145
    %p147 = scmp.ne.s32.totalorder %s136, %s139
    %p148 = scmp.eq.s32.totalorder %s15, 7
    %p149 = por %p147, %p148
    %p150 = scmp.ne.s32.totalorder %s139, %s140
    %p151 = scmp.eq.s32.totalorder %s15, 0
    %p152 = por %p150, %p151
    %p153 = scmp.ne.s32.totalorder %s139, %s140
    %p154 = scmp.eq.s32.totalorder %s16, 7
    %p155 = por %p153, %p154
    %p157 = scmp.ne.s32.totalorder %s140, %s156
    %p158 = scmp.eq.s32.totalorder %s16, 0
    %p159 = por %p157, %p158
    %p160 = scmp.le.s32.totalorder 1, %s10
    %p161 = scmp.lt.s32.totalorder %s10, 9
    %p162 = pnand %p160, %p161
    %p163 = pneg %p162
    // Predicated region
    $region9: #{tpu_custom_call.1} parent=5 // pred_check
      _
    $region10: #{tpu_custom_call.1} parent=5 // pred_check_branch
      %165 = sbr.rel (%p162) target = $region12
    $region11: #{tpu_custom_call.1} parent=5 // pred_region
      %s166 = ssub.s32 %s10, 1
      // Predicated region
      $region13: #{tpu_custom_call.1} parent=11 // pred_check
        %p167 = pneg %p103
      $region14: #{tpu_custom_call.1} parent=11 // pred_check_branch
        %169 = sbr.rel (%p167) target = $region16
      $region15: #{tpu_custom_call.1} parent=11 // pred_region
        _
      $region16: #{tpu_custom_call.1} parent=11 // pred_fallthru
        _
      // Predicated region
      $region17: #{tpu_custom_call.1} parent=11 // pred_check
        %p170 = pneg %p124
      $region18: #{tpu_custom_call.1} parent=11 // pred_check_branch
        %172 = sbr.rel (%p170) target = $region20
      $region19: #{tpu_custom_call.1} parent=11 // pred_region
        _
      $region20: #{tpu_custom_call.1} parent=11 // pred_fallthru
        _
    $region12: #{tpu_custom_call.1} parent=5 // pred_fallthru
      _
    %p173 = scmp.lt.s32.totalorder %s10, 8
    // Predicated region
    $region21: #{tpu_custom_call.1} parent=5 // pred_check
      %p174 = pneg %p173
    $region22: #{tpu_custom_call.1} parent=5 // pred_check_branch
      %176 = sbr.rel (%p174) target = $region24
    $region23: #{tpu_custom_call.1} parent=5 // pred_region
      // Predicated region
      $region25: #{tpu_custom_call.1} parent=23 // pred_check
        %p177 = pneg %p44
      $region26: #{tpu_custom_call.1} parent=23 // pred_check_branch
        %179 = sbr.rel (%p177) target = $region28
      $region27: #{tpu_custom_call.1} parent=23 // pred_region
        %s180 = smul.u32 16, %s18
        %p181 = scmp.lt.s32.totalorder %s17, 0
        %s182 = scalar_select %p181, %s17, 0
        %p183 = scmp.lt.s32.totalorder %s180, 143
        %s184 = scalar_select %p183, %s180, 143
        %s185 = smul.addr %s184, 17
        %s186 = smul.addr %s182, 2448
        %s187 = sadd.s32 %s185, %s186
        %s188 = smul.addr %s187, 4
        %s189 = scalar_lea.vmem %s0, %s188
        %s190 = smul.u32 16, %s18
      $region28: #{tpu_custom_call.1} parent=23 // pred_fallthru
        _
      // Predicated region
      $region29: #{tpu_custom_call.1} parent=23 // pred_check
        %p191 = pneg %p76
      $region30: #{tpu_custom_call.1} parent=23 // pred_check_branch
        %193 = sbr.rel (%p191) target = $region32
      $region31: #{tpu_custom_call.1} parent=23 // pred_region
        %s194 = sadd.s32 %s18, 1
        %s195 = smul.u32 %s194, 16
        %p196 = scmp.lt.s32.totalorder %s17, 0
        %s197 = scalar_select %p196, %s17, 0
        %p198 = scmp.lt.s32.totalorder %s195, 143
        %s199 = scalar_select %p198, %s195, 143
        %s200 = smul.addr %s199, 17
        %s201 = smul.addr %s197, 2448
        %s202 = sadd.s32 %s200, %s201
        %s203 = smul.addr %s202, 4
        %s204 = scalar_lea.vmem %s1, %s203
        %s205 = sadd.s32 %s18, 1
        %s206 = smul.u32 %s205, 16
      $region32: #{tpu_custom_call.1} parent=23 // pred_fallthru
        _
    $region24: #{tpu_custom_call.1} parent=5 // pred_fallthru
      _
    %p207 = scmp.le.s32.totalorder 1, %s10
    %p208 = scmp.lt.s32.totalorder %s10, 9
    %p209 = pnand %p207, %p208
    %p210 = pneg %p209
    // Predicated region
    $region33: #{tpu_custom_call.1} parent=5 // pred_check
      _
    $region34: #{tpu_custom_call.1} parent=5 // pred_check_branch
      %212 = sbr.rel (%p209) target = $region36
    $region35: #{tpu_custom_call.1} parent=5 // pred_region
      %s213 = ssub.s32 %s10, 1
      %s214 = smul.u32 16, %s20
      %p215 = scmp.lt.s32.totalorder %s19, 0
      %s216 = scalar_select %p215, %s19, 0
      %p217 = scmp.lt.s32.totalorder %s214, 143
      %s218 = scalar_select %p217, %s214, 143
      %s219 = smul.addr %s218, 17
      %s220 = smul.addr %s216, 2448
      %s221 = sadd.s32 %s219, %s220
      %s222 = smul.addr %s221, 4
      %s223 = scalar_lea.vmem %s0, %s222
      %p224 = pneg %p50
      %p225 = pneg %p47
      %s226 = sadd.s32 %s20, 1
      %s227 = smul.u32 %s226, 16
      %p228 = scmp.lt.s32.totalorder %s19, 0
      %s229 = scalar_select %p228, %s19, 0
      %p230 = scmp.lt.s32.totalorder %s227, 143
      %s231 = scalar_select %p230, %s227, 143
      %s232 = smul.addr %s231, 17
      %s233 = smul.addr %s229, 2448
      %s234 = sadd.s32 %s232, %s233
      %s235 = smul.addr %s234, 4
      %s236 = scalar_lea.vmem %s1, %s235
      %p237 = pneg %p82
      %p238 = pneg %p79
      %p239 = pneg %p103
      %p240 = pneg %p100
      %p241 = pneg %p124
      %p242 = pneg %p121
      %p243 = pneg %p152
      %p244 = pneg %p149
      %s245 = smul.u32 16, %s20
      %p246 = scmp.lt.s32.totalorder %s19, 0
      %s247 = scalar_select %p246, %s19, 0
      %p248 = scmp.lt.s32.totalorder %s245, 127
      %s249 = scalar_select %p248, %s245, 127
      %s250 = smul.addr %s249, 16
      %s251 = smul.addr %s247, 2048
      %s252 = sadd.s32 %s250, %s251
      %s253 = smul.addr %s252, 4
      %s254 = scalar_lea.vmem %s4, %s253
      %s255 = smul.u32 16, %s20
      %p256 = scmp.lt.s32.totalorder %s19, 0
      %s257 = scalar_select %p256, %s19, 0
      %p258 = scmp.lt.s32.totalorder %s255, 143
      %s259 = scalar_select %p258, %s255, 143
      %s260 = smul.addr %s259, 17
      %s261 = smul.addr %s257, 2448
      %s262 = sadd.s32 %s260, %s261
      %s263 = smul.addr %s262, 4
      %s264 = scalar_lea.vmem %s0, %s263
      %s265 = smul.u32 16, %s20
      %s266 = sadd.s32 %s20, 1
      %s267 = smul.u32 %s266, 16
      %p268 = scmp.lt.s32.totalorder %s19, 0
      %s269 = scalar_select %p268, %s19, 0
      %p270 = scmp.lt.s32.totalorder %s267, 143
      %s271 = scalar_select %p270, %s267, 143
      %s272 = smul.addr %s271, 17
      %s273 = smul.addr %s269, 2448
      %s274 = sadd.s32 %s272, %s273
      %s275 = smul.addr %s274, 4
      %s276 = scalar_lea.vmem %s1, %s275
      %s277 = sadd.s32 %s20, 1
      %s278 = smul.u32 %s277, 16
      %s279 = smul.u32 16, %s20
      %p280 = scmp.lt.s32.totalorder %s19, 0
      %s281 = scalar_select %p280, %s19, 0
      %p282 = scmp.lt.s32.totalorder %s279, 127
      %s283 = scalar_select %p282, %s279, 127
      %s284 = smul.addr %s283, 16
      %s285 = smul.addr %s281, 2048
      %s286 = sadd.s32 %s284, %s285
      %s287 = smul.addr %s286, 4
      %s288 = scalar_lea.vmem %s4, %s287
      %s289 = smul.u32 16, %s20
      %v291 = vld [vmem:[%s264] sm:$0xf]
      %v292 = vld [vmem:[%s264 + $0x4] sm:$0xf]
      %v293 = vld [vmem:[%s264 + $0x8] sm:$0xf]
      %v294 = vld [vmem:[%s264 + $0xc] sm:$0xf]
      %v295 = vld [vmem:[%s264 + $0x10] sm:$0xf]
      %v296 = vld [vmem:[%s264 + $0x14] sm:$0xf]
      %v297 = vld [vmem:[%s264 + $0x18] sm:$0xf]
      %v298 = vld [vmem:[%s264 + $0x1c] sm:$0xf]
      %v299 = vld [vmem:[%s264 + $0x20] sm:$0xf]
      %v300 = vld [vmem:[%s264 + $0x24] sm:$0xf]
      %v301 = vld [vmem:[%s264 + $0x28] sm:$0xf]
      %v302 = vld [vmem:[%s264 + $0x2c] sm:$0xf]
      %v303 = vld [vmem:[%s264 + $0x30] sm:$0xf]
      %v304 = vld [vmem:[%s264 + $0x34] sm:$0xf]
      %v305 = vld [vmem:[%s264 + $0x38] sm:$0xf]
      %v306 = vld [vmem:[%s264 + $0x3c] sm:$0xf]
      %v307 = vld [vmem:[%s264 + $0x40] sm:$0x1]
      %v308 = vld [vmem:[%s264 + $0x44] sm:$0xf]
      %v309 = vld [vmem:[%s264 + $0x48] sm:$0xf]
      %v310 = vld [vmem:[%s264 + $0x4c] sm:$0xf]
      %v311 = vld [vmem:[%s264 + $0x50] sm:$0xf]
      %v312 = vld [vmem:[%s264 + $0x54] sm:$0xf]
      %v313 = vld [vmem:[%s264 + $0x58] sm:$0xf]
      %v314 = vld [vmem:[%s264 + $0x5c] sm:$0xf]
      %v315 = vld [vmem:[%s264 + $0x60] sm:$0xf]
      %v316 = vld [vmem:[%s264 + $0x64] sm:$0xf]
      %v317 = vld [vmem:[%s264 + $0x68] sm:$0xf]
      %v318 = vld [vmem:[%s264 + $0x6c] sm:$0xf]
      %v319 = vld [vmem:[%s264 + $0x70] sm:$0xf]
      %v320 = vld [vmem:[%s264 + $0x74] sm:$0xf]
      %v321 = vld [vmem:[%s264 + $0x78] sm:$0xf]
      %v322 = vld [vmem:[%s264 + $0x7c] sm:$0xf]
      %v323 = vld [vmem:[%s264 + $0x80] sm:$0xf]
      %v324 = vld [vmem:[%s264 + $0x84] sm:$0x1]
      %v325 = vld [vmem:[%s264 + $0x88] sm:$0xf]
      %v326 = vld [vmem:[%s264 + $0x8c] sm:$0xf]
      %v327 = vld [vmem:[%s264 + $0x90] sm:$0xf]
      %v328 = vld [vmem:[%s264 + $0x94] sm:$0xf]
      %v329 = vld [vmem:[%s264 + $0x98] sm:$0xf]
      %v330 = vld [vmem:[%s264 + $0x9c] sm:$0xf]
      %v331 = vld [vmem:[%s264 + $0xa0] sm:$0xf]
      %v332 = vld [vmem:[%s264 + $0xa4] sm:$0xf]
      %v333 = vld [vmem:[%s264 + $0xa8] sm:$0xf]
      %v334 = vld [vmem:[%s264 + $0xac] sm:$0xf]
      %v335 = vld [vmem:[%s264 + $0xb0] sm:$0xf]
      %v336 = vld [vmem:[%s264 + $0xb4] sm:$0xf]
      %v337 = vld [vmem:[%s264 + $0xb8] sm:$0xf]
      %v338 = vld [vmem:[%s264 + $0xbc] sm:$0xf]
      %v339 = vld [vmem:[%s264 + $0xc0] sm:$0xf]
      %v340 = vld [vmem:[%s264 + $0xc4] sm:$0xf]
      %v341 = vld [vmem:[%s264 + $0xc8] sm:$0x1]
      %v342 = vld [vmem:[%s264 + $0xcc] sm:$0xf]
      %v343 = vld [vmem:[%s264 + $0xd0] sm:$0xf]
      %v344 = vld [vmem:[%s264 + $0xd4] sm:$0xf]
      %v345 = vld [vmem:[%s264 + $0xd8] sm:$0xf]
      %v346 = vld [vmem:[%s264 + $0xdc] sm:$0xf]
      %v347 = vld [vmem:[%s264 + $0xe0] sm:$0xf]
      %v348 = vld [vmem:[%s264 + $0xe4] sm:$0xf]
      %v349 = vld [vmem:[%s264 + $0xe8] sm:$0xf]
      %v350 = vld [vmem:[%s264 + $0xec] sm:$0xf]
      %v351 = vld [vmem:[%s264 + $0xf0] sm:$0xf]
      %v352 = vld [vmem:[%s264 + $0xf4] sm:$0xf]
      %v353 = vld [vmem:[%s264 + $0xf8] sm:$0xf]
      %v354 = vld [vmem:[%s264 + $0xfc] sm:$0xf]
      %v355 = vld [vmem:[%s264 + $0x100] sm:$0xf]
      %v356 = vld [vmem:[%s264 + $0x104] sm:$0xf]
      %v357 = vld [vmem:[%s264 + $0x108] sm:$0xf]
      %v358 = vld [vmem:[%s264 + $0x10c] sm:$0x1]
      %v359 = vld [vmem:[%s264 + $0x110] sm:$0xf]
      %v360 = vld [vmem:[%s264 + $0x114] sm:$0xf]
      %v361 = vld [vmem:[%s264 + $0x118] sm:$0xf]
      %v362 = vld [vmem:[%s264 + $0x11c] sm:$0xf]
      %v363 = vld [vmem:[%s264 + $0x120] sm:$0xf]
      %v364 = vld [vmem:[%s264 + $0x124] sm:$0xf]
      %v365 = vld [vmem:[%s264 + $0x128] sm:$0xf]
      %v366 = vld [vmem:[%s264 + $0x12c] sm:$0xf]
      %v367 = vld [vmem:[%s264 + $0x130] sm:$0xf]
      %v368 = vld [vmem:[%s264 + $0x134] sm:$0xf]
      %v369 = vld [vmem:[%s264 + $0x138] sm:$0xf]
      %v370 = vld [vmem:[%s264 + $0x13c] sm:$0xf]
      %v371 = vld [vmem:[%s264 + $0x140] sm:$0xf]
      %v372 = vld [vmem:[%s264 + $0x144] sm:$0xf]
      %v373 = vld [vmem:[%s264 + $0x148] sm:$0xf]
      %v374 = vld [vmem:[%s264 + $0x14c] sm:$0xf]
      %v375 = vld [vmem:[%s264 + $0x150] sm:$0x1]
      %v376 = vld [vmem:[%s264 + $0x154] sm:$0xf]
      %v377 = vld [vmem:[%s264 + $0x158] sm:$0xf]
      %v378 = vld [vmem:[%s264 + $0x15c] sm:$0xf]
      %v379 = vld [vmem:[%s264 + $0x160] sm:$0xf]
      %v380 = vld [vmem:[%s264 + $0x164] sm:$0xf]
      %v381 = vld [vmem:[%s264 + $0x168] sm:$0xf]
      %v382 = vld [vmem:[%s264 + $0x16c] sm:$0xf]
      %v383 = vld [vmem:[%s264 + $0x170] sm:$0xf]
      %v384 = vld [vmem:[%s264 + $0x174] sm:$0xf]
      %v385 = vld [vmem:[%s264 + $0x178] sm:$0xf]
      %v386 = vld [vmem:[%s264 + $0x17c] sm:$0xf]
      %v387 = vld [vmem:[%s264 + $0x180] sm:$0xf]
      %v388 = vld [vmem:[%s264 + $0x184] sm:$0xf]
      %v389 = vld [vmem:[%s264 + $0x188] sm:$0xf]
      %v390 = vld [vmem:[%s264 + $0x18c] sm:$0xf]
      %v391 = vld [vmem:[%s264 + $0x190] sm:$0xf]
      %v392 = vld [vmem:[%s264 + $0x194] sm:$0x1]
      %v393 = vld [vmem:[%s264 + $0x198] sm:$0xf]
      %v394 = vld [vmem:[%s264 + $0x19c] sm:$0xf]
      %v395 = vld [vmem:[%s264 + $0x1a0] sm:$0xf]
      %v396 = vld [vmem:[%s264 + $0x1a4] sm:$0xf]
      %v397 = vld [vmem:[%s264 + $0x1a8] sm:$0xf]
      %v398 = vld [vmem:[%s264 + $0x1ac] sm:$0xf]
      %v399 = vld [vmem:[%s264 + $0x1b0] sm:$0xf]
      %v400 = vld [vmem:[%s264 + $0x1b4] sm:$0xf]
      %v401 = vld [vmem:[%s264 + $0x1b8] sm:$0xf]
      %v402 = vld [vmem:[%s264 + $0x1bc] sm:$0xf]
      %v403 = vld [vmem:[%s264 + $0x1c0] sm:$0xf]
      %v404 = vld [vmem:[%s264 + $0x1c4] sm:$0xf]
      %v405 = vld [vmem:[%s264 + $0x1c8] sm:$0xf]
      %v406 = vld [vmem:[%s264 + $0x1cc] sm:$0xf]
      %v407 = vld [vmem:[%s264 + $0x1d0] sm:$0xf]
      %v408 = vld [vmem:[%s264 + $0x1d4] sm:$0xf]
      %v409 = vld [vmem:[%s264 + $0x1d8] sm:$0x1]
      %v410 = vld [vmem:[%s264 + $0x1dc] sm:$0xf]
      %v411 = vld [vmem:[%s264 + $0x1e0] sm:$0xf]
      %v412 = vld [vmem:[%s264 + $0x1e4] sm:$0xf]
      %v413 = vld [vmem:[%s264 + $0x1e8] sm:$0xf]
      %v414 = vld [vmem:[%s264 + $0x1ec] sm:$0xf]
      %v415 = vld [vmem:[%s264 + $0x1f0] sm:$0xf]
      %v416 = vld [vmem:[%s264 + $0x1f4] sm:$0xf]
      %v417 = vld [vmem:[%s264 + $0x1f8] sm:$0xf]
      %v418 = vld [vmem:[%s264 + $0x1fc] sm:$0xf]
      %v419 = vld [vmem:[%s264 + $0x200] sm:$0xf]
      %v420 = vld [vmem:[%s264 + $0x204] sm:$0xf]
      %v421 = vld [vmem:[%s264 + $0x208] sm:$0xf]
      %v422 = vld [vmem:[%s264 + $0x20c] sm:$0xf]
      %v423 = vld [vmem:[%s264 + $0x210] sm:$0xf]
      %v424 = vld [vmem:[%s264 + $0x214] sm:$0xf]
      %v425 = vld [vmem:[%s264 + $0x218] sm:$0xf]
      %v426 = vld [vmem:[%s264 + $0x21c] sm:$0x1]
      %v427 = vld [vmem:[%s264 + $0x220] sm:$0xf]
      %v428 = vld [vmem:[%s264 + $0x224] sm:$0xf]
      %v429 = vld [vmem:[%s264 + $0x228] sm:$0xf]
      %v430 = vld [vmem:[%s264 + $0x22c] sm:$0xf]
      %v431 = vld [vmem:[%s264 + $0x230] sm:$0xf]
      %v432 = vld [vmem:[%s264 + $0x234] sm:$0xf]
      %v433 = vld [vmem:[%s264 + $0x238] sm:$0xf]
      %v434 = vld [vmem:[%s264 + $0x23c] sm:$0xf]
      %v435 = vld [vmem:[%s264 + $0x240] sm:$0xf]
      %v436 = vld [vmem:[%s264 + $0x244] sm:$0xf]
      %v437 = vld [vmem:[%s264 + $0x248] sm:$0xf]
      %v438 = vld [vmem:[%s264 + $0x24c] sm:$0xf]
      %v439 = vld [vmem:[%s264 + $0x250] sm:$0xf]
      %v440 = vld [vmem:[%s264 + $0x254] sm:$0xf]
      %v441 = vld [vmem:[%s264 + $0x258] sm:$0xf]
      %v442 = vld [vmem:[%s264 + $0x25c] sm:$0xf]
      %v443 = vld [vmem:[%s264 + $0x260] sm:$0x1]
      %v444 = vld [vmem:[%s264 + $0x264] sm:$0xf]
      %v445 = vld [vmem:[%s264 + $0x268] sm:$0xf]
      %v446 = vld [vmem:[%s264 + $0x26c] sm:$0xf]
      %v447 = vld [vmem:[%s264 + $0x270] sm:$0xf]
      %v448 = vld [vmem:[%s264 + $0x274] sm:$0xf]
      %v449 = vld [vmem:[%s264 + $0x278] sm:$0xf]
      %v450 = vld [vmem:[%s264 + $0x27c] sm:$0xf]
      %v451 = vld [vmem:[%s264 + $0x280] sm:$0xf]
      %v452 = vld [vmem:[%s264 + $0x284] sm:$0xf]
      %v453 = vld [vmem:[%s264 + $0x288] sm:$0xf]
      %v454 = vld [vmem:[%s264 + $0x28c] sm:$0xf]
      %v455 = vld [vmem:[%s264 + $0x290] sm:$0xf]
      %v456 = vld [vmem:[%s264 + $0x294] sm:$0xf]
      %v457 = vld [vmem:[%s264 + $0x298] sm:$0xf]
      %v458 = vld [vmem:[%s264 + $0x29c] sm:$0xf]
      %v459 = vld [vmem:[%s264 + $0x2a0] sm:$0xf]
      %v460 = vld [vmem:[%s264 + $0x2a4] sm:$0x1]
      %v461 = vld [vmem:[%s264 + $0x2a8] sm:$0xf]
      %v462 = vld [vmem:[%s264 + $0x2ac] sm:$0xf]
      %v463 = vld [vmem:[%s264 + $0x2b0] sm:$0xf]
      %v464 = vld [vmem:[%s264 + $0x2b4] sm:$0xf]
      %v465 = vld [vmem:[%s264 + $0x2b8] sm:$0xf]
      %v466 = vld [vmem:[%s264 + $0x2bc] sm:$0xf]
      %v467 = vld [vmem:[%s264 + $0x2c0] sm:$0xf]
      %v468 = vld [vmem:[%s264 + $0x2c4] sm:$0xf]
      %v469 = vld [vmem:[%s264 + $0x2c8] sm:$0xf]
      %v470 = vld [vmem:[%s264 + $0x2cc] sm:$0xf]
      %v471 = vld [vmem:[%s264 + $0x2d0] sm:$0xf]
      %v472 = vld [vmem:[%s264 + $0x2d4] sm:$0xf]
      %v473 = vld [vmem:[%s264 + $0x2d8] sm:$0xf]
      %v474 = vld [vmem:[%s264 + $0x2dc] sm:$0xf]
      %v475 = vld [vmem:[%s264 + $0x2e0] sm:$0xf]
      %v476 = vld [vmem:[%s264 + $0x2e4] sm:$0xf]
      %v477 = vld [vmem:[%s264 + $0x2e8] sm:$0x1]
      %v478 = vld [vmem:[%s264 + $0x2ec] sm:$0xf]
      %v479 = vld [vmem:[%s264 + $0x2f0] sm:$0xf]
      %v480 = vld [vmem:[%s264 + $0x2f4] sm:$0xf]
      %v481 = vld [vmem:[%s264 + $0x2f8] sm:$0xf]
      %v482 = vld [vmem:[%s264 + $0x2fc] sm:$0xf]
      %v483 = vld [vmem:[%s264 + $0x300] sm:$0xf]
      %v484 = vld [vmem:[%s264 + $0x304] sm:$0xf]
      %v485 = vld [vmem:[%s264 + $0x308] sm:$0xf]
      %v486 = vld [vmem:[%s264 + $0x30c] sm:$0xf]
      %v487 = vld [vmem:[%s264 + $0x310] sm:$0xf]
      %v488 = vld [vmem:[%s264 + $0x314] sm:$0xf]
      %v489 = vld [vmem:[%s264 + $0x318] sm:$0xf]
      %v490 = vld [vmem:[%s264 + $0x31c] sm:$0xf]
      %v491 = vld [vmem:[%s264 + $0x320] sm:$0xf]
      %v492 = vld [vmem:[%s264 + $0x324] sm:$0xf]
      %v493 = vld [vmem:[%s264 + $0x328] sm:$0xf]
      %v494 = vld [vmem:[%s264 + $0x32c] sm:$0x1]
      %v495 = vld [vmem:[%s264 + $0x330] sm:$0xf]
      %v496 = vld [vmem:[%s264 + $0x334] sm:$0xf]
      %v497 = vld [vmem:[%s264 + $0x338] sm:$0xf]
      %v498 = vld [vmem:[%s264 + $0x33c] sm:$0xf]
      %v499 = vld [vmem:[%s264 + $0x340] sm:$0xf]
      %v500 = vld [vmem:[%s264 + $0x344] sm:$0xf]
      %v501 = vld [vmem:[%s264 + $0x348] sm:$0xf]
      %v502 = vld [vmem:[%s264 + $0x34c] sm:$0xf]
      %v503 = vld [vmem:[%s264 + $0x350] sm:$0xf]
      %v504 = vld [vmem:[%s264 + $0x354] sm:$0xf]
      %v505 = vld [vmem:[%s264 + $0x358] sm:$0xf]
      %v506 = vld [vmem:[%s264 + $0x35c] sm:$0xf]
      %v507 = vld [vmem:[%s264 + $0x360] sm:$0xf]
      %v508 = vld [vmem:[%s264 + $0x364] sm:$0xf]
      %v509 = vld [vmem:[%s264 + $0x368] sm:$0xf]
      %v510 = vld [vmem:[%s264 + $0x36c] sm:$0xf]
      %v511 = vld [vmem:[%s264 + $0x370] sm:$0x1]
      %v512 = vld [vmem:[%s264 + $0x374] sm:$0xf]
      %v513 = vld [vmem:[%s264 + $0x378] sm:$0xf]
      %v514 = vld [vmem:[%s264 + $0x37c] sm:$0xf]
      %v515 = vld [vmem:[%s264 + $0x380] sm:$0xf]
      %v516 = vld [vmem:[%s264 + $0x384] sm:$0xf]
      %v517 = vld [vmem:[%s264 + $0x388] sm:$0xf]
      %v518 = vld [vmem:[%s264 + $0x38c] sm:$0xf]
      %v519 = vld [vmem:[%s264 + $0x390] sm:$0xf]
      %v520 = vld [vmem:[%s264 + $0x394] sm:$0xf]
      %v521 = vld [vmem:[%s264 + $0x398] sm:$0xf]
      %v522 = vld [vmem:[%s264 + $0x39c] sm:$0xf]
      %v523 = vld [vmem:[%s264 + $0x3a0] sm:$0xf]
      %v524 = vld [vmem:[%s264 + $0x3a4] sm:$0xf]
      %v525 = vld [vmem:[%s264 + $0x3a8] sm:$0xf]
      %v526 = vld [vmem:[%s264 + $0x3ac] sm:$0xf]
      %v527 = vld [vmem:[%s264 + $0x3b0] sm:$0xf]
      %v528 = vld [vmem:[%s264 + $0x3b4] sm:$0x1]
      %v529 = vld [vmem:[%s264 + $0x3b8] sm:$0xf]
      %v530 = vld [vmem:[%s264 + $0x3bc] sm:$0xf]
      %v531 = vld [vmem:[%s264 + $0x3c0] sm:$0xf]
      %v532 = vld [vmem:[%s264 + $0x3c4] sm:$0xf]
      %v533 = vld [vmem:[%s264 + $0x3c8] sm:$0xf]
      %v534 = vld [vmem:[%s264 + $0x3cc] sm:$0xf]
      %v535 = vld [vmem:[%s264 + $0x3d0] sm:$0xf]
      %v536 = vld [vmem:[%s264 + $0x3d4] sm:$0xf]
      %v537 = vld [vmem:[%s264 + $0x3d8] sm:$0xf]
      %v538 = vld [vmem:[%s264 + $0x3dc] sm:$0xf]
      %v539 = vld [vmem:[%s264 + $0x3e0] sm:$0xf]
      %v540 = vld [vmem:[%s264 + $0x3e4] sm:$0xf]
      %v541 = vld [vmem:[%s264 + $0x3e8] sm:$0xf]
      %v542 = vld [vmem:[%s264 + $0x3ec] sm:$0xf]
      %v543 = vld [vmem:[%s264 + $0x3f0] sm:$0xf]
      %v544 = vld [vmem:[%s264 + $0x3f4] sm:$0xf]
      %v545 = vld [vmem:[%s264 + $0x3f8] sm:$0x1]
      %v546 = vld [vmem:[%s264 + $0x3fc] sm:$0xf]
      %v547 = vld [vmem:[%s264 + $0x400] sm:$0xf]
      %v548 = vld [vmem:[%s264 + $0x404] sm:$0xf]
      %v549 = vld [vmem:[%s264 + $0x408] sm:$0xf]
      %v550 = vld [vmem:[%s264 + $0x40c] sm:$0xf]
      %v551 = vld [vmem:[%s264 + $0x410] sm:$0xf]
      %v552 = vld [vmem:[%s264 + $0x414] sm:$0xf]
      %v553 = vld [vmem:[%s264 + $0x418] sm:$0xf]
      %v554 = vld [vmem:[%s264 + $0x41c] sm:$0xf]
      %v555 = vld [vmem:[%s264 + $0x420] sm:$0xf]
      %v556 = vld [vmem:[%s264 + $0x424] sm:$0xf]
      %v557 = vld [vmem:[%s264 + $0x428] sm:$0xf]
      %v558 = vld [vmem:[%s264 + $0x42c] sm:$0xf]
      %v559 = vld [vmem:[%s264 + $0x430] sm:$0xf]
      %v560 = vld [vmem:[%s264 + $0x434] sm:$0xf]
      %v561 = vld [vmem:[%s264 + $0x438] sm:$0xf]
      %v562 = vld [vmem:[%s264 + $0x43c] sm:$0x1]
      %v563 = vld [vmem:[%s276] sm:$0xf]
      %v564 = vld [vmem:[%s276 + $0x4] sm:$0xf]
      %v565 = vld [vmem:[%s276 + $0x8] sm:$0xf]
      %v566 = vld [vmem:[%s276 + $0xc] sm:$0xf]
      %v567 = vld [vmem:[%s276 + $0x10] sm:$0xf]
      %v568 = vld [vmem:[%s276 + $0x14] sm:$0xf]
      %v569 = vld [vmem:[%s276 + $0x18] sm:$0xf]
      %v570 = vld [vmem:[%s276 + $0x1c] sm:$0xf]
      %v571 = vld [vmem:[%s276 + $0x20] sm:$0xf]
      %v572 = vld [vmem:[%s276 + $0x24] sm:$0xf]
      %v573 = vld [vmem:[%s276 + $0x28] sm:$0xf]
      %v574 = vld [vmem:[%s276 + $0x2c] sm:$0xf]
      %v575 = vld [vmem:[%s276 + $0x30] sm:$0xf]
      %v576 = vld [vmem:[%s276 + $0x34] sm:$0xf]
      %v577 = vld [vmem:[%s276 + $0x38] sm:$0xf]
      %v578 = vld [vmem:[%s276 + $0x3c] sm:$0xf]
      %v579 = vld [vmem:[%s276 + $0x40] sm:$0x1]
      %v580 = vld [vmem:[%s2] sm:$0xf]
      %v581 = vld [vmem:[%s2 + $0x4] sm:$0x3]
      %vm582 = vsmask.f32 3328
      %vm583 = vsmask.f32 7440
      %vm584 = vmor %vm582, %vm583
      %v586 = vshrl.u32 %v291, 16
      %v588 = vrot.slane %v586, 4
      %v589 = vshll.u32 %v291, 16
      %v591 = vrot.slane %v589, 5
      %v592 = vor.u32 %v588, %v591
      %v593 = vrot.slane %v592, 4
      %v595 = vshll.u32 %v292, 16
      %v597 = vrot.slane %v595, 5
      %v598 = vsel %vm584, %v593, %v597
      %v599 = vshrl.u32 %v292, 16
      %v601 = vrot.slane %v599, 4
      %v602 = vor.u32 %v601, %v597
      %v603 = vrot.slane %v602, 4
      %v605 = vshll.u32 %v293, 16
      %v607 = vrot.slane %v605, 5
      %v608 = vsel %vm584, %v603, %v607
      %v609 = vshrl.u32 %v293, 16
      %v611 = vrot.slane %v609, 4
      %v612 = vor.u32 %v611, %v607
      %v613 = vrot.slane %v612, 4
      %v615 = vshll.u32 %v294, 16
      %v617 = vrot.slane %v615, 5
      %v618 = vsel %vm584, %v613, %v617
      %v619 = vshrl.u32 %v294, 16
      %v621 = vrot.slane %v619, 4
      %v622 = vor.u32 %v621, %v617
      %v623 = vrot.slane %v622, 4
      %v625 = vshll.u32 %v295, 16
      %v627 = vrot.slane %v625, 5
      %v628 = vsel %vm584, %v623, %v627
      %v629 = vshrl.u32 %v295, 16
      %v631 = vrot.slane %v629, 4
      %v632 = vor.u32 %v631, %v627
      %v633 = vrot.slane %v632, 4
      %v635 = vshll.u32 %v296, 16
      %v637 = vrot.slane %v635, 5
      %v638 = vsel %vm584, %v633, %v637
      %v639 = vshrl.u32 %v296, 16
      %v641 = vrot.slane %v639, 4
      %v642 = vor.u32 %v641, %v637
      %v643 = vrot.slane %v642, 4
      %v645 = vshll.u32 %v297, 16
      %v647 = vrot.slane %v645, 5
      %v648 = vsel %vm584, %v643, %v647
      %v649 = vshrl.u32 %v297, 16
      %v651 = vrot.slane %v649, 4
      %v652 = vor.u32 %v651, %v647
      %v653 = vrot.slane %v652, 4
      %v655 = vshll.u32 %v298, 16
      %v657 = vrot.slane %v655, 5
      %v658 = vsel %vm584, %v653, %v657
      %v659 = vshrl.u32 %v298, 16
      %v661 = vrot.slane %v659, 4
      %v662 = vor.u32 %v661, %v657
      %v663 = vrot.slane %v662, 4
      %v665 = vshll.u32 %v299, 16
      %v667 = vrot.slane %v665, 5
      %v668 = vsel %vm584, %v663, %v667
      %v669 = vshrl.u32 %v299, 16
      %v671 = vrot.slane %v669, 4
      %v672 = vor.u32 %v671, %v667
      %v673 = vrot.slane %v672, 4
      %v675 = vshll.u32 %v300, 16
      %v677 = vrot.slane %v675, 5
      %v678 = vsel %vm584, %v673, %v677
      %v679 = vshrl.u32 %v300, 16
      %v681 = vrot.slane %v679, 4
      %v682 = vor.u32 %v681, %v677
      %v683 = vrot.slane %v682, 4
      %v685 = vshll.u32 %v301, 16
      %v687 = vrot.slane %v685, 5
      %v688 = vsel %vm584, %v683, %v687
      %v689 = vshrl.u32 %v301, 16
      %v691 = vrot.slane %v689, 4
      %v692 = vor.u32 %v691, %v687
      %v693 = vrot.slane %v692, 4
      %v695 = vshll.u32 %v302, 16
      %v697 = vrot.slane %v695, 5
      %v698 = vsel %vm584, %v693, %v697
      %v699 = vshrl.u32 %v302, 16
      %v701 = vrot.slane %v699, 4
      %v702 = vor.u32 %v701, %v697
      %v703 = vrot.slane %v702, 4
      %v705 = vshll.u32 %v303, 16
      %v707 = vrot.slane %v705, 5
      %v708 = vsel %vm584, %v703, %v707
      %v709 = vshrl.u32 %v303, 16
      %v711 = vrot.slane %v709, 4
      %v712 = vor.u32 %v711, %v707
      %v713 = vrot.slane %v712, 4
      %v715 = vshll.u32 %v304, 16
      %v717 = vrot.slane %v715, 5
      %v718 = vsel %vm584, %v713, %v717
      %v719 = vshrl.u32 %v304, 16
      %v721 = vrot.slane %v719, 4
      %v722 = vor.u32 %v721, %v717
      %v723 = vrot.slane %v722, 4
      %v725 = vshll.u32 %v305, 16
      %v727 = vrot.slane %v725, 5
      %v728 = vsel %vm584, %v723, %v727
      %v729 = vshrl.u32 %v305, 16
      %v731 = vrot.slane %v729, 4
      %v732 = vor.u32 %v731, %v727
      %v733 = vrot.slane %v732, 4
      %v735 = vshll.u32 %v306, 16
      %v737 = vrot.slane %v735, 5
      %v738 = vsel %vm584, %v733, %v737
      %v739 = vshrl.u32 %v306, 16
      %v741 = vrot.slane %v739, 4
      %v742 = vor.u32 %v741, %v737
      %v743 = vrot.slane %v742, 4
      %v745 = vshll.u32 %v307, 16
      %v747 = vrot.slane %v745, 5
      %v748 = vsel %vm584, %v743, %v747
      %v750 = vshrl.u32 %v308, 16
      %v752 = vrot.slane %v750, 4
      %v753 = vshll.u32 %v308, 16
      %v755 = vrot.slane %v753, 5
      %v756 = vor.u32 %v752, %v755
      %v757 = vrot.slane %v756, 4
      %v759 = vshll.u32 %v309, 16
      %v761 = vrot.slane %v759, 5
      %v762 = vsel %vm584, %v757, %v761
      %v763 = vshrl.u32 %v309, 16
      %v765 = vrot.slane %v763, 4
      %v766 = vor.u32 %v765, %v761
      %v767 = vrot.slane %v766, 4
      %v769 = vshll.u32 %v310, 16
      %v771 = vrot.slane %v769, 5
      %v772 = vsel %vm584, %v767, %v771
      %v773 = vshrl.u32 %v310, 16
      %v775 = vrot.slane %v773, 4
      %v776 = vor.u32 %v775, %v771
      %v777 = vrot.slane %v776, 4
      %v779 = vshll.u32 %v311, 16
      %v781 = vrot.slane %v779, 5
      %v782 = vsel %vm584, %v777, %v781
      %v783 = vshrl.u32 %v311, 16
      %v785 = vrot.slane %v783, 4
      %v786 = vor.u32 %v785, %v781
      %v787 = vrot.slane %v786, 4
      %v789 = vshll.u32 %v312, 16
      %v791 = vrot.slane %v789, 5
      %v792 = vsel %vm584, %v787, %v791
      %v793 = vshrl.u32 %v312, 16
      %v795 = vrot.slane %v793, 4
      %v796 = vor.u32 %v795, %v791
      %v797 = vrot.slane %v796, 4
      %v799 = vshll.u32 %v313, 16
      %v801 = vrot.slane %v799, 5
      %v802 = vsel %vm584, %v797, %v801
      %v803 = vshrl.u32 %v313, 16
      %v805 = vrot.slane %v803, 4
      %v806 = vor.u32 %v805, %v801
      %v807 = vrot.slane %v806, 4
      %v809 = vshll.u32 %v314, 16
      %v811 = vrot.slane %v809, 5
      %v812 = vsel %vm584, %v807, %v811
      %v813 = vshrl.u32 %v314, 16
      %v815 = vrot.slane %v813, 4
      %v816 = vor.u32 %v815, %v811
      %v817 = vrot.slane %v816, 4
      %v819 = vshll.u32 %v315, 16
      %v821 = vrot.slane %v819, 5
      %v822 = vsel %vm584, %v817, %v821
      %v823 = vshrl.u32 %v315, 16
      %v825 = vrot.slane %v823, 4
      %v826 = vor.u32 %v825, %v821
      %v827 = vrot.slane %v826, 4
      %v829 = vshll.u32 %v316, 16
      %v831 = vrot.slane %v829, 5
      %v832 = vsel %vm584, %v827, %v831
      %v833 = vshrl.u32 %v316, 16
      %v835 = vrot.slane %v833, 4
      %v836 = vor.u32 %v835, %v831
      %v837 = vrot.slane %v836, 4
      %v839 = vshll.u32 %v317, 16
      %v841 = vrot.slane %v839, 5
      %v842 = vsel %vm584, %v837, %v841
      %v843 = vshrl.u32 %v317, 16
      %v845 = vrot.slane %v843, 4
      %v846 = vor.u32 %v845, %v841
      %v847 = vrot.slane %v846, 4
      %v849 = vshll.u32 %v318, 16
      %v851 = vrot.slane %v849, 5
      %v852 = vsel %vm584, %v847, %v851
      %v853 = vshrl.u32 %v318, 16
      %v855 = vrot.slane %v853, 4
      %v856 = vor.u32 %v855, %v851
      %v857 = vrot.slane %v856, 4
      %v859 = vshll.u32 %v319, 16
      %v861 = vrot.slane %v859, 5
      %v862 = vsel %vm584, %v857, %v861
      %v863 = vshrl.u32 %v319, 16
      %v865 = vrot.slane %v863, 4
      %v866 = vor.u32 %v865, %v861
      %v867 = vrot.slane %v866, 4
      %v869 = vshll.u32 %v320, 16
      %v871 = vrot.slane %v869, 5
      %v872 = vsel %vm584, %v867, %v871
      %v873 = vshrl.u32 %v320, 16
      %v875 = vrot.slane %v873, 4
      %v876 = vor.u32 %v875, %v871
      %v877 = vrot.slane %v876, 4
      %v879 = vshll.u32 %v321, 16
      %v881 = vrot.slane %v879, 5
      %v882 = vsel %vm584, %v877, %v881
      %v883 = vshrl.u32 %v321, 16
      %v885 = vrot.slane %v883, 4
      %v886 = vor.u32 %v885, %v881
      %v887 = vrot.slane %v886, 4
      %v889 = vshll.u32 %v322, 16
      %v891 = vrot.slane %v889, 5
      %v892 = vsel %vm584, %v887, %v891
      %v893 = vshrl.u32 %v322, 16
      %v895 = vrot.slane %v893, 4
      %v896 = vor.u32 %v895, %v891
      %v897 = vrot.slane %v896, 4
      %v899 = vshll.u32 %v323, 16
      %v901 = vrot.slane %v899, 5
      %v902 = vsel %vm584, %v897, %v901
      %v903 = vshrl.u32 %v323, 16
      %v905 = vrot.slane %v903, 4
      %v906 = vor.u32 %v905, %v901
      %v907 = vrot.slane %v906, 4
      %v909 = vshll.u32 %v324, 16
      %v911 = vrot.slane %v909, 5
      %v912 = vsel %vm584, %v907, %v911
      %v914 = vshrl.u32 %v325, 16
      %v916 = vrot.slane %v914, 4
      %v917 = vshll.u32 %v325, 16
      %v919 = vrot.slane %v917, 5
      %v920 = vor.u32 %v916, %v919
      %v921 = vrot.slane %v920, 4
      %v923 = vshll.u32 %v326, 16
      %v925 = vrot.slane %v923, 5
      %v926 = vsel %vm584, %v921, %v925
      %v927 = vshrl.u32 %v326, 16
      %v929 = vrot.slane %v927, 4
      %v930 = vor.u32 %v929, %v925
      %v931 = vrot.slane %v930, 4
      %v933 = vshll.u32 %v327, 16
      %v935 = vrot.slane %v933, 5
      %v936 = vsel %vm584, %v931, %v935
      %v937 = vshrl.u32 %v327, 16
      %v939 = vrot.slane %v937, 4
      %v940 = vor.u32 %v939, %v935
      %v941 = vrot.slane %v940, 4
      %v943 = vshll.u32 %v328, 16
      %v945 = vrot.slane %v943, 5
      %v946 = vsel %vm584, %v941, %v945
      %v947 = vshrl.u32 %v328, 16
      %v949 = vrot.slane %v947, 4
      %v950 = vor.u32 %v949, %v945
      %v951 = vrot.slane %v950, 4
      %v953 = vshll.u32 %v329, 16
      %v955 = vrot.slane %v953, 5
      %v956 = vsel %vm584, %v951, %v955
      %v957 = vshrl.u32 %v329, 16
      %v959 = vrot.slane %v957, 4
      %v960 = vor.u32 %v959, %v955
      %v961 = vrot.slane %v960, 4
      %v963 = vshll.u32 %v330, 16
      %v965 = vrot.slane %v963, 5
      %v966 = vsel %vm584, %v961, %v965
      %v967 = vshrl.u32 %v330, 16
      %v969 = vrot.slane %v967, 4
      %v970 = vor.u32 %v969, %v965
      %v971 = vrot.slane %v970, 4
      %v973 = vshll.u32 %v331, 16
      %v975 = vrot.slane %v973, 5
      %v976 = vsel %vm584, %v971, %v975
      %v977 = vshrl.u32 %v331, 16
      %v979 = vrot.slane %v977, 4
      %v980 = vor.u32 %v979, %v975
      %v981 = vrot.slane %v980, 4
      %v983 = vshll.u32 %v332, 16
      %v985 = vrot.slane %v983, 5
      %v986 = vsel %vm584, %v981, %v985
      %v987 = vshrl.u32 %v332, 16
      %v989 = vrot.slane %v987, 4
      %v990 = vor.u32 %v989, %v985
      %v991 = vrot.slane %v990, 4
      %v993 = vshll.u32 %v333, 16
      %v995 = vrot.slane %v993, 5
      %v996 = vsel %vm584, %v991, %v995
      %v997 = vshrl.u32 %v333, 16
      %v999 = vrot.slane %v997, 4
      %v1000 = vor.u32 %v999, %v995
      %v1001 = vrot.slane %v1000, 4
      %v1003 = vshll.u32 %v334, 16
      %v1005 = vrot.slane %v1003, 5
      %v1006 = vsel %vm584, %v1001, %v1005
      %v1007 = vshrl.u32 %v334, 16
      %v1009 = vrot.slane %v1007, 4
      %v1010 = vor.u32 %v1009, %v1005
      %v1011 = vrot.slane %v1010, 4
      %v1013 = vshll.u32 %v335, 16
      %v1015 = vrot.slane %v1013, 5
      %v1016 = vsel %vm584, %v1011, %v1015
      %v1017 = vshrl.u32 %v335, 16
      %v1019 = vrot.slane %v1017, 4
      %v1020 = vor.u32 %v1019, %v1015
      %v1021 = vrot.slane %v1020, 4
      %v1023 = vshll.u32 %v336, 16
      %v1025 = vrot.slane %v1023, 5
      %v1026 = vsel %vm584, %v1021, %v1025
      %v1027 = vshrl.u32 %v336, 16
      %v1029 = vrot.slane %v1027, 4
      %v1030 = vor.u32 %v1029, %v1025
      %v1031 = vrot.slane %v1030, 4
      %v1033 = vshll.u32 %v337, 16
      %v1035 = vrot.slane %v1033, 5
      %v1036 = vsel %vm584, %v1031, %v1035
      %v1037 = vshrl.u32 %v337, 16
      %v1039 = vrot.slane %v1037, 4
      %v1040 = vor.u32 %v1039, %v1035
      %v1041 = vrot.slane %v1040, 4
      %v1043 = vshll.u32 %v338, 16
      %v1045 = vrot.slane %v1043, 5
      %v1046 = vsel %vm584, %v1041, %v1045
      %v1047 = vshrl.u32 %v338, 16
      %v1049 = vrot.slane %v1047, 4
      %v1050 = vor.u32 %v1049, %v1045
      %v1051 = vrot.slane %v1050, 4
      %v1053 = vshll.u32 %v339, 16
      %v1055 = vrot.slane %v1053, 5
      %v1056 = vsel %vm584, %v1051, %v1055
      %v1057 = vshrl.u32 %v339, 16
      %v1059 = vrot.slane %v1057, 4
      %v1060 = vor.u32 %v1059, %v1055
      %v1061 = vrot.slane %v1060, 4
      %v1063 = vshll.u32 %v340, 16
      %v1065 = vrot.slane %v1063, 5
      %v1066 = vsel %vm584, %v1061, %v1065
      %v1067 = vshrl.u32 %v340, 16
      %v1069 = vrot.slane %v1067, 4
      %v1070 = vor.u32 %v1069, %v1065
      %v1071 = vrot.slane %v1070, 4
      %v1073 = vshll.u32 %v341, 16
      %v1075 = vrot.slane %v1073, 5
      %v1076 = vsel %vm584, %v1071, %v1075
      %v1078 = vshrl.u32 %v342, 16
      %v1080 = vrot.slane %v1078, 4
      %v1081 = vshll.u32 %v342, 16
      %v1083 = vrot.slane %v1081, 5
      %v1084 = vor.u32 %v1080, %v1083
      %v1085 = vrot.slane %v1084, 4
      %v1087 = vshll.u32 %v343, 16
      %v1089 = vrot.slane %v1087, 5
      %v1090 = vsel %vm584, %v1085, %v1089
      %v1091 = vshrl.u32 %v343, 16
      %v1093 = vrot.slane %v1091, 4
      %v1094 = vor.u32 %v1093, %v1089
      %v1095 = vrot.slane %v1094, 4
      %v1097 = vshll.u32 %v344, 16
      %v1099 = vrot.slane %v1097, 5
      %v1100 = vsel %vm584, %v1095, %v1099
      %v1101 = vshrl.u32 %v344, 16
      %v1103 = vrot.slane %v1101, 4
      %v1104 = vor.u32 %v1103, %v1099
      %v1105 = vrot.slane %v1104, 4
      %v1107 = vshll.u32 %v345, 16
      %v1109 = vrot.slane %v1107, 5
      %v1110 = vsel %vm584, %v1105, %v1109
      %v1111 = vshrl.u32 %v345, 16
      %v1113 = vrot.slane %v1111, 4
      %v1114 = vor.u32 %v1113, %v1109
      %v1115 = vrot.slane %v1114, 4
      %v1117 = vshll.u32 %v346, 16
      %v1119 = vrot.slane %v1117, 5
      %v1120 = vsel %vm584, %v1115, %v1119
      %v1121 = vshrl.u32 %v346, 16
      %v1123 = vrot.slane %v1121, 4
      %v1124 = vor.u32 %v1123, %v1119
      %v1125 = vrot.slane %v1124, 4
      %v1127 = vshll.u32 %v347, 16
      %v1129 = vrot.slane %v1127, 5
      %v1130 = vsel %vm584, %v1125, %v1129
      %v1131 = vshrl.u32 %v347, 16
      %v1133 = vrot.slane %v1131, 4
      %v1134 = vor.u32 %v1133, %v1129
      %v1135 = vrot.slane %v1134, 4
      %v1137 = vshll.u32 %v348, 16
      %v1139 = vrot.slane %v1137, 5
      %v1140 = vsel %vm584, %v1135, %v1139
      %v1141 = vshrl.u32 %v348, 16
      %v1143 = vrot.slane %v1141, 4
      %v1144 = vor.u32 %v1143, %v1139
      %v1145 = vrot.slane %v1144, 4
      %v1147 = vshll.u32 %v349, 16
      %v1149 = vrot.slane %v1147, 5
      %v1150 = vsel %vm584, %v1145, %v1149
      %v1151 = vshrl.u32 %v349, 16
      %v1153 = vrot.slane %v1151, 4
      %v1154 = vor.u32 %v1153, %v1149
      %v1155 = vrot.slane %v1154, 4
      %v1157 = vshll.u32 %v350, 16
      %v1159 = vrot.slane %v1157, 5
      %v1160 = vsel %vm584, %v1155, %v1159
      %v1161 = vshrl.u32 %v350, 16
      %v1163 = vrot.slane %v1161, 4
      %v1164 = vor.u32 %v1163, %v1159
      %v1165 = vrot.slane %v1164, 4
      %v1167 = vshll.u32 %v351, 16
      %v1169 = vrot.slane %v1167, 5
      %v1170 = vsel %vm584, %v1165, %v1169
      %v1171 = vshrl.u32 %v351, 16
      %v1173 = vrot.slane %v1171, 4
      %v1174 = vor.u32 %v1173, %v1169
      %v1175 = vrot.slane %v1174, 4
      %v1177 = vshll.u32 %v352, 16
      %v1179 = vrot.slane %v1177, 5
      %v1180 = vsel %vm584, %v1175, %v1179
      %v1181 = vshrl.u32 %v352, 16
      %v1183 = vrot.slane %v1181, 4
      %v1184 = vor.u32 %v1183, %v1179
      %v1185 = vrot.slane %v1184, 4
      %v1187 = vshll.u32 %v353, 16
      %v1189 = vrot.slane %v1187, 5
      %v1190 = vsel %vm584, %v1185, %v1189
      %v1191 = vshrl.u32 %v353, 16
      %v1193 = vrot.slane %v1191, 4
      %v1194 = vor.u32 %v1193, %v1189
      %v1195 = vrot.slane %v1194, 4
      %v1197 = vshll.u32 %v354, 16
      %v1199 = vrot.slane %v1197, 5
      %v1200 = vsel %vm584, %v1195, %v1199
      %v1201 = vshrl.u32 %v354, 16
      %v1203 = vrot.slane %v1201, 4
      %v1204 = vor.u32 %v1203, %v1199
      %v1205 = vrot.slane %v1204, 4
      %v1207 = vshll.u32 %v355, 16
      %v1209 = vrot.slane %v1207, 5
      %v1210 = vsel %vm584, %v1205, %v1209
      %v1211 = vshrl.u32 %v355, 16
      %v1213 = vrot.slane %v1211, 4
      %v1214 = vor.u32 %v1213, %v1209
      %v1215 = vrot.slane %v1214, 4
      %v1217 = vshll.u32 %v356, 16
      %v1219 = vrot.slane %v1217, 5
      %v1220 = vsel %vm584, %v1215, %v1219
      %v1221 = vshrl.u32 %v356, 16
      %v1223 = vrot.slane %v1221, 4
      %v1224 = vor.u32 %v1223, %v1219
      %v1225 = vrot.slane %v1224, 4
      %v1227 = vshll.u32 %v357, 16
      %v1229 = vrot.slane %v1227, 5
      %v1230 = vsel %vm584, %v1225, %v1229
      %v1231 = vshrl.u32 %v357, 16
      %v1233 = vrot.slane %v1231, 4
      %v1234 = vor.u32 %v1233, %v1229
      %v1235 = vrot.slane %v1234, 4
      %v1237 = vshll.u32 %v358, 16
      %v1239 = vrot.slane %v1237, 5
      %v1240 = vsel %vm584, %v1235, %v1239
      %v1242 = vshrl.u32 %v359, 16
      %v1244 = vrot.slane %v1242, 4
      %v1245 = vshll.u32 %v359, 16
      %v1247 = vrot.slane %v1245, 5
      %v1248 = vor.u32 %v1244, %v1247
      %v1249 = vrot.slane %v1248, 4
      %v1251 = vshll.u32 %v360, 16
      %v1253 = vrot.slane %v1251, 5
      %v1254 = vsel %vm584, %v1249, %v1253
      %v1255 = vshrl.u32 %v360, 16
      %v1257 = vrot.slane %v1255, 4
      %v1258 = vor.u32 %v1257, %v1253
      %v1259 = vrot.slane %v1258, 4
      %v1261 = vshll.u32 %v361, 16
      %v1263 = vrot.slane %v1261, 5
      %v1264 = vsel %vm584, %v1259, %v1263
      %v1265 = vshrl.u32 %v361, 16
      %v1267 = vrot.slane %v1265, 4
      %v1268 = vor.u32 %v1267, %v1263
      %v1269 = vrot.slane %v1268, 4
      %v1271 = vshll.u32 %v362, 16
      %v1273 = vrot.slane %v1271, 5
      %v1274 = vsel %vm584, %v1269, %v1273
      %v1275 = vshrl.u32 %v362, 16
      %v1277 = vrot.slane %v1275, 4
      %v1278 = vor.u32 %v1277, %v1273
      %v1279 = vrot.slane %v1278, 4
      %v1281 = vshll.u32 %v363, 16
      %v1283 = vrot.slane %v1281, 5
      %v1284 = vsel %vm584, %v1279, %v1283
      %v1285 = vshrl.u32 %v363, 16
      %v1287 = vrot.slane %v1285, 4
      %v1288 = vor.u32 %v1287, %v1283
      %v1289 = vrot.slane %v1288, 4
      %v1291 = vshll.u32 %v364, 16
      %v1293 = vrot.slane %v1291, 5
      %v1294 = vsel %vm584, %v1289, %v1293
      %v1295 = vshrl.u32 %v364, 16
      %v1297 = vrot.slane %v1295, 4
      %v1298 = vor.u32 %v1297, %v1293
      %v1299 = vrot.slane %v1298, 4
      %v1301 = vshll.u32 %v365, 16
      %v1303 = vrot.slane %v1301, 5
      %v1304 = vsel %vm584, %v1299, %v1303
      %v1305 = vshrl.u32 %v365, 16
      %v1307 = vrot.slane %v1305, 4
      %v1308 = vor.u32 %v1307, %v1303
      %v1309 = vrot.slane %v1308, 4
      %v1311 = vshll.u32 %v366, 16
      %v1313 = vrot.slane %v1311, 5
      %v1314 = vsel %vm584, %v1309, %v1313
      %v1315 = vshrl.u32 %v366, 16
      %v1317 = vrot.slane %v1315, 4
      %v1318 = vor.u32 %v1317, %v1313
      %v1319 = vrot.slane %v1318, 4
      %v1321 = vshll.u32 %v367, 16
      %v1323 = vrot.slane %v1321, 5
      %v1324 = vsel %vm584, %v1319, %v1323
      %v1325 = vshrl.u32 %v367, 16
      %v1327 = vrot.slane %v1325, 4
      %v1328 = vor.u32 %v1327, %v1323
      %v1329 = vrot.slane %v1328, 4
      %v1331 = vshll.u32 %v368, 16
      %v1333 = vrot.slane %v1331, 5
      %v1334 = vsel %vm584, %v1329, %v1333
      %v1335 = vshrl.u32 %v368, 16
      %v1337 = vrot.slane %v1335, 4
      %v1338 = vor.u32 %v1337, %v1333
      %v1339 = vrot.slane %v1338, 4
      %v1341 = vshll.u32 %v369, 16
      %v1343 = vrot.slane %v1341, 5
      %v1344 = vsel %vm584, %v1339, %v1343
      %v1345 = vshrl.u32 %v369, 16
      %v1347 = vrot.slane %v1345, 4
      %v1348 = vor.u32 %v1347, %v1343
      %v1349 = vrot.slane %v1348, 4
      %v1351 = vshll.u32 %v370, 16
      %v1353 = vrot.slane %v1351, 5
      %v1354 = vsel %vm584, %v1349, %v1353
      %v1355 = vshrl.u32 %v370, 16
      %v1357 = vrot.slane %v1355, 4
      %v1358 = vor.u32 %v1357, %v1353
      %v1359 = vrot.slane %v1358, 4
      %v1361 = vshll.u32 %v371, 16
      %v1363 = vrot.slane %v1361, 5
      %v1364 = vsel %vm584, %v1359, %v1363
      %v1365 = vshrl.u32 %v371, 16
      %v1367 = vrot.slane %v1365, 4
      %v1368 = vor.u32 %v1367, %v1363
      %v1369 = vrot.slane %v1368, 4
      %v1371 = vshll.u32 %v372, 16
      %v1373 = vrot.slane %v1371, 5
      %v1374 = vsel %vm584, %v1369, %v1373
      %v1375 = vshrl.u32 %v372, 16
      %v1377 = vrot.slane %v1375, 4
      %v1378 = vor.u32 %v1377, %v1373
      %v1379 = vrot.slane %v1378, 4
      %v1381 = vshll.u32 %v373, 16
      %v1383 = vrot.slane %v1381, 5
      %v1384 = vsel %vm584, %v1379, %v1383
      %v1385 = vshrl.u32 %v373, 16
      %v1387 = vrot.slane %v1385, 4
      %v1388 = vor.u32 %v1387, %v1383
      %v1389 = vrot.slane %v1388, 4
      %v1391 = vshll.u32 %v374, 16
      %v1393 = vrot.slane %v1391, 5
      %v1394 = vsel %vm584, %v1389, %v1393
      %v1395 = vshrl.u32 %v374, 16
      %v1397 = vrot.slane %v1395, 4
      %v1398 = vor.u32 %v1397, %v1393
      %v1399 = vrot.slane %v1398, 4
      %v1401 = vshll.u32 %v375, 16
      %v1403 = vrot.slane %v1401, 5
      %v1404 = vsel %vm584, %v1399, %v1403
      %v1406 = vshrl.u32 %v376, 16
      %v1408 = vrot.slane %v1406, 4
      %v1409 = vshll.u32 %v376, 16
      %v1411 = vrot.slane %v1409, 5
      %v1412 = vor.u32 %v1408, %v1411
      %v1413 = vrot.slane %v1412, 4
      %v1415 = vshll.u32 %v377, 16
      %v1417 = vrot.slane %v1415, 5
      %v1418 = vsel %vm584, %v1413, %v1417
      %v1419 = vshrl.u32 %v377, 16
      %v1421 = vrot.slane %v1419, 4
      %v1422 = vor.u32 %v1421, %v1417
      %v1423 = vrot.slane %v1422, 4
      %v1425 = vshll.u32 %v378, 16
      %v1427 = vrot.slane %v1425, 5
      %v1428 = vsel %vm584, %v1423, %v1427
      %v1429 = vshrl.u32 %v378, 16
      %v1431 = vrot.slane %v1429, 4
      %v1432 = vor.u32 %v1431, %v1427
      %v1433 = vrot.slane %v1432, 4
      %v1435 = vshll.u32 %v379, 16
      %v1437 = vrot.slane %v1435, 5
      %v1438 = vsel %vm584, %v1433, %v1437
      %v1439 = vshrl.u32 %v379, 16
      %v1441 = vrot.slane %v1439, 4
      %v1442 = vor.u32 %v1441, %v1437
      %v1443 = vrot.slane %v1442, 4
      %v1445 = vshll.u32 %v380, 16
      %v1447 = vrot.slane %v1445, 5
      %v1448 = vsel %vm584, %v1443, %v1447
      %v1449 = vshrl.u32 %v380, 16
      %v1451 = vrot.slane %v1449, 4
      %v1452 = vor.u32 %v1451, %v1447
      %v1453 = vrot.slane %v1452, 4
      %v1455 = vshll.u32 %v381, 16
      %v1457 = vrot.slane %v1455, 5
      %v1458 = vsel %vm584, %v1453, %v1457
      %v1459 = vshrl.u32 %v381, 16
      %v1461 = vrot.slane %v1459, 4
      %v1462 = vor.u32 %v1461, %v1457
      %v1463 = vrot.slane %v1462, 4
      %v1465 = vshll.u32 %v382, 16
      %v1467 = vrot.slane %v1465, 5
      %v1468 = vsel %vm584, %v1463, %v1467
      %v1469 = vshrl.u32 %v382, 16
      %v1471 = vrot.slane %v1469, 4
      %v1472 = vor.u32 %v1471, %v1467
      %v1473 = vrot.slane %v1472, 4
      %v1475 = vshll.u32 %v383, 16
      %v1477 = vrot.slane %v1475, 5
      %v1478 = vsel %vm584, %v1473, %v1477
      %v1479 = vshrl.u32 %v383, 16
      %v1481 = vrot.slane %v1479, 4
      %v1482 = vor.u32 %v1481, %v1477
      %v1483 = vrot.slane %v1482, 4
      %v1485 = vshll.u32 %v384, 16
      %v1487 = vrot.slane %v1485, 5
      %v1488 = vsel %vm584, %v1483, %v1487
      %v1489 = vshrl.u32 %v384, 16
      %v1491 = vrot.slane %v1489, 4
      %v1492 = vor.u32 %v1491, %v1487
      %v1493 = vrot.slane %v1492, 4
      %v1495 = vshll.u32 %v385, 16
      %v1497 = vrot.slane %v1495, 5
      %v1498 = vsel %vm584, %v1493, %v1497
      %v1499 = vshrl.u32 %v385, 16
      %v1501 = vrot.slane %v1499, 4
      %v1502 = vor.u32 %v1501, %v1497
      %v1503 = vrot.slane %v1502, 4
      %v1505 = vshll.u32 %v386, 16
      %v1507 = vrot.slane %v1505, 5
      %v1508 = vsel %vm584, %v1503, %v1507
      %v1509 = vshrl.u32 %v386, 16
      %v1511 = vrot.slane %v1509, 4
      %v1512 = vor.u32 %v1511, %v1507
      %v1513 = vrot.slane %v1512, 4
      %v1515 = vshll.u32 %v387, 16
      %v1517 = vrot.slane %v1515, 5
      %v1518 = vsel %vm584, %v1513, %v1517
      %v1519 = vshrl.u32 %v387, 16
      %v1521 = vrot.slane %v1519, 4
      %v1522 = vor.u32 %v1521, %v1517
      %v1523 = vrot.slane %v1522, 4
      %v1525 = vshll.u32 %v388, 16
      %v1527 = vrot.slane %v1525, 5
      %v1528 = vsel %vm584, %v1523, %v1527
      %v1529 = vshrl.u32 %v388, 16
      %v1531 = vrot.slane %v1529, 4
      %v1532 = vor.u32 %v1531, %v1527
      %v1533 = vrot.slane %v1532, 4
      %v1535 = vshll.u32 %v389, 16
      %v1537 = vrot.slane %v1535, 5
      %v1538 = vsel %vm584, %v1533, %v1537
      %v1539 = vshrl.u32 %v389, 16
      %v1541 = vrot.slane %v1539, 4
      %v1542 = vor.u32 %v1541, %v1537
      %v1543 = vrot.slane %v1542, 4
      %v1545 = vshll.u32 %v390, 16
      %v1547 = vrot.slane %v1545, 5
      %v1548 = vsel %vm584, %v1543, %v1547
      %v1549 = vshrl.u32 %v390, 16
      %v1551 = vrot.slane %v1549, 4
      %v1552 = vor.u32 %v1551, %v1547
      %v1553 = vrot.slane %v1552, 4
      %v1555 = vshll.u32 %v391, 16
      %v1557 = vrot.slane %v1555, 5
      %v1558 = vsel %vm584, %v1553, %v1557
      %v1559 = vshrl.u32 %v391, 16
      %v1561 = vrot.slane %v1559, 4
      %v1562 = vor.u32 %v1561, %v1557
      %v1563 = vrot.slane %v1562, 4
      %v1565 = vshll.u32 %v392, 16
      %v1567 = vrot.slane %v1565, 5
      %v1568 = vsel %vm584, %v1563, %v1567
      %v1570 = vshrl.u32 %v393, 16
      %v1572 = vrot.slane %v1570, 4
      %v1573 = vshll.u32 %v393, 16
      %v1575 = vrot.slane %v1573, 5
      %v1576 = vor.u32 %v1572, %v1575
      %v1577 = vrot.slane %v1576, 4
      %v1579 = vshll.u32 %v394, 16
      %v1581 = vrot.slane %v1579, 5
      %v1582 = vsel %vm584, %v1577, %v1581
      %v1583 = vshrl.u32 %v394, 16
      %v1585 = vrot.slane %v1583, 4
      %v1586 = vor.u32 %v1585, %v1581
      %v1587 = vrot.slane %v1586, 4
      %v1589 = vshll.u32 %v395, 16
      %v1591 = vrot.slane %v1589, 5
      %v1592 = vsel %vm584, %v1587, %v1591
      %v1593 = vshrl.u32 %v395, 16
      %v1595 = vrot.slane %v1593, 4
      %v1596 = vor.u32 %v1595, %v1591
      %v1597 = vrot.slane %v1596, 4
      %v1599 = vshll.u32 %v396, 16
      %v1601 = vrot.slane %v1599, 5
      %v1602 = vsel %vm584, %v1597, %v1601
      %v1603 = vshrl.u32 %v396, 16
      %v1605 = vrot.slane %v1603, 4
      %v1606 = vor.u32 %v1605, %v1601
      %v1607 = vrot.slane %v1606, 4
      %v1609 = vshll.u32 %v397, 16
      %v1611 = vrot.slane %v1609, 5
      %v1612 = vsel %vm584, %v1607, %v1611
      %v1613 = vshrl.u32 %v397, 16
      %v1615 = vrot.slane %v1613, 4
      %v1616 = vor.u32 %v1615, %v1611
      %v1617 = vrot.slane %v1616, 4
      %v1619 = vshll.u32 %v398, 16
      %v1621 = vrot.slane %v1619, 5
      %v1622 = vsel %vm584, %v1617, %v1621
      %v1623 = vshrl.u32 %v398, 16
      %v1625 = vrot.slane %v1623, 4
      %v1626 = vor.u32 %v1625, %v1621
      %v1627 = vrot.slane %v1626, 4
      %v1629 = vshll.u32 %v399, 16
      %v1631 = vrot.slane %v1629, 5
      %v1632 = vsel %vm584, %v1627, %v1631
      %v1633 = vshrl.u32 %v399, 16
      %v1635 = vrot.slane %v1633, 4
      %v1636 = vor.u32 %v1635, %v1631
      %v1637 = vrot.slane %v1636, 4
      %v1639 = vshll.u32 %v400, 16
      %v1641 = vrot.slane %v1639, 5
      %v1642 = vsel %vm584, %v1637, %v1641
      %v1643 = vshrl.u32 %v400, 16
      %v1645 = vrot.slane %v1643, 4
      %v1646 = vor.u32 %v1645, %v1641
      %v1647 = vrot.slane %v1646, 4
      %v1649 = vshll.u32 %v401, 16
      %v1651 = vrot.slane %v1649, 5
      %v1652 = vsel %vm584, %v1647, %v1651
      %v1653 = vshrl.u32 %v401, 16
      %v1655 = vrot.slane %v1653, 4
      %v1656 = vor.u32 %v1655, %v1651
      %v1657 = vrot.slane %v1656, 4
      %v1659 = vshll.u32 %v402, 16
      %v1661 = vrot.slane %v1659, 5
      %v1662 = vsel %vm584, %v1657, %v1661
      %v1663 = vshrl.u32 %v402, 16
      %v1665 = vrot.slane %v1663, 4
      %v1666 = vor.u32 %v1665, %v1661
      %v1667 = vrot.slane %v1666, 4
      %v1669 = vshll.u32 %v403, 16
      %v1671 = vrot.slane %v1669, 5
      %v1672 = vsel %vm584, %v1667, %v1671
      %v1673 = vshrl.u32 %v403, 16
      %v1675 = vrot.slane %v1673, 4
      %v1676 = vor.u32 %v1675, %v1671
      %v1677 = vrot.slane %v1676, 4
      %v1679 = vshll.u32 %v404, 16
      %v1681 = vrot.slane %v1679, 5
      %v1682 = vsel %vm584, %v1677, %v1681
      %v1683 = vshrl.u32 %v404, 16
      %v1685 = vrot.slane %v1683, 4
      %v1686 = vor.u32 %v1685, %v1681
      %v1687 = vrot.slane %v1686, 4
      %v1689 = vshll.u32 %v405, 16
      %v1691 = vrot.slane %v1689, 5
      %v1692 = vsel %vm584, %v1687, %v1691
      %v1693 = vshrl.u32 %v405, 16
      %v1695 = vrot.slane %v1693, 4
      %v1696 = vor.u32 %v1695, %v1691
      %v1697 = vrot.slane %v1696, 4
      %v1699 = vshll.u32 %v406, 16
      %v1701 = vrot.slane %v1699, 5
      %v1702 = vsel %vm584, %v1697, %v1701
      %v1703 = vshrl.u32 %v406, 16
      %v1705 = vrot.slane %v1703, 4
      %v1706 = vor.u32 %v1705, %v1701
      %v1707 = vrot.slane %v1706, 4
      %v1709 = vshll.u32 %v407, 16
      %v1711 = vrot.slane %v1709, 5
      %v1712 = vsel %vm584, %v1707, %v1711
      %v1713 = vshrl.u32 %v407, 16
      %v1715 = vrot.slane %v1713, 4
      %v1716 = vor.u32 %v1715, %v1711
      %v1717 = vrot.slane %v1716, 4
      %v1719 = vshll.u32 %v408, 16
      %v1721 = vrot.slane %v1719, 5
      %v1722 = vsel %vm584, %v1717, %v1721
      %v1723 = vshrl.u32 %v408, 16
      %v1725 = vrot.slane %v1723, 4
      %v1726 = vor.u32 %v1725, %v1721
      %v1727 = vrot.slane %v1726, 4
      %v1729 = vshll.u32 %v409, 16
      %v1731 = vrot.slane %v1729, 5
      %v1732 = vsel %vm584, %v1727, %v1731
      %v1734 = vshrl.u32 %v410, 16
      %v1736 = vrot.slane %v1734, 4
      %v1737 = vshll.u32 %v410, 16
      %v1739 = vrot.slane %v1737, 5
      %v1740 = vor.u32 %v1736, %v1739
      %v1741 = vrot.slane %v1740, 4
      %v1743 = vshll.u32 %v411, 16
      %v1745 = vrot.slane %v1743, 5
      %v1746 = vsel %vm584, %v1741, %v1745
      %v1747 = vshrl.u32 %v411, 16
      %v1749 = vrot.slane %v1747, 4
      %v1750 = vor.u32 %v1749, %v1745
      %v1751 = vrot.slane %v1750, 4
      %v1753 = vshll.u32 %v412, 16
      %v1755 = vrot.slane %v1753, 5
      %v1756 = vsel %vm584, %v1751, %v1755
      %v1757 = vshrl.u32 %v412, 16
      %v1759 = vrot.slane %v1757, 4
      %v1760 = vor.u32 %v1759, %v1755
      %v1761 = vrot.slane %v1760, 4
      %v1763 = vshll.u32 %v413, 16
      %v1765 = vrot.slane %v1763, 5
      %v1766 = vsel %vm584, %v1761, %v1765
      %v1767 = vshrl.u32 %v413, 16
      %v1769 = vrot.slane %v1767, 4
      %v1770 = vor.u32 %v1769, %v1765
      %v1771 = vrot.slane %v1770, 4
      %v1773 = vshll.u32 %v414, 16
      %v1775 = vrot.slane %v1773, 5
      %v1776 = vsel %vm584, %v1771, %v1775
      %v1777 = vshrl.u32 %v414, 16
      %v1779 = vrot.slane %v1777, 4
      %v1780 = vor.u32 %v1779, %v1775
      %v1781 = vrot.slane %v1780, 4
      %v1783 = vshll.u32 %v415, 16
      %v1785 = vrot.slane %v1783, 5
      %v1786 = vsel %vm584, %v1781, %v1785
      %v1787 = vshrl.u32 %v415, 16
      %v1789 = vrot.slane %v1787, 4
      %v1790 = vor.u32 %v1789, %v1785
      %v1791 = vrot.slane %v1790, 4
      %v1793 = vshll.u32 %v416, 16
      %v1795 = vrot.slane %v1793, 5
      %v1796 = vsel %vm584, %v1791, %v1795
      %v1797 = vshrl.u32 %v416, 16
      %v1799 = vrot.slane %v1797, 4
      %v1800 = vor.u32 %v1799, %v1795
      %v1801 = vrot.slane %v1800, 4
      %v1803 = vshll.u32 %v417, 16
      %v1805 = vrot.slane %v1803, 5
      %v1806 = vsel %vm584, %v1801, %v1805
      %v1807 = vshrl.u32 %v417, 16
      %v1809 = vrot.slane %v1807, 4
      %v1810 = vor.u32 %v1809, %v1805
      %v1811 = vrot.slane %v1810, 4
      %v1813 = vshll.u32 %v418, 16
      %v1815 = vrot.slane %v1813, 5
      %v1816 = vsel %vm584, %v1811, %v1815
      %v1817 = vshrl.u32 %v418, 16
      %v1819 = vrot.slane %v1817, 4
      %v1820 = vor.u32 %v1819, %v1815
      %v1821 = vrot.slane %v1820, 4
      %v1823 = vshll.u32 %v419, 16
      %v1825 = vrot.slane %v1823, 5
      %v1826 = vsel %vm584, %v1821, %v1825
      %v1827 = vshrl.u32 %v419, 16
      %v1829 = vrot.slane %v1827, 4
      %v1830 = vor.u32 %v1829, %v1825
      %v1831 = vrot.slane %v1830, 4
      %v1833 = vshll.u32 %v420, 16
      %v1835 = vrot.slane %v1833, 5
      %v1836 = vsel %vm584, %v1831, %v1835
      %v1837 = vshrl.u32 %v420, 16
      %v1839 = vrot.slane %v1837, 4
      %v1840 = vor.u32 %v1839, %v1835
      %v1841 = vrot.slane %v1840, 4
      %v1843 = vshll.u32 %v421, 16
      %v1845 = vrot.slane %v1843, 5
      %v1846 = vsel %vm584, %v1841, %v1845
      %v1847 = vshrl.u32 %v421, 16
      %v1849 = vrot.slane %v1847, 4
      %v1850 = vor.u32 %v1849, %v1845
      %v1851 = vrot.slane %v1850, 4
      %v1853 = vshll.u32 %v422, 16
      %v1855 = vrot.slane %v1853, 5
      %v1856 = vsel %vm584, %v1851, %v1855
      %v1857 = vshrl.u32 %v422, 16
      %v1859 = vrot.slane %v1857, 4
      %v1860 = vor.u32 %v1859, %v1855
      %v1861 = vrot.slane %v1860, 4
      %v1863 = vshll.u32 %v423, 16
      %v1865 = vrot.slane %v1863, 5
      %v1866 = vsel %vm584, %v1861, %v1865
      %v1867 = vshrl.u32 %v423, 16
      %v1869 = vrot.slane %v1867, 4
      %v1870 = vor.u32 %v1869, %v1865
      %v1871 = vrot.slane %v1870, 4
      %v1873 = vshll.u32 %v424, 16
      %v1875 = vrot.slane %v1873, 5
      %v1876 = vsel %vm584, %v1871, %v1875
      %v1877 = vshrl.u32 %v424, 16
      %v1879 = vrot.slane %v1877, 4
      %v1880 = vor.u32 %v1879, %v1875
      %v1881 = vrot.slane %v1880, 4
      %v1883 = vshll.u32 %v425, 16
      %v1885 = vrot.slane %v1883, 5
      %v1886 = vsel %vm584, %v1881, %v1885
      %v1887 = vshrl.u32 %v425, 16
      %v1889 = vrot.slane %v1887, 4
      %v1890 = vor.u32 %v1889, %v1885
      %v1891 = vrot.slane %v1890, 4
      %v1893 = vshll.u32 %v426, 16
      %v1895 = vrot.slane %v1893, 5
      %v1896 = vsel %vm584, %v1891, %v1895
      %v1898 = vshrl.u32 %v427, 16
      %v1900 = vrot.slane %v1898, 4
      %v1901 = vshll.u32 %v427, 16
      %v1903 = vrot.slane %v1901, 5
      %v1904 = vor.u32 %v1900, %v1903
      %v1905 = vrot.slane %v1904, 4
      %v1907 = vshll.u32 %v428, 16
      %v1909 = vrot.slane %v1907, 5
      %v1910 = vsel %vm584, %v1905, %v1909
      %v1911 = vshrl.u32 %v428, 16
      %v1913 = vrot.slane %v1911, 4
      %v1914 = vor.u32 %v1913, %v1909
      %v1915 = vrot.slane %v1914, 4
      %v1917 = vshll.u32 %v429, 16
      %v1919 = vrot.slane %v1917, 5
      %v1920 = vsel %vm584, %v1915, %v1919
      %v1921 = vshrl.u32 %v429, 16
      %v1923 = vrot.slane %v1921, 4
      %v1924 = vor.u32 %v1923, %v1919
      %v1925 = vrot.slane %v1924, 4
      %v1927 = vshll.u32 %v430, 16
      %v1929 = vrot.slane %v1927, 5
      %v1930 = vsel %vm584, %v1925, %v1929
      %v1931 = vshrl.u32 %v430, 16
      %v1933 = vrot.slane %v1931, 4
      %v1934 = vor.u32 %v1933, %v1929
      %v1935 = vrot.slane %v1934, 4
      %v1937 = vshll.u32 %v431, 16
      %v1939 = vrot.slane %v1937, 5
      %v1940 = vsel %vm584, %v1935, %v1939
      %v1941 = vshrl.u32 %v431, 16
      %v1943 = vrot.slane %v1941, 4
      %v1944 = vor.u32 %v1943, %v1939
      %v1945 = vrot.slane %v1944, 4
      %v1947 = vshll.u32 %v432, 16
      %v1949 = vrot.slane %v1947, 5
      %v1950 = vsel %vm584, %v1945, %v1949
      %v1951 = vshrl.u32 %v432, 16
      %v1953 = vrot.slane %v1951, 4
      %v1954 = vor.u32 %v1953, %v1949
      %v1955 = vrot.slane %v1954, 4
      %v1957 = vshll.u32 %v433, 16
      %v1959 = vrot.slane %v1957, 5
      %v1960 = vsel %vm584, %v1955, %v1959
      %v1961 = vshrl.u32 %v433, 16
      %v1963 = vrot.slane %v1961, 4
      %v1964 = vor.u32 %v1963, %v1959
      %v1965 = vrot.slane %v1964, 4
      %v1967 = vshll.u32 %v434, 16
      %v1969 = vrot.slane %v1967, 5
      %v1970 = vsel %vm584, %v1965, %v1969
      %v1971 = vshrl.u32 %v434, 16
      %v1973 = vrot.slane %v1971, 4
      %v1974 = vor.u32 %v1973, %v1969
      %v1975 = vrot.slane %v1974, 4
      %v1977 = vshll.u32 %v435, 16
      %v1979 = vrot.slane %v1977, 5
      %v1980 = vsel %vm584, %v1975, %v1979
      %v1981 = vshrl.u32 %v435, 16
      %v1983 = vrot.slane %v1981, 4
      %v1984 = vor.u32 %v1983, %v1979
      %v1985 = vrot.slane %v1984, 4
      %v1987 = vshll.u32 %v436, 16
      %v1989 = vrot.slane %v1987, 5
      %v1990 = vsel %vm584, %v1985, %v1989
      %v1991 = vshrl.u32 %v436, 16
      %v1993 = vrot.slane %v1991, 4
      %v1994 = vor.u32 %v1993, %v1989
      %v1995 = vrot.slane %v1994, 4
      %v1997 = vshll.u32 %v437, 16
      %v1999 = vrot.slane %v1997, 5
      %v2000 = vsel %vm584, %v1995, %v1999
      %v2001 = vshrl.u32 %v437, 16
      %v2003 = vrot.slane %v2001, 4
      %v2004 = vor.u32 %v2003, %v1999
      %v2005 = vrot.slane %v2004, 4
      %v2007 = vshll.u32 %v438, 16
      %v2009 = vrot.slane %v2007, 5
      %v2010 = vsel %vm584, %v2005, %v2009
      %v2011 = vshrl.u32 %v438, 16
      %v2013 = vrot.slane %v2011, 4
      %v2014 = vor.u32 %v2013, %v2009
      %v2015 = vrot.slane %v2014, 4
      %v2017 = vshll.u32 %v439, 16
      %v2019 = vrot.slane %v2017, 5
      %v2020 = vsel %vm584, %v2015, %v2019
      %v2021 = vshrl.u32 %v439, 16
      %v2023 = vrot.slane %v2021, 4
      %v2024 = vor.u32 %v2023, %v2019
      %v2025 = vrot.slane %v2024, 4
      %v2027 = vshll.u32 %v440, 16
      %v2029 = vrot.slane %v2027, 5
      %v2030 = vsel %vm584, %v2025, %v2029
      %v2031 = vshrl.u32 %v440, 16
      %v2033 = vrot.slane %v2031, 4
      %v2034 = vor.u32 %v2033, %v2029
      %v2035 = vrot.slane %v2034, 4
      %v2037 = vshll.u32 %v441, 16
      %v2039 = vrot.slane %v2037, 5
      %v2040 = vsel %vm584, %v2035, %v2039
      %v2041 = vshrl.u32 %v441, 16
      %v2043 = vrot.slane %v2041, 4
      %v2044 = vor.u32 %v2043, %v2039
      %v2045 = vrot.slane %v2044, 4
      %v2047 = vshll.u32 %v442, 16
      %v2049 = vrot.slane %v2047, 5
      %v2050 = vsel %vm584, %v2045, %v2049
      %v2051 = vshrl.u32 %v442, 16
      %v2053 = vrot.slane %v2051, 4
      %v2054 = vor.u32 %v2053, %v2049
      %v2055 = vrot.slane %v2054, 4
      %v2057 = vshll.u32 %v443, 16
      %v2059 = vrot.slane %v2057, 5
      %v2060 = vsel %vm584, %v2055, %v2059
      %v2062 = vshrl.u32 %v444, 16
      %v2064 = vrot.slane %v2062, 4
      %v2065 = vshll.u32 %v444, 16
      %v2067 = vrot.slane %v2065, 5
      %v2068 = vor.u32 %v2064, %v2067
      %v2069 = vrot.slane %v2068, 4
      %v2071 = vshll.u32 %v445, 16
      %v2073 = vrot.slane %v2071, 5
      %v2074 = vsel %vm584, %v2069, %v2073
      %v2075 = vshrl.u32 %v445, 16
      %v2077 = vrot.slane %v2075, 4
      %v2078 = vor.u32 %v2077, %v2073
      %v2079 = vrot.slane %v2078, 4
      %v2081 = vshll.u32 %v446, 16
      %v2083 = vrot.slane %v2081, 5
      %v2084 = vsel %vm584, %v2079, %v2083
      %v2085 = vshrl.u32 %v446, 16
      %v2087 = vrot.slane %v2085, 4
      %v2088 = vor.u32 %v2087, %v2083
      %v2089 = vrot.slane %v2088, 4
      %v2091 = vshll.u32 %v447, 16
      %v2093 = vrot.slane %v2091, 5
      %v2094 = vsel %vm584, %v2089, %v2093
      %v2095 = vshrl.u32 %v447, 16
      %v2097 = vrot.slane %v2095, 4
      %v2098 = vor.u32 %v2097, %v2093
      %v2099 = vrot.slane %v2098, 4
      %v2101 = vshll.u32 %v448, 16
      %v2103 = vrot.slane %v2101, 5
      %v2104 = vsel %vm584, %v2099, %v2103
      %v2105 = vshrl.u32 %v448, 16
      %v2107 = vrot.slane %v2105, 4
      %v2108 = vor.u32 %v2107, %v2103
      %v2109 = vrot.slane %v2108, 4
      %v2111 = vshll.u32 %v449, 16
      %v2113 = vrot.slane %v2111, 5
      %v2114 = vsel %vm584, %v2109, %v2113
      %v2115 = vshrl.u32 %v449, 16
      %v2117 = vrot.slane %v2115, 4
      %v2118 = vor.u32 %v2117, %v2113
      %v2119 = vrot.slane %v2118, 4
      %v2121 = vshll.u32 %v450, 16
      %v2123 = vrot.slane %v2121, 5
      %v2124 = vsel %vm584, %v2119, %v2123
      %v2125 = vshrl.u32 %v450, 16
      %v2127 = vrot.slane %v2125, 4
      %v2128 = vor.u32 %v2127, %v2123
      %v2129 = vrot.slane %v2128, 4
      %v2131 = vshll.u32 %v451, 16
      %v2133 = vrot.slane %v2131, 5
      %v2134 = vsel %vm584, %v2129, %v2133
      %v2135 = vshrl.u32 %v451, 16
      %v2137 = vrot.slane %v2135, 4
      %v2138 = vor.u32 %v2137, %v2133
      %v2139 = vrot.slane %v2138, 4
      %v2141 = vshll.u32 %v452, 16
      %v2143 = vrot.slane %v2141, 5
      %v2144 = vsel %vm584, %v2139, %v2143
      %v2145 = vshrl.u32 %v452, 16
      %v2147 = vrot.slane %v2145, 4
      %v2148 = vor.u32 %v2147, %v2143
      %v2149 = vrot.slane %v2148, 4
      %v2151 = vshll.u32 %v453, 16
      %v2153 = vrot.slane %v2151, 5
      %v2154 = vsel %vm584, %v2149, %v2153
      %v2155 = vshrl.u32 %v453, 16
      %v2157 = vrot.slane %v2155, 4
      %v2158 = vor.u32 %v2157, %v2153
      %v2159 = vrot.slane %v2158, 4
      %v2161 = vshll.u32 %v454, 16
      %v2163 = vrot.slane %v2161, 5
      %v2164 = vsel %vm584, %v2159, %v2163
      %v2165 = vshrl.u32 %v454, 16
      %v2167 = vrot.slane %v2165, 4
      %v2168 = vor.u32 %v2167, %v2163
      %v2169 = vrot.slane %v2168, 4
      %v2171 = vshll.u32 %v455, 16
      %v2173 = vrot.slane %v2171, 5
      %v2174 = vsel %vm584, %v2169, %v2173
      %v2175 = vshrl.u32 %v455, 16
      %v2177 = vrot.slane %v2175, 4
      %v2178 = vor.u32 %v2177, %v2173
      %v2179 = vrot.slane %v2178, 4
      %v2181 = vshll.u32 %v456, 16
      %v2183 = vrot.slane %v2181, 5
      %v2184 = vsel %vm584, %v2179, %v2183
      %v2185 = vshrl.u32 %v456, 16
      %v2187 = vrot.slane %v2185, 4
      %v2188 = vor.u32 %v2187, %v2183
      %v2189 = vrot.slane %v2188, 4
      %v2191 = vshll.u32 %v457, 16
      %v2193 = vrot.slane %v2191, 5
      %v2194 = vsel %vm584, %v2189, %v2193
      %v2195 = vshrl.u32 %v457, 16
      %v2197 = vrot.slane %v2195, 4
      %v2198 = vor.u32 %v2197, %v2193
      %v2199 = vrot.slane %v2198, 4
      %v2201 = vshll.u32 %v458, 16
      %v2203 = vrot.slane %v2201, 5
      %v2204 = vsel %vm584, %v2199, %v2203
      %v2205 = vshrl.u32 %v458, 16
      %v2207 = vrot.slane %v2205, 4
      %v2208 = vor.u32 %v2207, %v2203
      %v2209 = vrot.slane %v2208, 4
      %v2211 = vshll.u32 %v459, 16
      %v2213 = vrot.slane %v2211, 5
      %v2214 = vsel %vm584, %v2209, %v2213
      %v2215 = vshrl.u32 %v459, 16
      %v2217 = vrot.slane %v2215, 4
      %v2218 = vor.u32 %v2217, %v2213
      %v2219 = vrot.slane %v2218, 4
      %v2221 = vshll.u32 %v460, 16
      %v2223 = vrot.slane %v2221, 5
      %v2224 = vsel %vm584, %v2219, %v2223
      %v2226 = vshrl.u32 %v461, 16
      %v2228 = vrot.slane %v2226, 4
      %v2229 = vshll.u32 %v461, 16
      %v2231 = vrot.slane %v2229, 5
      %v2232 = vor.u32 %v2228, %v2231
      %v2233 = vrot.slane %v2232, 4
      %v2235 = vshll.u32 %v462, 16
      %v2237 = vrot.slane %v2235, 5
      %v2238 = vsel %vm584, %v2233, %v2237
      %v2239 = vshrl.u32 %v462, 16
      %v2241 = vrot.slane %v2239, 4
      %v2242 = vor.u32 %v2241, %v2237
      %v2243 = vrot.slane %v2242, 4
      %v2245 = vshll.u32 %v463, 16
      %v2247 = vrot.slane %v2245, 5
      %v2248 = vsel %vm584, %v2243, %v2247
      %v2249 = vshrl.u32 %v463, 16
      %v2251 = vrot.slane %v2249, 4
      %v2252 = vor.u32 %v2251, %v2247
      %v2253 = vrot.slane %v2252, 4
      %v2255 = vshll.u32 %v464, 16
      %v2257 = vrot.slane %v2255, 5
      %v2258 = vsel %vm584, %v2253, %v2257
      %v2259 = vshrl.u32 %v464, 16
      %v2261 = vrot.slane %v2259, 4
      %v2262 = vor.u32 %v2261, %v2257
      %v2263 = vrot.slane %v2262, 4
      %v2265 = vshll.u32 %v465, 16
      %v2267 = vrot.slane %v2265, 5
      %v2268 = vsel %vm584, %v2263, %v2267
      %v2269 = vshrl.u32 %v465, 16
      %v2271 = vrot.slane %v2269, 4
      %v2272 = vor.u32 %v2271, %v2267
      %v2273 = vrot.slane %v2272, 4
      %v2275 = vshll.u32 %v466, 16
      %v2277 = vrot.slane %v2275, 5
      %v2278 = vsel %vm584, %v2273, %v2277
      %v2279 = vshrl.u32 %v466, 16
      %v2281 = vrot.slane %v2279, 4
      %v2282 = vor.u32 %v2281, %v2277
      %v2283 = vrot.slane %v2282, 4
      %v2285 = vshll.u32 %v467, 16
      %v2287 = vrot.slane %v2285, 5
      %v2288 = vsel %vm584, %v2283, %v2287
      %v2289 = vshrl.u32 %v467, 16
      %v2291 = vrot.slane %v2289, 4
      %v2292 = vor.u32 %v2291, %v2287
      %v2293 = vrot.slane %v2292, 4
      %v2295 = vshll.u32 %v468, 16
      %v2297 = vrot.slane %v2295, 5
      %v2298 = vsel %vm584, %v2293, %v2297
      %v2299 = vshrl.u32 %v468, 16
      %v2301 = vrot.slane %v2299, 4
      %v2302 = vor.u32 %v2301, %v2297
      %v2303 = vrot.slane %v2302, 4
      %v2305 = vshll.u32 %v469, 16
      %v2307 = vrot.slane %v2305, 5
      %v2308 = vsel %vm584, %v2303, %v2307
      %v2309 = vshrl.u32 %v469, 16
      %v2311 = vrot.slane %v2309, 4
      %v2312 = vor.u32 %v2311, %v2307
      %v2313 = vrot.slane %v2312, 4
      %v2315 = vshll.u32 %v470, 16
      %v2317 = vrot.slane %v2315, 5
      %v2318 = vsel %vm584, %v2313, %v2317
      %v2319 = vshrl.u32 %v470, 16
      %v2321 = vrot.slane %v2319, 4
      %v2322 = vor.u32 %v2321, %v2317
      %v2323 = vrot.slane %v2322, 4
      %v2325 = vshll.u32 %v471, 16
      %v2327 = vrot.slane %v2325, 5
      %v2328 = vsel %vm584, %v2323, %v2327
      %v2329 = vshrl.u32 %v471, 16
      %v2331 = vrot.slane %v2329, 4
      %v2332 = vor.u32 %v2331, %v2327
      %v2333 = vrot.slane %v2332, 4
      %v2335 = vshll.u32 %v472, 16
      %v2337 = vrot.slane %v2335, 5
      %v2338 = vsel %vm584, %v2333, %v2337
      %v2339 = vshrl.u32 %v472, 16
      %v2341 = vrot.slane %v2339, 4
      %v2342 = vor.u32 %v2341, %v2337
      %v2343 = vrot.slane %v2342, 4
      %v2345 = vshll.u32 %v473, 16
      %v2347 = vrot.slane %v2345, 5
      %v2348 = vsel %vm584, %v2343, %v2347
      %v2349 = vshrl.u32 %v473, 16
      %v2351 = vrot.slane %v2349, 4
      %v2352 = vor.u32 %v2351, %v2347
      %v2353 = vrot.slane %v2352, 4
      %v2355 = vshll.u32 %v474, 16
      %v2357 = vrot.slane %v2355, 5
      %v2358 = vsel %vm584, %v2353, %v2357
      %v2359 = vshrl.u32 %v474, 16
      %v2361 = vrot.slane %v2359, 4
      %v2362 = vor.u32 %v2361, %v2357
      %v2363 = vrot.slane %v2362, 4
      %v2365 = vshll.u32 %v475, 16
      %v2367 = vrot.slane %v2365, 5
      %v2368 = vsel %vm584, %v2363, %v2367
      %v2369 = vshrl.u32 %v475, 16
      %v2371 = vrot.slane %v2369, 4
      %v2372 = vor.u32 %v2371, %v2367
      %v2373 = vrot.slane %v2372, 4
      %v2375 = vshll.u32 %v476, 16
      %v2377 = vrot.slane %v2375, 5
      %v2378 = vsel %vm584, %v2373, %v2377
      %v2379 = vshrl.u32 %v476, 16
      %v2381 = vrot.slane %v2379, 4
      %v2382 = vor.u32 %v2381, %v2377
      %v2383 = vrot.slane %v2382, 4
      %v2385 = vshll.u32 %v477, 16
      %v2387 = vrot.slane %v2385, 5
      %v2388 = vsel %vm584, %v2383, %v2387
      %v2390 = vshrl.u32 %v478, 16
      %v2392 = vrot.slane %v2390, 4
      %v2393 = vshll.u32 %v478, 16
      %v2395 = vrot.slane %v2393, 5
      %v2396 = vor.u32 %v2392, %v2395
      %v2397 = vrot.slane %v2396, 4
      %v2399 = vshll.u32 %v479, 16
      %v2401 = vrot.slane %v2399, 5
      %v2402 = vsel %vm584, %v2397, %v2401
      %v2403 = vshrl.u32 %v479, 16
      %v2405 = vrot.slane %v2403, 4
      %v2406 = vor.u32 %v2405, %v2401
      %v2407 = vrot.slane %v2406, 4
      %v2409 = vshll.u32 %v480, 16
      %v2411 = vrot.slane %v2409, 5
      %v2412 = vsel %vm584, %v2407, %v2411
      %v2413 = vshrl.u32 %v480, 16
      %v2415 = vrot.slane %v2413, 4
      %v2416 = vor.u32 %v2415, %v2411
      %v2417 = vrot.slane %v2416, 4
      %v2419 = vshll.u32 %v481, 16
      %v2421 = vrot.slane %v2419, 5
      %v2422 = vsel %vm584, %v2417, %v2421
      %v2423 = vshrl.u32 %v481, 16
      %v2425 = vrot.slane %v2423, 4
      %v2426 = vor.u32 %v2425, %v2421
      %v2427 = vrot.slane %v2426, 4
      %v2429 = vshll.u32 %v482, 16
      %v2431 = vrot.slane %v2429, 5
      %v2432 = vsel %vm584, %v2427, %v2431
      %v2433 = vshrl.u32 %v482, 16
      %v2435 = vrot.slane %v2433, 4
      %v2436 = vor.u32 %v2435, %v2431
      %v2437 = vrot.slane %v2436, 4
      %v2439 = vshll.u32 %v483, 16
      %v2441 = vrot.slane %v2439, 5
      %v2442 = vsel %vm584, %v2437, %v2441
      %v2443 = vshrl.u32 %v483, 16
      %v2445 = vrot.slane %v2443, 4
      %v2446 = vor.u32 %v2445, %v2441
      %v2447 = vrot.slane %v2446, 4
      %v2449 = vshll.u32 %v484, 16
      %v2451 = vrot.slane %v2449, 5
      %v2452 = vsel %vm584, %v2447, %v2451
      %v2453 = vshrl.u32 %v484, 16
      %v2455 = vrot.slane %v2453, 4
      %v2456 = vor.u32 %v2455, %v2451
      %v2457 = vrot.slane %v2456, 4
      %v2459 = vshll.u32 %v485, 16
      %v2461 = vrot.slane %v2459, 5
      %v2462 = vsel %vm584, %v2457, %v2461
      %v2463 = vshrl.u32 %v485, 16
      %v2465 = vrot.slane %v2463, 4
      %v2466 = vor.u32 %v2465, %v2461
      %v2467 = vrot.slane %v2466, 4
      %v2469 = vshll.u32 %v486, 16
      %v2471 = vrot.slane %v2469, 5
      %v2472 = vsel %vm584, %v2467, %v2471
      %v2473 = vshrl.u32 %v486, 16
      %v2475 = vrot.slane %v2473, 4
      %v2476 = vor.u32 %v2475, %v2471
      %v2477 = vrot.slane %v2476, 4
      %v2479 = vshll.u32 %v487, 16
      %v2481 = vrot.slane %v2479, 5
      %v2482 = vsel %vm584, %v2477, %v2481
      %v2483 = vshrl.u32 %v487, 16
      %v2485 = vrot.slane %v2483, 4
      %v2486 = vor.u32 %v2485, %v2481
      %v2487 = vrot.slane %v2486, 4
      %v2489 = vshll.u32 %v488, 16
      %v2491 = vrot.slane %v2489, 5
      %v2492 = vsel %vm584, %v2487, %v2491
      %v2493 = vshrl.u32 %v488, 16
      %v2495 = vrot.slane %v2493, 4
      %v2496 = vor.u32 %v2495, %v2491
      %v2497 = vrot.slane %v2496, 4
      %v2499 = vshll.u32 %v489, 16
      %v2501 = vrot.slane %v2499, 5
      %v2502 = vsel %vm584, %v2497, %v2501
      %v2503 = vshrl.u32 %v489, 16
      %v2505 = vrot.slane %v2503, 4
      %v2506 = vor.u32 %v2505, %v2501
      %v2507 = vrot.slane %v2506, 4
      %v2509 = vshll.u32 %v490, 16
      %v2511 = vrot.slane %v2509, 5
      %v2512 = vsel %vm584, %v2507, %v2511
      %v2513 = vshrl.u32 %v490, 16
      %v2515 = vrot.slane %v2513, 4
      %v2516 = vor.u32 %v2515, %v2511
      %v2517 = vrot.slane %v2516, 4
      %v2519 = vshll.u32 %v491, 16
      %v2521 = vrot.slane %v2519, 5
      %v2522 = vsel %vm584, %v2517, %v2521
      %v2523 = vshrl.u32 %v491, 16
      %v2525 = vrot.slane %v2523, 4
      %v2526 = vor.u32 %v2525, %v2521
      %v2527 = vrot.slane %v2526, 4
      %v2529 = vshll.u32 %v492, 16
      %v2531 = vrot.slane %v2529, 5
      %v2532 = vsel %vm584, %v2527, %v2531
      %v2533 = vshrl.u32 %v492, 16
      %v2535 = vrot.slane %v2533, 4
      %v2536 = vor.u32 %v2535, %v2531
      %v2537 = vrot.slane %v2536, 4
      %v2539 = vshll.u32 %v493, 16
      %v2541 = vrot.slane %v2539, 5
      %v2542 = vsel %vm584, %v2537, %v2541
      %v2543 = vshrl.u32 %v493, 16
      %v2545 = vrot.slane %v2543, 4
      %v2546 = vor.u32 %v2545, %v2541
      %v2547 = vrot.slane %v2546, 4
      %v2549 = vshll.u32 %v494, 16
      %v2551 = vrot.slane %v2549, 5
      %v2552 = vsel %vm584, %v2547, %v2551
      %v2554 = vshrl.u32 %v495, 16
      %v2556 = vrot.slane %v2554, 4
      %v2557 = vshll.u32 %v495, 16
      %v2559 = vrot.slane %v2557, 5
      %v2560 = vor.u32 %v2556, %v2559
      %v2561 = vrot.slane %v2560, 4
      %v2563 = vshll.u32 %v496, 16
      %v2565 = vrot.slane %v2563, 5
      %v2566 = vsel %vm584, %v2561, %v2565
      %v2567 = vshrl.u32 %v496, 16
      %v2569 = vrot.slane %v2567, 4
      %v2570 = vor.u32 %v2569, %v2565
      %v2571 = vrot.slane %v2570, 4
      %v2573 = vshll.u32 %v497, 16
      %v2575 = vrot.slane %v2573, 5
      %v2576 = vsel %vm584, %v2571, %v2575
      %v2577 = vshrl.u32 %v497, 16
      %v2579 = vrot.slane %v2577, 4
      %v2580 = vor.u32 %v2579, %v2575
      %v2581 = vrot.slane %v2580, 4
      %v2583 = vshll.u32 %v498, 16
      %v2585 = vrot.slane %v2583, 5
      %v2586 = vsel %vm584, %v2581, %v2585
      %v2587 = vshrl.u32 %v498, 16
      %v2589 = vrot.slane %v2587, 4
      %v2590 = vor.u32 %v2589, %v2585
      %v2591 = vrot.slane %v2590, 4
      %v2593 = vshll.u32 %v499, 16
      %v2595 = vrot.slane %v2593, 5
      %v2596 = vsel %vm584, %v2591, %v2595
      %v2597 = vshrl.u32 %v499, 16
      %v2599 = vrot.slane %v2597, 4
      %v2600 = vor.u32 %v2599, %v2595
      %v2601 = vrot.slane %v2600, 4
      %v2603 = vshll.u32 %v500, 16
      %v2605 = vrot.slane %v2603, 5
      %v2606 = vsel %vm584, %v2601, %v2605
      %v2607 = vshrl.u32 %v500, 16
      %v2609 = vrot.slane %v2607, 4
      %v2610 = vor.u32 %v2609, %v2605
      %v2611 = vrot.slane %v2610, 4
      %v2613 = vshll.u32 %v501, 16
      %v2615 = vrot.slane %v2613, 5
      %v2616 = vsel %vm584, %v2611, %v2615
      %v2617 = vshrl.u32 %v501, 16
      %v2619 = vrot.slane %v2617, 4
      %v2620 = vor.u32 %v2619, %v2615
      %v2621 = vrot.slane %v2620, 4
      %v2623 = vshll.u32 %v502, 16
      %v2625 = vrot.slane %v2623, 5
      %v2626 = vsel %vm584, %v2621, %v2625
      %v2627 = vshrl.u32 %v502, 16
      %v2629 = vrot.slane %v2627, 4
      %v2630 = vor.u32 %v2629, %v2625
      %v2631 = vrot.slane %v2630, 4
      %v2633 = vshll.u32 %v503, 16
      %v2635 = vrot.slane %v2633, 5
      %v2636 = vsel %vm584, %v2631, %v2635
      %v2637 = vshrl.u32 %v503, 16
      %v2639 = vrot.slane %v2637, 4
      %v2640 = vor.u32 %v2639, %v2635
      %v2641 = vrot.slane %v2640, 4
      %v2643 = vshll.u32 %v504, 16
      %v2645 = vrot.slane %v2643, 5
      %v2646 = vsel %vm584, %v2641, %v2645
      %v2647 = vshrl.u32 %v504, 16
      %v2649 = vrot.slane %v2647, 4
      %v2650 = vor.u32 %v2649, %v2645
      %v2651 = vrot.slane %v2650, 4
      %v2653 = vshll.u32 %v505, 16
      %v2655 = vrot.slane %v2653, 5
      %v2656 = vsel %vm584, %v2651, %v2655
      %v2657 = vshrl.u32 %v505, 16
      %v2659 = vrot.slane %v2657, 4
      %v2660 = vor.u32 %v2659, %v2655
      %v2661 = vrot.slane %v2660, 4
      %v2663 = vshll.u32 %v506, 16
      %v2665 = vrot.slane %v2663, 5
      %v2666 = vsel %vm584, %v2661, %v2665
      %v2667 = vshrl.u32 %v506, 16
      %v2669 = vrot.slane %v2667, 4
      %v2670 = vor.u32 %v2669, %v2665
      %v2671 = vrot.slane %v2670, 4
      %v2673 = vshll.u32 %v507, 16
      %v2675 = vrot.slane %v2673, 5
      %v2676 = vsel %vm584, %v2671, %v2675
      %v2677 = vshrl.u32 %v507, 16
      %v2679 = vrot.slane %v2677, 4
      %v2680 = vor.u32 %v2679, %v2675
      %v2681 = vrot.slane %v2680, 4
      %v2683 = vshll.u32 %v508, 16
      %v2685 = vrot.slane %v2683, 5
      %v2686 = vsel %vm584, %v2681, %v2685
      %v2687 = vshrl.u32 %v508, 16
      %v2689 = vrot.slane %v2687, 4
      %v2690 = vor.u32 %v2689, %v2685
      %v2691 = vrot.slane %v2690, 4
      %v2693 = vshll.u32 %v509, 16
      %v2695 = vrot.slane %v2693, 5
      %v2696 = vsel %vm584, %v2691, %v2695
      %v2697 = vshrl.u32 %v509, 16
      %v2699 = vrot.slane %v2697, 4
      %v2700 = vor.u32 %v2699, %v2695
      %v2701 = vrot.slane %v2700, 4
      %v2703 = vshll.u32 %v510, 16
      %v2705 = vrot.slane %v2703, 5
      %v2706 = vsel %vm584, %v2701, %v2705
      %v2707 = vshrl.u32 %v510, 16
      %v2709 = vrot.slane %v2707, 4
      %v2710 = vor.u32 %v2709, %v2705
      %v2711 = vrot.slane %v2710, 4
      %v2713 = vshll.u32 %v511, 16
      %v2715 = vrot.slane %v2713, 5
      %v2716 = vsel %vm584, %v2711, %v2715
      %v2718 = vshrl.u32 %v512, 16
      %v2720 = vrot.slane %v2718, 4
      %v2721 = vshll.u32 %v512, 16
      %v2723 = vrot.slane %v2721, 5
      %v2724 = vor.u32 %v2720, %v2723
      %v2725 = vrot.slane %v2724, 4
      %v2727 = vshll.u32 %v513, 16
      %v2729 = vrot.slane %v2727, 5
      %v2730 = vsel %vm584, %v2725, %v2729
      %v2731 = vshrl.u32 %v513, 16
      %v2733 = vrot.slane %v2731, 4
      %v2734 = vor.u32 %v2733, %v2729
      %v2735 = vrot.slane %v2734, 4
      %v2737 = vshll.u32 %v514, 16
      %v2739 = vrot.slane %v2737, 5
      %v2740 = vsel %vm584, %v2735, %v2739
      %v2741 = vshrl.u32 %v514, 16
      %v2743 = vrot.slane %v2741, 4
      %v2744 = vor.u32 %v2743, %v2739
      %v2745 = vrot.slane %v2744, 4
      %v2747 = vshll.u32 %v515, 16
      %v2749 = vrot.slane %v2747, 5
      %v2750 = vsel %vm584, %v2745, %v2749
      %v2751 = vshrl.u32 %v515, 16
      %v2753 = vrot.slane %v2751, 4
      %v2754 = vor.u32 %v2753, %v2749
      %v2755 = vrot.slane %v2754, 4
      %v2757 = vshll.u32 %v516, 16
      %v2759 = vrot.slane %v2757, 5
      %v2760 = vsel %vm584, %v2755, %v2759
      %v2761 = vshrl.u32 %v516, 16
      %v2763 = vrot.slane %v2761, 4
      %v2764 = vor.u32 %v2763, %v2759
      %v2765 = vrot.slane %v2764, 4
      %v2767 = vshll.u32 %v517, 16
      %v2769 = vrot.slane %v2767, 5
      %v2770 = vsel %vm584, %v2765, %v2769
      %v2771 = vshrl.u32 %v517, 16
      %v2773 = vrot.slane %v2771, 4
      %v2774 = vor.u32 %v2773, %v2769
      %v2775 = vrot.slane %v2774, 4
      %v2777 = vshll.u32 %v518, 16
      %v2779 = vrot.slane %v2777, 5
      %v2780 = vsel %vm584, %v2775, %v2779
      %v2781 = vshrl.u32 %v518, 16
      %v2783 = vrot.slane %v2781, 4
      %v2784 = vor.u32 %v2783, %v2779
      %v2785 = vrot.slane %v2784, 4
      %v2787 = vshll.u32 %v519, 16
      %v2789 = vrot.slane %v2787, 5
      %v2790 = vsel %vm584, %v2785, %v2789
      %v2791 = vshrl.u32 %v519, 16
      %v2793 = vrot.slane %v2791, 4
      %v2794 = vor.u32 %v2793, %v2789
      %v2795 = vrot.slane %v2794, 4
      %v2797 = vshll.u32 %v520, 16
      %v2799 = vrot.slane %v2797, 5
      %v2800 = vsel %vm584, %v2795, %v2799
      %v2801 = vshrl.u32 %v520, 16
      %v2803 = vrot.slane %v2801, 4
      %v2804 = vor.u32 %v2803, %v2799
      %v2805 = vrot.slane %v2804, 4
      %v2807 = vshll.u32 %v521, 16
      %v2809 = vrot.slane %v2807, 5
      %v2810 = vsel %vm584, %v2805, %v2809
      %v2811 = vshrl.u32 %v521, 16
      %v2813 = vrot.slane %v2811, 4
      %v2814 = vor.u32 %v2813, %v2809
      %v2815 = vrot.slane %v2814, 4
      %v2817 = vshll.u32 %v522, 16
      %v2819 = vrot.slane %v2817, 5
      %v2820 = vsel %vm584, %v2815, %v2819
      %v2821 = vshrl.u32 %v522, 16
      %v2823 = vrot.slane %v2821, 4
      %v2824 = vor.u32 %v2823, %v2819
      %v2825 = vrot.slane %v2824, 4
      %v2827 = vshll.u32 %v523, 16
      %v2829 = vrot.slane %v2827, 5
      %v2830 = vsel %vm584, %v2825, %v2829
      %v2831 = vshrl.u32 %v523, 16
      %v2833 = vrot.slane %v2831, 4
      %v2834 = vor.u32 %v2833, %v2829
      %v2835 = vrot.slane %v2834, 4
      %v2837 = vshll.u32 %v524, 16
      %v2839 = vrot.slane %v2837, 5
      %v2840 = vsel %vm584, %v2835, %v2839
      %v2841 = vshrl.u32 %v524, 16
      %v2843 = vrot.slane %v2841, 4
      %v2844 = vor.u32 %v2843, %v2839
      %v2845 = vrot.slane %v2844, 4
      %v2847 = vshll.u32 %v525, 16
      %v2849 = vrot.slane %v2847, 5
      %v2850 = vsel %vm584, %v2845, %v2849
      %v2851 = vshrl.u32 %v525, 16
      %v2853 = vrot.slane %v2851, 4
      %v2854 = vor.u32 %v2853, %v2849
      %v2855 = vrot.slane %v2854, 4
      %v2857 = vshll.u32 %v526, 16
      %v2859 = vrot.slane %v2857, 5
      %v2860 = vsel %vm584, %v2855, %v2859
      %v2861 = vshrl.u32 %v526, 16
      %v2863 = vrot.slane %v2861, 4
      %v2864 = vor.u32 %v2863, %v2859
      %v2865 = vrot.slane %v2864, 4
      %v2867 = vshll.u32 %v527, 16
      %v2869 = vrot.slane %v2867, 5
      %v2870 = vsel %vm584, %v2865, %v2869
      %v2871 = vshrl.u32 %v527, 16
      %v2873 = vrot.slane %v2871, 4
      %v2874 = vor.u32 %v2873, %v2869
      %v2875 = vrot.slane %v2874, 4
      %v2877 = vshll.u32 %v528, 16
      %v2879 = vrot.slane %v2877, 5
      %v2880 = vsel %vm584, %v2875, %v2879
      %v2882 = vshrl.u32 %v529, 16
      %v2884 = vrot.slane %v2882, 4
      %v2885 = vshll.u32 %v529, 16
      %v2887 = vrot.slane %v2885, 5
      %v2888 = vor.u32 %v2884, %v2887
      %v2889 = vrot.slane %v2888, 4
      %v2891 = vshll.u32 %v530, 16
      %v2893 = vrot.slane %v2891, 5
      %v2894 = vsel %vm584, %v2889, %v2893
      %v2895 = vshrl.u32 %v530, 16
      %v2897 = vrot.slane %v2895, 4
      %v2898 = vor.u32 %v2897, %v2893
      %v2899 = vrot.slane %v2898, 4
      %v2901 = vshll.u32 %v531, 16
      %v2903 = vrot.slane %v2901, 5
      %v2904 = vsel %vm584, %v2899, %v2903
      %v2905 = vshrl.u32 %v531, 16
      %v2907 = vrot.slane %v2905, 4
      %v2908 = vor.u32 %v2907, %v2903
      %v2909 = vrot.slane %v2908, 4
      %v2911 = vshll.u32 %v532, 16
      %v2913 = vrot.slane %v2911, 5
      %v2914 = vsel %vm584, %v2909, %v2913
      %v2915 = vshrl.u32 %v532, 16
      %v2917 = vrot.slane %v2915, 4
      %v2918 = vor.u32 %v2917, %v2913
      %v2919 = vrot.slane %v2918, 4
      %v2921 = vshll.u32 %v533, 16
      %v2923 = vrot.slane %v2921, 5
      %v2924 = vsel %vm584, %v2919, %v2923
      %v2925 = vshrl.u32 %v533, 16
      %v2927 = vrot.slane %v2925, 4
      %v2928 = vor.u32 %v2927, %v2923
      %v2929 = vrot.slane %v2928, 4
      %v2931 = vshll.u32 %v534, 16
      %v2933 = vrot.slane %v2931, 5
      %v2934 = vsel %vm584, %v2929, %v2933
      %v2935 = vshrl.u32 %v534, 16
      %v2937 = vrot.slane %v2935, 4
      %v2938 = vor.u32 %v2937, %v2933
      %v2939 = vrot.slane %v2938, 4
      %v2941 = vshll.u32 %v535, 16
      %v2943 = vrot.slane %v2941, 5
      %v2944 = vsel %vm584, %v2939, %v2943
      %v2945 = vshrl.u32 %v535, 16
      %v2947 = vrot.slane %v2945, 4
      %v2948 = vor.u32 %v2947, %v2943
      %v2949 = vrot.slane %v2948, 4
      %v2951 = vshll.u32 %v536, 16
      %v2953 = vrot.slane %v2951, 5
      %v2954 = vsel %vm584, %v2949, %v2953
      %v2955 = vshrl.u32 %v536, 16
      %v2957 = vrot.slane %v2955, 4
      %v2958 = vor.u32 %v2957, %v2953
      %v2959 = vrot.slane %v2958, 4
      %v2961 = vshll.u32 %v537, 16
      %v2963 = vrot.slane %v2961, 5
      %v2964 = vsel %vm584, %v2959, %v2963
      %v2965 = vshrl.u32 %v537, 16
      %v2967 = vrot.slane %v2965, 4
      %v2968 = vor.u32 %v2967, %v2963
      %v2969 = vrot.slane %v2968, 4
      %v2971 = vshll.u32 %v538, 16
      %v2973 = vrot.slane %v2971, 5
      %v2974 = vsel %vm584, %v2969, %v2973
      %v2975 = vshrl.u32 %v538, 16
      %v2977 = vrot.slane %v2975, 4
      %v2978 = vor.u32 %v2977, %v2973
      %v2979 = vrot.slane %v2978, 4
      %v2981 = vshll.u32 %v539, 16
      %v2983 = vrot.slane %v2981, 5
      %v2984 = vsel %vm584, %v2979, %v2983
      %v2985 = vshrl.u32 %v539, 16
      %v2987 = vrot.slane %v2985, 4
      %v2988 = vor.u32 %v2987, %v2983
      %v2989 = vrot.slane %v2988, 4
      %v2991 = vshll.u32 %v540, 16
      %v2993 = vrot.slane %v2991, 5
      %v2994 = vsel %vm584, %v2989, %v2993
      %v2995 = vshrl.u32 %v540, 16
      %v2997 = vrot.slane %v2995, 4
      %v2998 = vor.u32 %v2997, %v2993
      %v2999 = vrot.slane %v2998, 4
      %v3001 = vshll.u32 %v541, 16
      %v3003 = vrot.slane %v3001, 5
      %v3004 = vsel %vm584, %v2999, %v3003
      %v3005 = vshrl.u32 %v541, 16
      %v3007 = vrot.slane %v3005, 4
      %v3008 = vor.u32 %v3007, %v3003
      %v3009 = vrot.slane %v3008, 4
      %v3011 = vshll.u32 %v542, 16
      %v3013 = vrot.slane %v3011, 5
      %v3014 = vsel %vm584, %v3009, %v3013
      %v3015 = vshrl.u32 %v542, 16
      %v3017 = vrot.slane %v3015, 4
      %v3018 = vor.u32 %v3017, %v3013
      %v3019 = vrot.slane %v3018, 4
      %v3021 = vshll.u32 %v543, 16
      %v3023 = vrot.slane %v3021, 5
      %v3024 = vsel %vm584, %v3019, %v3023
      %v3025 = vshrl.u32 %v543, 16
      %v3027 = vrot.slane %v3025, 4
      %v3028 = vor.u32 %v3027, %v3023
      %v3029 = vrot.slane %v3028, 4
      %v3031 = vshll.u32 %v544, 16
      %v3033 = vrot.slane %v3031, 5
      %v3034 = vsel %vm584, %v3029, %v3033
      %v3035 = vshrl.u32 %v544, 16
      %v3037 = vrot.slane %v3035, 4
      %v3038 = vor.u32 %v3037, %v3033
      %v3039 = vrot.slane %v3038, 4
      %v3041 = vshll.u32 %v545, 16
      %v3043 = vrot.slane %v3041, 5
      %v3044 = vsel %vm584, %v3039, %v3043
      %v3046 = vshrl.u32 %v546, 16
      %v3048 = vrot.slane %v3046, 4
      %v3049 = vshll.u32 %v546, 16
      %v3051 = vrot.slane %v3049, 5
      %v3052 = vor.u32 %v3048, %v3051
      %v3053 = vrot.slane %v3052, 4
      %v3055 = vshll.u32 %v547, 16
      %v3057 = vrot.slane %v3055, 5
      %v3058 = vsel %vm584, %v3053, %v3057
      %v3059 = vshrl.u32 %v547, 16
      %v3061 = vrot.slane %v3059, 4
      %v3062 = vor.u32 %v3061, %v3057
      %v3063 = vrot.slane %v3062, 4
      %v3065 = vshll.u32 %v548, 16
      %v3067 = vrot.slane %v3065, 5
      %v3068 = vsel %vm584, %v3063, %v3067
      %v3069 = vshrl.u32 %v548, 16
      %v3071 = vrot.slane %v3069, 4
      %v3072 = vor.u32 %v3071, %v3067
      %v3073 = vrot.slane %v3072, 4
      %v3075 = vshll.u32 %v549, 16
      %v3077 = vrot.slane %v3075, 5
      %v3078 = vsel %vm584, %v3073, %v3077
      %v3079 = vshrl.u32 %v549, 16
      %v3081 = vrot.slane %v3079, 4
      %v3082 = vor.u32 %v3081, %v3077
      %v3083 = vrot.slane %v3082, 4
      %v3085 = vshll.u32 %v550, 16
      %v3087 = vrot.slane %v3085, 5
      %v3088 = vsel %vm584, %v3083, %v3087
      %v3089 = vshrl.u32 %v550, 16
      %v3091 = vrot.slane %v3089, 4
      %v3092 = vor.u32 %v3091, %v3087
      %v3093 = vrot.slane %v3092, 4
      %v3095 = vshll.u32 %v551, 16
      %v3097 = vrot.slane %v3095, 5
      %v3098 = vsel %vm584, %v3093, %v3097
      %v3099 = vshrl.u32 %v551, 16
      %v3101 = vrot.slane %v3099, 4
      %v3102 = vor.u32 %v3101, %v3097
      %v3103 = vrot.slane %v3102, 4
      %v3105 = vshll.u32 %v552, 16
      %v3107 = vrot.slane %v3105, 5
      %v3108 = vsel %vm584, %v3103, %v3107
      %v3109 = vshrl.u32 %v552, 16
      %v3111 = vrot.slane %v3109, 4
      %v3112 = vor.u32 %v3111, %v3107
      %v3113 = vrot.slane %v3112, 4
      %v3115 = vshll.u32 %v553, 16
      %v3117 = vrot.slane %v3115, 5
      %v3118 = vsel %vm584, %v3113, %v3117
      %v3119 = vshrl.u32 %v553, 16
      %v3121 = vrot.slane %v3119, 4
      %v3122 = vor.u32 %v3121, %v3117
      %v3123 = vrot.slane %v3122, 4
      %v3125 = vshll.u32 %v554, 16
      %v3127 = vrot.slane %v3125, 5
      %v3128 = vsel %vm584, %v3123, %v3127
      %v3129 = vshrl.u32 %v554, 16
      %v3131 = vrot.slane %v3129, 4
      %v3132 = vor.u32 %v3131, %v3127
      %v3133 = vrot.slane %v3132, 4
      %v3135 = vshll.u32 %v555, 16
      %v3137 = vrot.slane %v3135, 5
      %v3138 = vsel %vm584, %v3133, %v3137
      %v3139 = vshrl.u32 %v555, 16
      %v3141 = vrot.slane %v3139, 4
      %v3142 = vor.u32 %v3141, %v3137
      %v3143 = vrot.slane %v3142, 4
      %v3145 = vshll.u32 %v556, 16
      %v3147 = vrot.slane %v3145, 5
      %v3148 = vsel %vm584, %v3143, %v3147
      %v3149 = vshrl.u32 %v556, 16
      %v3151 = vrot.slane %v3149, 4
      %v3152 = vor.u32 %v3151, %v3147
      %v3153 = vrot.slane %v3152, 4
      %v3155 = vshll.u32 %v557, 16
      %v3157 = vrot.slane %v3155, 5
      %v3158 = vsel %vm584, %v3153, %v3157
      %v3159 = vshrl.u32 %v557, 16
      %v3161 = vrot.slane %v3159, 4
      %v3162 = vor.u32 %v3161, %v3157
      %v3163 = vrot.slane %v3162, 4
      %v3165 = vshll.u32 %v558, 16
      %v3167 = vrot.slane %v3165, 5
      %v3168 = vsel %vm584, %v3163, %v3167
      %v3169 = vshrl.u32 %v558, 16
      %v3171 = vrot.slane %v3169, 4
      %v3172 = vor.u32 %v3171, %v3167
      %v3173 = vrot.slane %v3172, 4
      %v3175 = vshll.u32 %v559, 16
      %v3177 = vrot.slane %v3175, 5
      %v3178 = vsel %vm584, %v3173, %v3177
      %v3179 = vshrl.u32 %v559, 16
      %v3181 = vrot.slane %v3179, 4
      %v3182 = vor.u32 %v3181, %v3177
      %v3183 = vrot.slane %v3182, 4
      %v3185 = vshll.u32 %v560, 16
      %v3187 = vrot.slane %v3185, 5
      %v3188 = vsel %vm584, %v3183, %v3187
      %v3189 = vshrl.u32 %v560, 16
      %v3191 = vrot.slane %v3189, 4
      %v3192 = vor.u32 %v3191, %v3187
      %v3193 = vrot.slane %v3192, 4
      %v3195 = vshll.u32 %v561, 16
      %v3197 = vrot.slane %v3195, 5
      %v3198 = vsel %vm584, %v3193, %v3197
      %v3199 = vshrl.u32 %v561, 16
      %v3201 = vrot.slane %v3199, 4
      %v3202 = vor.u32 %v3201, %v3197
      %v3203 = vrot.slane %v3202, 4
      %v3205 = vshll.u32 %v562, 16
      %v3207 = vrot.slane %v3205, 5
      %v3208 = vsel %vm584, %v3203, %v3207
      %s3209 = scalar_lea.vmem %s2, 8
      %v3210 = vld [vmem:[%s3209] sm:$0xf]
      %v3211 = vld [vmem:[%s3209 + $0x4] sm:$0x3]
      %v3212 = vunpack.c.l.b16 %v598
      %v3213 = vunpack.c.l.b16 %v608
      %v3214 = vunpack.c.l.b16 %v618
      %v3215 = vunpack.c.l.b16 %v628
      %v3216 = vunpack.c.l.b16 %v638
      %v3217 = vunpack.c.l.b16 %v648
      %v3218 = vunpack.c.l.b16 %v658
      %v3219 = vunpack.c.l.b16 %v668
      %v3220 = vunpack.c.l.b16 %v678
      %v3221 = vunpack.c.l.b16 %v688
      %v3222 = vunpack.c.l.b16 %v698
      %v3223 = vunpack.c.l.b16 %v708
      %v3224 = vunpack.c.l.b16 %v718
      %v3225 = vunpack.c.l.b16 %v728
      %v3226 = vunpack.c.l.b16 %v738
      %v3227 = vunpack.c.l.b16 %v748
      %v3228 = vunpack.c.l.b16 %v762
      %v3229 = vunpack.c.l.b16 %v772
      %v3230 = vunpack.c.l.b16 %v782
      %v3231 = vunpack.c.l.b16 %v792
      %v3232 = vunpack.c.l.b16 %v802
      %v3233 = vunpack.c.l.b16 %v812
      %v3234 = vunpack.c.l.b16 %v822
      %v3235 = vunpack.c.l.b16 %v832
      %v3236 = vunpack.c.l.b16 %v842
      %v3237 = vunpack.c.l.b16 %v852
      %v3238 = vunpack.c.l.b16 %v862
      %v3239 = vunpack.c.l.b16 %v872
      %v3240 = vunpack.c.l.b16 %v882
      %v3241 = vunpack.c.l.b16 %v892
      %v3242 = vunpack.c.l.b16 %v902
      %v3243 = vunpack.c.l.b16 %v912
      %v3244 = vunpack.c.l.b16 %v926
      %v3245 = vunpack.c.l.b16 %v936
      %v3246 = vunpack.c.l.b16 %v946
      %v3247 = vunpack.c.l.b16 %v956
      %v3248 = vunpack.c.l.b16 %v966
      %v3249 = vunpack.c.l.b16 %v976
      %v3250 = vunpack.c.l.b16 %v986
      %v3251 = vunpack.c.l.b16 %v996
      %v3252 = vunpack.c.l.b16 %v1006
      %v3253 = vunpack.c.l.b16 %v1016
      %v3254 = vunpack.c.l.b16 %v1026
      %v3255 = vunpack.c.l.b16 %v1036
      %v3256 = vunpack.c.l.b16 %v1046
      %v3257 = vunpack.c.l.b16 %v1056
      %v3258 = vunpack.c.l.b16 %v1066
      %v3259 = vunpack.c.l.b16 %v1076
      %v3260 = vunpack.c.l.b16 %v1090
      %v3261 = vunpack.c.l.b16 %v1100
      %v3262 = vunpack.c.l.b16 %v1110
      %v3263 = vunpack.c.l.b16 %v1120
      %v3264 = vunpack.c.l.b16 %v1130
      %v3265 = vunpack.c.l.b16 %v1140
      %v3266 = vunpack.c.l.b16 %v1150
      %v3267 = vunpack.c.l.b16 %v1160
      %v3268 = vunpack.c.l.b16 %v1170
      %v3269 = vunpack.c.l.b16 %v1180
      %v3270 = vunpack.c.l.b16 %v1190
      %v3271 = vunpack.c.l.b16 %v1200
      %v3272 = vunpack.c.l.b16 %v1210
      %v3273 = vunpack.c.l.b16 %v1220
      %v3274 = vunpack.c.l.b16 %v1230
      %v3275 = vunpack.c.l.b16 %v1240
      %v3276 = vunpack.c.l.b16 %v1254
      %v3277 = vunpack.c.l.b16 %v1264
      %v3278 = vunpack.c.l.b16 %v1274
      %v3279 = vunpack.c.l.b16 %v1284
      %v3280 = vunpack.c.l.b16 %v1294
      %v3281 = vunpack.c.l.b16 %v1304
      %v3282 = vunpack.c.l.b16 %v1314
      %v3283 = vunpack.c.l.b16 %v1324
      %v3284 = vunpack.c.l.b16 %v1334
      %v3285 = vunpack.c.l.b16 %v1344
      %v3286 = vunpack.c.l.b16 %v1354
      %v3287 = vunpack.c.l.b16 %v1364
      %v3288 = vunpack.c.l.b16 %v1374
      %v3289 = vunpack.c.l.b16 %v1384
      %v3290 = vunpack.c.l.b16 %v1394
      %v3291 = vunpack.c.l.b16 %v1404
      %v3292 = vunpack.c.l.b16 %v1418
      %v3293 = vunpack.c.l.b16 %v1428
      %v3294 = vunpack.c.l.b16 %v1438
      %v3295 = vunpack.c.l.b16 %v1448
      %v3296 = vunpack.c.l.b16 %v1458
      %v3297 = vunpack.c.l.b16 %v1468
      %v3298 = vunpack.c.l.b16 %v1478
      %v3299 = vunpack.c.l.b16 %v1488
      %v3300 = vunpack.c.l.b16 %v1498
      %v3301 = vunpack.c.l.b16 %v1508
      %v3302 = vunpack.c.l.b16 %v1518
      %v3303 = vunpack.c.l.b16 %v1528
      %v3304 = vunpack.c.l.b16 %v1538
      %v3305 = vunpack.c.l.b16 %v1548
      %v3306 = vunpack.c.l.b16 %v1558
      %v3307 = vunpack.c.l.b16 %v1568
      %v3308 = vunpack.c.l.b16 %v1582
      %v3309 = vunpack.c.l.b16 %v1592
      %v3310 = vunpack.c.l.b16 %v1602
      %v3311 = vunpack.c.l.b16 %v1612
      %v3312 = vunpack.c.l.b16 %v1622
      %v3313 = vunpack.c.l.b16 %v1632
      %v3314 = vunpack.c.l.b16 %v1642
      %v3315 = vunpack.c.l.b16 %v1652
      %v3316 = vunpack.c.l.b16 %v1662
      %v3317 = vunpack.c.l.b16 %v1672
      %v3318 = vunpack.c.l.b16 %v1682
      %v3319 = vunpack.c.l.b16 %v1692
      %v3320 = vunpack.c.l.b16 %v1702
      %v3321 = vunpack.c.l.b16 %v1712
      %v3322 = vunpack.c.l.b16 %v1722
      %v3323 = vunpack.c.l.b16 %v1732
      %v3324 = vunpack.c.l.b16 %v1746
      %v3325 = vunpack.c.l.b16 %v1756
      %v3326 = vunpack.c.l.b16 %v1766
      %v3327 = vunpack.c.l.b16 %v1776
      %v3328 = vunpack.c.l.b16 %v1786
      %v3329 = vunpack.c.l.b16 %v1796
      %v3330 = vunpack.c.l.b16 %v1806
      %v3331 = vunpack.c.l.b16 %v1816
      %v3332 = vunpack.c.l.b16 %v1826
      %v3333 = vunpack.c.l.b16 %v1836
      %v3334 = vunpack.c.l.b16 %v1846
      %v3335 = vunpack.c.l.b16 %v1856
      %v3336 = vunpack.c.l.b16 %v1866
      %v3337 = vunpack.c.l.b16 %v1876
      %v3338 = vunpack.c.l.b16 %v1886
      %v3339 = vunpack.c.l.b16 %v1896
      %v3340 = vunpack.c.l.b16 %v1910
      %v3341 = vunpack.c.l.b16 %v1920
      %v3342 = vunpack.c.l.b16 %v1930
      %v3343 = vunpack.c.l.b16 %v1940
      %v3344 = vunpack.c.l.b16 %v1950
      %v3345 = vunpack.c.l.b16 %v1960
      %v3346 = vunpack.c.l.b16 %v1970
      %v3347 = vunpack.c.l.b16 %v1980
      %v3348 = vunpack.c.l.b16 %v1990
      %v3349 = vunpack.c.l.b16 %v2000
      %v3350 = vunpack.c.l.b16 %v2010
      %v3351 = vunpack.c.l.b16 %v2020
      %v3352 = vunpack.c.l.b16 %v2030
      %v3353 = vunpack.c.l.b16 %v2040
      %v3354 = vunpack.c.l.b16 %v2050
      %v3355 = vunpack.c.l.b16 %v2060
      %v3356 = vunpack.c.l.b16 %v2074
      %v3357 = vunpack.c.l.b16 %v2084
      %v3358 = vunpack.c.l.b16 %v2094
      %v3359 = vunpack.c.l.b16 %v2104
      %v3360 = vunpack.c.l.b16 %v2114
      %v3361 = vunpack.c.l.b16 %v2124
      %v3362 = vunpack.c.l.b16 %v2134
      %v3363 = vunpack.c.l.b16 %v2144
      %v3364 = vunpack.c.l.b16 %v2154
      %v3365 = vunpack.c.l.b16 %v2164
      %v3366 = vunpack.c.l.b16 %v2174
      %v3367 = vunpack.c.l.b16 %v2184
      %v3368 = vunpack.c.l.b16 %v2194
      %v3369 = vunpack.c.l.b16 %v2204
      %v3370 = vunpack.c.l.b16 %v2214
      %v3371 = vunpack.c.l.b16 %v2224
      %v3372 = vunpack.c.l.b16 %v2238
      %v3373 = vunpack.c.l.b16 %v2248
      %v3374 = vunpack.c.l.b16 %v2258
      %v3375 = vunpack.c.l.b16 %v2268
      %v3376 = vunpack.c.l.b16 %v2278
      %v3377 = vunpack.c.l.b16 %v2288
      %v3378 = vunpack.c.l.b16 %v2298
      %v3379 = vunpack.c.l.b16 %v2308
      %v3380 = vunpack.c.l.b16 %v2318
      %v3381 = vunpack.c.l.b16 %v2328
      %v3382 = vunpack.c.l.b16 %v2338
      %v3383 = vunpack.c.l.b16 %v2348
      %v3384 = vunpack.c.l.b16 %v2358
      %v3385 = vunpack.c.l.b16 %v2368
      %v3386 = vunpack.c.l.b16 %v2378
      %v3387 = vunpack.c.l.b16 %v2388
      %v3388 = vunpack.c.l.b16 %v2402
      %v3389 = vunpack.c.l.b16 %v2412
      %v3390 = vunpack.c.l.b16 %v2422
      %v3391 = vunpack.c.l.b16 %v2432
      %v3392 = vunpack.c.l.b16 %v2442
      %v3393 = vunpack.c.l.b16 %v2452
      %v3394 = vunpack.c.l.b16 %v2462
      %v3395 = vunpack.c.l.b16 %v2472
      %v3396 = vunpack.c.l.b16 %v2482
      %v3397 = vunpack.c.l.b16 %v2492
      %v3398 = vunpack.c.l.b16 %v2502
      %v3399 = vunpack.c.l.b16 %v2512
      %v3400 = vunpack.c.l.b16 %v2522
      %v3401 = vunpack.c.l.b16 %v2532
      %v3402 = vunpack.c.l.b16 %v2542
      %v3403 = vunpack.c.l.b16 %v2552
      %v3404 = vunpack.c.l.b16 %v2566
      %v3405 = vunpack.c.l.b16 %v2576
      %v3406 = vunpack.c.l.b16 %v2586
      %v3407 = vunpack.c.l.b16 %v2596
      %v3408 = vunpack.c.l.b16 %v2606
      %v3409 = vunpack.c.l.b16 %v2616
      %v3410 = vunpack.c.l.b16 %v2626
      %v3411 = vunpack.c.l.b16 %v2636
      %v3412 = vunpack.c.l.b16 %v2646
      %v3413 = vunpack.c.l.b16 %v2656
      %v3414 = vunpack.c.l.b16 %v2666
      %v3415 = vunpack.c.l.b16 %v2676
      %v3416 = vunpack.c.l.b16 %v2686
      %v3417 = vunpack.c.l.b16 %v2696
      %v3418 = vunpack.c.l.b16 %v2706
      %v3419 = vunpack.c.l.b16 %v2716
      %v3420 = vunpack.c.l.b16 %v2730
      %v3421 = vunpack.c.l.b16 %v2740
      %v3422 = vunpack.c.l.b16 %v2750
      %v3423 = vunpack.c.l.b16 %v2760
      %v3424 = vunpack.c.l.b16 %v2770
      %v3425 = vunpack.c.l.b16 %v2780
      %v3426 = vunpack.c.l.b16 %v2790
      %v3427 = vunpack.c.l.b16 %v2800
      %v3428 = vunpack.c.l.b16 %v2810
      %v3429 = vunpack.c.l.b16 %v2820
      %v3430 = vunpack.c.l.b16 %v2830
      %v3431 = vunpack.c.l.b16 %v2840
      %v3432 = vunpack.c.l.b16 %v2850
      %v3433 = vunpack.c.l.b16 %v2860
      %v3434 = vunpack.c.l.b16 %v2870
      %v3435 = vunpack.c.l.b16 %v2880
      %v3436 = vunpack.c.l.b16 %v2894
      %v3437 = vunpack.c.l.b16 %v2904
      %v3438 = vunpack.c.l.b16 %v2914
      %v3439 = vunpack.c.l.b16 %v2924
      %v3440 = vunpack.c.l.b16 %v2934
      %v3441 = vunpack.c.l.b16 %v2944
      %v3442 = vunpack.c.l.b16 %v2954
      %v3443 = vunpack.c.l.b16 %v2964
      %v3444 = vunpack.c.l.b16 %v2974
      %v3445 = vunpack.c.l.b16 %v2984
      %v3446 = vunpack.c.l.b16 %v2994
      %v3447 = vunpack.c.l.b16 %v3004
      %v3448 = vunpack.c.l.b16 %v3014
      %v3449 = vunpack.c.l.b16 %v3024
      %v3450 = vunpack.c.l.b16 %v3034
      %v3451 = vunpack.c.l.b16 %v3044
      %v3452 = vunpack.c.l.b16 %v3058
      %v3453 = vunpack.c.l.b16 %v3068
      %v3454 = vunpack.c.l.b16 %v3078
      %v3455 = vunpack.c.l.b16 %v3088
      %v3456 = vunpack.c.l.b16 %v3098
      %v3457 = vunpack.c.l.b16 %v3108
      %v3458 = vunpack.c.l.b16 %v3118
      %v3459 = vunpack.c.l.b16 %v3128
      %v3460 = vunpack.c.l.b16 %v3138
      %v3461 = vunpack.c.l.b16 %v3148
      %v3462 = vunpack.c.l.b16 %v3158
      %v3463 = vunpack.c.l.b16 %v3168
      %v3464 = vunpack.c.l.b16 %v3178
      %v3465 = vunpack.c.l.b16 %v3188
      %v3466 = vunpack.c.l.b16 %v3198
      %v3467 = vunpack.c.l.b16 %v3208
      %v3468 = vpack.c.b16 %v3213, %v3212
      %v3469 = vpack.c.b16 %v3215, %v3214
      %v3470 = vpack.c.b16 %v3217, %v3216
      %v3471 = vpack.c.b16 %v3219, %v3218
      %v3472 = vpack.c.b16 %v3221, %v3220
      %v3473 = vpack.c.b16 %v3223, %v3222
      %v3474 = vpack.c.b16 %v3225, %v3224
      %v3475 = vpack.c.b16 %v3227, %v3226
      %v3476 = vpack.c.b16 %v3229, %v3228
      %v3477 = vpack.c.b16 %v3231, %v3230
      %v3478 = vpack.c.b16 %v3233, %v3232
      %v3479 = vpack.c.b16 %v3235, %v3234
      %v3480 = vpack.c.b16 %v3237, %v3236
      %v3481 = vpack.c.b16 %v3239, %v3238
      %v3482 = vpack.c.b16 %v3241, %v3240
      %v3483 = vpack.c.b16 %v3243, %v3242
      %v3484 = vpack.c.b16 %v3245, %v3244
      %v3485 = vpack.c.b16 %v3247, %v3246
      %v3486 = vpack.c.b16 %v3249, %v3248
      %v3487 = vpack.c.b16 %v3251, %v3250
      %v3488 = vpack.c.b16 %v3253, %v3252
      %v3489 = vpack.c.b16 %v3255, %v3254
      %v3490 = vpack.c.b16 %v3257, %v3256
      %v3491 = vpack.c.b16 %v3259, %v3258
      %v3492 = vpack.c.b16 %v3261, %v3260
      %v3493 = vpack.c.b16 %v3263, %v3262
      %v3494 = vpack.c.b16 %v3265, %v3264
      %v3495 = vpack.c.b16 %v3267, %v3266
      %v3496 = vpack.c.b16 %v3269, %v3268
      %v3497 = vpack.c.b16 %v3271, %v3270
      %v3498 = vpack.c.b16 %v3273, %v3272
      %v3499 = vpack.c.b16 %v3275, %v3274
      %v3500 = vpack.c.b16 %v3277, %v3276
      %v3501 = vpack.c.b16 %v3279, %v3278
      %v3502 = vpack.c.b16 %v3281, %v3280
      %v3503 = vpack.c.b16 %v3283, %v3282
      %v3504 = vpack.c.b16 %v3285, %v3284
      %v3505 = vpack.c.b16 %v3287, %v3286
      %v3506 = vpack.c.b16 %v3289, %v3288
      %v3507 = vpack.c.b16 %v3291, %v3290
      %v3508 = vpack.c.b16 %v3293, %v3292
      %v3509 = vpack.c.b16 %v3295, %v3294
      %v3510 = vpack.c.b16 %v3297, %v3296
      %v3511 = vpack.c.b16 %v3299, %v3298
      %v3512 = vpack.c.b16 %v3301, %v3300
      %v3513 = vpack.c.b16 %v3303, %v3302
      %v3514 = vpack.c.b16 %v3305, %v3304
      %v3515 = vpack.c.b16 %v3307, %v3306
      %v3516 = vpack.c.b16 %v3309, %v3308
      %v3517 = vpack.c.b16 %v3311, %v3310
      %v3518 = vpack.c.b16 %v3313, %v3312
      %v3519 = vpack.c.b16 %v3315, %v3314
      %v3520 = vpack.c.b16 %v3317, %v3316
      %v3521 = vpack.c.b16 %v3319, %v3318
      %v3522 = vpack.c.b16 %v3321, %v3320
      %v3523 = vpack.c.b16 %v3323, %v3322
      %v3524 = vpack.c.b16 %v3325, %v3324
      %v3525 = vpack.c.b16 %v3327, %v3326
      %v3526 = vpack.c.b16 %v3329, %v3328
      %v3527 = vpack.c.b16 %v3331, %v3330
      %v3528 = vpack.c.b16 %v3333, %v3332
      %v3529 = vpack.c.b16 %v3335, %v3334
      %v3530 = vpack.c.b16 %v3337, %v3336
      %v3531 = vpack.c.b16 %v3339, %v3338
      %v3532 = vpack.c.b16 %v3341, %v3340
      %v3533 = vpack.c.b16 %v3343, %v3342
      %v3534 = vpack.c.b16 %v3345, %v3344
      %v3535 = vpack.c.b16 %v3347, %v3346
      %v3536 = vpack.c.b16 %v3349, %v3348
      %v3537 = vpack.c.b16 %v3351, %v3350
      %v3538 = vpack.c.b16 %v3353, %v3352
      %v3539 = vpack.c.b16 %v3355, %v3354
      %v3540 = vpack.c.b16 %v3357, %v3356
      %v3541 = vpack.c.b16 %v3359, %v3358
      %v3542 = vpack.c.b16 %v3361, %v3360
      %v3543 = vpack.c.b16 %v3363, %v3362
      %v3544 = vpack.c.b16 %v3365, %v3364
      %v3545 = vpack.c.b16 %v3367, %v3366
      %v3546 = vpack.c.b16 %v3369, %v3368
      %v3547 = vpack.c.b16 %v3371, %v3370
      %v3548 = vpack.c.b16 %v3373, %v3372
      %v3549 = vpack.c.b16 %v3375, %v3374
      %v3550 = vpack.c.b16 %v3377, %v3376
      %v3551 = vpack.c.b16 %v3379, %v3378
      %v3552 = vpack.c.b16 %v3381, %v3380
      %v3553 = vpack.c.b16 %v3383, %v3382
      %v3554 = vpack.c.b16 %v3385, %v3384
      %v3555 = vpack.c.b16 %v3387, %v3386
      %v3556 = vpack.c.b16 %v3389, %v3388
      %v3557 = vpack.c.b16 %v3391, %v3390
      %v3558 = vpack.c.b16 %v3393, %v3392
      %v3559 = vpack.c.b16 %v3395, %v3394
      %v3560 = vpack.c.b16 %v3397, %v3396
      %v3561 = vpack.c.b16 %v3399, %v3398
      %v3562 = vpack.c.b16 %v3401, %v3400
      %v3563 = vpack.c.b16 %v3403, %v3402
      %v3564 = vpack.c.b16 %v3405, %v3404
      %v3565 = vpack.c.b16 %v3407, %v3406
      %v3566 = vpack.c.b16 %v3409, %v3408
      %v3567 = vpack.c.b16 %v3411, %v3410
      %v3568 = vpack.c.b16 %v3413, %v3412
      %v3569 = vpack.c.b16 %v3415, %v3414
      %v3570 = vpack.c.b16 %v3417, %v3416
      %v3571 = vpack.c.b16 %v3419, %v3418
      %v3572 = vpack.c.b16 %v3421, %v3420
      %v3573 = vpack.c.b16 %v3423, %v3422
      %v3574 = vpack.c.b16 %v3425, %v3424
      %v3575 = vpack.c.b16 %v3427, %v3426
      %v3576 = vpack.c.b16 %v3429, %v3428
      %v3577 = vpack.c.b16 %v3431, %v3430
      %v3578 = vpack.c.b16 %v3433, %v3432
      %v3579 = vpack.c.b16 %v3435, %v3434
      %v3580 = vpack.c.b16 %v3437, %v3436
      %v3581 = vpack.c.b16 %v3439, %v3438
      %v3582 = vpack.c.b16 %v3441, %v3440
      %v3583 = vpack.c.b16 %v3443, %v3442
      %v3584 = vpack.c.b16 %v3445, %v3444
      %v3585 = vpack.c.b16 %v3447, %v3446
      %v3586 = vpack.c.b16 %v3449, %v3448
      %v3587 = vpack.c.b16 %v3451, %v3450
      %v3588 = vpack.c.b16 %v3453, %v3452
      %v3589 = vpack.c.b16 %v3455, %v3454
      %v3590 = vpack.c.b16 %v3457, %v3456
      %v3591 = vpack.c.b16 %v3459, %v3458
      %v3592 = vpack.c.b16 %v3461, %v3460
      %v3593 = vpack.c.b16 %v3463, %v3462
      %v3594 = vpack.c.b16 %v3465, %v3464
      %v3595 = vpack.c.b16 %v3467, %v3466
      %v3598 = vunpack.c.l.b16 %v3210
      %v3599 = vunpack.c.l.b16 %v3211
      %v3600 = vpack.c.b16 %v3599, %v3598
      %vm3601 = vcmask 97280
      %v3603 = vsel %vm3601, %v3468, 0
      %v3606 = vsel %vm3601, %v3469, 0
      %v3609 = vsel %vm3601, %v3470, 0
      %v3612 = vsel %vm3601, %v3471, 0
      %v3615 = vsel %vm3601, %v3472, 0
      %v3618 = vsel %vm3601, %v3473, 0
      %v3621 = vsel %vm3601, %v3474, 0
      %v3624 = vsel %vm3601, %v3475, 0
      %v3627 = vsel %vm3601, %v3476, 0
      %v3630 = vsel %vm3601, %v3477, 0
      %v3633 = vsel %vm3601, %v3478, 0
      %v3636 = vsel %vm3601, %v3479, 0
      %v3639 = vsel %vm3601, %v3480, 0
      %v3642 = vsel %vm3601, %v3481, 0
      %v3645 = vsel %vm3601, %v3482, 0
      %v3648 = vsel %vm3601, %v3483, 0
      %v3651 = vsel %vm3601, %v3484, 0
      %v3654 = vsel %vm3601, %v3485, 0
      %v3657 = vsel %vm3601, %v3486, 0
      %v3660 = vsel %vm3601, %v3487, 0
      %v3663 = vsel %vm3601, %v3488, 0
      %v3666 = vsel %vm3601, %v3489, 0
      %v3669 = vsel %vm3601, %v3490, 0
      %v3672 = vsel %vm3601, %v3491, 0
      %v3675 = vsel %vm3601, %v3492, 0
      %v3678 = vsel %vm3601, %v3493, 0
      %v3681 = vsel %vm3601, %v3494, 0
      %v3684 = vsel %vm3601, %v3495, 0
      %v3687 = vsel %vm3601, %v3496, 0
      %v3690 = vsel %vm3601, %v3497, 0
      %v3693 = vsel %vm3601, %v3498, 0
      %v3696 = vsel %vm3601, %v3499, 0
      %v3699 = vsel %vm3601, %v3500, 0
      %v3702 = vsel %vm3601, %v3501, 0
      %v3705 = vsel %vm3601, %v3502, 0
      %v3708 = vsel %vm3601, %v3503, 0
      %v3711 = vsel %vm3601, %v3504, 0
      %v3714 = vsel %vm3601, %v3505, 0
      %v3717 = vsel %vm3601, %v3506, 0
      %v3720 = vsel %vm3601, %v3507, 0
      %v3723 = vsel %vm3601, %v3508, 0
      %v3726 = vsel %vm3601, %v3509, 0
      %v3729 = vsel %vm3601, %v3510, 0
      %v3732 = vsel %vm3601, %v3511, 0
      %v3735 = vsel %vm3601, %v3512, 0
      %v3738 = vsel %vm3601, %v3513, 0
      %v3741 = vsel %vm3601, %v3514, 0
      %v3744 = vsel %vm3601, %v3515, 0
      %v3747 = vsel %vm3601, %v3516, 0
      %v3750 = vsel %vm3601, %v3517, 0
      %v3753 = vsel %vm3601, %v3518, 0
      %v3756 = vsel %vm3601, %v3519, 0
      %v3759 = vsel %vm3601, %v3520, 0
      %v3762 = vsel %vm3601, %v3521, 0
      %v3765 = vsel %vm3601, %v3522, 0
      %v3768 = vsel %vm3601, %v3523, 0
      %v3771 = vsel %vm3601, %v3524, 0
      %v3774 = vsel %vm3601, %v3525, 0
      %v3777 = vsel %vm3601, %v3526, 0
      %v3780 = vsel %vm3601, %v3527, 0
      %v3783 = vsel %vm3601, %v3528, 0
      %v3786 = vsel %vm3601, %v3529, 0
      %v3789 = vsel %vm3601, %v3530, 0
      %v3792 = vsel %vm3601, %v3531, 0
      %v3795 = vsel %vm3601, %v3532, 0
      %v3798 = vsel %vm3601, %v3533, 0
      %v3801 = vsel %vm3601, %v3534, 0
      %v3804 = vsel %vm3601, %v3535, 0
      %v3807 = vsel %vm3601, %v3536, 0
      %v3810 = vsel %vm3601, %v3537, 0
      %v3813 = vsel %vm3601, %v3538, 0
      %v3816 = vsel %vm3601, %v3539, 0
      %v3819 = vsel %vm3601, %v3540, 0
      %v3822 = vsel %vm3601, %v3541, 0
      %v3825 = vsel %vm3601, %v3542, 0
      %v3828 = vsel %vm3601, %v3543, 0
      %v3831 = vsel %vm3601, %v3544, 0
      %v3834 = vsel %vm3601, %v3545, 0
      %v3837 = vsel %vm3601, %v3546, 0
      %v3840 = vsel %vm3601, %v3547, 0
      %v3843 = vsel %vm3601, %v3548, 0
      %v3846 = vsel %vm3601, %v3549, 0
      %v3849 = vsel %vm3601, %v3550, 0
      %v3852 = vsel %vm3601, %v3551, 0
      %v3855 = vsel %vm3601, %v3552, 0
      %v3858 = vsel %vm3601, %v3553, 0
      %v3861 = vsel %vm3601, %v3554, 0
      %v3864 = vsel %vm3601, %v3555, 0
      %v3867 = vsel %vm3601, %v3556, 0
      %v3870 = vsel %vm3601, %v3557, 0
      %v3873 = vsel %vm3601, %v3558, 0
      %v3876 = vsel %vm3601, %v3559, 0
      %v3879 = vsel %vm3601, %v3560, 0
      %v3882 = vsel %vm3601, %v3561, 0
      %v3885 = vsel %vm3601, %v3562, 0
      %v3888 = vsel %vm3601, %v3563, 0
      %v3891 = vsel %vm3601, %v3564, 0
      %v3894 = vsel %vm3601, %v3565, 0
      %v3897 = vsel %vm3601, %v3566, 0
      %v3900 = vsel %vm3601, %v3567, 0
      %v3903 = vsel %vm3601, %v3568, 0
      %v3906 = vsel %vm3601, %v3569, 0
      %v3909 = vsel %vm3601, %v3570, 0
      %v3912 = vsel %vm3601, %v3571, 0
      %v3915 = vsel %vm3601, %v3572, 0
      %v3918 = vsel %vm3601, %v3573, 0
      %v3921 = vsel %vm3601, %v3574, 0
      %v3924 = vsel %vm3601, %v3575, 0
      %v3927 = vsel %vm3601, %v3576, 0
      %v3930 = vsel %vm3601, %v3577, 0
      %v3933 = vsel %vm3601, %v3578, 0
      %v3936 = vsel %vm3601, %v3579, 0
      %v3939 = vsel %vm3601, %v3580, 0
      %v3942 = vsel %vm3601, %v3581, 0
      %v3945 = vsel %vm3601, %v3582, 0
      %v3948 = vsel %vm3601, %v3583, 0
      %v3951 = vsel %vm3601, %v3584, 0
      %v3954 = vsel %vm3601, %v3585, 0
      %v3957 = vsel %vm3601, %v3586, 0
      %v3960 = vsel %vm3601, %v3587, 0
      %v3963 = vsel %vm3601, %v3588, 0
      %v3966 = vsel %vm3601, %v3589, 0
      %v3969 = vsel %vm3601, %v3590, 0
      %v3972 = vsel %vm3601, %v3591, 0
      %v3975 = vsel %vm3601, %v3592, 0
      %v3978 = vsel %vm3601, %v3593, 0
      %v3981 = vsel %vm3601, %v3594, 0
      %v3984 = vsel %vm3601, %v3595, 0
      %vm3986 = vcmask 1045504
      %v3988 = vsel %vm3986, %v3600, 0
      %3990 = vmatprep.subr.bf16.mxu0 0
      %3991 = vmatpush1.bf16.msra.mxu0 %v3988
      %3992 = vmatprep.subr.bf16.mxu0 0
      %3993 = vmatpush1.bf16.msra.mxu0 0
      %3994 = vmatprep.subr.bf16.mxu0 0
      %3995 = vmatpush1.bf16.msra.mxu0 0
      %3996 = vmatprep.subr.bf16.mxu0 0
      %3997 = vmatpush1.bf16.msra.mxu0 0
      %3998 = vmatprep.subr.bf16.mxu0 0
      %3999 = vmatpush1.bf16.msra.mxu0 0
      %4000 = vmatprep.subr.bf16.mxu0 0
      %4001 = vmatpush1.bf16.msra.mxu0 0
      %4002 = vmatprep.subr.bf16.mxu0 0
      %4003 = vmatpush1.bf16.msra.mxu0 0
      %4004 = vmatprep.subr.bf16.mxu0 0
      %4005 = vmatpush1.bf16.msra.mxu0 0
      %4006 = vmatprep.subr.bf16.mxu0 0
      %4007 = vmatpush1.bf16.msra.mxu0 0
      %4008 = vmatprep.subr.bf16.mxu0 0
      %4009 = vmatpush1.bf16.msra.mxu0 0
      %4010 = vmatprep.subr.bf16.mxu0 0
      %4011 = vmatpush1.bf16.msra.mxu0 0
      %4012 = vmatprep.subr.bf16.mxu0 0
      %4013 = vmatpush1.bf16.msra.mxu0 0
      %4014 = vmatprep.subr.bf16.mxu0 0
      %4015 = vmatpush1.bf16.msra.mxu0 0
      %4016 = vmatprep.subr.bf16.mxu0 0
      %4017 = vmatpush1.bf16.msra.mxu0 0
      %4018 = vmatprep.subr.bf16.mxu0 0
      %4019 = vmatpush1.bf16.msra.mxu0 0
      %4020 = vmatprep.subr.bf16.mxu0 0
      %4021 = vmatpush1.bf16.msra.mxu0 0
      %4022 = vmatprep.mubr.bf16.mxu0 0
      %4023 = vmatmul.mubr.bf16.gmra.mrb[0].mxu0 %v3603
      %v4024 = vpop.f32.mrb[0].mxu0
      %v4025 = vadd.f32 0.0, %v4024
      %v4026 = vpop.f32.mrb[0].mxu0
      %v4027 = vpop.f32.mrb[0].mxu0
      %v4028 = vadd.f32 0.0, %v4027
      %v4029 = vpop.f32.mrb[0].mxu0
      %4030 = vmatprep.mubr.bf16.mxu0 0
      %4031 = vmatmul.mubr.bf16.gmra.mrb[0].mxu0 %v3606
      %v4032 = vpop.f32.mrb[0].mxu0
      %v4033 = vadd.f32 0.0, %v4032
      %v4034 = vpop.f32.mrb[0].mxu0
      %v4035 = vpop.f32.mrb[0].mxu0
      %v4036 = vadd.f32 0.0, %v4035
      %v4037 = vpop.f32.mrb[0].mxu0
      %4038 = vmatprep.mubr.bf16.mxu0 0
      %4039 = vmatmul.mubr.bf16.gmra.mrb[0].mxu0 %v3609
      %v4040 = vpop.f32.mrb[0].mxu0
      %v4041 = vadd.f32 0.0, %v4040
      %v4042 = vpop.f32.mrb[0].mxu0
      %v4043 = vpop.f32.mrb[0].mxu0
      %v4044 = vadd.f32 0.0, %v4043
      %v4045 = vpop.f32.mrb[0].mxu0
      %4046 = vmatprep.mubr.bf16.mxu0 0
      %4047 = vmatmul.mubr.bf16.gmra.mrb[0].mxu0 %v3612
      %v4048 = vpop.f32.mrb[0].mxu0
      %v4049 = vadd.f32 0.0, %v4048
      %v4050 = vpop.f32.mrb[0].mxu0
      %v4051 = vpop.f32.mrb[0].mxu0
      %v4052 = vadd.f32 0.0, %v4051
      %v4053 = vpop.f32.mrb[0].mxu0
      %4054 = vmatprep.mubr.bf16.mxu0 0
      %4055 = vmatmul.mubr.bf16.gmra.mrb[0].mxu0 %v3615
      %v4056 = vpop.f32.mrb[0].mxu0
      %v4057 = vadd.f32 0.0, %v4056
      %v4058 = vpop.f32.mrb[0].mxu0
      %v4059 = vpop.f32.mrb[0].mxu0
      %v4060 = vadd.f32 0.0, %v4059
      %v4061 = vpop.f32.mrb[0].mxu0
      %4062 = vmatprep.mubr.bf16.mxu0 0
      %4063 = vmatmul.mubr.bf16.gmra.mrb[0].mxu0 %v3618
      %v4064 = vpop.f32.mrb[0].mxu0
      %v4065 = vadd.f32 0.0, %v4064
      %v4066 = vpop.f32.mrb[0].mxu0
      %v4067 = vpop.f32.mrb[0].mxu0
      %v4068 = vadd.f32 0.0, %v4067
      %v4069 = vpop.f32.mrb[0].mxu0
      %4070 = vmatprep.mubr.bf16.mxu0 0
      %4071 = vmatmul.mubr.bf16.gmra.mrb[0].mxu0 %v3621
      %v4072 = vpop.f32.mrb[0].mxu0
      %v4073 = vadd.f32 0.0, %v4072
      %v4074 = vpop.f32.mrb[0].mxu0
      %v4075 = vpop.f32.mrb[0].mxu0
      %v4076 = vadd.f32 0.0, %v4075
      %v4077 = vpop.f32.mrb[0].mxu0
      %4078 = vmatprep.mubr.bf16.mxu0 0
      %4079 = vmatmul.mubr.bf16.gmra.mrb[0].mxu0 %v3624
      %v4080 = vpop.f32.mrb[0].mxu0
      %v4081 = vadd.f32 0.0, %v4080
      %v4082 = vpop.f32.mrb[0].mxu0
      %v4083 = vpop.f32.mrb[0].mxu0
      %v4084 = vadd.f32 0.0, %v4083
      %v4085 = vpop.f32.mrb[0].mxu0
      %4086 = vmatprep.mubr.bf16.mxu0 0
      %4087 = vmatmul.mubr.bf16.gmra.mrb[0].mxu0 %v3627
      %v4088 = vpop.f32.mrb[0].mxu0
      %v4089 = vadd.f32 0.0, %v4088
      %v4090 = vpop.f32.mrb[0].mxu0
      %v4091 = vpop.f32.mrb[0].mxu0
      %v4092 = vadd.f32 0.0, %v4091
      %v4093 = vpop.f32.mrb[0].mxu0
      %4094 = vmatprep.mubr.bf16.mxu0 0
      %4095 = vmatmul.mubr.bf16.gmra.mrb[0].mxu0 %v3630
      %v4096 = vpop.f32.mrb[0].mxu0
      %v4097 = vadd.f32 0.0, %v4096
      %v4098 = vpop.f32.mrb[0].mxu0
      %v4099 = vpop.f32.mrb[0].mxu0
      %v4100 = vadd.f32 0.0, %v4099
      %v4101 = vpop.f32.mrb[0].mxu0
      %4102 = vmatprep.mubr.bf16.mxu0 0
      %4103 = vmatmul.mubr.bf16.gmra.mrb[0].mxu0 %v3633
      %v4104 = vpop.f32.mrb[0].mxu0
      %v4105 = vadd.f32 0.0, %v4104
      %v4106 = vpop.f32.mrb[0].mxu0
      %v4107 = vpop.f32.mrb[0].mxu0
      %v4108 = vadd.f32 0.0, %v4107
      %v4109 = vpop.f32.mrb[0].mxu0
      %4110 = vmatprep.mubr.bf16.mxu0 0
      %4111 = vmatmul.mubr.bf16.gmra.mrb[0].mxu0 %v3636
      %v4112 = vpop.f32.mrb[0].mxu0
      %v4113 = vadd.f32 0.0, %v4112
      %v4114 = vpop.f32.mrb[0].mxu0
      %v4115 = vpop.f32.mrb[0].mxu0
      %v4116 = vadd.f32 0.0, %v4115
      %v4117 = vpop.f32.mrb[0].mxu0
      %4118 = vmatprep.mubr.bf16.mxu0 0
      %4119 = vmatmul.mubr.bf16.gmra.mrb[0].mxu0 %v3639
      %v4120 = vpop.f32.mrb[0].mxu0
      %v4121 = vadd.f32 0.0, %v4120
      %v4122 = vpop.f32.mrb[0].mxu0
      %v4123 = vpop.f32.mrb[0].mxu0
      %v4124 = vadd.f32 0.0, %v4123
      %v4125 = vpop.f32.mrb[0].mxu0
      %4126 = vmatprep.mubr.bf16.mxu0 0
      %4127 = vmatmul.mubr.bf16.gmra.mrb[0].mxu0 %v3642
      %v4128 = vpop.f32.mrb[0].mxu0
      %v4129 = vadd.f32 0.0, %v4128
      %v4130 = vpop.f32.mrb[0].mxu0
      %v4131 = vpop.f32.mrb[0].mxu0
      %v4132 = vadd.f32 0.0, %v4131
      %v4133 = vpop.f32.mrb[0].mxu0
      %4134 = vmatprep.mubr.bf16.mxu0 0
      %4135 = vmatmul.mubr.bf16.gmra.mrb[0].mxu0 %v3645
      %v4136 = vpop.f32.mrb[0].mxu0
      %v4137 = vadd.f32 0.0, %v4136
      %v4138 = vpop.f32.mrb[0].mxu0
      %v4139 = vpop.f32.mrb[0].mxu0
      %v4140 = vadd.f32 0.0, %v4139
      %v4141 = vpop.f32.mrb[0].mxu0
      %4142 = vmatprep.mubr.bf16.mxu0 0
      %4143 = vmatmul.mubr.bf16.gmra.mrb[0].mxu0 %v3648
      %v4144 = vpop.f32.mrb[0].mxu0
      %v4145 = vadd.f32 0.0, %v4144
      %v4146 = vpop.f32.mrb[0].mxu0
      %v4147 = vpop.f32.mrb[0].mxu0
      %v4148 = vadd.f32 0.0, %v4147
      %v4149 = vpop.f32.mrb[0].mxu0
      %4150 = vmatprep.mubr.bf16.mxu0 0
      %4151 = vmatmul.mubr.bf16.gmra.mrb[0].mxu0 %v3651
      %v4152 = vpop.f32.mrb[0].mxu0
      %v4153 = vadd.f32 0.0, %v4152
      %v4154 = vpop.f32.mrb[0].mxu0
      %v4155 = vpop.f32.mrb[0].mxu0
      %v4156 = vadd.f32 0.0, %v4155
      %v4157 = vpop.f32.mrb[0].mxu0
      %4158 = vmatprep.mubr.bf16.mxu0 0
      %4159 = vmatmul.mubr.bf16.gmra.mrb[0].mxu0 %v3654
      %v4160 = vpop.f32.mrb[0].mxu0
      %v4161 = vadd.f32 0.0, %v4160
      %v4162 = vpop.f32.mrb[0].mxu0
      %v4163 = vpop.f32.mrb[0].mxu0
      %v4164 = vadd.f32 0.0, %v4163
      %v4165 = vpop.f32.mrb[0].mxu0
      %4166 = vmatprep.mubr.bf16.mxu0 0
      %4167 = vmatmul.mubr.bf16.gmra.mrb[0].mxu0 %v3657
      %v4168 = vpop.f32.mrb[0].mxu0
      %v4169 = vadd.f32 0.0, %v4168
      %v4170 = vpop.f32.mrb[0].mxu0
      %v4171 = vpop.f32.mrb[0].mxu0
      %v4172 = vadd.f32 0.0, %v4171
      %v4173 = vpop.f32.mrb[0].mxu0
      %4174 = vmatprep.mubr.bf16.mxu0 0
      %4175 = vmatmul.mubr.bf16.gmra.mrb[0].mxu0 %v3660
      %v4176 = vpop.f32.mrb[0].mxu0
      %v4177 = vadd.f32 0.0, %v4176
      %v4178 = vpop.f32.mrb[0].mxu0
      %v4179 = vpop.f32.mrb[0].mxu0
      %v4180 = vadd.f32 0.0, %v4179
      %v4181 = vpop.f32.mrb[0].mxu0
      %4182 = vmatprep.mubr.bf16.mxu0 0
      %4183 = vmatmul.mubr.bf16.gmra.mrb[0].mxu0 %v3663
      %v4184 = vpop.f32.mrb[0].mxu0
      %v4185 = vadd.f32 0.0, %v4184
      %v4186 = vpop.f32.mrb[0].mxu0
      %v4187 = vpop.f32.mrb[0].mxu0
      %v4188 = vadd.f32 0.0, %v4187
      %v4189 = vpop.f32.mrb[0].mxu0
      %4190 = vmatprep.mubr.bf16.mxu0 0
      %4191 = vmatmul.mubr.bf16.gmra.mrb[0].mxu0 %v3666
      %v4192 = vpop.f32.mrb[0].mxu0
      %v4193 = vadd.f32 0.0, %v4192
      %v4194 = vpop.f32.mrb[0].mxu0
      %v4195 = vpop.f32.mrb[0].mxu0
      %v4196 = vadd.f32 0.0, %v4195
      %v4197 = vpop.f32.mrb[0].mxu0
      %4198 = vmatprep.mubr.bf16.mxu0 0
      %4199 = vmatmul.mubr.bf16.gmra.mrb[0].mxu0 %v3669
      %v4200 = vpop.f32.mrb[0].mxu0
      %v4201 = vadd.f32 0.0, %v4200
      %v4202 = vpop.f32.mrb[0].mxu0
      %v4203 = vpop.f32.mrb[0].mxu0
      %v4204 = vadd.f32 0.0, %v4203
      %v4205 = vpop.f32.mrb[0].mxu0
      %4206 = vmatprep.mubr.bf16.mxu0 0
      %4207 = vmatmul.mubr.bf16.gmra.mrb[0].mxu0 %v3672
      %v4208 = vpop.f32.mrb[0].mxu0
      %v4209 = vadd.f32 0.0, %v4208
      %v4210 = vpop.f32.mrb[0].mxu0
      %v4211 = vpop.f32.mrb[0].mxu0
      %v4212 = vadd.f32 0.0, %v4211
      %v4213 = vpop.f32.mrb[0].mxu0
      %4214 = vmatprep.mubr.bf16.mxu0 0
      %4215 = vmatmul.mubr.bf16.gmra.mrb[0].mxu0 %v3675
      %v4216 = vpop.f32.mrb[0].mxu0
      %v4217 = vadd.f32 0.0, %v4216
      %v4218 = vpop.f32.mrb[0].mxu0
      %v4219 = vpop.f32.mrb[0].mxu0
      %v4220 = vadd.f32 0.0, %v4219
      %v4221 = vpop.f32.mrb[0].mxu0
      %4222 = vmatprep.mubr.bf16.mxu0 0
      %4223 = vmatmul.mubr.bf16.gmra.mrb[0].mxu0 %v3678
      %v4224 = vpop.f32.mrb[0].mxu0
      %v4225 = vadd.f32 0.0, %v4224
      %v4226 = vpop.f32.mrb[0].mxu0
      %v4227 = vpop.f32.mrb[0].mxu0
      %v4228 = vadd.f32 0.0, %v4227
      %v4229 = vpop.f32.mrb[0].mxu0
      %4230 = vmatprep.mubr.bf16.mxu0 0
      %4231 = vmatmul.mubr.bf16.gmra.mrb[0].mxu0 %v3681
      %v4232 = vpop.f32.mrb[0].mxu0
      %v4233 = vadd.f32 0.0, %v4232
      %v4234 = vpop.f32.mrb[0].mxu0
      %v4235 = vpop.f32.mrb[0].mxu0
      %v4236 = vadd.f32 0.0, %v4235
      %v4237 = vpop.f32.mrb[0].mxu0
      %4238 = vmatprep.mubr.bf16.mxu0 0
      %4239 = vmatmul.mubr.bf16.gmra.mrb[0].mxu0 %v3684
      %v4240 = vpop.f32.mrb[0].mxu0
      %v4241 = vadd.f32 0.0, %v4240
      %v4242 = vpop.f32.mrb[0].mxu0
      %v4243 = vpop.f32.mrb[0].mxu0
      %v4244 = vadd.f32 0.0, %v4243
      %v4245 = vpop.f32.mrb[0].mxu0
      %4246 = vmatprep.mubr.bf16.mxu0 0
      %4247 = vmatmul.mubr.bf16.gmra.mrb[0].mxu0 %v3687
      %v4248 = vpop.f32.mrb[0].mxu0
      %v4249 = vadd.f32 0.0, %v4248
      %v4250 = vpop.f32.mrb[0].mxu0
      %v4251 = vpop.f32.mrb[0].mxu0
      %v4252 = vadd.f32 0.0, %v4251
      %v4253 = vpop.f32.mrb[0].mxu0
      %4254 = vmatprep.mubr.bf16.mxu0 0
      %4255 = vmatmul.mubr.bf16.gmra.mrb[0].mxu0 %v3690
      %v4256 = vpop.f32.mrb[0].mxu0
      %v4257 = vadd.f32 0.0, %v4256
      %v4258 = vpop.f32.mrb[0].mxu0
      %v4259 = vpop.f32.mrb[0].mxu0
      %v4260 = vadd.f32 0.0, %v4259
      %v4261 = vpop.f32.mrb[0].mxu0
      %4262 = vmatprep.mubr.bf16.mxu0 0
      %4263 = vmatmul.mubr.bf16.gmra.mrb[0].mxu0 %v3693
      %v4264 = vpop.f32.mrb[0].mxu0
      %v4265 = vadd.f32 0.0, %v4264
      %v4266 = vpop.f32.mrb[0].mxu0
      %v4267 = vpop.f32.mrb[0].mxu0
      %v4268 = vadd.f32 0.0, %v4267
      %v4269 = vpop.f32.mrb[0].mxu0
      %4270 = vmatprep.mubr.bf16.mxu0 0
      %4271 = vmatmul.mubr.bf16.gmra.mrb[0].mxu0 %v3696
      %v4272 = vpop.f32.mrb[0].mxu0
      %v4273 = vadd.f32 0.0, %v4272
      %v4274 = vpop.f32.mrb[0].mxu0
      %v4275 = vpop.f32.mrb[0].mxu0
      %v4276 = vadd.f32 0.0, %v4275
      %v4277 = vpop.f32.mrb[0].mxu0
      %4278 = vmatprep.mubr.bf16.mxu0 0
      %4279 = vmatmul.mubr.bf16.gmra.mrb[0].mxu0 %v3699
      %v4280 = vpop.f32.mrb[0].mxu0
      %v4281 = vadd.f32 0.0, %v4280
      %v4282 = vpop.f32.mrb[0].mxu0
      %v4283 = vpop.f32.mrb[0].mxu0
      %v4284 = vadd.f32 0.0, %v4283
      %v4285 = vpop.f32.mrb[0].mxu0
      %4286 = vmatprep.mubr.bf16.mxu0 0
      %4287 = vmatmul.mubr.bf16.gmra.mrb[0].mxu0 %v3702
      %v4288 = vpop.f32.mrb[0].mxu0
      %v4289 = vadd.f32 0.0, %v4288
      %v4290 = vpop.f32.mrb[0].mxu0
      %v4291 = vpop.f32.mrb[0].mxu0
      %v4292 = vadd.f32 0.0, %v4291
      %v4293 = vpop.f32.mrb[0].mxu0
      %4294 = vmatprep.mubr.bf16.mxu0 0
      %4295 = vmatmul.mubr.bf16.gmra.mrb[0].mxu0 %v3705
      %v4296 = vpop.f32.mrb[0].mxu0
      %v4297 = vadd.f32 0.0, %v4296
      %v4298 = vpop.f32.mrb[0].mxu0
      %v4299 = vpop.f32.mrb[0].mxu0
      %v4300 = vadd.f32 0.0, %v4299
      %v4301 = vpop.f32.mrb[0].mxu0
      %4302 = vmatprep.mubr.bf16.mxu0 0
      %4303 = vmatmul.mubr.bf16.gmra.mrb[0].mxu0 %v3708
      %v4304 = vpop.f32.mrb[0].mxu0
      %v4305 = vadd.f32 0.0, %v4304
      %v4306 = vpop.f32.mrb[0].mxu0
      %v4307 = vpop.f32.mrb[0].mxu0
      %v4308 = vadd.f32 0.0, %v4307
      %v4309 = vpop.f32.mrb[0].mxu0
      %4310 = vmatprep.mubr.bf16.mxu0 0
      %4311 = vmatmul.mubr.bf16.gmra.mrb[0].mxu0 %v3711
      %v4312 = vpop.f32.mrb[0].mxu0
      %v4313 = vadd.f32 0.0, %v4312
      %v4314 = vpop.f32.mrb[0].mxu0
      %v4315 = vpop.f32.mrb[0].mxu0
      %v4316 = vadd.f32 0.0, %v4315
      %v4317 = vpop.f32.mrb[0].mxu0
      %4318 = vmatprep.mubr.bf16.mxu0 0
      %4319 = vmatmul.mubr.bf16.gmra.mrb[0].mxu0 %v3714
      %v4320 = vpop.f32.mrb[0].mxu0
      %v4321 = vadd.f32 0.0, %v4320
      %v4322 = vpop.f32.mrb[0].mxu0
      %v4323 = vpop.f32.mrb[0].mxu0
      %v4324 = vadd.f32 0.0, %v4323
      %v4325 = vpop.f32.mrb[0].mxu0
      %4326 = vmatprep.mubr.bf16.mxu0 0
      %4327 = vmatmul.mubr.bf16.gmra.mrb[0].mxu0 %v3717
      %v4328 = vpop.f32.mrb[0].mxu0
      %v4329 = vadd.f32 0.0, %v4328
      %v4330 = vpop.f32.mrb[0].mxu0
      %v4331 = vpop.f32.mrb[0].mxu0
      %v4332 = vadd.f32 0.0, %v4331
      %v4333 = vpop.f32.mrb[0].mxu0
      %4334 = vmatprep.mubr.bf16.mxu0 0
      %4335 = vmatmul.mubr.bf16.gmra.mrb[0].mxu0 %v3720
      %v4336 = vpop.f32.mrb[0].mxu0
      %v4337 = vadd.f32 0.0, %v4336
      %v4338 = vpop.f32.mrb[0].mxu0
      %v4339 = vpop.f32.mrb[0].mxu0
      %v4340 = vadd.f32 0.0, %v4339
      %v4341 = vpop.f32.mrb[0].mxu0
      %4342 = vmatprep.mubr.bf16.mxu0 0
      %4343 = vmatmul.mubr.bf16.gmra.mrb[0].mxu0 %v3723
      %v4344 = vpop.f32.mrb[0].mxu0
      %v4345 = vadd.f32 0.0, %v4344
      %v4346 = vpop.f32.mrb[0].mxu0
      %v4347 = vpop.f32.mrb[0].mxu0
      %v4348 = vadd.f32 0.0, %v4347
      %v4349 = vpop.f32.mrb[0].mxu0
      %4350 = vmatprep.mubr.bf16.mxu0 0
      %4351 = vmatmul.mubr.bf16.gmra.mrb[0].mxu0 %v3726
      %v4352 = vpop.f32.mrb[0].mxu0
      %v4353 = vadd.f32 0.0, %v4352
      %v4354 = vpop.f32.mrb[0].mxu0
      %v4355 = vpop.f32.mrb[0].mxu0
      %v4356 = vadd.f32 0.0, %v4355
      %v4357 = vpop.f32.mrb[0].mxu0
      %4358 = vmatprep.mubr.bf16.mxu0 0
      %4359 = vmatmul.mubr.bf16.gmra.mrb[0].mxu0 %v3729
      %v4360 = vpop.f32.mrb[0].mxu0
      %v4361 = vadd.f32 0.0, %v4360
      %v4362 = vpop.f32.mrb[0].mxu0
      %v4363 = vpop.f32.mrb[0].mxu0
      %v4364 = vadd.f32 0.0, %v4363
      %v4365 = vpop.f32.mrb[0].mxu0
      %4366 = vmatprep.mubr.bf16.mxu0 0
      %4367 = vmatmul.mubr.bf16.gmra.mrb[0].mxu0 %v3732
      %v4368 = vpop.f32.mrb[0].mxu0
      %v4369 = vadd.f32 0.0, %v4368
      %v4370 = vpop.f32.mrb[0].mxu0
      %v4371 = vpop.f32.mrb[0].mxu0
      %v4372 = vadd.f32 0.0, %v4371
      %v4373 = vpop.f32.mrb[0].mxu0
      %4374 = vmatprep.mubr.bf16.mxu0 0
      %4375 = vmatmul.mubr.bf16.gmra.mrb[0].mxu0 %v3735
      %v4376 = vpop.f32.mrb[0].mxu0
      %v4377 = vadd.f32 0.0, %v4376
      %v4378 = vpop.f32.mrb[0].mxu0
      %v4379 = vpop.f32.mrb[0].mxu0
      %v4380 = vadd.f32 0.0, %v4379
      %v4381 = vpop.f32.mrb[0].mxu0
      %4382 = vmatprep.mubr.bf16.mxu0 0
      %4383 = vmatmul.mubr.bf16.gmra.mrb[0].mxu0 %v3738
      %v4384 = vpop.f32.mrb[0].mxu0
      %v4385 = vadd.f32 0.0, %v4384
      %v4386 = vpop.f32.mrb[0].mxu0
      %v4387 = vpop.f32.mrb[0].mxu0
      %v4388 = vadd.f32 0.0, %v4387
      %v4389 = vpop.f32.mrb[0].mxu0
      %4390 = vmatprep.mubr.bf16.mxu0 0
      %4391 = vmatmul.mubr.bf16.gmra.mrb[0].mxu0 %v3741
      %v4392 = vpop.f32.mrb[0].mxu0
      %v4393 = vadd.f32 0.0, %v4392
      %v4394 = vpop.f32.mrb[0].mxu0
      %v4395 = vpop.f32.mrb[0].mxu0
      %v4396 = vadd.f32 0.0, %v4395
      %v4397 = vpop.f32.mrb[0].mxu0
      %4398 = vmatprep.mubr.bf16.mxu0 0
      %4399 = vmatmul.mubr.bf16.gmra.mrb[0].mxu0 %v3744
      %v4400 = vpop.f32.mrb[0].mxu0
      %v4401 = vadd.f32 0.0, %v4400
      %v4402 = vpop.f32.mrb[0].mxu0
      %v4403 = vpop.f32.mrb[0].mxu0
      %v4404 = vadd.f32 0.0, %v4403
      %v4405 = vpop.f32.mrb[0].mxu0
      %4406 = vmatprep.mubr.bf16.mxu0 0
      %4407 = vmatmul.mubr.bf16.gmra.mrb[0].mxu0 %v3747
      %v4408 = vpop.f32.mrb[0].mxu0
      %v4409 = vadd.f32 0.0, %v4408
      %v4410 = vpop.f32.mrb[0].mxu0
      %v4411 = vpop.f32.mrb[0].mxu0
      %v4412 = vadd.f32 0.0, %v4411
      %v4413 = vpop.f32.mrb[0].mxu0
      %4414 = vmatprep.mubr.bf16.mxu0 0
      %4415 = vmatmul.mubr.bf16.gmra.mrb[0].mxu0 %v3750
      %v4416 = vpop.f32.mrb[0].mxu0
      %v4417 = vadd.f32 0.0, %v4416
      %v4418 = vpop.f32.mrb[0].mxu0
      %v4419 = vpop.f32.mrb[0].mxu0
      %v4420 = vadd.f32 0.0, %v4419
      %v4421 = vpop.f32.mrb[0].mxu0
      %4422 = vmatprep.mubr.bf16.mxu0 0
      %4423 = vmatmul.mubr.bf16.gmra.mrb[0].mxu0 %v3753
      %v4424 = vpop.f32.mrb[0].mxu0
      %v4425 = vadd.f32 0.0, %v4424
      %v4426 = vpop.f32.mrb[0].mxu0
      %v4427 = vpop.f32.mrb[0].mxu0
      %v4428 = vadd.f32 0.0, %v4427
      %v4429 = vpop.f32.mrb[0].mxu0
      %4430 = vmatprep.mubr.bf16.mxu0 0
      %4431 = vmatmul.mubr.bf16.gmra.mrb[0].mxu0 %v3756
      %v4432 = vpop.f32.mrb[0].mxu0
      %v4433 = vadd.f32 0.0, %v4432
      %v4434 = vpop.f32.mrb[0].mxu0
      %v4435 = vpop.f32.mrb[0].mxu0
      %v4436 = vadd.f32 0.0, %v4435
      %v4437 = vpop.f32.mrb[0].mxu0
      %4438 = vmatprep.mubr.bf16.mxu0 0
      %4439 = vmatmul.mubr.bf16.gmra.mrb[0].mxu0 %v3759
      %v4440 = vpop.f32.mrb[0].mxu0
      %v4441 = vadd.f32 0.0, %v4440
      %v4442 = vpop.f32.mrb[0].mxu0
      %v4443 = vpop.f32.mrb[0].mxu0
      %v4444 = vadd.f32 0.0, %v4443
      %v4445 = vpop.f32.mrb[0].mxu0
      %4446 = vmatprep.mubr.bf16.mxu0 0
      %4447 = vmatmul.mubr.bf16.gmra.mrb[0].mxu0 %v3762
      %v4448 = vpop.f32.mrb[0].mxu0
      %v4449 = vadd.f32 0.0, %v4448
      %v4450 = vpop.f32.mrb[0].mxu0
      %v4451 = vpop.f32.mrb[0].mxu0
      %v4452 = vadd.f32 0.0, %v4451
      %v4453 = vpop.f32.mrb[0].mxu0
      %4454 = vmatprep.mubr.bf16.mxu0 0
      %4455 = vmatmul.mubr.bf16.gmra.mrb[0].mxu0 %v3765
      %v4456 = vpop.f32.mrb[0].mxu0
      %v4457 = vadd.f32 0.0, %v4456
      %v4458 = vpop.f32.mrb[0].mxu0
      %v4459 = vpop.f32.mrb[0].mxu0
      %v4460 = vadd.f32 0.0, %v4459
      %v4461 = vpop.f32.mrb[0].mxu0
      %4462 = vmatprep.mubr.bf16.mxu0 0
      %4463 = vmatmul.mubr.bf16.gmra.mrb[0].mxu0 %v3768
      %v4464 = vpop.f32.mrb[0].mxu0
      %v4465 = vadd.f32 0.0, %v4464
      %v4466 = vpop.f32.mrb[0].mxu0
      %v4467 = vpop.f32.mrb[0].mxu0
      %v4468 = vadd.f32 0.0, %v4467
      %v4469 = vpop.f32.mrb[0].mxu0
      %4470 = vmatprep.mubr.bf16.mxu0 0
      %4471 = vmatmul.mubr.bf16.gmra.mrb[0].mxu0 %v3771
      %v4472 = vpop.f32.mrb[0].mxu0
      %v4473 = vadd.f32 0.0, %v4472
      %v4474 = vpop.f32.mrb[0].mxu0
      %v4475 = vpop.f32.mrb[0].mxu0
      %v4476 = vadd.f32 0.0, %v4475
      %v4477 = vpop.f32.mrb[0].mxu0
      %4478 = vmatprep.mubr.bf16.mxu0 0
      %4479 = vmatmul.mubr.bf16.gmra.mrb[0].mxu0 %v3774
      %v4480 = vpop.f32.mrb[0].mxu0
      %v4481 = vadd.f32 0.0, %v4480
      %v4482 = vpop.f32.mrb[0].mxu0
      %v4483 = vpop.f32.mrb[0].mxu0
      %v4484 = vadd.f32 0.0, %v4483
      %v4485 = vpop.f32.mrb[0].mxu0
      %4486 = vmatprep.mubr.bf16.mxu0 0
      %4487 = vmatmul.mubr.bf16.gmra.mrb[0].mxu0 %v3777
      %v4488 = vpop.f32.mrb[0].mxu0
      %v4489 = vadd.f32 0.0, %v4488
      %v4490 = vpop.f32.mrb[0].mxu0
      %v4491 = vpop.f32.mrb[0].mxu0
      %v4492 = vadd.f32 0.0, %v4491
      %v4493 = vpop.f32.mrb[0].mxu0
      %4494 = vmatprep.mubr.bf16.mxu0 0
      %4495 = vmatmul.mubr.bf16.gmra.mrb[0].mxu0 %v3780
      %v4496 = vpop.f32.mrb[0].mxu0
      %v4497 = vadd.f32 0.0, %v4496
      %v4498 = vpop.f32.mrb[0].mxu0
      %v4499 = vpop.f32.mrb[0].mxu0
      %v4500 = vadd.f32 0.0, %v4499
      %v4501 = vpop.f32.mrb[0].mxu0
      %4502 = vmatprep.mubr.bf16.mxu0 0
      %4503 = vmatmul.mubr.bf16.gmra.mrb[0].mxu0 %v3783
      %v4504 = vpop.f32.mrb[0].mxu0
      %v4505 = vadd.f32 0.0, %v4504
      %v4506 = vpop.f32.mrb[0].mxu0
      %v4507 = vpop.f32.mrb[0].mxu0
      %v4508 = vadd.f32 0.0, %v4507
      %v4509 = vpop.f32.mrb[0].mxu0
      %4510 = vmatprep.mubr.bf16.mxu0 0
      %4511 = vmatmul.mubr.bf16.gmra.mrb[0].mxu0 %v3786
      %v4512 = vpop.f32.mrb[0].mxu0
      %v4513 = vadd.f32 0.0, %v4512
      %v4514 = vpop.f32.mrb[0].mxu0
      %v4515 = vpop.f32.mrb[0].mxu0
      %v4516 = vadd.f32 0.0, %v4515
      %v4517 = vpop.f32.mrb[0].mxu0
      %4518 = vmatprep.mubr.bf16.mxu0 0
      %4519 = vmatmul.mubr.bf16.gmra.mrb[0].mxu0 %v3789
      %v4520 = vpop.f32.mrb[0].mxu0
      %v4521 = vadd.f32 0.0, %v4520
      %v4522 = vpop.f32.mrb[0].mxu0
      %v4523 = vpop.f32.mrb[0].mxu0
      %v4524 = vadd.f32 0.0, %v4523
      %v4525 = vpop.f32.mrb[0].mxu0
      %4526 = vmatprep.mubr.bf16.mxu0 0
      %4527 = vmatmul.mubr.bf16.gmra.mrb[0].mxu0 %v3792
      %v4528 = vpop.f32.mrb[0].mxu0
      %v4529 = vadd.f32 0.0, %v4528
      %v4530 = vpop.f32.mrb[0].mxu0
      %v4531 = vpop.f32.mrb[0].mxu0
      %v4532 = vadd.f32 0.0, %v4531
      %v4533 = vpop.f32.mrb[0].mxu0
      %4534 = vmatprep.mubr.bf16.mxu0 0
      %4535 = vmatmul.mubr.bf16.gmra.mrb[0].mxu0 %v3795
      %v4536 = vpop.f32.mrb[0].mxu0
      %v4537 = vadd.f32 0.0, %v4536
      %v4538 = vpop.f32.mrb[0].mxu0
      %v4539 = vpop.f32.mrb[0].mxu0
      %v4540 = vadd.f32 0.0, %v4539
      %v4541 = vpop.f32.mrb[0].mxu0
      %4542 = vmatprep.mubr.bf16.mxu0 0
      %4543 = vmatmul.mubr.bf16.gmra.mrb[0].mxu0 %v3798
      %v4544 = vpop.f32.mrb[0].mxu0
      %v4545 = vadd.f32 0.0, %v4544
      %v4546 = vpop.f32.mrb[0].mxu0
      %v4547 = vpop.f32.mrb[0].mxu0
      %v4548 = vadd.f32 0.0, %v4547
      %v4549 = vpop.f32.mrb[0].mxu0
      %4550 = vmatprep.mubr.bf16.mxu0 0
      %4551 = vmatmul.mubr.bf16.gmra.mrb[0].mxu0 %v3801
      %v4552 = vpop.f32.mrb[0].mxu0
      %v4553 = vadd.f32 0.0, %v4552
      %v4554 = vpop.f32.mrb[0].mxu0
      %v4555 = vpop.f32.mrb[0].mxu0
      %v4556 = vadd.f32 0.0, %v4555
      %v4557 = vpop.f32.mrb[0].mxu0
      %4558 = vmatprep.mubr.bf16.mxu0 0
      %4559 = vmatmul.mubr.bf16.gmra.mrb[0].mxu0 %v3804
      %v4560 = vpop.f32.mrb[0].mxu0
      %v4561 = vadd.f32 0.0, %v4560
      %v4562 = vpop.f32.mrb[0].mxu0
      %v4563 = vpop.f32.mrb[0].mxu0
      %v4564 = vadd.f32 0.0, %v4563
      %v4565 = vpop.f32.mrb[0].mxu0
      %4566 = vmatprep.mubr.bf16.mxu0 0
      %4567 = vmatmul.mubr.bf16.gmra.mrb[0].mxu0 %v3807
      %v4568 = vpop.f32.mrb[0].mxu0
      %v4569 = vadd.f32 0.0, %v4568
      %v4570 = vpop.f32.mrb[0].mxu0
      %v4571 = vpop.f32.mrb[0].mxu0
      %v4572 = vadd.f32 0.0, %v4571
      %v4573 = vpop.f32.mrb[0].mxu0
      %4574 = vmatprep.mubr.bf16.mxu0 0
      %4575 = vmatmul.mubr.bf16.gmra.mrb[0].mxu0 %v3810
      %v4576 = vpop.f32.mrb[0].mxu0
      %v4577 = vadd.f32 0.0, %v4576
      %v4578 = vpop.f32.mrb[0].mxu0
      %v4579 = vpop.f32.mrb[0].mxu0
      %v4580 = vadd.f32 0.0, %v4579
      %v4581 = vpop.f32.mrb[0].mxu0
      %4582 = vmatprep.mubr.bf16.mxu0 0
      %4583 = vmatmul.mubr.bf16.gmra.mrb[0].mxu0 %v3813
      %v4584 = vpop.f32.mrb[0].mxu0
      %v4585 = vadd.f32 0.0, %v4584
      %v4586 = vpop.f32.mrb[0].mxu0
      %v4587 = vpop.f32.mrb[0].mxu0
      %v4588 = vadd.f32 0.0, %v4587
      %v4589 = vpop.f32.mrb[0].mxu0
      %4590 = vmatprep.mubr.bf16.mxu0 0
      %4591 = vmatmul.mubr.bf16.gmra.mrb[0].mxu0 %v3816
      %v4592 = vpop.f32.mrb[0].mxu0
      %v4593 = vadd.f32 0.0, %v4592
      %v4594 = vpop.f32.mrb[0].mxu0
      %v4595 = vpop.f32.mrb[0].mxu0
      %v4596 = vadd.f32 0.0, %v4595
      %v4597 = vpop.f32.mrb[0].mxu0
      %4598 = vmatprep.mubr.bf16.mxu0 0
      %4599 = vmatmul.mubr.bf16.gmra.mrb[0].mxu0 %v3819
      %v4600 = vpop.f32.mrb[0].mxu0
      %v4601 = vadd.f32 0.0, %v4600
      %v4602 = vpop.f32.mrb[0].mxu0
      %v4603 = vpop.f32.mrb[0].mxu0
      %v4604 = vadd.f32 0.0, %v4603
      %v4605 = vpop.f32.mrb[0].mxu0
      %4606 = vmatprep.mubr.bf16.mxu0 0
      %4607 = vmatmul.mubr.bf16.gmra.mrb[0].mxu0 %v3822
      %v4608 = vpop.f32.mrb[0].mxu0
      %v4609 = vadd.f32 0.0, %v4608
      %v4610 = vpop.f32.mrb[0].mxu0
      %v4611 = vpop.f32.mrb[0].mxu0
      %v4612 = vadd.f32 0.0, %v4611
      %v4613 = vpop.f32.mrb[0].mxu0
      %4614 = vmatprep.mubr.bf16.mxu0 0
      %4615 = vmatmul.mubr.bf16.gmra.mrb[0].mxu0 %v3825
      %v4616 = vpop.f32.mrb[0].mxu0
      %v4617 = vadd.f32 0.0, %v4616
      %v4618 = vpop.f32.mrb[0].mxu0
      %v4619 = vpop.f32.mrb[0].mxu0
      %v4620 = vadd.f32 0.0, %v4619
      %v4621 = vpop.f32.mrb[0].mxu0
      %4622 = vmatprep.mubr.bf16.mxu0 0
      %4623 = vmatmul.mubr.bf16.gmra.mrb[0].mxu0 %v3828
      %v4624 = vpop.f32.mrb[0].mxu0
      %v4625 = vadd.f32 0.0, %v4624
      %v4626 = vpop.f32.mrb[0].mxu0
      %v4627 = vpop.f32.mrb[0].mxu0
      %v4628 = vadd.f32 0.0, %v4627
      %v4629 = vpop.f32.mrb[0].mxu0
      %4630 = vmatprep.mubr.bf16.mxu0 0
      %4631 = vmatmul.mubr.bf16.gmra.mrb[0].mxu0 %v3831
      %v4632 = vpop.f32.mrb[0].mxu0
      %v4633 = vadd.f32 0.0, %v4632
      %v4634 = vpop.f32.mrb[0].mxu0
      %v4635 = vpop.f32.mrb[0].mxu0
      %v4636 = vadd.f32 0.0, %v4635
      %v4637 = vpop.f32.mrb[0].mxu0
      %4638 = vmatprep.mubr.bf16.mxu0 0
      %4639 = vmatmul.mubr.bf16.gmra.mrb[0].mxu0 %v3834
      %v4640 = vpop.f32.mrb[0].mxu0
      %v4641 = vadd.f32 0.0, %v4640
      %v4642 = vpop.f32.mrb[0].mxu0
      %v4643 = vpop.f32.mrb[0].mxu0
      %v4644 = vadd.f32 0.0, %v4643
      %v4645 = vpop.f32.mrb[0].mxu0
      %4646 = vmatprep.mubr.bf16.mxu0 0
      %4647 = vmatmul.mubr.bf16.gmra.mrb[0].mxu0 %v3837
      %v4648 = vpop.f32.mrb[0].mxu0
      %v4649 = vadd.f32 0.0, %v4648
      %v4650 = vpop.f32.mrb[0].mxu0
      %v4651 = vpop.f32.mrb[0].mxu0
      %v4652 = vadd.f32 0.0, %v4651
      %v4653 = vpop.f32.mrb[0].mxu0
      %4654 = vmatprep.mubr.bf16.mxu0 0
      %4655 = vmatmul.mubr.bf16.gmra.mrb[0].mxu0 %v3840
      %v4656 = vpop.f32.mrb[0].mxu0
      %v4657 = vadd.f32 0.0, %v4656
      %v4658 = vpop.f32.mrb[0].mxu0
      %v4659 = vpop.f32.mrb[0].mxu0
      %v4660 = vadd.f32 0.0, %v4659
      %v4661 = vpop.f32.mrb[0].mxu0
      %4662 = vmatprep.mubr.bf16.mxu0 0
      %4663 = vmatmul.mubr.bf16.gmra.mrb[0].mxu0 %v3843
      %v4664 = vpop.f32.mrb[0].mxu0
      %v4665 = vadd.f32 0.0, %v4664
      %v4666 = vpop.f32.mrb[0].mxu0
      %v4667 = vpop.f32.mrb[0].mxu0
      %v4668 = vadd.f32 0.0, %v4667
      %v4669 = vpop.f32.mrb[0].mxu0
      %4670 = vmatprep.mubr.bf16.mxu0 0
      %4671 = vmatmul.mubr.bf16.gmra.mrb[0].mxu0 %v3846
      %v4672 = vpop.f32.mrb[0].mxu0
      %v4673 = vadd.f32 0.0, %v4672
      %v4674 = vpop.f32.mrb[0].mxu0
      %v4675 = vpop.f32.mrb[0].mxu0
      %v4676 = vadd.f32 0.0, %v4675
      %v4677 = vpop.f32.mrb[0].mxu0
      %4678 = vmatprep.mubr.bf16.mxu0 0
      %4679 = vmatmul.mubr.bf16.gmra.mrb[0].mxu0 %v3849
      %v4680 = vpop.f32.mrb[0].mxu0
      %v4681 = vadd.f32 0.0, %v4680
      %v4682 = vpop.f32.mrb[0].mxu0
      %v4683 = vpop.f32.mrb[0].mxu0
      %v4684 = vadd.f32 0.0, %v4683
      %v4685 = vpop.f32.mrb[0].mxu0
      %4686 = vmatprep.mubr.bf16.mxu0 0
      %4687 = vmatmul.mubr.bf16.gmra.mrb[0].mxu0 %v3852
      %v4688 = vpop.f32.mrb[0].mxu0
      %v4689 = vadd.f32 0.0, %v4688
      %v4690 = vpop.f32.mrb[0].mxu0
      %v4691 = vpop.f32.mrb[0].mxu0
      %v4692 = vadd.f32 0.0, %v4691
      %v4693 = vpop.f32.mrb[0].mxu0
      %4694 = vmatprep.mubr.bf16.mxu0 0
      %4695 = vmatmul.mubr.bf16.gmra.mrb[0].mxu0 %v3855
      %v4696 = vpop.f32.mrb[0].mxu0
      %v4697 = vadd.f32 0.0, %v4696
      %v4698 = vpop.f32.mrb[0].mxu0
      %v4699 = vpop.f32.mrb[0].mxu0
      %v4700 = vadd.f32 0.0, %v4699
      %v4701 = vpop.f32.mrb[0].mxu0
      %4702 = vmatprep.mubr.bf16.mxu0 0
      %4703 = vmatmul.mubr.bf16.gmra.mrb[0].mxu0 %v3858
      %v4704 = vpop.f32.mrb[0].mxu0
      %v4705 = vadd.f32 0.0, %v4704
      %v4706 = vpop.f32.mrb[0].mxu0
      %v4707 = vpop.f32.mrb[0].mxu0
      %v4708 = vadd.f32 0.0, %v4707
      %v4709 = vpop.f32.mrb[0].mxu0
      %4710 = vmatprep.mubr.bf16.mxu0 0
      %4711 = vmatmul.mubr.bf16.gmra.mrb[0].mxu0 %v3861
      %v4712 = vpop.f32.mrb[0].mxu0
      %v4713 = vadd.f32 0.0, %v4712
      %v4714 = vpop.f32.mrb[0].mxu0
      %v4715 = vpop.f32.mrb[0].mxu0
      %v4716 = vadd.f32 0.0, %v4715
      %v4717 = vpop.f32.mrb[0].mxu0
      %4718 = vmatprep.mubr.bf16.mxu0 0
      %4719 = vmatmul.mubr.bf16.gmra.mrb[0].mxu0 %v3864
      %v4720 = vpop.f32.mrb[0].mxu0
      %v4721 = vadd.f32 0.0, %v4720
      %v4722 = vpop.f32.mrb[0].mxu0
      %v4723 = vpop.f32.mrb[0].mxu0
      %v4724 = vadd.f32 0.0, %v4723
      %v4725 = vpop.f32.mrb[0].mxu0
      %4726 = vmatprep.mubr.bf16.mxu0 0
      %4727 = vmatmul.mubr.bf16.gmra.mrb[0].mxu0 %v3867
      %v4728 = vpop.f32.mrb[0].mxu0
      %v4729 = vadd.f32 0.0, %v4728
      %v4730 = vpop.f32.mrb[0].mxu0
      %v4731 = vpop.f32.mrb[0].mxu0
      %v4732 = vadd.f32 0.0, %v4731
      %v4733 = vpop.f32.mrb[0].mxu0
      %4734 = vmatprep.mubr.bf16.mxu0 0
      %4735 = vmatmul.mubr.bf16.gmra.mrb[0].mxu0 %v3870
      %v4736 = vpop.f32.mrb[0].mxu0
      %v4737 = vadd.f32 0.0, %v4736
      %v4738 = vpop.f32.mrb[0].mxu0
      %v4739 = vpop.f32.mrb[0].mxu0
      %v4740 = vadd.f32 0.0, %v4739
      %v4741 = vpop.f32.mrb[0].mxu0
      %4742 = vmatprep.mubr.bf16.mxu0 0
      %4743 = vmatmul.mubr.bf16.gmra.mrb[0].mxu0 %v3873
      %v4744 = vpop.f32.mrb[0].mxu0
      %v4745 = vadd.f32 0.0, %v4744
      %v4746 = vpop.f32.mrb[0].mxu0
      %v4747 = vpop.f32.mrb[0].mxu0
      %v4748 = vadd.f32 0.0, %v4747
      %v4749 = vpop.f32.mrb[0].mxu0
      %4750 = vmatprep.mubr.bf16.mxu0 0
      %4751 = vmatmul.mubr.bf16.gmra.mrb[0].mxu0 %v3876
      %v4752 = vpop.f32.mrb[0].mxu0
      %v4753 = vadd.f32 0.0, %v4752
      %v4754 = vpop.f32.mrb[0].mxu0
      %v4755 = vpop.f32.mrb[0].mxu0
      %v4756 = vadd.f32 0.0, %v4755
      %v4757 = vpop.f32.mrb[0].mxu0
      %4758 = vmatprep.mubr.bf16.mxu0 0
      %4759 = vmatmul.mubr.bf16.gmra.mrb[0].mxu0 %v3879
      %v4760 = vpop.f32.mrb[0].mxu0
      %v4761 = vadd.f32 0.0, %v4760
      %v4762 = vpop.f32.mrb[0].mxu0
      %v4763 = vpop.f32.mrb[0].mxu0
      %v4764 = vadd.f32 0.0, %v4763
      %v4765 = vpop.f32.mrb[0].mxu0
      %4766 = vmatprep.mubr.bf16.mxu0 0
      %4767 = vmatmul.mubr.bf16.gmra.mrb[0].mxu0 %v3882
      %v4768 = vpop.f32.mrb[0].mxu0
      %v4769 = vadd.f32 0.0, %v4768
      %v4770 = vpop.f32.mrb[0].mxu0
      %v4771 = vpop.f32.mrb[0].mxu0
      %v4772 = vadd.f32 0.0, %v4771
      %v4773 = vpop.f32.mrb[0].mxu0
      %4774 = vmatprep.mubr.bf16.mxu0 0
      %4775 = vmatmul.mubr.bf16.gmra.mrb[0].mxu0 %v3885
      %v4776 = vpop.f32.mrb[0].mxu0
      %v4777 = vadd.f32 0.0, %v4776
      %v4778 = vpop.f32.mrb[0].mxu0
      %v4779 = vpop.f32.mrb[0].mxu0
      %v4780 = vadd.f32 0.0, %v4779
      %v4781 = vpop.f32.mrb[0].mxu0
      %4782 = vmatprep.mubr.bf16.mxu0 0
      %4783 = vmatmul.mubr.bf16.gmra.mrb[0].mxu0 %v3888
      %v4784 = vpop.f32.mrb[0].mxu0
      %v4785 = vadd.f32 0.0, %v4784
      %v4786 = vpop.f32.mrb[0].mxu0
      %v4787 = vpop.f32.mrb[0].mxu0
      %v4788 = vadd.f32 0.0, %v4787
      %v4789 = vpop.f32.mrb[0].mxu0
      %4790 = vmatprep.mubr.bf16.mxu0 0
      %4791 = vmatmul.mubr.bf16.gmra.mrb[0].mxu0 %v3891
      %v4792 = vpop.f32.mrb[0].mxu0
      %v4793 = vadd.f32 0.0, %v4792
      %v4794 = vpop.f32.mrb[0].mxu0
      %v4795 = vpop.f32.mrb[0].mxu0
      %v4796 = vadd.f32 0.0, %v4795
      %v4797 = vpop.f32.mrb[0].mxu0
      %4798 = vmatprep.mubr.bf16.mxu0 0
      %4799 = vmatmul.mubr.bf16.gmra.mrb[0].mxu0 %v3894
      %v4800 = vpop.f32.mrb[0].mxu0
      %v4801 = vadd.f32 0.0, %v4800
      %v4802 = vpop.f32.mrb[0].mxu0
      %v4803 = vpop.f32.mrb[0].mxu0
      %v4804 = vadd.f32 0.0, %v4803
      %v4805 = vpop.f32.mrb[0].mxu0
      %4806 = vmatprep.mubr.bf16.mxu0 0
      %4807 = vmatmul.mubr.bf16.gmra.mrb[0].mxu0 %v3897
      %v4808 = vpop.f32.mrb[0].mxu0
      %v4809 = vadd.f32 0.0, %v4808
      %v4810 = vpop.f32.mrb[0].mxu0
      %v4811 = vpop.f32.mrb[0].mxu0
      %v4812 = vadd.f32 0.0, %v4811
      %v4813 = vpop.f32.mrb[0].mxu0
      %4814 = vmatprep.mubr.bf16.mxu0 0
      %4815 = vmatmul.mubr.bf16.gmra.mrb[0].mxu0 %v3900
      %v4816 = vpop.f32.mrb[0].mxu0
      %v4817 = vadd.f32 0.0, %v4816
      %v4818 = vpop.f32.mrb[0].mxu0
      %v4819 = vpop.f32.mrb[0].mxu0
      %v4820 = vadd.f32 0.0, %v4819
      %v4821 = vpop.f32.mrb[0].mxu0
      %4822 = vmatprep.mubr.bf16.mxu0 0
      %4823 = vmatmul.mubr.bf16.gmra.mrb[0].mxu0 %v3903
      %v4824 = vpop.f32.mrb[0].mxu0
      %v4825 = vadd.f32 0.0, %v4824
      %v4826 = vpop.f32.mrb[0].mxu0
      %v4827 = vpop.f32.mrb[0].mxu0
      %v4828 = vadd.f32 0.0, %v4827
      %v4829 = vpop.f32.mrb[0].mxu0
      %4830 = vmatprep.mubr.bf16.mxu0 0
      %4831 = vmatmul.mubr.bf16.gmra.mrb[0].mxu0 %v3906
      %v4832 = vpop.f32.mrb[0].mxu0
      %v4833 = vadd.f32 0.0, %v4832
      %v4834 = vpop.f32.mrb[0].mxu0
      %v4835 = vpop.f32.mrb[0].mxu0
      %v4836 = vadd.f32 0.0, %v4835
      %v4837 = vpop.f32.mrb[0].mxu0
      %4838 = vmatprep.mubr.bf16.mxu0 0
      %4839 = vmatmul.mubr.bf16.gmra.mrb[0].mxu0 %v3909
      %v4840 = vpop.f32.mrb[0].mxu0
      %v4841 = vadd.f32 0.0, %v4840
      %v4842 = vpop.f32.mrb[0].mxu0
      %v4843 = vpop.f32.mrb[0].mxu0
      %v4844 = vadd.f32 0.0, %v4843
      %v4845 = vpop.f32.mrb[0].mxu0
      %4846 = vmatprep.mubr.bf16.mxu0 0
      %4847 = vmatmul.mubr.bf16.gmra.mrb[0].mxu0 %v3912
      %v4848 = vpop.f32.mrb[0].mxu0
      %v4849 = vadd.f32 0.0, %v4848
      %v4850 = vpop.f32.mrb[0].mxu0
      %v4851 = vpop.f32.mrb[0].mxu0
      %v4852 = vadd.f32 0.0, %v4851
      %v4853 = vpop.f32.mrb[0].mxu0
      %4854 = vmatprep.mubr.bf16.mxu0 0
      %4855 = vmatmul.mubr.bf16.gmra.mrb[0].mxu0 %v3915
      %v4856 = vpop.f32.mrb[0].mxu0
      %v4857 = vadd.f32 0.0, %v4856
      %v4858 = vpop.f32.mrb[0].mxu0
      %v4859 = vpop.f32.mrb[0].mxu0
      %v4860 = vadd.f32 0.0, %v4859
      %v4861 = vpop.f32.mrb[0].mxu0
      %4862 = vmatprep.mubr.bf16.mxu0 0
      %4863 = vmatmul.mubr.bf16.gmra.mrb[0].mxu0 %v3918
      %v4864 = vpop.f32.mrb[0].mxu0
      %v4865 = vadd.f32 0.0, %v4864
      %v4866 = vpop.f32.mrb[0].mxu0
      %v4867 = vpop.f32.mrb[0].mxu0
      %v4868 = vadd.f32 0.0, %v4867
      %v4869 = vpop.f32.mrb[0].mxu0
      %4870 = vmatprep.mubr.bf16.mxu0 0
      %4871 = vmatmul.mubr.bf16.gmra.mrb[0].mxu0 %v3921
      %v4872 = vpop.f32.mrb[0].mxu0
      %v4873 = vadd.f32 0.0, %v4872
      %v4874 = vpop.f32.mrb[0].mxu0
      %v4875 = vpop.f32.mrb[0].mxu0
      %v4876 = vadd.f32 0.0, %v4875
      %v4877 = vpop.f32.mrb[0].mxu0
      %4878 = vmatprep.mubr.bf16.mxu0 0
      %4879 = vmatmul.mubr.bf16.gmra.mrb[0].mxu0 %v3924
      %v4880 = vpop.f32.mrb[0].mxu0
      %v4881 = vadd.f32 0.0, %v4880
      %v4882 = vpop.f32.mrb[0].mxu0
      %v4883 = vpop.f32.mrb[0].mxu0
      %v4884 = vadd.f32 0.0, %v4883
      %v4885 = vpop.f32.mrb[0].mxu0
      %4886 = vmatprep.mubr.bf16.mxu0 0
      %4887 = vmatmul.mubr.bf16.gmra.mrb[0].mxu0 %v3927
      %v4888 = vpop.f32.mrb[0].mxu0
      %v4889 = vadd.f32 0.0, %v4888
      %v4890 = vpop.f32.mrb[0].mxu0
      %v4891 = vpop.f32.mrb[0].mxu0
      %v4892 = vadd.f32 0.0, %v4891
      %v4893 = vpop.f32.mrb[0].mxu0
      %4894 = vmatprep.mubr.bf16.mxu0 0
      %4895 = vmatmul.mubr.bf16.gmra.mrb[0].mxu0 %v3930
      %v4896 = vpop.f32.mrb[0].mxu0
      %v4897 = vadd.f32 0.0, %v4896
      %v4898 = vpop.f32.mrb[0].mxu0
      %v4899 = vpop.f32.mrb[0].mxu0
      %v4900 = vadd.f32 0.0, %v4899
      %v4901 = vpop.f32.mrb[0].mxu0
      %4902 = vmatprep.mubr.bf16.mxu0 0
      %4903 = vmatmul.mubr.bf16.gmra.mrb[0].mxu0 %v3933
      %v4904 = vpop.f32.mrb[0].mxu0
      %v4905 = vadd.f32 0.0, %v4904
      %v4906 = vpop.f32.mrb[0].mxu0
      %v4907 = vpop.f32.mrb[0].mxu0
      %v4908 = vadd.f32 0.0, %v4907
      %v4909 = vpop.f32.mrb[0].mxu0
      %4910 = vmatprep.mubr.bf16.mxu0 0
      %4911 = vmatmul.mubr.bf16.gmra.mrb[0].mxu0 %v3936
      %v4912 = vpop.f32.mrb[0].mxu0
      %v4913 = vadd.f32 0.0, %v4912
      %v4914 = vpop.f32.mrb[0].mxu0
      %v4915 = vpop.f32.mrb[0].mxu0
      %v4916 = vadd.f32 0.0, %v4915
      %v4917 = vpop.f32.mrb[0].mxu0
      %4918 = vmatprep.mubr.bf16.mxu0 0
      %4919 = vmatmul.mubr.bf16.gmra.mrb[0].mxu0 %v3939
      %v4920 = vpop.f32.mrb[0].mxu0
      %v4921 = vadd.f32 0.0, %v4920
      %v4922 = vpop.f32.mrb[0].mxu0
      %v4923 = vpop.f32.mrb[0].mxu0
      %v4924 = vadd.f32 0.0, %v4923
      %v4925 = vpop.f32.mrb[0].mxu0
      %4926 = vmatprep.mubr.bf16.mxu0 0
      %4927 = vmatmul.mubr.bf16.gmra.mrb[0].mxu0 %v3942
      %v4928 = vpop.f32.mrb[0].mxu0
      %v4929 = vadd.f32 0.0, %v4928
      %v4930 = vpop.f32.mrb[0].mxu0
      %v4931 = vpop.f32.mrb[0].mxu0
      %v4932 = vadd.f32 0.0, %v4931
      %v4933 = vpop.f32.mrb[0].mxu0
      %4934 = vmatprep.mubr.bf16.mxu0 0
      %4935 = vmatmul.mubr.bf16.gmra.mrb[0].mxu0 %v3945
      %v4936 = vpop.f32.mrb[0].mxu0
      %v4937 = vadd.f32 0.0, %v4936
      %v4938 = vpop.f32.mrb[0].mxu0
      %v4939 = vpop.f32.mrb[0].mxu0
      %v4940 = vadd.f32 0.0, %v4939
      %v4941 = vpop.f32.mrb[0].mxu0
      %4942 = vmatprep.mubr.bf16.mxu0 0
      %4943 = vmatmul.mubr.bf16.gmra.mrb[0].mxu0 %v3948
      %v4944 = vpop.f32.mrb[0].mxu0
      %v4945 = vadd.f32 0.0, %v4944
      %v4946 = vpop.f32.mrb[0].mxu0
      %v4947 = vpop.f32.mrb[0].mxu0
      %v4948 = vadd.f32 0.0, %v4947
      %v4949 = vpop.f32.mrb[0].mxu0
      %4950 = vmatprep.mubr.bf16.mxu0 0
      %4951 = vmatmul.mubr.bf16.gmra.mrb[0].mxu0 %v3951
      %v4952 = vpop.f32.mrb[0].mxu0
      %v4953 = vadd.f32 0.0, %v4952
      %v4954 = vpop.f32.mrb[0].mxu0
      %v4955 = vpop.f32.mrb[0].mxu0
      %v4956 = vadd.f32 0.0, %v4955
      %v4957 = vpop.f32.mrb[0].mxu0
      %4958 = vmatprep.mubr.bf16.mxu0 0
      %4959 = vmatmul.mubr.bf16.gmra.mrb[0].mxu0 %v3954
      %v4960 = vpop.f32.mrb[0].mxu0
      %v4961 = vadd.f32 0.0, %v4960
      %v4962 = vpop.f32.mrb[0].mxu0
      %v4963 = vpop.f32.mrb[0].mxu0
      %v4964 = vadd.f32 0.0, %v4963
      %v4965 = vpop.f32.mrb[0].mxu0
      %4966 = vmatprep.mubr.bf16.mxu0 0
      %4967 = vmatmul.mubr.bf16.gmra.mrb[0].mxu0 %v3957
      %v4968 = vpop.f32.mrb[0].mxu0
      %v4969 = vadd.f32 0.0, %v4968
      %v4970 = vpop.f32.mrb[0].mxu0
      %v4971 = vpop.f32.mrb[0].mxu0
      %v4972 = vadd.f32 0.0, %v4971
      %v4973 = vpop.f32.mrb[0].mxu0
      %4974 = vmatprep.mubr.bf16.mxu0 0
      %4975 = vmatmul.mubr.bf16.gmra.mrb[0].mxu0 %v3960
      %v4976 = vpop.f32.mrb[0].mxu0
      %v4977 = vadd.f32 0.0, %v4976
      %v4978 = vpop.f32.mrb[0].mxu0
      %v4979 = vpop.f32.mrb[0].mxu0
      %v4980 = vadd.f32 0.0, %v4979
      %v4981 = vpop.f32.mrb[0].mxu0
      %4982 = vmatprep.mubr.bf16.mxu0 0
      %4983 = vmatmul.mubr.bf16.gmra.mrb[0].mxu0 %v3963
      %v4984 = vpop.f32.mrb[0].mxu0
      %v4985 = vadd.f32 0.0, %v4984
      %v4986 = vpop.f32.mrb[0].mxu0
      %v4987 = vpop.f32.mrb[0].mxu0
      %v4988 = vadd.f32 0.0, %v4987
      %v4989 = vpop.f32.mrb[0].mxu0
      %4990 = vmatprep.mubr.bf16.mxu0 0
      %4991 = vmatmul.mubr.bf16.gmra.mrb[0].mxu0 %v3966
      %v4992 = vpop.f32.mrb[0].mxu0
      %v4993 = vadd.f32 0.0, %v4992
      %v4994 = vpop.f32.mrb[0].mxu0
      %v4995 = vpop.f32.mrb[0].mxu0
      %v4996 = vadd.f32 0.0, %v4995
      %v4997 = vpop.f32.mrb[0].mxu0
      %4998 = vmatprep.mubr.bf16.mxu0 0
      %4999 = vmatmul.mubr.bf16.gmra.mrb[0].mxu0 %v3969
      %v5000 = vpop.f32.mrb[0].mxu0
      %v5001 = vadd.f32 0.0, %v5000
      %v5002 = vpop.f32.mrb[0].mxu0
      %v5003 = vpop.f32.mrb[0].mxu0
      %v5004 = vadd.f32 0.0, %v5003
      %v5005 = vpop.f32.mrb[0].mxu0
      %5006 = vmatprep.mubr.bf16.mxu0 0
      %5007 = vmatmul.mubr.bf16.gmra.mrb[0].mxu0 %v3972
      %v5008 = vpop.f32.mrb[0].mxu0
      %v5009 = vadd.f32 0.0, %v5008
      %v5010 = vpop.f32.mrb[0].mxu0
      %v5011 = vpop.f32.mrb[0].mxu0
      %v5012 = vadd.f32 0.0, %v5011
      %v5013 = vpop.f32.mrb[0].mxu0
      %5014 = vmatprep.mubr.bf16.mxu0 0
      %5015 = vmatmul.mubr.bf16.gmra.mrb[0].mxu0 %v3975
      %v5016 = vpop.f32.mrb[0].mxu0
      %v5017 = vadd.f32 0.0, %v5016
      %v5018 = vpop.f32.mrb[0].mxu0
      %v5019 = vpop.f32.mrb[0].mxu0
      %v5020 = vadd.f32 0.0, %v5019
      %v5021 = vpop.f32.mrb[0].mxu0
      %5022 = vmatprep.mubr.bf16.mxu0 0
      %5023 = vmatmul.mubr.bf16.gmra.mrb[0].mxu0 %v3978
      %v5024 = vpop.f32.mrb[0].mxu0
      %v5025 = vadd.f32 0.0, %v5024
      %v5026 = vpop.f32.mrb[0].mxu0
      %v5027 = vpop.f32.mrb[0].mxu0
      %v5028 = vadd.f32 0.0, %v5027
      %v5029 = vpop.f32.mrb[0].mxu0
      %5030 = vmatprep.mubr.bf16.mxu0 0
      %5031 = vmatmul.mubr.bf16.gmra.mrb[0].mxu0 %v3981
      %v5032 = vpop.f32.mrb[0].mxu0
      %v5033 = vadd.f32 0.0, %v5032
      %v5034 = vpop.f32.mrb[0].mxu0
      %v5035 = vpop.f32.mrb[0].mxu0
      %v5036 = vadd.f32 0.0, %v5035
      %v5037 = vpop.f32.mrb[0].mxu0
      %5038 = vmatprep.mubr.bf16.mxu0 0
      %5039 = vmatmul.mubr.bf16.gmra.mrb[0].mxu0 %v3984
      %v5040 = vpop.f32.mrb[0].mxu0
      %v5041 = vadd.f32 0.0, %v5040
      %v5042 = vpop.f32.mrb[0].mxu0
      %v5043 = vpop.f32.mrb[0].mxu0
      %v5044 = vadd.f32 0.0, %v5043
      %v5045 = vpop.f32.mrb[0].mxu0
      %5046 = vdwg.mxu0
      %v5303 = vunpack.c.l.b16 %v291
      %v5304 = vunpack.c.l.b16 %v292
      %v5305 = vunpack.c.l.b16 %v293
      %v5306 = vunpack.c.l.b16 %v294
      %v5307 = vunpack.c.l.b16 %v295
      %v5308 = vunpack.c.l.b16 %v296
      %v5309 = vunpack.c.l.b16 %v297
      %v5310 = vunpack.c.l.b16 %v298
      %v5311 = vunpack.c.l.b16 %v299
      %v5312 = vunpack.c.l.b16 %v300
      %v5313 = vunpack.c.l.b16 %v301
      %v5314 = vunpack.c.l.b16 %v302
      %v5315 = vunpack.c.l.b16 %v303
      %v5316 = vunpack.c.l.b16 %v304
      %v5317 = vunpack.c.l.b16 %v305
      %v5318 = vunpack.c.l.b16 %v306
      %v5319 = vunpack.c.l.b16 %v308
      %v5320 = vunpack.c.l.b16 %v309
      %v5321 = vunpack.c.l.b16 %v310
      %v5322 = vunpack.c.l.b16 %v311
      %v5323 = vunpack.c.l.b16 %v312
      %v5324 = vunpack.c.l.b16 %v313
      %v5325 = vunpack.c.l.b16 %v314
      %v5326 = vunpack.c.l.b16 %v315
      %v5327 = vunpack.c.l.b16 %v316
      %v5328 = vunpack.c.l.b16 %v317
      %v5329 = vunpack.c.l.b16 %v318
      %v5330 = vunpack.c.l.b16 %v319
      %v5331 = vunpack.c.l.b16 %v320
      %v5332 = vunpack.c.l.b16 %v321
      %v5333 = vunpack.c.l.b16 %v322
      %v5334 = vunpack.c.l.b16 %v323
      %v5335 = vunpack.c.l.b16 %v325
      %v5336 = vunpack.c.l.b16 %v326
      %v5337 = vunpack.c.l.b16 %v327
      %v5338 = vunpack.c.l.b16 %v328
      %v5339 = vunpack.c.l.b16 %v329
      %v5340 = vunpack.c.l.b16 %v330
      %v5341 = vunpack.c.l.b16 %v331
      %v5342 = vunpack.c.l.b16 %v332
      %v5343 = vunpack.c.l.b16 %v333
      %v5344 = vunpack.c.l.b16 %v334
      %v5345 = vunpack.c.l.b16 %v335
      %v5346 = vunpack.c.l.b16 %v336
      %v5347 = vunpack.c.l.b16 %v337
      %v5348 = vunpack.c.l.b16 %v338
      %v5349 = vunpack.c.l.b16 %v339
      %v5350 = vunpack.c.l.b16 %v340
      %v5351 = vunpack.c.l.b16 %v342
      %v5352 = vunpack.c.l.b16 %v343
      %v5353 = vunpack.c.l.b16 %v344
      %v5354 = vunpack.c.l.b16 %v345
      %v5355 = vunpack.c.l.b16 %v346
      %v5356 = vunpack.c.l.b16 %v347
      %v5357 = vunpack.c.l.b16 %v348
      %v5358 = vunpack.c.l.b16 %v349
      %v5359 = vunpack.c.l.b16 %v350
      %v5360 = vunpack.c.l.b16 %v351
      %v5361 = vunpack.c.l.b16 %v352
      %v5362 = vunpack.c.l.b16 %v353
      %v5363 = vunpack.c.l.b16 %v354
      %v5364 = vunpack.c.l.b16 %v355
      %v5365 = vunpack.c.l.b16 %v356
      %v5366 = vunpack.c.l.b16 %v357
      %v5367 = vunpack.c.l.b16 %v359
      %v5368 = vunpack.c.l.b16 %v360
      %v5369 = vunpack.c.l.b16 %v361
      %v5370 = vunpack.c.l.b16 %v362
      %v5371 = vunpack.c.l.b16 %v363
      %v5372 = vunpack.c.l.b16 %v364
      %v5373 = vunpack.c.l.b16 %v365
      %v5374 = vunpack.c.l.b16 %v366
      %v5375 = vunpack.c.l.b16 %v367
      %v5376 = vunpack.c.l.b16 %v368
      %v5377 = vunpack.c.l.b16 %v369
      %v5378 = vunpack.c.l.b16 %v370
      %v5379 = vunpack.c.l.b16 %v371
      %v5380 = vunpack.c.l.b16 %v372
      %v5381 = vunpack.c.l.b16 %v373
      %v5382 = vunpack.c.l.b16 %v374
      %v5383 = vunpack.c.l.b16 %v376
      %v5384 = vunpack.c.l.b16 %v377
      %v5385 = vunpack.c.l.b16 %v378
      %v5386 = vunpack.c.l.b16 %v379
      %v5387 = vunpack.c.l.b16 %v380
      %v5388 = vunpack.c.l.b16 %v381
      %v5389 = vunpack.c.l.b16 %v382
      %v5390 = vunpack.c.l.b16 %v383
      %v5391 = vunpack.c.l.b16 %v384
      %v5392 = vunpack.c.l.b16 %v385
      %v5393 = vunpack.c.l.b16 %v386
      %v5394 = vunpack.c.l.b16 %v387
      %v5395 = vunpack.c.l.b16 %v388
      %v5396 = vunpack.c.l.b16 %v389
      %v5397 = vunpack.c.l.b16 %v390
      %v5398 = vunpack.c.l.b16 %v391
      %v5399 = vunpack.c.l.b16 %v393
      %v5400 = vunpack.c.l.b16 %v394
      %v5401 = vunpack.c.l.b16 %v395
      %v5402 = vunpack.c.l.b16 %v396
      %v5403 = vunpack.c.l.b16 %v397
      %v5404 = vunpack.c.l.b16 %v398
      %v5405 = vunpack.c.l.b16 %v399
      %v5406 = vunpack.c.l.b16 %v400
      %v5407 = vunpack.c.l.b16 %v401
      %v5408 = vunpack.c.l.b16 %v402
      %v5409 = vunpack.c.l.b16 %v403
      %v5410 = vunpack.c.l.b16 %v404
      %v5411 = vunpack.c.l.b16 %v405
      %v5412 = vunpack.c.l.b16 %v406
      %v5413 = vunpack.c.l.b16 %v407
      %v5414 = vunpack.c.l.b16 %v408
      %v5415 = vunpack.c.l.b16 %v410
      %v5416 = vunpack.c.l.b16 %v411
      %v5417 = vunpack.c.l.b16 %v412
      %v5418 = vunpack.c.l.b16 %v413
      %v5419 = vunpack.c.l.b16 %v414
      %v5420 = vunpack.c.l.b16 %v415
      %v5421 = vunpack.c.l.b16 %v416
      %v5422 = vunpack.c.l.b16 %v417
      %v5423 = vunpack.c.l.b16 %v418
      %v5424 = vunpack.c.l.b16 %v419
      %v5425 = vunpack.c.l.b16 %v420
      %v5426 = vunpack.c.l.b16 %v421
      %v5427 = vunpack.c.l.b16 %v422
      %v5428 = vunpack.c.l.b16 %v423
      %v5429 = vunpack.c.l.b16 %v424
      %v5430 = vunpack.c.l.b16 %v425
      %v5431 = vunpack.c.l.b16 %v427
      %v5432 = vunpack.c.l.b16 %v428
      %v5433 = vunpack.c.l.b16 %v429
      %v5434 = vunpack.c.l.b16 %v430
      %v5435 = vunpack.c.l.b16 %v431
      %v5436 = vunpack.c.l.b16 %v432
      %v5437 = vunpack.c.l.b16 %v433
      %v5438 = vunpack.c.l.b16 %v434
      %v5439 = vunpack.c.l.b16 %v435
      %v5440 = vunpack.c.l.b16 %v436
      %v5441 = vunpack.c.l.b16 %v437
      %v5442 = vunpack.c.l.b16 %v438
      %v5443 = vunpack.c.l.b16 %v439
      %v5444 = vunpack.c.l.b16 %v440
      %v5445 = vunpack.c.l.b16 %v441
      %v5446 = vunpack.c.l.b16 %v442
      %v5447 = vunpack.c.l.b16 %v444
      %v5448 = vunpack.c.l.b16 %v445
      %v5449 = vunpack.c.l.b16 %v446
      %v5450 = vunpack.c.l.b16 %v447
      %v5451 = vunpack.c.l.b16 %v448
      %v5452 = vunpack.c.l.b16 %v449
      %v5453 = vunpack.c.l.b16 %v450
      %v5454 = vunpack.c.l.b16 %v451
      %v5455 = vunpack.c.l.b16 %v452
      %v5456 = vunpack.c.l.b16 %v453
      %v5457 = vunpack.c.l.b16 %v454
      %v5458 = vunpack.c.l.b16 %v455
      %v5459 = vunpack.c.l.b16 %v456
      %v5460 = vunpack.c.l.b16 %v457
      %v5461 = vunpack.c.l.b16 %v458
      %v5462 = vunpack.c.l.b16 %v459
      %v5463 = vunpack.c.l.b16 %v461
      %v5464 = vunpack.c.l.b16 %v462
      %v5465 = vunpack.c.l.b16 %v463
      %v5466 = vunpack.c.l.b16 %v464
      %v5467 = vunpack.c.l.b16 %v465
      %v5468 = vunpack.c.l.b16 %v466
      %v5469 = vunpack.c.l.b16 %v467
      %v5470 = vunpack.c.l.b16 %v468
      %v5471 = vunpack.c.l.b16 %v469
      %v5472 = vunpack.c.l.b16 %v470
      %v5473 = vunpack.c.l.b16 %v471
      %v5474 = vunpack.c.l.b16 %v472
      %v5475 = vunpack.c.l.b16 %v473
      %v5476 = vunpack.c.l.b16 %v474
      %v5477 = vunpack.c.l.b16 %v475
      %v5478 = vunpack.c.l.b16 %v476
      %v5479 = vunpack.c.l.b16 %v478
      %v5480 = vunpack.c.l.b16 %v479
      %v5481 = vunpack.c.l.b16 %v480
      %v5482 = vunpack.c.l.b16 %v481
      %v5483 = vunpack.c.l.b16 %v482
      %v5484 = vunpack.c.l.b16 %v483
      %v5485 = vunpack.c.l.b16 %v484
      %v5486 = vunpack.c.l.b16 %v485
      %v5487 = vunpack.c.l.b16 %v486
      %v5488 = vunpack.c.l.b16 %v487
      %v5489 = vunpack.c.l.b16 %v488
      %v5490 = vunpack.c.l.b16 %v489
      %v5491 = vunpack.c.l.b16 %v490
      %v5492 = vunpack.c.l.b16 %v491
      %v5493 = vunpack.c.l.b16 %v492
      %v5494 = vunpack.c.l.b16 %v493
      %v5495 = vunpack.c.l.b16 %v495
      %v5496 = vunpack.c.l.b16 %v496
      %v5497 = vunpack.c.l.b16 %v497
      %v5498 = vunpack.c.l.b16 %v498
      %v5499 = vunpack.c.l.b16 %v499
      %v5500 = vunpack.c.l.b16 %v500
      %v5501 = vunpack.c.l.b16 %v501
      %v5502 = vunpack.c.l.b16 %v502
      %v5503 = vunpack.c.l.b16 %v503
      %v5504 = vunpack.c.l.b16 %v504
      %v5505 = vunpack.c.l.b16 %v505
      %v5506 = vunpack.c.l.b16 %v506
      %v5507 = vunpack.c.l.b16 %v507
      %v5508 = vunpack.c.l.b16 %v508
      %v5509 = vunpack.c.l.b16 %v509
      %v5510 = vunpack.c.l.b16 %v510
      %v5511 = vunpack.c.l.b16 %v512
      %v5512 = vunpack.c.l.b16 %v513
      %v5513 = vunpack.c.l.b16 %v514
      %v5514 = vunpack.c.l.b16 %v515
      %v5515 = vunpack.c.l.b16 %v516
      %v5516 = vunpack.c.l.b16 %v517
      %v5517 = vunpack.c.l.b16 %v518
      %v5518 = vunpack.c.l.b16 %v519
      %v5519 = vunpack.c.l.b16 %v520
      %v5520 = vunpack.c.l.b16 %v521
      %v5521 = vunpack.c.l.b16 %v522
      %v5522 = vunpack.c.l.b16 %v523
      %v5523 = vunpack.c.l.b16 %v524
      %v5524 = vunpack.c.l.b16 %v525
      %v5525 = vunpack.c.l.b16 %v526
      %v5526 = vunpack.c.l.b16 %v527
      %v5527 = vunpack.c.l.b16 %v529
      %v5528 = vunpack.c.l.b16 %v530
      %v5529 = vunpack.c.l.b16 %v531
      %v5530 = vunpack.c.l.b16 %v532
      %v5531 = vunpack.c.l.b16 %v533
      %v5532 = vunpack.c.l.b16 %v534
      %v5533 = vunpack.c.l.b16 %v535
      %v5534 = vunpack.c.l.b16 %v536
      %v5535 = vunpack.c.l.b16 %v537
      %v5536 = vunpack.c.l.b16 %v538
      %v5537 = vunpack.c.l.b16 %v539
      %v5538 = vunpack.c.l.b16 %v540
      %v5539 = vunpack.c.l.b16 %v541
      %v5540 = vunpack.c.l.b16 %v542
      %v5541 = vunpack.c.l.b16 %v543
      %v5542 = vunpack.c.l.b16 %v544
      %v5543 = vunpack.c.l.b16 %v546
      %v5544 = vunpack.c.l.b16 %v547
      %v5545 = vunpack.c.l.b16 %v548
      %v5546 = vunpack.c.l.b16 %v549
      %v5547 = vunpack.c.l.b16 %v550
      %v5548 = vunpack.c.l.b16 %v551
      %v5549 = vunpack.c.l.b16 %v552
      %v5550 = vunpack.c.l.b16 %v553
      %v5551 = vunpack.c.l.b16 %v554
      %v5552 = vunpack.c.l.b16 %v555
      %v5553 = vunpack.c.l.b16 %v556
      %v5554 = vunpack.c.l.b16 %v557
      %v5555 = vunpack.c.l.b16 %v558
      %v5556 = vunpack.c.l.b16 %v559
      %v5557 = vunpack.c.l.b16 %v560
      %v5558 = vunpack.c.l.b16 %v561
      %v5559 = vpack.c.b16 %v5304, %v5303
      %v5560 = vpack.c.b16 %v5306, %v5305
      %v5561 = vpack.c.b16 %v5308, %v5307
      %v5562 = vpack.c.b16 %v5310, %v5309
      %v5563 = vpack.c.b16 %v5312, %v5311
      %v5564 = vpack.c.b16 %v5314, %v5313
      %v5565 = vpack.c.b16 %v5316, %v5315
      %v5566 = vpack.c.b16 %v5318, %v5317
      %v5567 = vpack.c.b16 %v5320, %v5319
      %v5568 = vpack.c.b16 %v5322, %v5321
      %v5569 = vpack.c.b16 %v5324, %v5323
      %v5570 = vpack.c.b16 %v5326, %v5325
      %v5571 = vpack.c.b16 %v5328, %v5327
      %v5572 = vpack.c.b16 %v5330, %v5329
      %v5573 = vpack.c.b16 %v5332, %v5331
      %v5574 = vpack.c.b16 %v5334, %v5333
      %v5575 = vpack.c.b16 %v5336, %v5335
      %v5576 = vpack.c.b16 %v5338, %v5337
      %v5577 = vpack.c.b16 %v5340, %v5339
      %v5578 = vpack.c.b16 %v5342, %v5341
      %v5579 = vpack.c.b16 %v5344, %v5343
      %v5580 = vpack.c.b16 %v5346, %v5345
      %v5581 = vpack.c.b16 %v5348, %v5347
      %v5582 = vpack.c.b16 %v5350, %v5349
      %v5583 = vpack.c.b16 %v5352, %v5351
      %v5584 = vpack.c.b16 %v5354, %v5353
      %v5585 = vpack.c.b16 %v5356, %v5355
      %v5586 = vpack.c.b16 %v5358, %v5357
      %v5587 = vpack.c.b16 %v5360, %v5359
      %v5588 = vpack.c.b16 %v5362, %v5361
      %v5589 = vpack.c.b16 %v5364, %v5363
      %v5590 = vpack.c.b16 %v5366, %v5365
      %v5591 = vpack.c.b16 %v5368, %v5367
      %v5592 = vpack.c.b16 %v5370, %v5369
      %v5593 = vpack.c.b16 %v5372, %v5371
      %v5594 = vpack.c.b16 %v5374, %v5373
      %v5595 = vpack.c.b16 %v5376, %v5375
      %v5596 = vpack.c.b16 %v5378, %v5377
      %v5597 = vpack.c.b16 %v5380, %v5379
      %v5598 = vpack.c.b16 %v5382, %v5381
      %v5599 = vpack.c.b16 %v5384, %v5383
      %v5600 = vpack.c.b16 %v5386, %v5385
      %v5601 = vpack.c.b16 %v5388, %v5387
      %v5602 = vpack.c.b16 %v5390, %v5389
      %v5603 = vpack.c.b16 %v5392, %v5391
      %v5604 = vpack.c.b16 %v5394, %v5393
      %v5605 = vpack.c.b16 %v5396, %v5395
      %v5606 = vpack.c.b16 %v5398, %v5397
      %v5607 = vpack.c.b16 %v5400, %v5399
      %v5608 = vpack.c.b16 %v5402, %v5401
      %v5609 = vpack.c.b16 %v5404, %v5403
      %v5610 = vpack.c.b16 %v5406, %v5405
      %v5611 = vpack.c.b16 %v5408, %v5407
      %v5612 = vpack.c.b16 %v5410, %v5409
      %v5613 = vpack.c.b16 %v5412, %v5411
      %v5614 = vpack.c.b16 %v5414, %v5413
      %v5615 = vpack.c.b16 %v5416, %v5415
      %v5616 = vpack.c.b16 %v5418, %v5417
      %v5617 = vpack.c.b16 %v5420, %v5419
      %v5618 = vpack.c.b16 %v5422, %v5421
      %v5619 = vpack.c.b16 %v5424, %v5423
      %v5620 = vpack.c.b16 %v5426, %v5425
      %v5621 = vpack.c.b16 %v5428, %v5427
      %v5622 = vpack.c.b16 %v5430, %v5429
      %v5623 = vpack.c.b16 %v5432, %v5431
      %v5624 = vpack.c.b16 %v5434, %v5433
      %v5625 = vpack.c.b16 %v5436, %v5435
      %v5626 = vpack.c.b16 %v5438, %v5437
      %v5627 = vpack.c.b16 %v5440, %v5439
      %v5628 = vpack.c.b16 %v5442, %v5441
      %v5629 = vpack.c.b16 %v5444, %v5443
      %v5630 = vpack.c.b16 %v5446, %v5445
      %v5631 = vpack.c.b16 %v5448, %v5447
      %v5632 = vpack.c.b16 %v5450, %v5449
      %v5633 = vpack.c.b16 %v5452, %v5451
      %v5634 = vpack.c.b16 %v5454, %v5453
      %v5635 = vpack.c.b16 %v5456, %v5455
      %v5636 = vpack.c.b16 %v5458, %v5457
      %v5637 = vpack.c.b16 %v5460, %v5459
      %v5638 = vpack.c.b16 %v5462, %v5461
      %v5639 = vpack.c.b16 %v5464, %v5463
      %v5640 = vpack.c.b16 %v5466, %v5465
      %v5641 = vpack.c.b16 %v5468, %v5467
      %v5642 = vpack.c.b16 %v5470, %v5469
      %v5643 = vpack.c.b16 %v5472, %v5471
      %v5644 = vpack.c.b16 %v5474, %v5473
      %v5645 = vpack.c.b16 %v5476, %v5475
      %v5646 = vpack.c.b16 %v5478, %v5477
      %v5647 = vpack.c.b16 %v5480, %v5479
      %v5648 = vpack.c.b16 %v5482, %v5481
      %v5649 = vpack.c.b16 %v5484, %v5483
      %v5650 = vpack.c.b16 %v5486, %v5485
      %v5651 = vpack.c.b16 %v5488, %v5487
      %v5652 = vpack.c.b16 %v5490, %v5489
      %v5653 = vpack.c.b16 %v5492, %v5491
      %v5654 = vpack.c.b16 %v5494, %v5493
      %v5655 = vpack.c.b16 %v5496, %v5495
      %v5656 = vpack.c.b16 %v5498, %v5497
      %v5657 = vpack.c.b16 %v5500, %v5499
      %v5658 = vpack.c.b16 %v5502, %v5501
      %v5659 = vpack.c.b16 %v5504, %v5503
      %v5660 = vpack.c.b16 %v5506, %v5505
      %v5661 = vpack.c.b16 %v5508, %v5507
      %v5662 = vpack.c.b16 %v5510, %v5509
      %v5663 = vpack.c.b16 %v5512, %v5511
      %v5664 = vpack.c.b16 %v5514, %v5513
      %v5665 = vpack.c.b16 %v5516, %v5515
      %v5666 = vpack.c.b16 %v5518, %v5517
      %v5667 = vpack.c.b16 %v5520, %v5519
      %v5668 = vpack.c.b16 %v5522, %v5521
      %v5669 = vpack.c.b16 %v5524, %v5523
      %v5670 = vpack.c.b16 %v5526, %v5525
      %v5671 = vpack.c.b16 %v5528, %v5527
      %v5672 = vpack.c.b16 %v5530, %v5529
      %v5673 = vpack.c.b16 %v5532, %v5531
      %v5674 = vpack.c.b16 %v5534, %v5533
      %v5675 = vpack.c.b16 %v5536, %v5535
      %v5676 = vpack.c.b16 %v5538, %v5537
      %v5677 = vpack.c.b16 %v5540, %v5539
      %v5678 = vpack.c.b16 %v5542, %v5541
      %v5679 = vpack.c.b16 %v5544, %v5543
      %v5680 = vpack.c.b16 %v5546, %v5545
      %v5681 = vpack.c.b16 %v5548, %v5547
      %v5682 = vpack.c.b16 %v5550, %v5549
      %v5683 = vpack.c.b16 %v5552, %v5551
      %v5684 = vpack.c.b16 %v5554, %v5553
      %v5685 = vpack.c.b16 %v5556, %v5555
      %v5686 = vpack.c.b16 %v5558, %v5557
      %v5689 = vunpack.c.l.b16 %v580
      %v5690 = vunpack.c.l.b16 %v581
      %v5691 = vpack.c.b16 %v5690, %v5689
      %v5693 = vsel %vm3601, %v5559, 0
      %v5696 = vsel %vm3601, %v5560, 0
      %v5699 = vsel %vm3601, %v5561, 0
      %v5702 = vsel %vm3601, %v5562, 0
      %v5705 = vsel %vm3601, %v5563, 0
      %v5708 = vsel %vm3601, %v5564, 0
      %v5711 = vsel %vm3601, %v5565, 0
      %v5714 = vsel %vm3601, %v5566, 0
      %v5717 = vsel %vm3601, %v5567, 0
      %v5720 = vsel %vm3601, %v5568, 0
      %v5723 = vsel %vm3601, %v5569, 0
      %v5726 = vsel %vm3601, %v5570, 0
      %v5729 = vsel %vm3601, %v5571, 0
      %v5732 = vsel %vm3601, %v5572, 0
      %v5735 = vsel %vm3601, %v5573, 0
      %v5738 = vsel %vm3601, %v5574, 0
      %v5741 = vsel %vm3601, %v5575, 0
      %v5744 = vsel %vm3601, %v5576, 0
      %v5747 = vsel %vm3601, %v5577, 0
      %v5750 = vsel %vm3601, %v5578, 0
      %v5753 = vsel %vm3601, %v5579, 0
      %v5756 = vsel %vm3601, %v5580, 0
      %v5759 = vsel %vm3601, %v5581, 0
      %v5762 = vsel %vm3601, %v5582, 0
      %v5765 = vsel %vm3601, %v5583, 0
      %v5768 = vsel %vm3601, %v5584, 0
      %v5771 = vsel %vm3601, %v5585, 0
      %v5774 = vsel %vm3601, %v5586, 0
      %v5777 = vsel %vm3601, %v5587, 0
      %v5780 = vsel %vm3601, %v5588, 0
      %v5783 = vsel %vm3601, %v5589, 0
      %v5786 = vsel %vm3601, %v5590, 0
      %v5789 = vsel %vm3601, %v5591, 0
      %v5792 = vsel %vm3601, %v5592, 0
      %v5795 = vsel %vm3601, %v5593, 0
      %v5798 = vsel %vm3601, %v5594, 0
      %v5801 = vsel %vm3601, %v5595, 0
      %v5804 = vsel %vm3601, %v5596, 0
      %v5807 = vsel %vm3601, %v5597, 0
      %v5810 = vsel %vm3601, %v5598, 0
      %v5813 = vsel %vm3601, %v5599, 0
      %v5816 = vsel %vm3601, %v5600, 0
      %v5819 = vsel %vm3601, %v5601, 0
      %v5822 = vsel %vm3601, %v5602, 0
      %v5825 = vsel %vm3601, %v5603, 0
      %v5828 = vsel %vm3601, %v5604, 0
      %v5831 = vsel %vm3601, %v5605, 0
      %v5834 = vsel %vm3601, %v5606, 0
      %v5837 = vsel %vm3601, %v5607, 0
      %v5840 = vsel %vm3601, %v5608, 0
      %v5843 = vsel %vm3601, %v5609, 0
      %v5846 = vsel %vm3601, %v5610, 0
      %v5849 = vsel %vm3601, %v5611, 0
      %v5852 = vsel %vm3601, %v5612, 0
      %v5855 = vsel %vm3601, %v5613, 0
      %v5858 = vsel %vm3601, %v5614, 0
      %v5861 = vsel %vm3601, %v5615, 0
      %v5864 = vsel %vm3601, %v5616, 0
      %v5867 = vsel %vm3601, %v5617, 0
      %v5870 = vsel %vm3601, %v5618, 0
      %v5873 = vsel %vm3601, %v5619, 0
      %v5876 = vsel %vm3601, %v5620, 0
      %v5879 = vsel %vm3601, %v5621, 0
      %v5882 = vsel %vm3601, %v5622, 0
      %v5885 = vsel %vm3601, %v5623, 0
      %v5888 = vsel %vm3601, %v5624, 0
      %v5891 = vsel %vm3601, %v5625, 0
      %v5894 = vsel %vm3601, %v5626, 0
      %v5897 = vsel %vm3601, %v5627, 0
      %v5900 = vsel %vm3601, %v5628, 0
      %v5903 = vsel %vm3601, %v5629, 0
      %v5906 = vsel %vm3601, %v5630, 0
      %v5909 = vsel %vm3601, %v5631, 0
      %v5912 = vsel %vm3601, %v5632, 0
      %v5915 = vsel %vm3601, %v5633, 0
      %v5918 = vsel %vm3601, %v5634, 0
      %v5921 = vsel %vm3601, %v5635, 0
      %v5924 = vsel %vm3601, %v5636, 0
      %v5927 = vsel %vm3601, %v5637, 0
      %v5930 = vsel %vm3601, %v5638, 0
      %v5933 = vsel %vm3601, %v5639, 0
      %v5936 = vsel %vm3601, %v5640, 0
      %v5939 = vsel %vm3601, %v5641, 0
      %v5942 = vsel %vm3601, %v5642, 0
      %v5945 = vsel %vm3601, %v5643, 0
      %v5948 = vsel %vm3601, %v5644, 0
      %v5951 = vsel %vm3601, %v5645, 0
      %v5954 = vsel %vm3601, %v5646, 0
      %v5957 = vsel %vm3601, %v5647, 0
      %v5960 = vsel %vm3601, %v5648, 0
      %v5963 = vsel %vm3601, %v5649, 0
      %v5966 = vsel %vm3601, %v5650, 0
      %v5969 = vsel %vm3601, %v5651, 0
      %v5972 = vsel %vm3601, %v5652, 0
      %v5975 = vsel %vm3601, %v5653, 0
      %v5978 = vsel %vm3601, %v5654, 0
      %v5981 = vsel %vm3601, %v5655, 0
      %v5984 = vsel %vm3601, %v5656, 0
      %v5987 = vsel %vm3601, %v5657, 0
      %v5990 = vsel %vm3601, %v5658, 0
      %v5993 = vsel %vm3601, %v5659, 0
      %v5996 = vsel %vm3601, %v5660, 0
      %v5999 = vsel %vm3601, %v5661, 0
      %v6002 = vsel %vm3601, %v5662, 0
      %v6005 = vsel %vm3601, %v5663, 0
      %v6008 = vsel %vm3601, %v5664, 0
      %v6011 = vsel %vm3601, %v5665, 0
      %v6014 = vsel %vm3601, %v5666, 0
      %v6017 = vsel %vm3601, %v5667, 0
      %v6020 = vsel %vm3601, %v5668, 0
      %v6023 = vsel %vm3601, %v5669, 0
      %v6026 = vsel %vm3601, %v5670, 0
      %v6029 = vsel %vm3601, %v5671, 0
      %v6032 = vsel %vm3601, %v5672, 0
      %v6035 = vsel %vm3601, %v5673, 0
      %v6038 = vsel %vm3601, %v5674, 0
      %v6041 = vsel %vm3601, %v5675, 0
      %v6044 = vsel %vm3601, %v5676, 0
      %v6047 = vsel %vm3601, %v5677, 0
      %v6050 = vsel %vm3601, %v5678, 0
      %v6053 = vsel %vm3601, %v5679, 0
      %v6056 = vsel %vm3601, %v5680, 0
      %v6059 = vsel %vm3601, %v5681, 0
      %v6062 = vsel %vm3601, %v5682, 0
      %v6065 = vsel %vm3601, %v5683, 0
      %v6068 = vsel %vm3601, %v5684, 0
      %v6071 = vsel %vm3601, %v5685, 0
      %v6074 = vsel %vm3601, %v5686, 0
      %v6077 = vsel %vm3986, %v5691, 0
      %6079 = vmatprep.subr.bf16.mxu0 0
      %6080 = vmatpush1.bf16.msra.mxu0 %v6077
      %6081 = vmatprep.subr.bf16.mxu0 0
      %6082 = vmatpush1.bf16.msra.mxu0 0
      %6083 = vmatprep.subr.bf16.mxu0 0
      %6084 = vmatpush1.bf16.msra.mxu0 0
      %6085 = vmatprep.subr.bf16.mxu0 0
      %6086 = vmatpush1.bf16.msra.mxu0 0
      %6087 = vmatprep.subr.bf16.mxu0 0
      %6088 = vmatpush1.bf16.msra.mxu0 0
      %6089 = vmatprep.subr.bf16.mxu0 0
      %6090 = vmatpush1.bf16.msra.mxu0 0
      %6091 = vmatprep.subr.bf16.mxu0 0
      %6092 = vmatpush1.bf16.msra.mxu0 0
      %6093 = vmatprep.subr.bf16.mxu0 0
      %6094 = vmatpush1.bf16.msra.mxu0 0
      %6095 = vmatprep.subr.bf16.mxu0 0
      %6096 = vmatpush1.bf16.msra.mxu0 0
      %6097 = vmatprep.subr.bf16.mxu0 0
      %6098 = vmatpush1.bf16.msra.mxu0 0
      %6099 = vmatprep.subr.bf16.mxu0 0
      %6100 = vmatpush1.bf16.msra.mxu0 0
      %6101 = vmatprep.subr.bf16.mxu0 0
      %6102 = vmatpush1.bf16.msra.mxu0 0
      %6103 = vmatprep.subr.bf16.mxu0 0
      %6104 = vmatpush1.bf16.msra.mxu0 0
      %6105 = vmatprep.subr.bf16.mxu0 0
      %6106 = vmatpush1.bf16.msra.mxu0 0
      %6107 = vmatprep.subr.bf16.mxu0 0
      %6108 = vmatpush1.bf16.msra.mxu0 0
      %6109 = vmatprep.subr.bf16.mxu0 0
      %6110 = vmatpush1.bf16.msra.mxu0 0
      %6111 = vmatprep.mubr.bf16.mxu0 0
      %6112 = vmatmul.mubr.bf16.gmra.mrb[0].mxu0 %v5693
      %v6113 = vpop.f32.mrb[0].mxu0
      %v6114 = vadd.f32 %v4025, %v6113
      %v6115 = vpop.f32.mrb[0].mxu0
      %v6116 = vpop.f32.mrb[0].mxu0
      %v6117 = vadd.f32 %v4028, %v6116
      %v6118 = vpop.f32.mrb[0].mxu0
      %6119 = vmatprep.mubr.bf16.mxu0 0
      %6120 = vmatmul.mubr.bf16.gmra.mrb[0].mxu0 %v5696
      %v6121 = vpop.f32.mrb[0].mxu0
      %v6122 = vadd.f32 %v4033, %v6121
      %v6123 = vpop.f32.mrb[0].mxu0
      %v6124 = vpop.f32.mrb[0].mxu0
      %v6125 = vadd.f32 %v4036, %v6124
      %v6126 = vpop.f32.mrb[0].mxu0
      %6127 = vmatprep.mubr.bf16.mxu0 0
      %6128 = vmatmul.mubr.bf16.gmra.mrb[0].mxu0 %v5699
      %v6129 = vpop.f32.mrb[0].mxu0
      %v6130 = vadd.f32 %v4041, %v6129
      %v6131 = vpop.f32.mrb[0].mxu0
      %v6132 = vpop.f32.mrb[0].mxu0
      %v6133 = vadd.f32 %v4044, %v6132
      %v6134 = vpop.f32.mrb[0].mxu0
      %6135 = vmatprep.mubr.bf16.mxu0 0
      %6136 = vmatmul.mubr.bf16.gmra.mrb[0].mxu0 %v5702
      %v6137 = vpop.f32.mrb[0].mxu0
      %v6138 = vadd.f32 %v4049, %v6137
      %v6139 = vpop.f32.mrb[0].mxu0
      %v6140 = vpop.f32.mrb[0].mxu0
      %v6141 = vadd.f32 %v4052, %v6140
      %v6142 = vpop.f32.mrb[0].mxu0
      %6143 = vmatprep.mubr.bf16.mxu0 0
      %6144 = vmatmul.mubr.bf16.gmra.mrb[0].mxu0 %v5705
      %v6145 = vpop.f32.mrb[0].mxu0
      %v6146 = vadd.f32 %v4057, %v6145
      %v6147 = vpop.f32.mrb[0].mxu0
      %v6148 = vpop.f32.mrb[0].mxu0
      %v6149 = vadd.f32 %v4060, %v6148
      %v6150 = vpop.f32.mrb[0].mxu0
      %6151 = vmatprep.mubr.bf16.mxu0 0
      %6152 = vmatmul.mubr.bf16.gmra.mrb[0].mxu0 %v5708
      %v6153 = vpop.f32.mrb[0].mxu0
      %v6154 = vadd.f32 %v4065, %v6153
      %v6155 = vpop.f32.mrb[0].mxu0
      %v6156 = vpop.f32.mrb[0].mxu0
      %v6157 = vadd.f32 %v4068, %v6156
      %v6158 = vpop.f32.mrb[0].mxu0
      %6159 = vmatprep.mubr.bf16.mxu0 0
      %6160 = vmatmul.mubr.bf16.gmra.mrb[0].mxu0 %v5711
      %v6161 = vpop.f32.mrb[0].mxu0
      %v6162 = vadd.f32 %v4073, %v6161
      %v6163 = vpop.f32.mrb[0].mxu0
      %v6164 = vpop.f32.mrb[0].mxu0
      %v6165 = vadd.f32 %v4076, %v6164
      %v6166 = vpop.f32.mrb[0].mxu0
      %6167 = vmatprep.mubr.bf16.mxu0 0
      %6168 = vmatmul.mubr.bf16.gmra.mrb[0].mxu0 %v5714
      %v6169 = vpop.f32.mrb[0].mxu0
      %v6170 = vadd.f32 %v4081, %v6169
      %v6171 = vpop.f32.mrb[0].mxu0
      %v6172 = vpop.f32.mrb[0].mxu0
      %v6173 = vadd.f32 %v4084, %v6172
      %v6174 = vpop.f32.mrb[0].mxu0
      %6175 = vmatprep.mubr.bf16.mxu0 0
      %6176 = vmatmul.mubr.bf16.gmra.mrb[0].mxu0 %v5717
      %v6177 = vpop.f32.mrb[0].mxu0
      %v6178 = vadd.f32 %v4089, %v6177
      %v6179 = vpop.f32.mrb[0].mxu0
      %v6180 = vpop.f32.mrb[0].mxu0
      %v6181 = vadd.f32 %v4092, %v6180
      %v6182 = vpop.f32.mrb[0].mxu0
      %6183 = vmatprep.mubr.bf16.mxu0 0
      %6184 = vmatmul.mubr.bf16.gmra.mrb[0].mxu0 %v5720
      %v6185 = vpop.f32.mrb[0].mxu0
      %v6186 = vadd.f32 %v4097, %v6185
      %v6187 = vpop.f32.mrb[0].mxu0
      %v6188 = vpop.f32.mrb[0].mxu0
      %v6189 = vadd.f32 %v4100, %v6188
      %v6190 = vpop.f32.mrb[0].mxu0
      %6191 = vmatprep.mubr.bf16.mxu0 0
      %6192 = vmatmul.mubr.bf16.gmra.mrb[0].mxu0 %v5723
      %v6193 = vpop.f32.mrb[0].mxu0
      %v6194 = vadd.f32 %v4105, %v6193
      %v6195 = vpop.f32.mrb[0].mxu0
      %v6196 = vpop.f32.mrb[0].mxu0
      %v6197 = vadd.f32 %v4108, %v6196
      %v6198 = vpop.f32.mrb[0].mxu0
      %6199 = vmatprep.mubr.bf16.mxu0 0
      %6200 = vmatmul.mubr.bf16.gmra.mrb[0].mxu0 %v5726
      %v6201 = vpop.f32.mrb[0].mxu0
      %v6202 = vadd.f32 %v4113, %v6201
      %v6203 = vpop.f32.mrb[0].mxu0
      %v6204 = vpop.f32.mrb[0].mxu0
      %v6205 = vadd.f32 %v4116, %v6204
      %v6206 = vpop.f32.mrb[0].mxu0
      %6207 = vmatprep.mubr.bf16.mxu0 0
      %6208 = vmatmul.mubr.bf16.gmra.mrb[0].mxu0 %v5729
      %v6209 = vpop.f32.mrb[0].mxu0
      %v6210 = vadd.f32 %v4121, %v6209
      %v6211 = vpop.f32.mrb[0].mxu0
      %v6212 = vpop.f32.mrb[0].mxu0
      %v6213 = vadd.f32 %v4124, %v6212
      %v6214 = vpop.f32.mrb[0].mxu0
      %6215 = vmatprep.mubr.bf16.mxu0 0
      %6216 = vmatmul.mubr.bf16.gmra.mrb[0].mxu0 %v5732
      %v6217 = vpop.f32.mrb[0].mxu0
      %v6218 = vadd.f32 %v4129, %v6217
      %v6219 = vpop.f32.mrb[0].mxu0
      %v6220 = vpop.f32.mrb[0].mxu0
      %v6221 = vadd.f32 %v4132, %v6220
      %v6222 = vpop.f32.mrb[0].mxu0
      %6223 = vmatprep.mubr.bf16.mxu0 0
      %6224 = vmatmul.mubr.bf16.gmra.mrb[0].mxu0 %v5735
      %v6225 = vpop.f32.mrb[0].mxu0
      %v6226 = vadd.f32 %v4137, %v6225
      %v6227 = vpop.f32.mrb[0].mxu0
      %v6228 = vpop.f32.mrb[0].mxu0
      %v6229 = vadd.f32 %v4140, %v6228
      %v6230 = vpop.f32.mrb[0].mxu0
      %6231 = vmatprep.mubr.bf16.mxu0 0
      %6232 = vmatmul.mubr.bf16.gmra.mrb[0].mxu0 %v5738
      %v6233 = vpop.f32.mrb[0].mxu0
      %v6234 = vadd.f32 %v4145, %v6233
      %v6235 = vpop.f32.mrb[0].mxu0
      %v6236 = vpop.f32.mrb[0].mxu0
      %v6237 = vadd.f32 %v4148, %v6236
      %v6238 = vpop.f32.mrb[0].mxu0
      %6239 = vmatprep.mubr.bf16.mxu0 0
      %6240 = vmatmul.mubr.bf16.gmra.mrb[0].mxu0 %v5741
      %v6241 = vpop.f32.mrb[0].mxu0
      %v6242 = vadd.f32 %v4153, %v6241
      %v6243 = vpop.f32.mrb[0].mxu0
      %v6244 = vpop.f32.mrb[0].mxu0
      %v6245 = vadd.f32 %v4156, %v6244
      %v6246 = vpop.f32.mrb[0].mxu0
      %6247 = vmatprep.mubr.bf16.mxu0 0
      %6248 = vmatmul.mubr.bf16.gmra.mrb[0].mxu0 %v5744
      %v6249 = vpop.f32.mrb[0].mxu0
      %v6250 = vadd.f32 %v4161, %v6249
      %v6251 = vpop.f32.mrb[0].mxu0
      %v6252 = vpop.f32.mrb[0].mxu0
      %v6253 = vadd.f32 %v4164, %v6252
      %v6254 = vpop.f32.mrb[0].mxu0
      %6255 = vmatprep.mubr.bf16.mxu0 0
      %6256 = vmatmul.mubr.bf16.gmra.mrb[0].mxu0 %v5747
      %v6257 = vpop.f32.mrb[0].mxu0
      %v6258 = vadd.f32 %v4169, %v6257
      %v6259 = vpop.f32.mrb[0].mxu0
      %v6260 = vpop.f32.mrb[0].mxu0
      %v6261 = vadd.f32 %v4172, %v6260
      %v6262 = vpop.f32.mrb[0].mxu0
      %6263 = vmatprep.mubr.bf16.mxu0 0
      %6264 = vmatmul.mubr.bf16.gmra.mrb[0].mxu0 %v5750
      %v6265 = vpop.f32.mrb[0].mxu0
      %v6266 = vadd.f32 %v4177, %v6265
      %v6267 = vpop.f32.mrb[0].mxu0
      %v6268 = vpop.f32.mrb[0].mxu0
      %v6269 = vadd.f32 %v4180, %v6268
      %v6270 = vpop.f32.mrb[0].mxu0
      %6271 = vmatprep.mubr.bf16.mxu0 0
      %6272 = vmatmul.mubr.bf16.gmra.mrb[0].mxu0 %v5753
      %v6273 = vpop.f32.mrb[0].mxu0
      %v6274 = vadd.f32 %v4185, %v6273
      %v6275 = vpop.f32.mrb[0].mxu0
      %v6276 = vpop.f32.mrb[0].mxu0
      %v6277 = vadd.f32 %v4188, %v6276
      %v6278 = vpop.f32.mrb[0].mxu0
      %6279 = vmatprep.mubr.bf16.mxu0 0
      %6280 = vmatmul.mubr.bf16.gmra.mrb[0].mxu0 %v5756
      %v6281 = vpop.f32.mrb[0].mxu0
      %v6282 = vadd.f32 %v4193, %v6281
      %v6283 = vpop.f32.mrb[0].mxu0
      %v6284 = vpop.f32.mrb[0].mxu0
      %v6285 = vadd.f32 %v4196, %v6284
      %v6286 = vpop.f32.mrb[0].mxu0
      %6287 = vmatprep.mubr.bf16.mxu0 0
      %6288 = vmatmul.mubr.bf16.gmra.mrb[0].mxu0 %v5759
      %v6289 = vpop.f32.mrb[0].mxu0
      %v6290 = vadd.f32 %v4201, %v6289
      %v6291 = vpop.f32.mrb[0].mxu0
      %v6292 = vpop.f32.mrb[0].mxu0
      %v6293 = vadd.f32 %v4204, %v6292
      %v6294 = vpop.f32.mrb[0].mxu0
      %6295 = vmatprep.mubr.bf16.mxu0 0
      %6296 = vmatmul.mubr.bf16.gmra.mrb[0].mxu0 %v5762
      %v6297 = vpop.f32.mrb[0].mxu0
      %v6298 = vadd.f32 %v4209, %v6297
      %v6299 = vpop.f32.mrb[0].mxu0
      %v6300 = vpop.f32.mrb[0].mxu0
      %v6301 = vadd.f32 %v4212, %v6300
      %v6302 = vpop.f32.mrb[0].mxu0
      %6303 = vmatprep.mubr.bf16.mxu0 0
      %6304 = vmatmul.mubr.bf16.gmra.mrb[0].mxu0 %v5765
      %v6305 = vpop.f32.mrb[0].mxu0
      %v6306 = vadd.f32 %v4217, %v6305
      %v6307 = vpop.f32.mrb[0].mxu0
      %v6308 = vpop.f32.mrb[0].mxu0
      %v6309 = vadd.f32 %v4220, %v6308
      %v6310 = vpop.f32.mrb[0].mxu0
      %6311 = vmatprep.mubr.bf16.mxu0 0
      %6312 = vmatmul.mubr.bf16.gmra.mrb[0].mxu0 %v5768
      %v6313 = vpop.f32.mrb[0].mxu0
      %v6314 = vadd.f32 %v4225, %v6313
      %v6315 = vpop.f32.mrb[0].mxu0
      %v6316 = vpop.f32.mrb[0].mxu0
      %v6317 = vadd.f32 %v4228, %v6316
      %v6318 = vpop.f32.mrb[0].mxu0
      %6319 = vmatprep.mubr.bf16.mxu0 0
      %6320 = vmatmul.mubr.bf16.gmra.mrb[0].mxu0 %v5771
      %v6321 = vpop.f32.mrb[0].mxu0
      %v6322 = vadd.f32 %v4233, %v6321
      %v6323 = vpop.f32.mrb[0].mxu0
      %v6324 = vpop.f32.mrb[0].mxu0
      %v6325 = vadd.f32 %v4236, %v6324
      %v6326 = vpop.f32.mrb[0].mxu0
      %6327 = vmatprep.mubr.bf16.mxu0 0
      %6328 = vmatmul.mubr.bf16.gmra.mrb[0].mxu0 %v5774
      %v6329 = vpop.f32.mrb[0].mxu0
      %v6330 = vadd.f32 %v4241, %v6329
      %v6331 = vpop.f32.mrb[0].mxu0
      %v6332 = vpop.f32.mrb[0].mxu0
      %v6333 = vadd.f32 %v4244, %v6332
      %v6334 = vpop.f32.mrb[0].mxu0
      %6335 = vmatprep.mubr.bf16.mxu0 0
      %6336 = vmatmul.mubr.bf16.gmra.mrb[0].mxu0 %v5777
      %v6337 = vpop.f32.mrb[0].mxu0
      %v6338 = vadd.f32 %v4249, %v6337
      %v6339 = vpop.f32.mrb[0].mxu0
      %v6340 = vpop.f32.mrb[0].mxu0
      %v6341 = vadd.f32 %v4252, %v6340
      %v6342 = vpop.f32.mrb[0].mxu0
      %6343 = vmatprep.mubr.bf16.mxu0 0
      %6344 = vmatmul.mubr.bf16.gmra.mrb[0].mxu0 %v5780
      %v6345 = vpop.f32.mrb[0].mxu0
      %v6346 = vadd.f32 %v4257, %v6345
      %v6347 = vpop.f32.mrb[0].mxu0
      %v6348 = vpop.f32.mrb[0].mxu0
      %v6349 = vadd.f32 %v4260, %v6348
      %v6350 = vpop.f32.mrb[0].mxu0
      %6351 = vmatprep.mubr.bf16.mxu0 0
      %6352 = vmatmul.mubr.bf16.gmra.mrb[0].mxu0 %v5783
      %v6353 = vpop.f32.mrb[0].mxu0
      %v6354 = vadd.f32 %v4265, %v6353
      %v6355 = vpop.f32.mrb[0].mxu0
      %v6356 = vpop.f32.mrb[0].mxu0
      %v6357 = vadd.f32 %v4268, %v6356
      %v6358 = vpop.f32.mrb[0].mxu0
      %6359 = vmatprep.mubr.bf16.mxu0 0
      %6360 = vmatmul.mubr.bf16.gmra.mrb[0].mxu0 %v5786
      %v6361 = vpop.f32.mrb[0].mxu0
      %v6362 = vadd.f32 %v4273, %v6361
      %v6363 = vpop.f32.mrb[0].mxu0
      %v6364 = vpop.f32.mrb[0].mxu0
      %v6365 = vadd.f32 %v4276, %v6364
      %v6366 = vpop.f32.mrb[0].mxu0
      %6367 = vmatprep.mubr.bf16.mxu0 0
      %6368 = vmatmul.mubr.bf16.gmra.mrb[0].mxu0 %v5789
      %v6369 = vpop.f32.mrb[0].mxu0
      %v6370 = vadd.f32 %v4281, %v6369
      %v6371 = vpop.f32.mrb[0].mxu0
      %v6372 = vpop.f32.mrb[0].mxu0
      %v6373 = vadd.f32 %v4284, %v6372
      %v6374 = vpop.f32.mrb[0].mxu0
      %6375 = vmatprep.mubr.bf16.mxu0 0
      %6376 = vmatmul.mubr.bf16.gmra.mrb[0].mxu0 %v5792
      %v6377 = vpop.f32.mrb[0].mxu0
      %v6378 = vadd.f32 %v4289, %v6377
      %v6379 = vpop.f32.mrb[0].mxu0
      %v6380 = vpop.f32.mrb[0].mxu0
      %v6381 = vadd.f32 %v4292, %v6380
      %v6382 = vpop.f32.mrb[0].mxu0
      %6383 = vmatprep.mubr.bf16.mxu0 0
      %6384 = vmatmul.mubr.bf16.gmra.mrb[0].mxu0 %v5795
      %v6385 = vpop.f32.mrb[0].mxu0
      %v6386 = vadd.f32 %v4297, %v6385
      %v6387 = vpop.f32.mrb[0].mxu0
      %v6388 = vpop.f32.mrb[0].mxu0
      %v6389 = vadd.f32 %v4300, %v6388
      %v6390 = vpop.f32.mrb[0].mxu0
      %6391 = vmatprep.mubr.bf16.mxu0 0
      %6392 = vmatmul.mubr.bf16.gmra.mrb[0].mxu0 %v5798
      %v6393 = vpop.f32.mrb[0].mxu0
      %v6394 = vadd.f32 %v4305, %v6393
      %v6395 = vpop.f32.mrb[0].mxu0
      %v6396 = vpop.f32.mrb[0].mxu0
      %v6397 = vadd.f32 %v4308, %v6396
      %v6398 = vpop.f32.mrb[0].mxu0
      %6399 = vmatprep.mubr.bf16.mxu0 0
      %6400 = vmatmul.mubr.bf16.gmra.mrb[0].mxu0 %v5801
      %v6401 = vpop.f32.mrb[0].mxu0
      %v6402 = vadd.f32 %v4313, %v6401
      %v6403 = vpop.f32.mrb[0].mxu0
      %v6404 = vpop.f32.mrb[0].mxu0
      %v6405 = vadd.f32 %v4316, %v6404
      %v6406 = vpop.f32.mrb[0].mxu0
      %6407 = vmatprep.mubr.bf16.mxu0 0
      %6408 = vmatmul.mubr.bf16.gmra.mrb[0].mxu0 %v5804
      %v6409 = vpop.f32.mrb[0].mxu0
      %v6410 = vadd.f32 %v4321, %v6409
      %v6411 = vpop.f32.mrb[0].mxu0
      %v6412 = vpop.f32.mrb[0].mxu0
      %v6413 = vadd.f32 %v4324, %v6412
      %v6414 = vpop.f32.mrb[0].mxu0
      %6415 = vmatprep.mubr.bf16.mxu0 0
      %6416 = vmatmul.mubr.bf16.gmra.mrb[0].mxu0 %v5807
      %v6417 = vpop.f32.mrb[0].mxu0
      %v6418 = vadd.f32 %v4329, %v6417
      %v6419 = vpop.f32.mrb[0].mxu0
      %v6420 = vpop.f32.mrb[0].mxu0
      %v6421 = vadd.f32 %v4332, %v6420
      %v6422 = vpop.f32.mrb[0].mxu0
      %6423 = vmatprep.mubr.bf16.mxu0 0
      %6424 = vmatmul.mubr.bf16.gmra.mrb[0].mxu0 %v5810
      %v6425 = vpop.f32.mrb[0].mxu0
      %v6426 = vadd.f32 %v4337, %v6425
      %v6427 = vpop.f32.mrb[0].mxu0
      %v6428 = vpop.f32.mrb[0].mxu0
      %v6429 = vadd.f32 %v4340, %v6428
      %v6430 = vpop.f32.mrb[0].mxu0
      %6431 = vmatprep.mubr.bf16.mxu0 0
      %6432 = vmatmul.mubr.bf16.gmra.mrb[0].mxu0 %v5813
      %v6433 = vpop.f32.mrb[0].mxu0
      %v6434 = vadd.f32 %v4345, %v6433
      %v6435 = vpop.f32.mrb[0].mxu0
      %v6436 = vpop.f32.mrb[0].mxu0
      %v6437 = vadd.f32 %v4348, %v6436
      %v6438 = vpop.f32.mrb[0].mxu0
      %6439 = vmatprep.mubr.bf16.mxu0 0
      %6440 = vmatmul.mubr.bf16.gmra.mrb[0].mxu0 %v5816
      %v6441 = vpop.f32.mrb[0].mxu0
      %v6442 = vadd.f32 %v4353, %v6441
      %v6443 = vpop.f32.mrb[0].mxu0
      %v6444 = vpop.f32.mrb[0].mxu0
      %v6445 = vadd.f32 %v4356, %v6444
      %v6446 = vpop.f32.mrb[0].mxu0
      %6447 = vmatprep.mubr.bf16.mxu0 0
      %6448 = vmatmul.mubr.bf16.gmra.mrb[0].mxu0 %v5819
      %v6449 = vpop.f32.mrb[0].mxu0
      %v6450 = vadd.f32 %v4361, %v6449
      %v6451 = vpop.f32.mrb[0].mxu0
      %v6452 = vpop.f32.mrb[0].mxu0
      %v6453 = vadd.f32 %v4364, %v6452
      %v6454 = vpop.f32.mrb[0].mxu0
      %6455 = vmatprep.mubr.bf16.mxu0 0
      %6456 = vmatmul.mubr.bf16.gmra.mrb[0].mxu0 %v5822
      %v6457 = vpop.f32.mrb[0].mxu0
      %v6458 = vadd.f32 %v4369, %v6457
      %v6459 = vpop.f32.mrb[0].mxu0
      %v6460 = vpop.f32.mrb[0].mxu0
      %v6461 = vadd.f32 %v4372, %v6460
      %v6462 = vpop.f32.mrb[0].mxu0
      %6463 = vmatprep.mubr.bf16.mxu0 0
      %6464 = vmatmul.mubr.bf16.gmra.mrb[0].mxu0 %v5825
      %v6465 = vpop.f32.mrb[0].mxu0
      %v6466 = vadd.f32 %v4377, %v6465
      %v6467 = vpop.f32.mrb[0].mxu0
      %v6468 = vpop.f32.mrb[0].mxu0
      %v6469 = vadd.f32 %v4380, %v6468
      %v6470 = vpop.f32.mrb[0].mxu0
      %6471 = vmatprep.mubr.bf16.mxu0 0
      %6472 = vmatmul.mubr.bf16.gmra.mrb[0].mxu0 %v5828
      %v6473 = vpop.f32.mrb[0].mxu0
      %v6474 = vadd.f32 %v4385, %v6473
      %v6475 = vpop.f32.mrb[0].mxu0
      %v6476 = vpop.f32.mrb[0].mxu0
      %v6477 = vadd.f32 %v4388, %v6476
      %v6478 = vpop.f32.mrb[0].mxu0
      %6479 = vmatprep.mubr.bf16.mxu0 0
      %6480 = vmatmul.mubr.bf16.gmra.mrb[0].mxu0 %v5831
      %v6481 = vpop.f32.mrb[0].mxu0
      %v6482 = vadd.f32 %v4393, %v6481
      %v6483 = vpop.f32.mrb[0].mxu0
      %v6484 = vpop.f32.mrb[0].mxu0
      %v6485 = vadd.f32 %v4396, %v6484
      %v6486 = vpop.f32.mrb[0].mxu0
      %6487 = vmatprep.mubr.bf16.mxu0 0
      %6488 = vmatmul.mubr.bf16.gmra.mrb[0].mxu0 %v5834
      %v6489 = vpop.f32.mrb[0].mxu0
      %v6490 = vadd.f32 %v4401, %v6489
      %v6491 = vpop.f32.mrb[0].mxu0
      %v6492 = vpop.f32.mrb[0].mxu0
      %v6493 = vadd.f32 %v4404, %v6492
      %v6494 = vpop.f32.mrb[0].mxu0
      %6495 = vmatprep.mubr.bf16.mxu0 0
      %6496 = vmatmul.mubr.bf16.gmra.mrb[0].mxu0 %v5837
      %v6497 = vpop.f32.mrb[0].mxu0
      %v6498 = vadd.f32 %v4409, %v6497
      %v6499 = vpop.f32.mrb[0].mxu0
      %v6500 = vpop.f32.mrb[0].mxu0
      %v6501 = vadd.f32 %v4412, %v6500
      %v6502 = vpop.f32.mrb[0].mxu0
      %6503 = vmatprep.mubr.bf16.mxu0 0
      %6504 = vmatmul.mubr.bf16.gmra.mrb[0].mxu0 %v5840
      %v6505 = vpop.f32.mrb[0].mxu0
      %v6506 = vadd.f32 %v4417, %v6505
      %v6507 = vpop.f32.mrb[0].mxu0
      %v6508 = vpop.f32.mrb[0].mxu0
      %v6509 = vadd.f32 %v4420, %v6508
      %v6510 = vpop.f32.mrb[0].mxu0
      %6511 = vmatprep.mubr.bf16.mxu0 0
      %6512 = vmatmul.mubr.bf16.gmra.mrb[0].mxu0 %v5843
      %v6513 = vpop.f32.mrb[0].mxu0
      %v6514 = vadd.f32 %v4425, %v6513
      %v6515 = vpop.f32.mrb[0].mxu0
      %v6516 = vpop.f32.mrb[0].mxu0
      %v6517 = vadd.f32 %v4428, %v6516
      %v6518 = vpop.f32.mrb[0].mxu0
      %6519 = vmatprep.mubr.bf16.mxu0 0
      %6520 = vmatmul.mubr.bf16.gmra.mrb[0].mxu0 %v5846
      %v6521 = vpop.f32.mrb[0].mxu0
      %v6522 = vadd.f32 %v4433, %v6521
      %v6523 = vpop.f32.mrb[0].mxu0
      %v6524 = vpop.f32.mrb[0].mxu0
      %v6525 = vadd.f32 %v4436, %v6524
      %v6526 = vpop.f32.mrb[0].mxu0
      %6527 = vmatprep.mubr.bf16.mxu0 0
      %6528 = vmatmul.mubr.bf16.gmra.mrb[0].mxu0 %v5849
      %v6529 = vpop.f32.mrb[0].mxu0
      %v6530 = vadd.f32 %v4441, %v6529
      %v6531 = vpop.f32.mrb[0].mxu0
      %v6532 = vpop.f32.mrb[0].mxu0
      %v6533 = vadd.f32 %v4444, %v6532
      %v6534 = vpop.f32.mrb[0].mxu0
      %6535 = vmatprep.mubr.bf16.mxu0 0
      %6536 = vmatmul.mubr.bf16.gmra.mrb[0].mxu0 %v5852
      %v6537 = vpop.f32.mrb[0].mxu0
      %v6538 = vadd.f32 %v4449, %v6537
      %v6539 = vpop.f32.mrb[0].mxu0
      %v6540 = vpop.f32.mrb[0].mxu0
      %v6541 = vadd.f32 %v4452, %v6540
      %v6542 = vpop.f32.mrb[0].mxu0
      %6543 = vmatprep.mubr.bf16.mxu0 0
      %6544 = vmatmul.mubr.bf16.gmra.mrb[0].mxu0 %v5855
      %v6545 = vpop.f32.mrb[0].mxu0
      %v6546 = vadd.f32 %v4457, %v6545
      %v6547 = vpop.f32.mrb[0].mxu0
      %v6548 = vpop.f32.mrb[0].mxu0
      %v6549 = vadd.f32 %v4460, %v6548
      %v6550 = vpop.f32.mrb[0].mxu0
      %6551 = vmatprep.mubr.bf16.mxu0 0
      %6552 = vmatmul.mubr.bf16.gmra.mrb[0].mxu0 %v5858
      %v6553 = vpop.f32.mrb[0].mxu0
      %v6554 = vadd.f32 %v4465, %v6553
      %v6555 = vpop.f32.mrb[0].mxu0
      %v6556 = vpop.f32.mrb[0].mxu0
      %v6557 = vadd.f32 %v4468, %v6556
      %v6558 = vpop.f32.mrb[0].mxu0
      %6559 = vmatprep.mubr.bf16.mxu0 0
      %6560 = vmatmul.mubr.bf16.gmra.mrb[0].mxu0 %v5861
      %v6561 = vpop.f32.mrb[0].mxu0
      %v6562 = vadd.f32 %v4473, %v6561
      %v6563 = vpop.f32.mrb[0].mxu0
      %v6564 = vpop.f32.mrb[0].mxu0
      %v6565 = vadd.f32 %v4476, %v6564
      %v6566 = vpop.f32.mrb[0].mxu0
      %6567 = vmatprep.mubr.bf16.mxu0 0
      %6568 = vmatmul.mubr.bf16.gmra.mrb[0].mxu0 %v5864
      %v6569 = vpop.f32.mrb[0].mxu0
      %v6570 = vadd.f32 %v4481, %v6569
      %v6571 = vpop.f32.mrb[0].mxu0
      %v6572 = vpop.f32.mrb[0].mxu0
      %v6573 = vadd.f32 %v4484, %v6572
      %v6574 = vpop.f32.mrb[0].mxu0
      %6575 = vmatprep.mubr.bf16.mxu0 0
      %6576 = vmatmul.mubr.bf16.gmra.mrb[0].mxu0 %v5867
      %v6577 = vpop.f32.mrb[0].mxu0
      %v6578 = vadd.f32 %v4489, %v6577
      %v6579 = vpop.f32.mrb[0].mxu0
      %v6580 = vpop.f32.mrb[0].mxu0
      %v6581 = vadd.f32 %v4492, %v6580
      %v6582 = vpop.f32.mrb[0].mxu0
      %6583 = vmatprep.mubr.bf16.mxu0 0
      %6584 = vmatmul.mubr.bf16.gmra.mrb[0].mxu0 %v5870
      %v6585 = vpop.f32.mrb[0].mxu0
      %v6586 = vadd.f32 %v4497, %v6585
      %v6587 = vpop.f32.mrb[0].mxu0
      %v6588 = vpop.f32.mrb[0].mxu0
      %v6589 = vadd.f32 %v4500, %v6588
      %v6590 = vpop.f32.mrb[0].mxu0
      %6591 = vmatprep.mubr.bf16.mxu0 0
      %6592 = vmatmul.mubr.bf16.gmra.mrb[0].mxu0 %v5873
      %v6593 = vpop.f32.mrb[0].mxu0
      %v6594 = vadd.f32 %v4505, %v6593
      %v6595 = vpop.f32.mrb[0].mxu0
      %v6596 = vpop.f32.mrb[0].mxu0
      %v6597 = vadd.f32 %v4508, %v6596
      %v6598 = vpop.f32.mrb[0].mxu0
      %6599 = vmatprep.mubr.bf16.mxu0 0
      %6600 = vmatmul.mubr.bf16.gmra.mrb[0].mxu0 %v5876
      %v6601 = vpop.f32.mrb[0].mxu0
      %v6602 = vadd.f32 %v4513, %v6601
      %v6603 = vpop.f32.mrb[0].mxu0
      %v6604 = vpop.f32.mrb[0].mxu0
      %v6605 = vadd.f32 %v4516, %v6604
      %v6606 = vpop.f32.mrb[0].mxu0
      %6607 = vmatprep.mubr.bf16.mxu0 0
      %6608 = vmatmul.mubr.bf16.gmra.mrb[0].mxu0 %v5879
      %v6609 = vpop.f32.mrb[0].mxu0
      %v6610 = vadd.f32 %v4521, %v6609
      %v6611 = vpop.f32.mrb[0].mxu0
      %v6612 = vpop.f32.mrb[0].mxu0
      %v6613 = vadd.f32 %v4524, %v6612
      %v6614 = vpop.f32.mrb[0].mxu0
      %6615 = vmatprep.mubr.bf16.mxu0 0
      %6616 = vmatmul.mubr.bf16.gmra.mrb[0].mxu0 %v5882
      %v6617 = vpop.f32.mrb[0].mxu0
      %v6618 = vadd.f32 %v4529, %v6617
      %v6619 = vpop.f32.mrb[0].mxu0
      %v6620 = vpop.f32.mrb[0].mxu0
      %v6621 = vadd.f32 %v4532, %v6620
      %v6622 = vpop.f32.mrb[0].mxu0
      %6623 = vmatprep.mubr.bf16.mxu0 0
      %6624 = vmatmul.mubr.bf16.gmra.mrb[0].mxu0 %v5885
      %v6625 = vpop.f32.mrb[0].mxu0
      %v6626 = vadd.f32 %v4537, %v6625
      %v6627 = vpop.f32.mrb[0].mxu0
      %v6628 = vpop.f32.mrb[0].mxu0
      %v6629 = vadd.f32 %v4540, %v6628
      %v6630 = vpop.f32.mrb[0].mxu0
      %6631 = vmatprep.mubr.bf16.mxu0 0
      %6632 = vmatmul.mubr.bf16.gmra.mrb[0].mxu0 %v5888
      %v6633 = vpop.f32.mrb[0].mxu0
      %v6634 = vadd.f32 %v4545, %v6633
      %v6635 = vpop.f32.mrb[0].mxu0
      %v6636 = vpop.f32.mrb[0].mxu0
      %v6637 = vadd.f32 %v4548, %v6636
      %v6638 = vpop.f32.mrb[0].mxu0
      %6639 = vmatprep.mubr.bf16.mxu0 0
      %6640 = vmatmul.mubr.bf16.gmra.mrb[0].mxu0 %v5891
      %v6641 = vpop.f32.mrb[0].mxu0
      %v6642 = vadd.f32 %v4553, %v6641
      %v6643 = vpop.f32.mrb[0].mxu0
      %v6644 = vpop.f32.mrb[0].mxu0
      %v6645 = vadd.f32 %v4556, %v6644
      %v6646 = vpop.f32.mrb[0].mxu0
      %6647 = vmatprep.mubr.bf16.mxu0 0
      %6648 = vmatmul.mubr.bf16.gmra.mrb[0].mxu0 %v5894
      %v6649 = vpop.f32.mrb[0].mxu0
      %v6650 = vadd.f32 %v4561, %v6649
      %v6651 = vpop.f32.mrb[0].mxu0
      %v6652 = vpop.f32.mrb[0].mxu0
      %v6653 = vadd.f32 %v4564, %v6652
      %v6654 = vpop.f32.mrb[0].mxu0
      %6655 = vmatprep.mubr.bf16.mxu0 0
      %6656 = vmatmul.mubr.bf16.gmra.mrb[0].mxu0 %v5897
      %v6657 = vpop.f32.mrb[0].mxu0
      %v6658 = vadd.f32 %v4569, %v6657
      %v6659 = vpop.f32.mrb[0].mxu0
      %v6660 = vpop.f32.mrb[0].mxu0
      %v6661 = vadd.f32 %v4572, %v6660
      %v6662 = vpop.f32.mrb[0].mxu0
      %6663 = vmatprep.mubr.bf16.mxu0 0
      %6664 = vmatmul.mubr.bf16.gmra.mrb[0].mxu0 %v5900
      %v6665 = vpop.f32.mrb[0].mxu0
      %v6666 = vadd.f32 %v4577, %v6665
      %v6667 = vpop.f32.mrb[0].mxu0
      %v6668 = vpop.f32.mrb[0].mxu0
      %v6669 = vadd.f32 %v4580, %v6668
      %v6670 = vpop.f32.mrb[0].mxu0
      %6671 = vmatprep.mubr.bf16.mxu0 0
      %6672 = vmatmul.mubr.bf16.gmra.mrb[0].mxu0 %v5903
      %v6673 = vpop.f32.mrb[0].mxu0
      %v6674 = vadd.f32 %v4585, %v6673
      %v6675 = vpop.f32.mrb[0].mxu0
      %v6676 = vpop.f32.mrb[0].mxu0
      %v6677 = vadd.f32 %v4588, %v6676
      %v6678 = vpop.f32.mrb[0].mxu0
      %6679 = vmatprep.mubr.bf16.mxu0 0
      %6680 = vmatmul.mubr.bf16.gmra.mrb[0].mxu0 %v5906
      %v6681 = vpop.f32.mrb[0].mxu0
      %v6682 = vadd.f32 %v4593, %v6681
      %v6683 = vpop.f32.mrb[0].mxu0
      %v6684 = vpop.f32.mrb[0].mxu0
      %v6685 = vadd.f32 %v4596, %v6684
      %v6686 = vpop.f32.mrb[0].mxu0
      %6687 = vmatprep.mubr.bf16.mxu0 0
      %6688 = vmatmul.mubr.bf16.gmra.mrb[0].mxu0 %v5909
      %v6689 = vpop.f32.mrb[0].mxu0
      %v6690 = vadd.f32 %v4601, %v6689
      %v6691 = vpop.f32.mrb[0].mxu0
      %v6692 = vpop.f32.mrb[0].mxu0
      %v6693 = vadd.f32 %v4604, %v6692
      %v6694 = vpop.f32.mrb[0].mxu0
      %6695 = vmatprep.mubr.bf16.mxu0 0
      %6696 = vmatmul.mubr.bf16.gmra.mrb[0].mxu0 %v5912
      %v6697 = vpop.f32.mrb[0].mxu0
      %v6698 = vadd.f32 %v4609, %v6697
      %v6699 = vpop.f32.mrb[0].mxu0
      %v6700 = vpop.f32.mrb[0].mxu0
      %v6701 = vadd.f32 %v4612, %v6700
      %v6702 = vpop.f32.mrb[0].mxu0
      %6703 = vmatprep.mubr.bf16.mxu0 0
      %6704 = vmatmul.mubr.bf16.gmra.mrb[0].mxu0 %v5915
      %v6705 = vpop.f32.mrb[0].mxu0
      %v6706 = vadd.f32 %v4617, %v6705
      %v6707 = vpop.f32.mrb[0].mxu0
      %v6708 = vpop.f32.mrb[0].mxu0
      %v6709 = vadd.f32 %v4620, %v6708
      %v6710 = vpop.f32.mrb[0].mxu0
      %6711 = vmatprep.mubr.bf16.mxu0 0
      %6712 = vmatmul.mubr.bf16.gmra.mrb[0].mxu0 %v5918
      %v6713 = vpop.f32.mrb[0].mxu0
      %v6714 = vadd.f32 %v4625, %v6713
      %v6715 = vpop.f32.mrb[0].mxu0
      %v6716 = vpop.f32.mrb[0].mxu0
      %v6717 = vadd.f32 %v4628, %v6716
      %v6718 = vpop.f32.mrb[0].mxu0
      %6719 = vmatprep.mubr.bf16.mxu0 0
      %6720 = vmatmul.mubr.bf16.gmra.mrb[0].mxu0 %v5921
      %v6721 = vpop.f32.mrb[0].mxu0
      %v6722 = vadd.f32 %v4633, %v6721
      %v6723 = vpop.f32.mrb[0].mxu0
      %v6724 = vpop.f32.mrb[0].mxu0
      %v6725 = vadd.f32 %v4636, %v6724
      %v6726 = vpop.f32.mrb[0].mxu0
      %6727 = vmatprep.mubr.bf16.mxu0 0
      %6728 = vmatmul.mubr.bf16.gmra.mrb[0].mxu0 %v5924
      %v6729 = vpop.f32.mrb[0].mxu0
      %v6730 = vadd.f32 %v4641, %v6729
      %v6731 = vpop.f32.mrb[0].mxu0
      %v6732 = vpop.f32.mrb[0].mxu0
      %v6733 = vadd.f32 %v4644, %v6732
      %v6734 = vpop.f32.mrb[0].mxu0
      %6735 = vmatprep.mubr.bf16.mxu0 0
      %6736 = vmatmul.mubr.bf16.gmra.mrb[0].mxu0 %v5927
      %v6737 = vpop.f32.mrb[0].mxu0
      %v6738 = vadd.f32 %v4649, %v6737
      %v6739 = vpop.f32.mrb[0].mxu0
      %v6740 = vpop.f32.mrb[0].mxu0
      %v6741 = vadd.f32 %v4652, %v6740
      %v6742 = vpop.f32.mrb[0].mxu0
      %6743 = vmatprep.mubr.bf16.mxu0 0
      %6744 = vmatmul.mubr.bf16.gmra.mrb[0].mxu0 %v5930
      %v6745 = vpop.f32.mrb[0].mxu0
      %v6746 = vadd.f32 %v4657, %v6745
      %v6747 = vpop.f32.mrb[0].mxu0
      %v6748 = vpop.f32.mrb[0].mxu0
      %v6749 = vadd.f32 %v4660, %v6748
      %v6750 = vpop.f32.mrb[0].mxu0
      %6751 = vmatprep.mubr.bf16.mxu0 0
      %6752 = vmatmul.mubr.bf16.gmra.mrb[0].mxu0 %v5933
      %v6753 = vpop.f32.mrb[0].mxu0
      %v6754 = vadd.f32 %v4665, %v6753
      %v6755 = vpop.f32.mrb[0].mxu0
      %v6756 = vpop.f32.mrb[0].mxu0
      %v6757 = vadd.f32 %v4668, %v6756
      %v6758 = vpop.f32.mrb[0].mxu0
      %6759 = vmatprep.mubr.bf16.mxu0 0
      %6760 = vmatmul.mubr.bf16.gmra.mrb[0].mxu0 %v5936
      %v6761 = vpop.f32.mrb[0].mxu0
      %v6762 = vadd.f32 %v4673, %v6761
      %v6763 = vpop.f32.mrb[0].mxu0
      %v6764 = vpop.f32.mrb[0].mxu0
      %v6765 = vadd.f32 %v4676, %v6764
      %v6766 = vpop.f32.mrb[0].mxu0
      %6767 = vmatprep.mubr.bf16.mxu0 0
      %6768 = vmatmul.mubr.bf16.gmra.mrb[0].mxu0 %v5939
      %v6769 = vpop.f32.mrb[0].mxu0
      %v6770 = vadd.f32 %v4681, %v6769
      %v6771 = vpop.f32.mrb[0].mxu0
      %v6772 = vpop.f32.mrb[0].mxu0
      %v6773 = vadd.f32 %v4684, %v6772
      %v6774 = vpop.f32.mrb[0].mxu0
      %6775 = vmatprep.mubr.bf16.mxu0 0
      %6776 = vmatmul.mubr.bf16.gmra.mrb[0].mxu0 %v5942
      %v6777 = vpop.f32.mrb[0].mxu0
      %v6778 = vadd.f32 %v4689, %v6777
      %v6779 = vpop.f32.mrb[0].mxu0
      %v6780 = vpop.f32.mrb[0].mxu0
      %v6781 = vadd.f32 %v4692, %v6780
      %v6782 = vpop.f32.mrb[0].mxu0
      %6783 = vmatprep.mubr.bf16.mxu0 0
      %6784 = vmatmul.mubr.bf16.gmra.mrb[0].mxu0 %v5945
      %v6785 = vpop.f32.mrb[0].mxu0
      %v6786 = vadd.f32 %v4697, %v6785
      %v6787 = vpop.f32.mrb[0].mxu0
      %v6788 = vpop.f32.mrb[0].mxu0
      %v6789 = vadd.f32 %v4700, %v6788
      %v6790 = vpop.f32.mrb[0].mxu0
      %6791 = vmatprep.mubr.bf16.mxu0 0
      %6792 = vmatmul.mubr.bf16.gmra.mrb[0].mxu0 %v5948
      %v6793 = vpop.f32.mrb[0].mxu0
      %v6794 = vadd.f32 %v4705, %v6793
      %v6795 = vpop.f32.mrb[0].mxu0
      %v6796 = vpop.f32.mrb[0].mxu0
      %v6797 = vadd.f32 %v4708, %v6796
      %v6798 = vpop.f32.mrb[0].mxu0
      %6799 = vmatprep.mubr.bf16.mxu0 0
      %6800 = vmatmul.mubr.bf16.gmra.mrb[0].mxu0 %v5951
      %v6801 = vpop.f32.mrb[0].mxu0
      %v6802 = vadd.f32 %v4713, %v6801
      %v6803 = vpop.f32.mrb[0].mxu0
      %v6804 = vpop.f32.mrb[0].mxu0
      %v6805 = vadd.f32 %v4716, %v6804
      %v6806 = vpop.f32.mrb[0].mxu0
      %6807 = vmatprep.mubr.bf16.mxu0 0
      %6808 = vmatmul.mubr.bf16.gmra.mrb[0].mxu0 %v5954
      %v6809 = vpop.f32.mrb[0].mxu0
      %v6810 = vadd.f32 %v4721, %v6809
      %v6811 = vpop.f32.mrb[0].mxu0
      %v6812 = vpop.f32.mrb[0].mxu0
      %v6813 = vadd.f32 %v4724, %v6812
      %v6814 = vpop.f32.mrb[0].mxu0
      %6815 = vmatprep.mubr.bf16.mxu0 0
      %6816 = vmatmul.mubr.bf16.gmra.mrb[0].mxu0 %v5957
      %v6817 = vpop.f32.mrb[0].mxu0
      %v6818 = vadd.f32 %v4729, %v6817
      %v6819 = vpop.f32.mrb[0].mxu0
      %v6820 = vpop.f32.mrb[0].mxu0
      %v6821 = vadd.f32 %v4732, %v6820
      %v6822 = vpop.f32.mrb[0].mxu0
      %6823 = vmatprep.mubr.bf16.mxu0 0
      %6824 = vmatmul.mubr.bf16.gmra.mrb[0].mxu0 %v5960
      %v6825 = vpop.f32.mrb[0].mxu0
      %v6826 = vadd.f32 %v4737, %v6825
      %v6827 = vpop.f32.mrb[0].mxu0
      %v6828 = vpop.f32.mrb[0].mxu0
      %v6829 = vadd.f32 %v4740, %v6828
      %v6830 = vpop.f32.mrb[0].mxu0
      %6831 = vmatprep.mubr.bf16.mxu0 0
      %6832 = vmatmul.mubr.bf16.gmra.mrb[0].mxu0 %v5963
      %v6833 = vpop.f32.mrb[0].mxu0
      %v6834 = vadd.f32 %v4745, %v6833
      %v6835 = vpop.f32.mrb[0].mxu0
      %v6836 = vpop.f32.mrb[0].mxu0
      %v6837 = vadd.f32 %v4748, %v6836
      %v6838 = vpop.f32.mrb[0].mxu0
      %6839 = vmatprep.mubr.bf16.mxu0 0
      %6840 = vmatmul.mubr.bf16.gmra.mrb[0].mxu0 %v5966
      %v6841 = vpop.f32.mrb[0].mxu0
      %v6842 = vadd.f32 %v4753, %v6841
      %v6843 = vpop.f32.mrb[0].mxu0
      %v6844 = vpop.f32.mrb[0].mxu0
      %v6845 = vadd.f32 %v4756, %v6844
      %v6846 = vpop.f32.mrb[0].mxu0
      %6847 = vmatprep.mubr.bf16.mxu0 0
      %6848 = vmatmul.mubr.bf16.gmra.mrb[0].mxu0 %v5969
      %v6849 = vpop.f32.mrb[0].mxu0
      %v6850 = vadd.f32 %v4761, %v6849
      %v6851 = vpop.f32.mrb[0].mxu0
      %v6852 = vpop.f32.mrb[0].mxu0
      %v6853 = vadd.f32 %v4764, %v6852
      %v6854 = vpop.f32.mrb[0].mxu0
      %6855 = vmatprep.mubr.bf16.mxu0 0
      %6856 = vmatmul.mubr.bf16.gmra.mrb[0].mxu0 %v5972
      %v6857 = vpop.f32.mrb[0].mxu0
      %v6858 = vadd.f32 %v4769, %v6857
      %v6859 = vpop.f32.mrb[0].mxu0
      %v6860 = vpop.f32.mrb[0].mxu0
      %v6861 = vadd.f32 %v4772, %v6860
      %v6862 = vpop.f32.mrb[0].mxu0
      %6863 = vmatprep.mubr.bf16.mxu0 0
      %6864 = vmatmul.mubr.bf16.gmra.mrb[0].mxu0 %v5975
      %v6865 = vpop.f32.mrb[0].mxu0
      %v6866 = vadd.f32 %v4777, %v6865
      %v6867 = vpop.f32.mrb[0].mxu0
      %v6868 = vpop.f32.mrb[0].mxu0
      %v6869 = vadd.f32 %v4780, %v6868
      %v6870 = vpop.f32.mrb[0].mxu0
      %6871 = vmatprep.mubr.bf16.mxu0 0
      %6872 = vmatmul.mubr.bf16.gmra.mrb[0].mxu0 %v5978
      %v6873 = vpop.f32.mrb[0].mxu0
      %v6874 = vadd.f32 %v4785, %v6873
      %v6875 = vpop.f32.mrb[0].mxu0
      %v6876 = vpop.f32.mrb[0].mxu0
      %v6877 = vadd.f32 %v4788, %v6876
      %v6878 = vpop.f32.mrb[0].mxu0
      %6879 = vmatprep.mubr.bf16.mxu0 0
      %6880 = vmatmul.mubr.bf16.gmra.mrb[0].mxu0 %v5981
      %v6881 = vpop.f32.mrb[0].mxu0
      %v6882 = vadd.f32 %v4793, %v6881
      %v6883 = vpop.f32.mrb[0].mxu0
      %v6884 = vpop.f32.mrb[0].mxu0
      %v6885 = vadd.f32 %v4796, %v6884
      %v6886 = vpop.f32.mrb[0].mxu0
      %6887 = vmatprep.mubr.bf16.mxu0 0
      %6888 = vmatmul.mubr.bf16.gmra.mrb[0].mxu0 %v5984
      %v6889 = vpop.f32.mrb[0].mxu0
      %v6890 = vadd.f32 %v4801, %v6889
      %v6891 = vpop.f32.mrb[0].mxu0
      %v6892 = vpop.f32.mrb[0].mxu0
      %v6893 = vadd.f32 %v4804, %v6892
      %v6894 = vpop.f32.mrb[0].mxu0
      %6895 = vmatprep.mubr.bf16.mxu0 0
      %6896 = vmatmul.mubr.bf16.gmra.mrb[0].mxu0 %v5987
      %v6897 = vpop.f32.mrb[0].mxu0
      %v6898 = vadd.f32 %v4809, %v6897
      %v6899 = vpop.f32.mrb[0].mxu0
      %v6900 = vpop.f32.mrb[0].mxu0
      %v6901 = vadd.f32 %v4812, %v6900
      %v6902 = vpop.f32.mrb[0].mxu0
      %6903 = vmatprep.mubr.bf16.mxu0 0
      %6904 = vmatmul.mubr.bf16.gmra.mrb[0].mxu0 %v5990
      %v6905 = vpop.f32.mrb[0].mxu0
      %v6906 = vadd.f32 %v4817, %v6905
      %v6907 = vpop.f32.mrb[0].mxu0
      %v6908 = vpop.f32.mrb[0].mxu0
      %v6909 = vadd.f32 %v4820, %v6908
      %v6910 = vpop.f32.mrb[0].mxu0
      %6911 = vmatprep.mubr.bf16.mxu0 0
      %6912 = vmatmul.mubr.bf16.gmra.mrb[0].mxu0 %v5993
      %v6913 = vpop.f32.mrb[0].mxu0
      %v6914 = vadd.f32 %v4825, %v6913
      %v6915 = vpop.f32.mrb[0].mxu0
      %v6916 = vpop.f32.mrb[0].mxu0
      %v6917 = vadd.f32 %v4828, %v6916
      %v6918 = vpop.f32.mrb[0].mxu0
      %6919 = vmatprep.mubr.bf16.mxu0 0
      %6920 = vmatmul.mubr.bf16.gmra.mrb[0].mxu0 %v5996
      %v6921 = vpop.f32.mrb[0].mxu0
      %v6922 = vadd.f32 %v4833, %v6921
      %v6923 = vpop.f32.mrb[0].mxu0
      %v6924 = vpop.f32.mrb[0].mxu0
      %v6925 = vadd.f32 %v4836, %v6924
      %v6926 = vpop.f32.mrb[0].mxu0
      %6927 = vmatprep.mubr.bf16.mxu0 0
      %6928 = vmatmul.mubr.bf16.gmra.mrb[0].mxu0 %v5999
      %v6929 = vpop.f32.mrb[0].mxu0
      %v6930 = vadd.f32 %v4841, %v6929
      %v6931 = vpop.f32.mrb[0].mxu0
      %v6932 = vpop.f32.mrb[0].mxu0
      %v6933 = vadd.f32 %v4844, %v6932
      %v6934 = vpop.f32.mrb[0].mxu0
      %6935 = vmatprep.mubr.bf16.mxu0 0
      %6936 = vmatmul.mubr.bf16.gmra.mrb[0].mxu0 %v6002
      %v6937 = vpop.f32.mrb[0].mxu0
      %v6938 = vadd.f32 %v4849, %v6937
      %v6939 = vpop.f32.mrb[0].mxu0
      %v6940 = vpop.f32.mrb[0].mxu0
      %v6941 = vadd.f32 %v4852, %v6940
      %v6942 = vpop.f32.mrb[0].mxu0
      %6943 = vmatprep.mubr.bf16.mxu0 0
      %6944 = vmatmul.mubr.bf16.gmra.mrb[0].mxu0 %v6005
      %v6945 = vpop.f32.mrb[0].mxu0
      %v6946 = vadd.f32 %v4857, %v6945
      %v6947 = vpop.f32.mrb[0].mxu0
      %v6948 = vpop.f32.mrb[0].mxu0
      %v6949 = vadd.f32 %v4860, %v6948
      %v6950 = vpop.f32.mrb[0].mxu0
      %6951 = vmatprep.mubr.bf16.mxu0 0
      %6952 = vmatmul.mubr.bf16.gmra.mrb[0].mxu0 %v6008
      %v6953 = vpop.f32.mrb[0].mxu0
      %v6954 = vadd.f32 %v4865, %v6953
      %v6955 = vpop.f32.mrb[0].mxu0
      %v6956 = vpop.f32.mrb[0].mxu0
      %v6957 = vadd.f32 %v4868, %v6956
      %v6958 = vpop.f32.mrb[0].mxu0
      %6959 = vmatprep.mubr.bf16.mxu0 0
      %6960 = vmatmul.mubr.bf16.gmra.mrb[0].mxu0 %v6011
      %v6961 = vpop.f32.mrb[0].mxu0
      %v6962 = vadd.f32 %v4873, %v6961
      %v6963 = vpop.f32.mrb[0].mxu0
      %v6964 = vpop.f32.mrb[0].mxu0
      %v6965 = vadd.f32 %v4876, %v6964
      %v6966 = vpop.f32.mrb[0].mxu0
      %6967 = vmatprep.mubr.bf16.mxu0 0
      %6968 = vmatmul.mubr.bf16.gmra.mrb[0].mxu0 %v6014
      %v6969 = vpop.f32.mrb[0].mxu0
      %v6970 = vadd.f32 %v4881, %v6969
      %v6971 = vpop.f32.mrb[0].mxu0
      %v6972 = vpop.f32.mrb[0].mxu0
      %v6973 = vadd.f32 %v4884, %v6972
      %v6974 = vpop.f32.mrb[0].mxu0
      %6975 = vmatprep.mubr.bf16.mxu0 0
      %6976 = vmatmul.mubr.bf16.gmra.mrb[0].mxu0 %v6017
      %v6977 = vpop.f32.mrb[0].mxu0
      %v6978 = vadd.f32 %v4889, %v6977
      %v6979 = vpop.f32.mrb[0].mxu0
      %v6980 = vpop.f32.mrb[0].mxu0
      %v6981 = vadd.f32 %v4892, %v6980
      %v6982 = vpop.f32.mrb[0].mxu0
      %6983 = vmatprep.mubr.bf16.mxu0 0
      %6984 = vmatmul.mubr.bf16.gmra.mrb[0].mxu0 %v6020
      %v6985 = vpop.f32.mrb[0].mxu0
      %v6986 = vadd.f32 %v4897, %v6985
      %v6987 = vpop.f32.mrb[0].mxu0
      %v6988 = vpop.f32.mrb[0].mxu0
      %v6989 = vadd.f32 %v4900, %v6988
      %v6990 = vpop.f32.mrb[0].mxu0
      %6991 = vmatprep.mubr.bf16.mxu0 0
      %6992 = vmatmul.mubr.bf16.gmra.mrb[0].mxu0 %v6023
      %v6993 = vpop.f32.mrb[0].mxu0
      %v6994 = vadd.f32 %v4905, %v6993
      %v6995 = vpop.f32.mrb[0].mxu0
      %v6996 = vpop.f32.mrb[0].mxu0
      %v6997 = vadd.f32 %v4908, %v6996
      %v6998 = vpop.f32.mrb[0].mxu0
      %6999 = vmatprep.mubr.bf16.mxu0 0
      %7000 = vmatmul.mubr.bf16.gmra.mrb[0].mxu0 %v6026
      %v7001 = vpop.f32.mrb[0].mxu0
      %v7002 = vadd.f32 %v4913, %v7001
      %v7003 = vpop.f32.mrb[0].mxu0
      %v7004 = vpop.f32.mrb[0].mxu0
      %v7005 = vadd.f32 %v4916, %v7004
      %v7006 = vpop.f32.mrb[0].mxu0
      %7007 = vmatprep.mubr.bf16.mxu0 0
      %7008 = vmatmul.mubr.bf16.gmra.mrb[0].mxu0 %v6029
      %v7009 = vpop.f32.mrb[0].mxu0
      %v7010 = vadd.f32 %v4921, %v7009
      %v7011 = vpop.f32.mrb[0].mxu0
      %v7012 = vpop.f32.mrb[0].mxu0
      %v7013 = vadd.f32 %v4924, %v7012
      %v7014 = vpop.f32.mrb[0].mxu0
      %7015 = vmatprep.mubr.bf16.mxu0 0
      %7016 = vmatmul.mubr.bf16.gmra.mrb[0].mxu0 %v6032
      %v7017 = vpop.f32.mrb[0].mxu0
      %v7018 = vadd.f32 %v4929, %v7017
      %v7019 = vpop.f32.mrb[0].mxu0
      %v7020 = vpop.f32.mrb[0].mxu0
      %v7021 = vadd.f32 %v4932, %v7020
      %v7022 = vpop.f32.mrb[0].mxu0
      %7023 = vmatprep.mubr.bf16.mxu0 0
      %7024 = vmatmul.mubr.bf16.gmra.mrb[0].mxu0 %v6035
      %v7025 = vpop.f32.mrb[0].mxu0
      %v7026 = vadd.f32 %v4937, %v7025
      %v7027 = vpop.f32.mrb[0].mxu0
      %v7028 = vpop.f32.mrb[0].mxu0
      %v7029 = vadd.f32 %v4940, %v7028
      %v7030 = vpop.f32.mrb[0].mxu0
      %7031 = vmatprep.mubr.bf16.mxu0 0
      %7032 = vmatmul.mubr.bf16.gmra.mrb[0].mxu0 %v6038
      %v7033 = vpop.f32.mrb[0].mxu0
      %v7034 = vadd.f32 %v4945, %v7033
      %v7035 = vpop.f32.mrb[0].mxu0
      %v7036 = vpop.f32.mrb[0].mxu0
      %v7037 = vadd.f32 %v4948, %v7036
      %v7038 = vpop.f32.mrb[0].mxu0
      %7039 = vmatprep.mubr.bf16.mxu0 0
      %7040 = vmatmul.mubr.bf16.gmra.mrb[0].mxu0 %v6041
      %v7041 = vpop.f32.mrb[0].mxu0
      %v7042 = vadd.f32 %v4953, %v7041
      %v7043 = vpop.f32.mrb[0].mxu0
      %v7044 = vpop.f32.mrb[0].mxu0
      %v7045 = vadd.f32 %v4956, %v7044
      %v7046 = vpop.f32.mrb[0].mxu0
      %7047 = vmatprep.mubr.bf16.mxu0 0
      %7048 = vmatmul.mubr.bf16.gmra.mrb[0].mxu0 %v6044
      %v7049 = vpop.f32.mrb[0].mxu0
      %v7050 = vadd.f32 %v4961, %v7049
      %v7051 = vpop.f32.mrb[0].mxu0
      %v7052 = vpop.f32.mrb[0].mxu0
      %v7053 = vadd.f32 %v4964, %v7052
      %v7054 = vpop.f32.mrb[0].mxu0
      %7055 = vmatprep.mubr.bf16.mxu0 0
      %7056 = vmatmul.mubr.bf16.gmra.mrb[0].mxu0 %v6047
      %v7057 = vpop.f32.mrb[0].mxu0
      %v7058 = vadd.f32 %v4969, %v7057
      %v7059 = vpop.f32.mrb[0].mxu0
      %v7060 = vpop.f32.mrb[0].mxu0
      %v7061 = vadd.f32 %v4972, %v7060
      %v7062 = vpop.f32.mrb[0].mxu0
      %7063 = vmatprep.mubr.bf16.mxu0 0
      %7064 = vmatmul.mubr.bf16.gmra.mrb[0].mxu0 %v6050
      %v7065 = vpop.f32.mrb[0].mxu0
      %v7066 = vadd.f32 %v4977, %v7065
      %v7067 = vpop.f32.mrb[0].mxu0
      %v7068 = vpop.f32.mrb[0].mxu0
      %v7069 = vadd.f32 %v4980, %v7068
      %v7070 = vpop.f32.mrb[0].mxu0
      %7071 = vmatprep.mubr.bf16.mxu0 0
      %7072 = vmatmul.mubr.bf16.gmra.mrb[0].mxu0 %v6053
      %v7073 = vpop.f32.mrb[0].mxu0
      %v7074 = vadd.f32 %v4985, %v7073
      %v7075 = vpop.f32.mrb[0].mxu0
      %v7076 = vpop.f32.mrb[0].mxu0
      %v7077 = vadd.f32 %v4988, %v7076
      %v7078 = vpop.f32.mrb[0].mxu0
      %7079 = vmatprep.mubr.bf16.mxu0 0
      %7080 = vmatmul.mubr.bf16.gmra.mrb[0].mxu0 %v6056
      %v7081 = vpop.f32.mrb[0].mxu0
      %v7082 = vadd.f32 %v4993, %v7081
      %v7083 = vpop.f32.mrb[0].mxu0
      %v7084 = vpop.f32.mrb[0].mxu0
      %v7085 = vadd.f32 %v4996, %v7084
      %v7086 = vpop.f32.mrb[0].mxu0
      %7087 = vmatprep.mubr.bf16.mxu0 0
      %7088 = vmatmul.mubr.bf16.gmra.mrb[0].mxu0 %v6059
      %v7089 = vpop.f32.mrb[0].mxu0
      %v7090 = vadd.f32 %v5001, %v7089
      %v7091 = vpop.f32.mrb[0].mxu0
      %v7092 = vpop.f32.mrb[0].mxu0
      %v7093 = vadd.f32 %v5004, %v7092
      %v7094 = vpop.f32.mrb[0].mxu0
      %7095 = vmatprep.mubr.bf16.mxu0 0
      %7096 = vmatmul.mubr.bf16.gmra.mrb[0].mxu0 %v6062
      %v7097 = vpop.f32.mrb[0].mxu0
      %v7098 = vadd.f32 %v5009, %v7097
      %v7099 = vpop.f32.mrb[0].mxu0
      %v7100 = vpop.f32.mrb[0].mxu0
      %v7101 = vadd.f32 %v5012, %v7100
      %v7102 = vpop.f32.mrb[0].mxu0
      %7103 = vmatprep.mubr.bf16.mxu0 0
      %7104 = vmatmul.mubr.bf16.gmra.mrb[0].mxu0 %v6065
      %v7105 = vpop.f32.mrb[0].mxu0
      %v7106 = vadd.f32 %v5017, %v7105
      %v7107 = vpop.f32.mrb[0].mxu0
      %v7108 = vpop.f32.mrb[0].mxu0
      %v7109 = vadd.f32 %v5020, %v7108
      %v7110 = vpop.f32.mrb[0].mxu0
      %7111 = vmatprep.mubr.bf16.mxu0 0
      %7112 = vmatmul.mubr.bf16.gmra.mrb[0].mxu0 %v6068
      %v7113 = vpop.f32.mrb[0].mxu0
      %v7114 = vadd.f32 %v5025, %v7113
      %v7115 = vpop.f32.mrb[0].mxu0
      %v7116 = vpop.f32.mrb[0].mxu0
      %v7117 = vadd.f32 %v5028, %v7116
      %v7118 = vpop.f32.mrb[0].mxu0
      %7119 = vmatprep.mubr.bf16.mxu0 0
      %7120 = vmatmul.mubr.bf16.gmra.mrb[0].mxu0 %v6071
      %v7121 = vpop.f32.mrb[0].mxu0
      %v7122 = vadd.f32 %v5033, %v7121
      %v7123 = vpop.f32.mrb[0].mxu0
      %v7124 = vpop.f32.mrb[0].mxu0
      %v7125 = vadd.f32 %v5036, %v7124
      %v7126 = vpop.f32.mrb[0].mxu0
      %7127 = vmatprep.mubr.bf16.mxu0 0
      %7128 = vmatmul.mubr.bf16.gmra.mrb[0].mxu0 %v6074
      %v7129 = vpop.f32.mrb[0].mxu0
      %v7130 = vadd.f32 %v5041, %v7129
      %v7131 = vpop.f32.mrb[0].mxu0
      %v7132 = vpop.f32.mrb[0].mxu0
      %v7133 = vadd.f32 %v5044, %v7132
      %v7134 = vpop.f32.mrb[0].mxu0
      %7135 = vdwg.mxu0
      %s7136 = scalar_lea.vmem %s2, 16
      %v7137 = vld [vmem:[%s7136] sm:$0xf]
      %v7138 = vld [vmem:[%s7136 + $0x4] sm:$0x3]
      %v7155 = vunpack.c.l.b16 %v563
      %v7156 = vunpack.c.l.b16 %v564
      %v7157 = vunpack.c.l.b16 %v565
      %v7158 = vunpack.c.l.b16 %v566
      %v7159 = vunpack.c.l.b16 %v567
      %v7160 = vunpack.c.l.b16 %v568
      %v7161 = vunpack.c.l.b16 %v569
      %v7162 = vunpack.c.l.b16 %v570
      %v7163 = vunpack.c.l.b16 %v571
      %v7164 = vunpack.c.l.b16 %v572
      %v7165 = vunpack.c.l.b16 %v573
      %v7166 = vunpack.c.l.b16 %v574
      %v7167 = vunpack.c.l.b16 %v575
      %v7168 = vunpack.c.l.b16 %v576
      %v7169 = vunpack.c.l.b16 %v577
      %v7170 = vunpack.c.l.b16 %v578
      %v7171 = vpack.c.b16 %v7156, %v7155
      %v7172 = vpack.c.b16 %v7158, %v7157
      %v7173 = vpack.c.b16 %v7160, %v7159
      %v7174 = vpack.c.b16 %v7162, %v7161
      %v7175 = vpack.c.b16 %v7164, %v7163
      %v7176 = vpack.c.b16 %v7166, %v7165
      %v7177 = vpack.c.b16 %v7168, %v7167
      %v7178 = vpack.c.b16 %v7170, %v7169
      %v7181 = vunpack.c.l.b16 %v7137
      %v7182 = vunpack.c.l.b16 %v7138
      %v7183 = vpack.c.b16 %v7182, %v7181
      %v7185 = vsel %vm3601, %v7171, 0
      %v7188 = vsel %vm3601, %v7172, 0
      %v7191 = vsel %vm3601, %v7173, 0
      %v7194 = vsel %vm3601, %v7174, 0
      %v7197 = vsel %vm3601, %v7175, 0
      %v7200 = vsel %vm3601, %v7176, 0
      %v7203 = vsel %vm3601, %v7177, 0
      %v7206 = vsel %vm3601, %v7178, 0
      %v7209 = vsel %vm3986, %v7183, 0
      %7211 = vmatprep.subr.bf16.mxu0 0
      %7212 = vmatpush1.bf16.msra.mxu0 %v7209
      %7213 = vmatprep.subr.bf16.mxu0 0
      %7214 = vmatpush1.bf16.msra.mxu0 0
      %7215 = vmatprep.subr.bf16.mxu0 0
      %7216 = vmatpush1.bf16.msra.mxu0 0
      %7217 = vmatprep.subr.bf16.mxu0 0
      %7218 = vmatpush1.bf16.msra.mxu0 0
      %7219 = vmatprep.subr.bf16.mxu0 0
      %7220 = vmatpush1.bf16.msra.mxu0 0
      %7221 = vmatprep.subr.bf16.mxu0 0
      %7222 = vmatpush1.bf16.msra.mxu0 0
      %7223 = vmatprep.subr.bf16.mxu0 0
      %7224 = vmatpush1.bf16.msra.mxu0 0
      %7225 = vmatprep.subr.bf16.mxu0 0
      %7226 = vmatpush1.bf16.msra.mxu0 0
      %7227 = vmatprep.subr.bf16.mxu0 0
      %7228 = vmatpush1.bf16.msra.mxu0 0
      %7229 = vmatprep.subr.bf16.mxu0 0
      %7230 = vmatpush1.bf16.msra.mxu0 0
      %7231 = vmatprep.subr.bf16.mxu0 0
      %7232 = vmatpush1.bf16.msra.mxu0 0
      %7233 = vmatprep.subr.bf16.mxu0 0
      %7234 = vmatpush1.bf16.msra.mxu0 0
      %7235 = vmatprep.subr.bf16.mxu0 0
      %7236 = vmatpush1.bf16.msra.mxu0 0
      %7237 = vmatprep.subr.bf16.mxu0 0
      %7238 = vmatpush1.bf16.msra.mxu0 0
      %7239 = vmatprep.subr.bf16.mxu0 0
      %7240 = vmatpush1.bf16.msra.mxu0 0
      %7241 = vmatprep.subr.bf16.mxu0 0
      %7242 = vmatpush1.bf16.msra.mxu0 0
      %7243 = vmatprep.mubr.bf16.mxu0 0
      %7244 = vmatmul.mubr.bf16.gmra.mrb[0].mxu0 %v5717
      %v7245 = vpop.f32.mrb[0].mxu0
      %v7246 = vadd.f32 0.0, %v7245
      %v7247 = vpop.f32.mrb[0].mxu0
      %v7248 = vpop.f32.mrb[0].mxu0
      %v7249 = vadd.f32 0.0, %v7248
      %v7250 = vpop.f32.mrb[0].mxu0
      %7251 = vmatprep.mubr.bf16.mxu0 0
      %7252 = vmatmul.mubr.bf16.gmra.mrb[0].mxu0 %v5720
      %v7253 = vpop.f32.mrb[0].mxu0
      %v7254 = vadd.f32 0.0, %v7253
      %v7255 = vpop.f32.mrb[0].mxu0
      %v7256 = vpop.f32.mrb[0].mxu0
      %v7257 = vadd.f32 0.0, %v7256
      %v7258 = vpop.f32.mrb[0].mxu0
      %7259 = vmatprep.mubr.bf16.mxu0 0
      %7260 = vmatmul.mubr.bf16.gmra.mrb[0].mxu0 %v5723
      %v7261 = vpop.f32.mrb[0].mxu0
      %v7262 = vadd.f32 0.0, %v7261
      %v7263 = vpop.f32.mrb[0].mxu0
      %v7264 = vpop.f32.mrb[0].mxu0
      %v7265 = vadd.f32 0.0, %v7264
      %v7266 = vpop.f32.mrb[0].mxu0
      %7267 = vmatprep.mubr.bf16.mxu0 0
      %7268 = vmatmul.mubr.bf16.gmra.mrb[0].mxu0 %v5726
      %v7269 = vpop.f32.mrb[0].mxu0
      %v7270 = vadd.f32 0.0, %v7269
      %v7271 = vpop.f32.mrb[0].mxu0
      %v7272 = vpop.f32.mrb[0].mxu0
      %v7273 = vadd.f32 0.0, %v7272
      %v7274 = vpop.f32.mrb[0].mxu0
      %7275 = vmatprep.mubr.bf16.mxu0 0
      %7276 = vmatmul.mubr.bf16.gmra.mrb[0].mxu0 %v5729
      %v7277 = vpop.f32.mrb[0].mxu0
      %v7278 = vadd.f32 0.0, %v7277
      %v7279 = vpop.f32.mrb[0].mxu0
      %v7280 = vpop.f32.mrb[0].mxu0
      %v7281 = vadd.f32 0.0, %v7280
      %v7282 = vpop.f32.mrb[0].mxu0
      %7283 = vmatprep.mubr.bf16.mxu0 0
      %7284 = vmatmul.mubr.bf16.gmra.mrb[0].mxu0 %v5732
      %v7285 = vpop.f32.mrb[0].mxu0
      %v7286 = vadd.f32 0.0, %v7285
      %v7287 = vpop.f32.mrb[0].mxu0
      %v7288 = vpop.f32.mrb[0].mxu0
      %v7289 = vadd.f32 0.0, %v7288
      %v7290 = vpop.f32.mrb[0].mxu0
      %7291 = vmatprep.mubr.bf16.mxu0 0
      %7292 = vmatmul.mubr.bf16.gmra.mrb[0].mxu0 %v5735
      %v7293 = vpop.f32.mrb[0].mxu0
      %v7294 = vadd.f32 0.0, %v7293
      %v7295 = vpop.f32.mrb[0].mxu0
      %v7296 = vpop.f32.mrb[0].mxu0
      %v7297 = vadd.f32 0.0, %v7296
      %v7298 = vpop.f32.mrb[0].mxu0
      %7299 = vmatprep.mubr.bf16.mxu0 0
      %7300 = vmatmul.mubr.bf16.gmra.mrb[0].mxu0 %v5738
      %v7301 = vpop.f32.mrb[0].mxu0
      %v7302 = vadd.f32 0.0, %v7301
      %v7303 = vpop.f32.mrb[0].mxu0
      %v7304 = vpop.f32.mrb[0].mxu0
      %v7305 = vadd.f32 0.0, %v7304
      %v7306 = vpop.f32.mrb[0].mxu0
      %7307 = vmatprep.mubr.bf16.mxu0 0
      %7308 = vmatmul.mubr.bf16.gmra.mrb[0].mxu0 %v5741
      %v7309 = vpop.f32.mrb[0].mxu0
      %v7310 = vadd.f32 0.0, %v7309
      %v7311 = vpop.f32.mrb[0].mxu0
      %v7312 = vpop.f32.mrb[0].mxu0
      %v7313 = vadd.f32 0.0, %v7312
      %v7314 = vpop.f32.mrb[0].mxu0
      %7315 = vmatprep.mubr.bf16.mxu0 0
      %7316 = vmatmul.mubr.bf16.gmra.mrb[0].mxu0 %v5744
      %v7317 = vpop.f32.mrb[0].mxu0
      %v7318 = vadd.f32 0.0, %v7317
      %v7319 = vpop.f32.mrb[0].mxu0
      %v7320 = vpop.f32.mrb[0].mxu0
      %v7321 = vadd.f32 0.0, %v7320
      %v7322 = vpop.f32.mrb[0].mxu0
      %7323 = vmatprep.mubr.bf16.mxu0 0
      %7324 = vmatmul.mubr.bf16.gmra.mrb[0].mxu0 %v5747
      %v7325 = vpop.f32.mrb[0].mxu0
      %v7326 = vadd.f32 0.0, %v7325
      %v7327 = vpop.f32.mrb[0].mxu0
      %v7328 = vpop.f32.mrb[0].mxu0
      %v7329 = vadd.f32 0.0, %v7328
      %v7330 = vpop.f32.mrb[0].mxu0
      %7331 = vmatprep.mubr.bf16.mxu0 0
      %7332 = vmatmul.mubr.bf16.gmra.mrb[0].mxu0 %v5750
      %v7333 = vpop.f32.mrb[0].mxu0
      %v7334 = vadd.f32 0.0, %v7333
      %v7335 = vpop.f32.mrb[0].mxu0
      %v7336 = vpop.f32.mrb[0].mxu0
      %v7337 = vadd.f32 0.0, %v7336
      %v7338 = vpop.f32.mrb[0].mxu0
      %7339 = vmatprep.mubr.bf16.mxu0 0
      %7340 = vmatmul.mubr.bf16.gmra.mrb[0].mxu0 %v5753
      %v7341 = vpop.f32.mrb[0].mxu0
      %v7342 = vadd.f32 0.0, %v7341
      %v7343 = vpop.f32.mrb[0].mxu0
      %v7344 = vpop.f32.mrb[0].mxu0
      %v7345 = vadd.f32 0.0, %v7344
      %v7346 = vpop.f32.mrb[0].mxu0
      %7347 = vmatprep.mubr.bf16.mxu0 0
      %7348 = vmatmul.mubr.bf16.gmra.mrb[0].mxu0 %v5756
      %v7349 = vpop.f32.mrb[0].mxu0
      %v7350 = vadd.f32 0.0, %v7349
      %v7351 = vpop.f32.mrb[0].mxu0
      %v7352 = vpop.f32.mrb[0].mxu0
      %v7353 = vadd.f32 0.0, %v7352
      %v7354 = vpop.f32.mrb[0].mxu0
      %7355 = vmatprep.mubr.bf16.mxu0 0
      %7356 = vmatmul.mubr.bf16.gmra.mrb[0].mxu0 %v5759
      %v7357 = vpop.f32.mrb[0].mxu0
      %v7358 = vadd.f32 0.0, %v7357
      %v7359 = vpop.f32.mrb[0].mxu0
      %v7360 = vpop.f32.mrb[0].mxu0
      %v7361 = vadd.f32 0.0, %v7360
      %v7362 = vpop.f32.mrb[0].mxu0
      %7363 = vmatprep.mubr.bf16.mxu0 0
      %7364 = vmatmul.mubr.bf16.gmra.mrb[0].mxu0 %v5762
      %v7365 = vpop.f32.mrb[0].mxu0
      %v7366 = vadd.f32 0.0, %v7365
      %v7367 = vpop.f32.mrb[0].mxu0
      %v7368 = vpop.f32.mrb[0].mxu0
      %v7369 = vadd.f32 0.0, %v7368
      %v7370 = vpop.f32.mrb[0].mxu0
      %7371 = vmatprep.mubr.bf16.mxu0 0
      %7372 = vmatmul.mubr.bf16.gmra.mrb[0].mxu0 %v5765
      %v7373 = vpop.f32.mrb[0].mxu0
      %v7374 = vadd.f32 0.0, %v7373
      %v7375 = vpop.f32.mrb[0].mxu0
      %v7376 = vpop.f32.mrb[0].mxu0
      %v7377 = vadd.f32 0.0, %v7376
      %v7378 = vpop.f32.mrb[0].mxu0
      %7379 = vmatprep.mubr.bf16.mxu0 0
      %7380 = vmatmul.mubr.bf16.gmra.mrb[0].mxu0 %v5768
      %v7381 = vpop.f32.mrb[0].mxu0
      %v7382 = vadd.f32 0.0, %v7381
      %v7383 = vpop.f32.mrb[0].mxu0
      %v7384 = vpop.f32.mrb[0].mxu0
      %v7385 = vadd.f32 0.0, %v7384
      %v7386 = vpop.f32.mrb[0].mxu0
      %7387 = vmatprep.mubr.bf16.mxu0 0
      %7388 = vmatmul.mubr.bf16.gmra.mrb[0].mxu0 %v5771
      %v7389 = vpop.f32.mrb[0].mxu0
      %v7390 = vadd.f32 0.0, %v7389
      %v7391 = vpop.f32.mrb[0].mxu0
      %v7392 = vpop.f32.mrb[0].mxu0
      %v7393 = vadd.f32 0.0, %v7392
      %v7394 = vpop.f32.mrb[0].mxu0
      %7395 = vmatprep.mubr.bf16.mxu0 0
      %7396 = vmatmul.mubr.bf16.gmra.mrb[0].mxu0 %v5774
      %v7397 = vpop.f32.mrb[0].mxu0
      %v7398 = vadd.f32 0.0, %v7397
      %v7399 = vpop.f32.mrb[0].mxu0
      %v7400 = vpop.f32.mrb[0].mxu0
      %v7401 = vadd.f32 0.0, %v7400
      %v7402 = vpop.f32.mrb[0].mxu0
      %7403 = vmatprep.mubr.bf16.mxu0 0
      %7404 = vmatmul.mubr.bf16.gmra.mrb[0].mxu0 %v5777
      %v7405 = vpop.f32.mrb[0].mxu0
      %v7406 = vadd.f32 0.0, %v7405
      %v7407 = vpop.f32.mrb[0].mxu0
      %v7408 = vpop.f32.mrb[0].mxu0
      %v7409 = vadd.f32 0.0, %v7408
      %v7410 = vpop.f32.mrb[0].mxu0
      %7411 = vmatprep.mubr.bf16.mxu0 0
      %7412 = vmatmul.mubr.bf16.gmra.mrb[0].mxu0 %v5780
      %v7413 = vpop.f32.mrb[0].mxu0
      %v7414 = vadd.f32 0.0, %v7413
      %v7415 = vpop.f32.mrb[0].mxu0
      %v7416 = vpop.f32.mrb[0].mxu0
      %v7417 = vadd.f32 0.0, %v7416
      %v7418 = vpop.f32.mrb[0].mxu0
      %7419 = vmatprep.mubr.bf16.mxu0 0
      %7420 = vmatmul.mubr.bf16.gmra.mrb[0].mxu0 %v5783
      %v7421 = vpop.f32.mrb[0].mxu0
      %v7422 = vadd.f32 0.0, %v7421
      %v7423 = vpop.f32.mrb[0].mxu0
      %v7424 = vpop.f32.mrb[0].mxu0
      %v7425 = vadd.f32 0.0, %v7424
      %v7426 = vpop.f32.mrb[0].mxu0
      %7427 = vmatprep.mubr.bf16.mxu0 0
      %7428 = vmatmul.mubr.bf16.gmra.mrb[0].mxu0 %v5786
      %v7429 = vpop.f32.mrb[0].mxu0
      %v7430 = vadd.f32 0.0, %v7429
      %v7431 = vpop.f32.mrb[0].mxu0
      %v7432 = vpop.f32.mrb[0].mxu0
      %v7433 = vadd.f32 0.0, %v7432
      %v7434 = vpop.f32.mrb[0].mxu0
      %7435 = vmatprep.mubr.bf16.mxu0 0
      %7436 = vmatmul.mubr.bf16.gmra.mrb[0].mxu0 %v5789
      %v7437 = vpop.f32.mrb[0].mxu0
      %v7438 = vadd.f32 0.0, %v7437
      %v7439 = vpop.f32.mrb[0].mxu0
      %v7440 = vpop.f32.mrb[0].mxu0
      %v7441 = vadd.f32 0.0, %v7440
      %v7442 = vpop.f32.mrb[0].mxu0
      %7443 = vmatprep.mubr.bf16.mxu0 0
      %7444 = vmatmul.mubr.bf16.gmra.mrb[0].mxu0 %v5792
      %v7445 = vpop.f32.mrb[0].mxu0
      %v7446 = vadd.f32 0.0, %v7445
      %v7447 = vpop.f32.mrb[0].mxu0
      %v7448 = vpop.f32.mrb[0].mxu0
      %v7449 = vadd.f32 0.0, %v7448
      %v7450 = vpop.f32.mrb[0].mxu0
      %7451 = vmatprep.mubr.bf16.mxu0 0
      %7452 = vmatmul.mubr.bf16.gmra.mrb[0].mxu0 %v5795
      %v7453 = vpop.f32.mrb[0].mxu0
      %v7454 = vadd.f32 0.0, %v7453
      %v7455 = vpop.f32.mrb[0].mxu0
      %v7456 = vpop.f32.mrb[0].mxu0
      %v7457 = vadd.f32 0.0, %v7456
      %v7458 = vpop.f32.mrb[0].mxu0
      %7459 = vmatprep.mubr.bf16.mxu0 0
      %7460 = vmatmul.mubr.bf16.gmra.mrb[0].mxu0 %v5798
      %v7461 = vpop.f32.mrb[0].mxu0
      %v7462 = vadd.f32 0.0, %v7461
      %v7463 = vpop.f32.mrb[0].mxu0
      %v7464 = vpop.f32.mrb[0].mxu0
      %v7465 = vadd.f32 0.0, %v7464
      %v7466 = vpop.f32.mrb[0].mxu0
      %7467 = vmatprep.mubr.bf16.mxu0 0
      %7468 = vmatmul.mubr.bf16.gmra.mrb[0].mxu0 %v5801
      %v7469 = vpop.f32.mrb[0].mxu0
      %v7470 = vadd.f32 0.0, %v7469
      %v7471 = vpop.f32.mrb[0].mxu0
      %v7472 = vpop.f32.mrb[0].mxu0
      %v7473 = vadd.f32 0.0, %v7472
      %v7474 = vpop.f32.mrb[0].mxu0
      %7475 = vmatprep.mubr.bf16.mxu0 0
      %7476 = vmatmul.mubr.bf16.gmra.mrb[0].mxu0 %v5804
      %v7477 = vpop.f32.mrb[0].mxu0
      %v7478 = vadd.f32 0.0, %v7477
      %v7479 = vpop.f32.mrb[0].mxu0
      %v7480 = vpop.f32.mrb[0].mxu0
      %v7481 = vadd.f32 0.0, %v7480
      %v7482 = vpop.f32.mrb[0].mxu0
      %7483 = vmatprep.mubr.bf16.mxu0 0
      %7484 = vmatmul.mubr.bf16.gmra.mrb[0].mxu0 %v5807
      %v7485 = vpop.f32.mrb[0].mxu0
      %v7486 = vadd.f32 0.0, %v7485
      %v7487 = vpop.f32.mrb[0].mxu0
      %v7488 = vpop.f32.mrb[0].mxu0
      %v7489 = vadd.f32 0.0, %v7488
      %v7490 = vpop.f32.mrb[0].mxu0
      %7491 = vmatprep.mubr.bf16.mxu0 0
      %7492 = vmatmul.mubr.bf16.gmra.mrb[0].mxu0 %v5810
      %v7493 = vpop.f32.mrb[0].mxu0
      %v7494 = vadd.f32 0.0, %v7493
      %v7495 = vpop.f32.mrb[0].mxu0
      %v7496 = vpop.f32.mrb[0].mxu0
      %v7497 = vadd.f32 0.0, %v7496
      %v7498 = vpop.f32.mrb[0].mxu0
      %7499 = vmatprep.mubr.bf16.mxu0 0
      %7500 = vmatmul.mubr.bf16.gmra.mrb[0].mxu0 %v5813
      %v7501 = vpop.f32.mrb[0].mxu0
      %v7502 = vadd.f32 0.0, %v7501
      %v7503 = vpop.f32.mrb[0].mxu0
      %v7504 = vpop.f32.mrb[0].mxu0
      %v7505 = vadd.f32 0.0, %v7504
      %v7506 = vpop.f32.mrb[0].mxu0
      %7507 = vmatprep.mubr.bf16.mxu0 0
      %7508 = vmatmul.mubr.bf16.gmra.mrb[0].mxu0 %v5816
      %v7509 = vpop.f32.mrb[0].mxu0
      %v7510 = vadd.f32 0.0, %v7509
      %v7511 = vpop.f32.mrb[0].mxu0
      %v7512 = vpop.f32.mrb[0].mxu0
      %v7513 = vadd.f32 0.0, %v7512
      %v7514 = vpop.f32.mrb[0].mxu0
      %7515 = vmatprep.mubr.bf16.mxu0 0
      %7516 = vmatmul.mubr.bf16.gmra.mrb[0].mxu0 %v5819
      %v7517 = vpop.f32.mrb[0].mxu0
      %v7518 = vadd.f32 0.0, %v7517
      %v7519 = vpop.f32.mrb[0].mxu0
      %v7520 = vpop.f32.mrb[0].mxu0
      %v7521 = vadd.f32 0.0, %v7520
      %v7522 = vpop.f32.mrb[0].mxu0
      %7523 = vmatprep.mubr.bf16.mxu0 0
      %7524 = vmatmul.mubr.bf16.gmra.mrb[0].mxu0 %v5822
      %v7525 = vpop.f32.mrb[0].mxu0
      %v7526 = vadd.f32 0.0, %v7525
      %v7527 = vpop.f32.mrb[0].mxu0
      %v7528 = vpop.f32.mrb[0].mxu0
      %v7529 = vadd.f32 0.0, %v7528
      %v7530 = vpop.f32.mrb[0].mxu0
      %7531 = vmatprep.mubr.bf16.mxu0 0
      %7532 = vmatmul.mubr.bf16.gmra.mrb[0].mxu0 %v5825
      %v7533 = vpop.f32.mrb[0].mxu0
      %v7534 = vadd.f32 0.0, %v7533
      %v7535 = vpop.f32.mrb[0].mxu0
      %v7536 = vpop.f32.mrb[0].mxu0
      %v7537 = vadd.f32 0.0, %v7536
      %v7538 = vpop.f32.mrb[0].mxu0
      %7539 = vmatprep.mubr.bf16.mxu0 0
      %7540 = vmatmul.mubr.bf16.gmra.mrb[0].mxu0 %v5828
      %v7541 = vpop.f32.mrb[0].mxu0
      %v7542 = vadd.f32 0.0, %v7541
      %v7543 = vpop.f32.mrb[0].mxu0
      %v7544 = vpop.f32.mrb[0].mxu0
      %v7545 = vadd.f32 0.0, %v7544
      %v7546 = vpop.f32.mrb[0].mxu0
      %7547 = vmatprep.mubr.bf16.mxu0 0
      %7548 = vmatmul.mubr.bf16.gmra.mrb[0].mxu0 %v5831
      %v7549 = vpop.f32.mrb[0].mxu0
      %v7550 = vadd.f32 0.0, %v7549
      %v7551 = vpop.f32.mrb[0].mxu0
      %v7552 = vpop.f32.mrb[0].mxu0
      %v7553 = vadd.f32 0.0, %v7552
      %v7554 = vpop.f32.mrb[0].mxu0
      %7555 = vmatprep.mubr.bf16.mxu0 0
      %7556 = vmatmul.mubr.bf16.gmra.mrb[0].mxu0 %v5834
      %v7557 = vpop.f32.mrb[0].mxu0
      %v7558 = vadd.f32 0.0, %v7557
      %v7559 = vpop.f32.mrb[0].mxu0
      %v7560 = vpop.f32.mrb[0].mxu0
      %v7561 = vadd.f32 0.0, %v7560
      %v7562 = vpop.f32.mrb[0].mxu0
      %7563 = vmatprep.mubr.bf16.mxu0 0
      %7564 = vmatmul.mubr.bf16.gmra.mrb[0].mxu0 %v5837
      %v7565 = vpop.f32.mrb[0].mxu0
      %v7566 = vadd.f32 0.0, %v7565
      %v7567 = vpop.f32.mrb[0].mxu0
      %v7568 = vpop.f32.mrb[0].mxu0
      %v7569 = vadd.f32 0.0, %v7568
      %v7570 = vpop.f32.mrb[0].mxu0
      %7571 = vmatprep.mubr.bf16.mxu0 0
      %7572 = vmatmul.mubr.bf16.gmra.mrb[0].mxu0 %v5840
      %v7573 = vpop.f32.mrb[0].mxu0
      %v7574 = vadd.f32 0.0, %v7573
      %v7575 = vpop.f32.mrb[0].mxu0
      %v7576 = vpop.f32.mrb[0].mxu0
      %v7577 = vadd.f32 0.0, %v7576
      %v7578 = vpop.f32.mrb[0].mxu0
      %7579 = vmatprep.mubr.bf16.mxu0 0
      %7580 = vmatmul.mubr.bf16.gmra.mrb[0].mxu0 %v5843
      %v7581 = vpop.f32.mrb[0].mxu0
      %v7582 = vadd.f32 0.0, %v7581
      %v7583 = vpop.f32.mrb[0].mxu0
      %v7584 = vpop.f32.mrb[0].mxu0
      %v7585 = vadd.f32 0.0, %v7584
      %v7586 = vpop.f32.mrb[0].mxu0
      %7587 = vmatprep.mubr.bf16.mxu0 0
      %7588 = vmatmul.mubr.bf16.gmra.mrb[0].mxu0 %v5846
      %v7589 = vpop.f32.mrb[0].mxu0
      %v7590 = vadd.f32 0.0, %v7589
      %v7591 = vpop.f32.mrb[0].mxu0
      %v7592 = vpop.f32.mrb[0].mxu0
      %v7593 = vadd.f32 0.0, %v7592
      %v7594 = vpop.f32.mrb[0].mxu0
      %7595 = vmatprep.mubr.bf16.mxu0 0
      %7596 = vmatmul.mubr.bf16.gmra.mrb[0].mxu0 %v5849
      %v7597 = vpop.f32.mrb[0].mxu0
      %v7598 = vadd.f32 0.0, %v7597
      %v7599 = vpop.f32.mrb[0].mxu0
      %v7600 = vpop.f32.mrb[0].mxu0
      %v7601 = vadd.f32 0.0, %v7600
      %v7602 = vpop.f32.mrb[0].mxu0
      %7603 = vmatprep.mubr.bf16.mxu0 0
      %7604 = vmatmul.mubr.bf16.gmra.mrb[0].mxu0 %v5852
      %v7605 = vpop.f32.mrb[0].mxu0
      %v7606 = vadd.f32 0.0, %v7605
      %v7607 = vpop.f32.mrb[0].mxu0
      %v7608 = vpop.f32.mrb[0].mxu0
      %v7609 = vadd.f32 0.0, %v7608
      %v7610 = vpop.f32.mrb[0].mxu0
      %7611 = vmatprep.mubr.bf16.mxu0 0
      %7612 = vmatmul.mubr.bf16.gmra.mrb[0].mxu0 %v5855
      %v7613 = vpop.f32.mrb[0].mxu0
      %v7614 = vadd.f32 0.0, %v7613
      %v7615 = vpop.f32.mrb[0].mxu0
      %v7616 = vpop.f32.mrb[0].mxu0
      %v7617 = vadd.f32 0.0, %v7616
      %v7618 = vpop.f32.mrb[0].mxu0
      %7619 = vmatprep.mubr.bf16.mxu0 0
      %7620 = vmatmul.mubr.bf16.gmra.mrb[0].mxu0 %v5858
      %v7621 = vpop.f32.mrb[0].mxu0
      %v7622 = vadd.f32 0.0, %v7621
      %v7623 = vpop.f32.mrb[0].mxu0
      %v7624 = vpop.f32.mrb[0].mxu0
      %v7625 = vadd.f32 0.0, %v7624
      %v7626 = vpop.f32.mrb[0].mxu0
      %7627 = vmatprep.mubr.bf16.mxu0 0
      %7628 = vmatmul.mubr.bf16.gmra.mrb[0].mxu0 %v5861
      %v7629 = vpop.f32.mrb[0].mxu0
      %v7630 = vadd.f32 0.0, %v7629
      %v7631 = vpop.f32.mrb[0].mxu0
      %v7632 = vpop.f32.mrb[0].mxu0
      %v7633 = vadd.f32 0.0, %v7632
      %v7634 = vpop.f32.mrb[0].mxu0
      %7635 = vmatprep.mubr.bf16.mxu0 0
      %7636 = vmatmul.mubr.bf16.gmra.mrb[0].mxu0 %v5864
      %v7637 = vpop.f32.mrb[0].mxu0
      %v7638 = vadd.f32 0.0, %v7637
      %v7639 = vpop.f32.mrb[0].mxu0
      %v7640 = vpop.f32.mrb[0].mxu0
      %v7641 = vadd.f32 0.0, %v7640
      %v7642 = vpop.f32.mrb[0].mxu0
      %7643 = vmatprep.mubr.bf16.mxu0 0
      %7644 = vmatmul.mubr.bf16.gmra.mrb[0].mxu0 %v5867
      %v7645 = vpop.f32.mrb[0].mxu0
      %v7646 = vadd.f32 0.0, %v7645
      %v7647 = vpop.f32.mrb[0].mxu0
      %v7648 = vpop.f32.mrb[0].mxu0
      %v7649 = vadd.f32 0.0, %v7648
      %v7650 = vpop.f32.mrb[0].mxu0
      %7651 = vmatprep.mubr.bf16.mxu0 0
      %7652 = vmatmul.mubr.bf16.gmra.mrb[0].mxu0 %v5870
      %v7653 = vpop.f32.mrb[0].mxu0
      %v7654 = vadd.f32 0.0, %v7653
      %v7655 = vpop.f32.mrb[0].mxu0
      %v7656 = vpop.f32.mrb[0].mxu0
      %v7657 = vadd.f32 0.0, %v7656
      %v7658 = vpop.f32.mrb[0].mxu0
      %7659 = vmatprep.mubr.bf16.mxu0 0
      %7660 = vmatmul.mubr.bf16.gmra.mrb[0].mxu0 %v5873
      %v7661 = vpop.f32.mrb[0].mxu0
      %v7662 = vadd.f32 0.0, %v7661
      %v7663 = vpop.f32.mrb[0].mxu0
      %v7664 = vpop.f32.mrb[0].mxu0
      %v7665 = vadd.f32 0.0, %v7664
      %v7666 = vpop.f32.mrb[0].mxu0
      %7667 = vmatprep.mubr.bf16.mxu0 0
      %7668 = vmatmul.mubr.bf16.gmra.mrb[0].mxu0 %v5876
      %v7669 = vpop.f32.mrb[0].mxu0
      %v7670 = vadd.f32 0.0, %v7669
      %v7671 = vpop.f32.mrb[0].mxu0
      %v7672 = vpop.f32.mrb[0].mxu0
      %v7673 = vadd.f32 0.0, %v7672
      %v7674 = vpop.f32.mrb[0].mxu0
      %7675 = vmatprep.mubr.bf16.mxu0 0
      %7676 = vmatmul.mubr.bf16.gmra.mrb[0].mxu0 %v5879
      %v7677 = vpop.f32.mrb[0].mxu0
      %v7678 = vadd.f32 0.0, %v7677
      %v7679 = vpop.f32.mrb[0].mxu0
      %v7680 = vpop.f32.mrb[0].mxu0
      %v7681 = vadd.f32 0.0, %v7680
      %v7682 = vpop.f32.mrb[0].mxu0
      %7683 = vmatprep.mubr.bf16.mxu0 0
      %7684 = vmatmul.mubr.bf16.gmra.mrb[0].mxu0 %v5882
      %v7685 = vpop.f32.mrb[0].mxu0
      %v7686 = vadd.f32 0.0, %v7685
      %v7687 = vpop.f32.mrb[0].mxu0
      %v7688 = vpop.f32.mrb[0].mxu0
      %v7689 = vadd.f32 0.0, %v7688
      %v7690 = vpop.f32.mrb[0].mxu0
      %7691 = vmatprep.mubr.bf16.mxu0 0
      %7692 = vmatmul.mubr.bf16.gmra.mrb[0].mxu0 %v5885
      %v7693 = vpop.f32.mrb[0].mxu0
      %v7694 = vadd.f32 0.0, %v7693
      %v7695 = vpop.f32.mrb[0].mxu0
      %v7696 = vpop.f32.mrb[0].mxu0
      %v7697 = vadd.f32 0.0, %v7696
      %v7698 = vpop.f32.mrb[0].mxu0
      %7699 = vmatprep.mubr.bf16.mxu0 0
      %7700 = vmatmul.mubr.bf16.gmra.mrb[0].mxu0 %v5888
      %v7701 = vpop.f32.mrb[0].mxu0
      %v7702 = vadd.f32 0.0, %v7701
      %v7703 = vpop.f32.mrb[0].mxu0
      %v7704 = vpop.f32.mrb[0].mxu0
      %v7705 = vadd.f32 0.0, %v7704
      %v7706 = vpop.f32.mrb[0].mxu0
      %7707 = vmatprep.mubr.bf16.mxu0 0
      %7708 = vmatmul.mubr.bf16.gmra.mrb[0].mxu0 %v5891
      %v7709 = vpop.f32.mrb[0].mxu0
      %v7710 = vadd.f32 0.0, %v7709
      %v7711 = vpop.f32.mrb[0].mxu0
      %v7712 = vpop.f32.mrb[0].mxu0
      %v7713 = vadd.f32 0.0, %v7712
      %v7714 = vpop.f32.mrb[0].mxu0
      %7715 = vmatprep.mubr.bf16.mxu0 0
      %7716 = vmatmul.mubr.bf16.gmra.mrb[0].mxu0 %v5894
      %v7717 = vpop.f32.mrb[0].mxu0
      %v7718 = vadd.f32 0.0, %v7717
      %v7719 = vpop.f32.mrb[0].mxu0
      %v7720 = vpop.f32.mrb[0].mxu0
      %v7721 = vadd.f32 0.0, %v7720
      %v7722 = vpop.f32.mrb[0].mxu0
      %7723 = vmatprep.mubr.bf16.mxu0 0
      %7724 = vmatmul.mubr.bf16.gmra.mrb[0].mxu0 %v5897
      %v7725 = vpop.f32.mrb[0].mxu0
      %v7726 = vadd.f32 0.0, %v7725
      %v7727 = vpop.f32.mrb[0].mxu0
      %v7728 = vpop.f32.mrb[0].mxu0
      %v7729 = vadd.f32 0.0, %v7728
      %v7730 = vpop.f32.mrb[0].mxu0
      %7731 = vmatprep.mubr.bf16.mxu0 0
      %7732 = vmatmul.mubr.bf16.gmra.mrb[0].mxu0 %v5900
      %v7733 = vpop.f32.mrb[0].mxu0
      %v7734 = vadd.f32 0.0, %v7733
      %v7735 = vpop.f32.mrb[0].mxu0
      %v7736 = vpop.f32.mrb[0].mxu0
      %v7737 = vadd.f32 0.0, %v7736
      %v7738 = vpop.f32.mrb[0].mxu0
      %7739 = vmatprep.mubr.bf16.mxu0 0
      %7740 = vmatmul.mubr.bf16.gmra.mrb[0].mxu0 %v5903
      %v7741 = vpop.f32.mrb[0].mxu0
      %v7742 = vadd.f32 0.0, %v7741
      %v7743 = vpop.f32.mrb[0].mxu0
      %v7744 = vpop.f32.mrb[0].mxu0
      %v7745 = vadd.f32 0.0, %v7744
      %v7746 = vpop.f32.mrb[0].mxu0
      %7747 = vmatprep.mubr.bf16.mxu0 0
      %7748 = vmatmul.mubr.bf16.gmra.mrb[0].mxu0 %v5906
      %v7749 = vpop.f32.mrb[0].mxu0
      %v7750 = vadd.f32 0.0, %v7749
      %v7751 = vpop.f32.mrb[0].mxu0
      %v7752 = vpop.f32.mrb[0].mxu0
      %v7753 = vadd.f32 0.0, %v7752
      %v7754 = vpop.f32.mrb[0].mxu0
      %7755 = vmatprep.mubr.bf16.mxu0 0
      %7756 = vmatmul.mubr.bf16.gmra.mrb[0].mxu0 %v5909
      %v7757 = vpop.f32.mrb[0].mxu0
      %v7758 = vadd.f32 0.0, %v7757
      %v7759 = vpop.f32.mrb[0].mxu0
      %v7760 = vpop.f32.mrb[0].mxu0
      %v7761 = vadd.f32 0.0, %v7760
      %v7762 = vpop.f32.mrb[0].mxu0
      %7763 = vmatprep.mubr.bf16.mxu0 0
      %7764 = vmatmul.mubr.bf16.gmra.mrb[0].mxu0 %v5912
      %v7765 = vpop.f32.mrb[0].mxu0
      %v7766 = vadd.f32 0.0, %v7765
      %v7767 = vpop.f32.mrb[0].mxu0
      %v7768 = vpop.f32.mrb[0].mxu0
      %v7769 = vadd.f32 0.0, %v7768
      %v7770 = vpop.f32.mrb[0].mxu0
      %7771 = vmatprep.mubr.bf16.mxu0 0
      %7772 = vmatmul.mubr.bf16.gmra.mrb[0].mxu0 %v5915
      %v7773 = vpop.f32.mrb[0].mxu0
      %v7774 = vadd.f32 0.0, %v7773
      %v7775 = vpop.f32.mrb[0].mxu0
      %v7776 = vpop.f32.mrb[0].mxu0
      %v7777 = vadd.f32 0.0, %v7776
      %v7778 = vpop.f32.mrb[0].mxu0
      %7779 = vmatprep.mubr.bf16.mxu0 0
      %7780 = vmatmul.mubr.bf16.gmra.mrb[0].mxu0 %v5918
      %v7781 = vpop.f32.mrb[0].mxu0
      %v7782 = vadd.f32 0.0, %v7781
      %v7783 = vpop.f32.mrb[0].mxu0
      %v7784 = vpop.f32.mrb[0].mxu0
      %v7785 = vadd.f32 0.0, %v7784
      %v7786 = vpop.f32.mrb[0].mxu0
      %7787 = vmatprep.mubr.bf16.mxu0 0
      %7788 = vmatmul.mubr.bf16.gmra.mrb[0].mxu0 %v5921
      %v7789 = vpop.f32.mrb[0].mxu0
      %v7790 = vadd.f32 0.0, %v7789
      %v7791 = vpop.f32.mrb[0].mxu0
      %v7792 = vpop.f32.mrb[0].mxu0
      %v7793 = vadd.f32 0.0, %v7792
      %v7794 = vpop.f32.mrb[0].mxu0
      %7795 = vmatprep.mubr.bf16.mxu0 0
      %7796 = vmatmul.mubr.bf16.gmra.mrb[0].mxu0 %v5924
      %v7797 = vpop.f32.mrb[0].mxu0
      %v7798 = vadd.f32 0.0, %v7797
      %v7799 = vpop.f32.mrb[0].mxu0
      %v7800 = vpop.f32.mrb[0].mxu0
      %v7801 = vadd.f32 0.0, %v7800
      %v7802 = vpop.f32.mrb[0].mxu0
      %7803 = vmatprep.mubr.bf16.mxu0 0
      %7804 = vmatmul.mubr.bf16.gmra.mrb[0].mxu0 %v5927
      %v7805 = vpop.f32.mrb[0].mxu0
      %v7806 = vadd.f32 0.0, %v7805
      %v7807 = vpop.f32.mrb[0].mxu0
      %v7808 = vpop.f32.mrb[0].mxu0
      %v7809 = vadd.f32 0.0, %v7808
      %v7810 = vpop.f32.mrb[0].mxu0
      %7811 = vmatprep.mubr.bf16.mxu0 0
      %7812 = vmatmul.mubr.bf16.gmra.mrb[0].mxu0 %v5930
      %v7813 = vpop.f32.mrb[0].mxu0
      %v7814 = vadd.f32 0.0, %v7813
      %v7815 = vpop.f32.mrb[0].mxu0
      %v7816 = vpop.f32.mrb[0].mxu0
      %v7817 = vadd.f32 0.0, %v7816
      %v7818 = vpop.f32.mrb[0].mxu0
      %7819 = vmatprep.mubr.bf16.mxu0 0
      %7820 = vmatmul.mubr.bf16.gmra.mrb[0].mxu0 %v5933
      %v7821 = vpop.f32.mrb[0].mxu0
      %v7822 = vadd.f32 0.0, %v7821
      %v7823 = vpop.f32.mrb[0].mxu0
      %v7824 = vpop.f32.mrb[0].mxu0
      %v7825 = vadd.f32 0.0, %v7824
      %v7826 = vpop.f32.mrb[0].mxu0
      %7827 = vmatprep.mubr.bf16.mxu0 0
      %7828 = vmatmul.mubr.bf16.gmra.mrb[0].mxu0 %v5936
      %v7829 = vpop.f32.mrb[0].mxu0
      %v7830 = vadd.f32 0.0, %v7829
      %v7831 = vpop.f32.mrb[0].mxu0
      %v7832 = vpop.f32.mrb[0].mxu0
      %v7833 = vadd.f32 0.0, %v7832
      %v7834 = vpop.f32.mrb[0].mxu0
      %7835 = vmatprep.mubr.bf16.mxu0 0
      %7836 = vmatmul.mubr.bf16.gmra.mrb[0].mxu0 %v5939
      %v7837 = vpop.f32.mrb[0].mxu0
      %v7838 = vadd.f32 0.0, %v7837
      %v7839 = vpop.f32.mrb[0].mxu0
      %v7840 = vpop.f32.mrb[0].mxu0
      %v7841 = vadd.f32 0.0, %v7840
      %v7842 = vpop.f32.mrb[0].mxu0
      %7843 = vmatprep.mubr.bf16.mxu0 0
      %7844 = vmatmul.mubr.bf16.gmra.mrb[0].mxu0 %v5942
      %v7845 = vpop.f32.mrb[0].mxu0
      %v7846 = vadd.f32 0.0, %v7845
      %v7847 = vpop.f32.mrb[0].mxu0
      %v7848 = vpop.f32.mrb[0].mxu0
      %v7849 = vadd.f32 0.0, %v7848
      %v7850 = vpop.f32.mrb[0].mxu0
      %7851 = vmatprep.mubr.bf16.mxu0 0
      %7852 = vmatmul.mubr.bf16.gmra.mrb[0].mxu0 %v5945
      %v7853 = vpop.f32.mrb[0].mxu0
      %v7854 = vadd.f32 0.0, %v7853
      %v7855 = vpop.f32.mrb[0].mxu0
      %v7856 = vpop.f32.mrb[0].mxu0
      %v7857 = vadd.f32 0.0, %v7856
      %v7858 = vpop.f32.mrb[0].mxu0
      %7859 = vmatprep.mubr.bf16.mxu0 0
      %7860 = vmatmul.mubr.bf16.gmra.mrb[0].mxu0 %v5948
      %v7861 = vpop.f32.mrb[0].mxu0
      %v7862 = vadd.f32 0.0, %v7861
      %v7863 = vpop.f32.mrb[0].mxu0
      %v7864 = vpop.f32.mrb[0].mxu0
      %v7865 = vadd.f32 0.0, %v7864
      %v7866 = vpop.f32.mrb[0].mxu0
      %7867 = vmatprep.mubr.bf16.mxu0 0
      %7868 = vmatmul.mubr.bf16.gmra.mrb[0].mxu0 %v5951
      %v7869 = vpop.f32.mrb[0].mxu0
      %v7870 = vadd.f32 0.0, %v7869
      %v7871 = vpop.f32.mrb[0].mxu0
      %v7872 = vpop.f32.mrb[0].mxu0
      %v7873 = vadd.f32 0.0, %v7872
      %v7874 = vpop.f32.mrb[0].mxu0
      %7875 = vmatprep.mubr.bf16.mxu0 0
      %7876 = vmatmul.mubr.bf16.gmra.mrb[0].mxu0 %v5954
      %v7877 = vpop.f32.mrb[0].mxu0
      %v7878 = vadd.f32 0.0, %v7877
      %v7879 = vpop.f32.mrb[0].mxu0
      %v7880 = vpop.f32.mrb[0].mxu0
      %v7881 = vadd.f32 0.0, %v7880
      %v7882 = vpop.f32.mrb[0].mxu0
      %7883 = vmatprep.mubr.bf16.mxu0 0
      %7884 = vmatmul.mubr.bf16.gmra.mrb[0].mxu0 %v5957
      %v7885 = vpop.f32.mrb[0].mxu0
      %v7886 = vadd.f32 0.0, %v7885
      %v7887 = vpop.f32.mrb[0].mxu0
      %v7888 = vpop.f32.mrb[0].mxu0
      %v7889 = vadd.f32 0.0, %v7888
      %v7890 = vpop.f32.mrb[0].mxu0
      %7891 = vmatprep.mubr.bf16.mxu0 0
      %7892 = vmatmul.mubr.bf16.gmra.mrb[0].mxu0 %v5960
      %v7893 = vpop.f32.mrb[0].mxu0
      %v7894 = vadd.f32 0.0, %v7893
      %v7895 = vpop.f32.mrb[0].mxu0
      %v7896 = vpop.f32.mrb[0].mxu0
      %v7897 = vadd.f32 0.0, %v7896
      %v7898 = vpop.f32.mrb[0].mxu0
      %7899 = vmatprep.mubr.bf16.mxu0 0
      %7900 = vmatmul.mubr.bf16.gmra.mrb[0].mxu0 %v5963
      %v7901 = vpop.f32.mrb[0].mxu0
      %v7902 = vadd.f32 0.0, %v7901
      %v7903 = vpop.f32.mrb[0].mxu0
      %v7904 = vpop.f32.mrb[0].mxu0
      %v7905 = vadd.f32 0.0, %v7904
      %v7906 = vpop.f32.mrb[0].mxu0
      %7907 = vmatprep.mubr.bf16.mxu0 0
      %7908 = vmatmul.mubr.bf16.gmra.mrb[0].mxu0 %v5966
      %v7909 = vpop.f32.mrb[0].mxu0
      %v7910 = vadd.f32 0.0, %v7909
      %v7911 = vpop.f32.mrb[0].mxu0
      %v7912 = vpop.f32.mrb[0].mxu0
      %v7913 = vadd.f32 0.0, %v7912
      %v7914 = vpop.f32.mrb[0].mxu0
      %7915 = vmatprep.mubr.bf16.mxu0 0
      %7916 = vmatmul.mubr.bf16.gmra.mrb[0].mxu0 %v5969
      %v7917 = vpop.f32.mrb[0].mxu0
      %v7918 = vadd.f32 0.0, %v7917
      %v7919 = vpop.f32.mrb[0].mxu0
      %v7920 = vpop.f32.mrb[0].mxu0
      %v7921 = vadd.f32 0.0, %v7920
      %v7922 = vpop.f32.mrb[0].mxu0
      %7923 = vmatprep.mubr.bf16.mxu0 0
      %7924 = vmatmul.mubr.bf16.gmra.mrb[0].mxu0 %v5972
      %v7925 = vpop.f32.mrb[0].mxu0
      %v7926 = vadd.f32 0.0, %v7925
      %v7927 = vpop.f32.mrb[0].mxu0
      %v7928 = vpop.f32.mrb[0].mxu0
      %v7929 = vadd.f32 0.0, %v7928
      %v7930 = vpop.f32.mrb[0].mxu0
      %7931 = vmatprep.mubr.bf16.mxu0 0
      %7932 = vmatmul.mubr.bf16.gmra.mrb[0].mxu0 %v5975
      %v7933 = vpop.f32.mrb[0].mxu0
      %v7934 = vadd.f32 0.0, %v7933
      %v7935 = vpop.f32.mrb[0].mxu0
      %v7936 = vpop.f32.mrb[0].mxu0
      %v7937 = vadd.f32 0.0, %v7936
      %v7938 = vpop.f32.mrb[0].mxu0
      %7939 = vmatprep.mubr.bf16.mxu0 0
      %7940 = vmatmul.mubr.bf16.gmra.mrb[0].mxu0 %v5978
      %v7941 = vpop.f32.mrb[0].mxu0
      %v7942 = vadd.f32 0.0, %v7941
      %v7943 = vpop.f32.mrb[0].mxu0
      %v7944 = vpop.f32.mrb[0].mxu0
      %v7945 = vadd.f32 0.0, %v7944
      %v7946 = vpop.f32.mrb[0].mxu0
      %7947 = vmatprep.mubr.bf16.mxu0 0
      %7948 = vmatmul.mubr.bf16.gmra.mrb[0].mxu0 %v5981
      %v7949 = vpop.f32.mrb[0].mxu0
      %v7950 = vadd.f32 0.0, %v7949
      %v7951 = vpop.f32.mrb[0].mxu0
      %v7952 = vpop.f32.mrb[0].mxu0
      %v7953 = vadd.f32 0.0, %v7952
      %v7954 = vpop.f32.mrb[0].mxu0
      %7955 = vmatprep.mubr.bf16.mxu0 0
      %7956 = vmatmul.mubr.bf16.gmra.mrb[0].mxu0 %v5984
      %v7957 = vpop.f32.mrb[0].mxu0
      %v7958 = vadd.f32 0.0, %v7957
      %v7959 = vpop.f32.mrb[0].mxu0
      %v7960 = vpop.f32.mrb[0].mxu0
      %v7961 = vadd.f32 0.0, %v7960
      %v7962 = vpop.f32.mrb[0].mxu0
      %7963 = vmatprep.mubr.bf16.mxu0 0
      %7964 = vmatmul.mubr.bf16.gmra.mrb[0].mxu0 %v5987
      %v7965 = vpop.f32.mrb[0].mxu0
      %v7966 = vadd.f32 0.0, %v7965
      %v7967 = vpop.f32.mrb[0].mxu0
      %v7968 = vpop.f32.mrb[0].mxu0
      %v7969 = vadd.f32 0.0, %v7968
      %v7970 = vpop.f32.mrb[0].mxu0
      %7971 = vmatprep.mubr.bf16.mxu0 0
      %7972 = vmatmul.mubr.bf16.gmra.mrb[0].mxu0 %v5990
      %v7973 = vpop.f32.mrb[0].mxu0
      %v7974 = vadd.f32 0.0, %v7973
      %v7975 = vpop.f32.mrb[0].mxu0
      %v7976 = vpop.f32.mrb[0].mxu0
      %v7977 = vadd.f32 0.0, %v7976
      %v7978 = vpop.f32.mrb[0].mxu0
      %7979 = vmatprep.mubr.bf16.mxu0 0
      %7980 = vmatmul.mubr.bf16.gmra.mrb[0].mxu0 %v5993
      %v7981 = vpop.f32.mrb[0].mxu0
      %v7982 = vadd.f32 0.0, %v7981
      %v7983 = vpop.f32.mrb[0].mxu0
      %v7984 = vpop.f32.mrb[0].mxu0
      %v7985 = vadd.f32 0.0, %v7984
      %v7986 = vpop.f32.mrb[0].mxu0
      %7987 = vmatprep.mubr.bf16.mxu0 0
      %7988 = vmatmul.mubr.bf16.gmra.mrb[0].mxu0 %v5996
      %v7989 = vpop.f32.mrb[0].mxu0
      %v7990 = vadd.f32 0.0, %v7989
      %v7991 = vpop.f32.mrb[0].mxu0
      %v7992 = vpop.f32.mrb[0].mxu0
      %v7993 = vadd.f32 0.0, %v7992
      %v7994 = vpop.f32.mrb[0].mxu0
      %7995 = vmatprep.mubr.bf16.mxu0 0
      %7996 = vmatmul.mubr.bf16.gmra.mrb[0].mxu0 %v5999
      %v7997 = vpop.f32.mrb[0].mxu0
      %v7998 = vadd.f32 0.0, %v7997
      %v7999 = vpop.f32.mrb[0].mxu0
      %v8000 = vpop.f32.mrb[0].mxu0
      %v8001 = vadd.f32 0.0, %v8000
      %v8002 = vpop.f32.mrb[0].mxu0
      %8003 = vmatprep.mubr.bf16.mxu0 0
      %8004 = vmatmul.mubr.bf16.gmra.mrb[0].mxu0 %v6002
      %v8005 = vpop.f32.mrb[0].mxu0
      %v8006 = vadd.f32 0.0, %v8005
      %v8007 = vpop.f32.mrb[0].mxu0
      %v8008 = vpop.f32.mrb[0].mxu0
      %v8009 = vadd.f32 0.0, %v8008
      %v8010 = vpop.f32.mrb[0].mxu0
      %8011 = vmatprep.mubr.bf16.mxu0 0
      %8012 = vmatmul.mubr.bf16.gmra.mrb[0].mxu0 %v6005
      %v8013 = vpop.f32.mrb[0].mxu0
      %v8014 = vadd.f32 0.0, %v8013
      %v8015 = vpop.f32.mrb[0].mxu0
      %v8016 = vpop.f32.mrb[0].mxu0
      %v8017 = vadd.f32 0.0, %v8016
      %v8018 = vpop.f32.mrb[0].mxu0
      %8019 = vmatprep.mubr.bf16.mxu0 0
      %8020 = vmatmul.mubr.bf16.gmra.mrb[0].mxu0 %v6008
      %v8021 = vpop.f32.mrb[0].mxu0
      %v8022 = vadd.f32 0.0, %v8021
      %v8023 = vpop.f32.mrb[0].mxu0
      %v8024 = vpop.f32.mrb[0].mxu0
      %v8025 = vadd.f32 0.0, %v8024
      %v8026 = vpop.f32.mrb[0].mxu0
      %8027 = vmatprep.mubr.bf16.mxu0 0
      %8028 = vmatmul.mubr.bf16.gmra.mrb[0].mxu0 %v6011
      %v8029 = vpop.f32.mrb[0].mxu0
      %v8030 = vadd.f32 0.0, %v8029
      %v8031 = vpop.f32.mrb[0].mxu0
      %v8032 = vpop.f32.mrb[0].mxu0
      %v8033 = vadd.f32 0.0, %v8032
      %v8034 = vpop.f32.mrb[0].mxu0
      %8035 = vmatprep.mubr.bf16.mxu0 0
      %8036 = vmatmul.mubr.bf16.gmra.mrb[0].mxu0 %v6014
      %v8037 = vpop.f32.mrb[0].mxu0
      %v8038 = vadd.f32 0.0, %v8037
      %v8039 = vpop.f32.mrb[0].mxu0
      %v8040 = vpop.f32.mrb[0].mxu0
      %v8041 = vadd.f32 0.0, %v8040
      %v8042 = vpop.f32.mrb[0].mxu0
      %8043 = vmatprep.mubr.bf16.mxu0 0
      %8044 = vmatmul.mubr.bf16.gmra.mrb[0].mxu0 %v6017
      %v8045 = vpop.f32.mrb[0].mxu0
      %v8046 = vadd.f32 0.0, %v8045
      %v8047 = vpop.f32.mrb[0].mxu0
      %v8048 = vpop.f32.mrb[0].mxu0
      %v8049 = vadd.f32 0.0, %v8048
      %v8050 = vpop.f32.mrb[0].mxu0
      %8051 = vmatprep.mubr.bf16.mxu0 0
      %8052 = vmatmul.mubr.bf16.gmra.mrb[0].mxu0 %v6020
      %v8053 = vpop.f32.mrb[0].mxu0
      %v8054 = vadd.f32 0.0, %v8053
      %v8055 = vpop.f32.mrb[0].mxu0
      %v8056 = vpop.f32.mrb[0].mxu0
      %v8057 = vadd.f32 0.0, %v8056
      %v8058 = vpop.f32.mrb[0].mxu0
      %8059 = vmatprep.mubr.bf16.mxu0 0
      %8060 = vmatmul.mubr.bf16.gmra.mrb[0].mxu0 %v6023
      %v8061 = vpop.f32.mrb[0].mxu0
      %v8062 = vadd.f32 0.0, %v8061
      %v8063 = vpop.f32.mrb[0].mxu0
      %v8064 = vpop.f32.mrb[0].mxu0
      %v8065 = vadd.f32 0.0, %v8064
      %v8066 = vpop.f32.mrb[0].mxu0
      %8067 = vmatprep.mubr.bf16.mxu0 0
      %8068 = vmatmul.mubr.bf16.gmra.mrb[0].mxu0 %v6026
      %v8069 = vpop.f32.mrb[0].mxu0
      %v8070 = vadd.f32 0.0, %v8069
      %v8071 = vpop.f32.mrb[0].mxu0
      %v8072 = vpop.f32.mrb[0].mxu0
      %v8073 = vadd.f32 0.0, %v8072
      %v8074 = vpop.f32.mrb[0].mxu0
      %8075 = vmatprep.mubr.bf16.mxu0 0
      %8076 = vmatmul.mubr.bf16.gmra.mrb[0].mxu0 %v6029
      %v8077 = vpop.f32.mrb[0].mxu0
      %v8078 = vadd.f32 0.0, %v8077
      %v8079 = vpop.f32.mrb[0].mxu0
      %v8080 = vpop.f32.mrb[0].mxu0
      %v8081 = vadd.f32 0.0, %v8080
      %v8082 = vpop.f32.mrb[0].mxu0
      %8083 = vmatprep.mubr.bf16.mxu0 0
      %8084 = vmatmul.mubr.bf16.gmra.mrb[0].mxu0 %v6032
      %v8085 = vpop.f32.mrb[0].mxu0
      %v8086 = vadd.f32 0.0, %v8085
      %v8087 = vpop.f32.mrb[0].mxu0
      %v8088 = vpop.f32.mrb[0].mxu0
      %v8089 = vadd.f32 0.0, %v8088
      %v8090 = vpop.f32.mrb[0].mxu0
      %8091 = vmatprep.mubr.bf16.mxu0 0
      %8092 = vmatmul.mubr.bf16.gmra.mrb[0].mxu0 %v6035
      %v8093 = vpop.f32.mrb[0].mxu0
      %v8094 = vadd.f32 0.0, %v8093
      %v8095 = vpop.f32.mrb[0].mxu0
      %v8096 = vpop.f32.mrb[0].mxu0
      %v8097 = vadd.f32 0.0, %v8096
      %v8098 = vpop.f32.mrb[0].mxu0
      %8099 = vmatprep.mubr.bf16.mxu0 0
      %8100 = vmatmul.mubr.bf16.gmra.mrb[0].mxu0 %v6038
      %v8101 = vpop.f32.mrb[0].mxu0
      %v8102 = vadd.f32 0.0, %v8101
      %v8103 = vpop.f32.mrb[0].mxu0
      %v8104 = vpop.f32.mrb[0].mxu0
      %v8105 = vadd.f32 0.0, %v8104
      %v8106 = vpop.f32.mrb[0].mxu0
      %8107 = vmatprep.mubr.bf16.mxu0 0
      %8108 = vmatmul.mubr.bf16.gmra.mrb[0].mxu0 %v6041
      %v8109 = vpop.f32.mrb[0].mxu0
      %v8110 = vadd.f32 0.0, %v8109
      %v8111 = vpop.f32.mrb[0].mxu0
      %v8112 = vpop.f32.mrb[0].mxu0
      %v8113 = vadd.f32 0.0, %v8112
      %v8114 = vpop.f32.mrb[0].mxu0
      %8115 = vmatprep.mubr.bf16.mxu0 0
      %8116 = vmatmul.mubr.bf16.gmra.mrb[0].mxu0 %v6044
      %v8117 = vpop.f32.mrb[0].mxu0
      %v8118 = vadd.f32 0.0, %v8117
      %v8119 = vpop.f32.mrb[0].mxu0
      %v8120 = vpop.f32.mrb[0].mxu0
      %v8121 = vadd.f32 0.0, %v8120
      %v8122 = vpop.f32.mrb[0].mxu0
      %8123 = vmatprep.mubr.bf16.mxu0 0
      %8124 = vmatmul.mubr.bf16.gmra.mrb[0].mxu0 %v6047
      %v8125 = vpop.f32.mrb[0].mxu0
      %v8126 = vadd.f32 0.0, %v8125
      %v8127 = vpop.f32.mrb[0].mxu0
      %v8128 = vpop.f32.mrb[0].mxu0
      %v8129 = vadd.f32 0.0, %v8128
      %v8130 = vpop.f32.mrb[0].mxu0
      %8131 = vmatprep.mubr.bf16.mxu0 0
      %8132 = vmatmul.mubr.bf16.gmra.mrb[0].mxu0 %v6050
      %v8133 = vpop.f32.mrb[0].mxu0
      %v8134 = vadd.f32 0.0, %v8133
      %v8135 = vpop.f32.mrb[0].mxu0
      %v8136 = vpop.f32.mrb[0].mxu0
      %v8137 = vadd.f32 0.0, %v8136
      %v8138 = vpop.f32.mrb[0].mxu0
      %8139 = vmatprep.mubr.bf16.mxu0 0
      %8140 = vmatmul.mubr.bf16.gmra.mrb[0].mxu0 %v6053
      %v8141 = vpop.f32.mrb[0].mxu0
      %v8142 = vadd.f32 0.0, %v8141
      %v8143 = vpop.f32.mrb[0].mxu0
      %v8144 = vpop.f32.mrb[0].mxu0
      %v8145 = vadd.f32 0.0, %v8144
      %v8146 = vpop.f32.mrb[0].mxu0
      %8147 = vmatprep.mubr.bf16.mxu0 0
      %8148 = vmatmul.mubr.bf16.gmra.mrb[0].mxu0 %v6056
      %v8149 = vpop.f32.mrb[0].mxu0
      %v8150 = vadd.f32 0.0, %v8149
      %v8151 = vpop.f32.mrb[0].mxu0
      %v8152 = vpop.f32.mrb[0].mxu0
      %v8153 = vadd.f32 0.0, %v8152
      %v8154 = vpop.f32.mrb[0].mxu0
      %8155 = vmatprep.mubr.bf16.mxu0 0
      %8156 = vmatmul.mubr.bf16.gmra.mrb[0].mxu0 %v6059
      %v8157 = vpop.f32.mrb[0].mxu0
      %v8158 = vadd.f32 0.0, %v8157
      %v8159 = vpop.f32.mrb[0].mxu0
      %v8160 = vpop.f32.mrb[0].mxu0
      %v8161 = vadd.f32 0.0, %v8160
      %v8162 = vpop.f32.mrb[0].mxu0
      %8163 = vmatprep.mubr.bf16.mxu0 0
      %8164 = vmatmul.mubr.bf16.gmra.mrb[0].mxu0 %v6062
      %v8165 = vpop.f32.mrb[0].mxu0
      %v8166 = vadd.f32 0.0, %v8165
      %v8167 = vpop.f32.mrb[0].mxu0
      %v8168 = vpop.f32.mrb[0].mxu0
      %v8169 = vadd.f32 0.0, %v8168
      %v8170 = vpop.f32.mrb[0].mxu0
      %8171 = vmatprep.mubr.bf16.mxu0 0
      %8172 = vmatmul.mubr.bf16.gmra.mrb[0].mxu0 %v6065
      %v8173 = vpop.f32.mrb[0].mxu0
      %v8174 = vadd.f32 0.0, %v8173
      %v8175 = vpop.f32.mrb[0].mxu0
      %v8176 = vpop.f32.mrb[0].mxu0
      %v8177 = vadd.f32 0.0, %v8176
      %v8178 = vpop.f32.mrb[0].mxu0
      %8179 = vmatprep.mubr.bf16.mxu0 0
      %8180 = vmatmul.mubr.bf16.gmra.mrb[0].mxu0 %v6068
      %v8181 = vpop.f32.mrb[0].mxu0
      %v8182 = vadd.f32 0.0, %v8181
      %v8183 = vpop.f32.mrb[0].mxu0
      %v8184 = vpop.f32.mrb[0].mxu0
      %v8185 = vadd.f32 0.0, %v8184
      %v8186 = vpop.f32.mrb[0].mxu0
      %8187 = vmatprep.mubr.bf16.mxu0 0
      %8188 = vmatmul.mubr.bf16.gmra.mrb[0].mxu0 %v6071
      %v8189 = vpop.f32.mrb[0].mxu0
      %v8190 = vadd.f32 0.0, %v8189
      %v8191 = vpop.f32.mrb[0].mxu0
      %v8192 = vpop.f32.mrb[0].mxu0
      %v8193 = vadd.f32 0.0, %v8192
      %v8194 = vpop.f32.mrb[0].mxu0
      %8195 = vmatprep.mubr.bf16.mxu0 0
      %8196 = vmatmul.mubr.bf16.gmra.mrb[0].mxu0 %v6074
      %v8197 = vpop.f32.mrb[0].mxu0
      %v8198 = vadd.f32 0.0, %v8197
      %v8199 = vpop.f32.mrb[0].mxu0
      %v8200 = vpop.f32.mrb[0].mxu0
      %v8201 = vadd.f32 0.0, %v8200
      %v8202 = vpop.f32.mrb[0].mxu0
      %8203 = vmatprep.mubr.bf16.mxu0 0
      %8204 = vmatmul.mubr.bf16.gmra.mrb[0].mxu0 %v7185
      %v8205 = vpop.f32.mrb[0].mxu0
      %v8206 = vadd.f32 0.0, %v8205
      %v8207 = vpop.f32.mrb[0].mxu0
      %v8208 = vpop.f32.mrb[0].mxu0
      %v8209 = vadd.f32 0.0, %v8208
      %v8210 = vpop.f32.mrb[0].mxu0
      %8211 = vmatprep.mubr.bf16.mxu0 0
      %8212 = vmatmul.mubr.bf16.gmra.mrb[0].mxu0 %v7188
      %v8213 = vpop.f32.mrb[0].mxu0
      %v8214 = vadd.f32 0.0, %v8213
      %v8215 = vpop.f32.mrb[0].mxu0
      %v8216 = vpop.f32.mrb[0].mxu0
      %v8217 = vadd.f32 0.0, %v8216
      %v8218 = vpop.f32.mrb[0].mxu0
      %8219 = vmatprep.mubr.bf16.mxu0 0
      %8220 = vmatmul.mubr.bf16.gmra.mrb[0].mxu0 %v7191
      %v8221 = vpop.f32.mrb[0].mxu0
      %v8222 = vadd.f32 0.0, %v8221
      %v8223 = vpop.f32.mrb[0].mxu0
      %v8224 = vpop.f32.mrb[0].mxu0
      %v8225 = vadd.f32 0.0, %v8224
      %v8226 = vpop.f32.mrb[0].mxu0
      %8227 = vmatprep.mubr.bf16.mxu0 0
      %8228 = vmatmul.mubr.bf16.gmra.mrb[0].mxu0 %v7194
      %v8229 = vpop.f32.mrb[0].mxu0
      %v8230 = vadd.f32 0.0, %v8229
      %v8231 = vpop.f32.mrb[0].mxu0
      %v8232 = vpop.f32.mrb[0].mxu0
      %v8233 = vadd.f32 0.0, %v8232
      %v8234 = vpop.f32.mrb[0].mxu0
      %8235 = vmatprep.mubr.bf16.mxu0 0
      %8236 = vmatmul.mubr.bf16.gmra.mrb[0].mxu0 %v7197
      %v8237 = vpop.f32.mrb[0].mxu0
      %v8238 = vadd.f32 0.0, %v8237
      %v8239 = vpop.f32.mrb[0].mxu0
      %v8240 = vpop.f32.mrb[0].mxu0
      %v8241 = vadd.f32 0.0, %v8240
      %v8242 = vpop.f32.mrb[0].mxu0
      %8243 = vmatprep.mubr.bf16.mxu0 0
      %8244 = vmatmul.mubr.bf16.gmra.mrb[0].mxu0 %v7200
      %v8245 = vpop.f32.mrb[0].mxu0
      %v8246 = vadd.f32 0.0, %v8245
      %v8247 = vpop.f32.mrb[0].mxu0
      %v8248 = vpop.f32.mrb[0].mxu0
      %v8249 = vadd.f32 0.0, %v8248
      %v8250 = vpop.f32.mrb[0].mxu0
      %8251 = vmatprep.mubr.bf16.mxu0 0
      %8252 = vmatmul.mubr.bf16.gmra.mrb[0].mxu0 %v7203
      %v8253 = vpop.f32.mrb[0].mxu0
      %v8254 = vadd.f32 0.0, %v8253
      %v8255 = vpop.f32.mrb[0].mxu0
      %v8256 = vpop.f32.mrb[0].mxu0
      %v8257 = vadd.f32 0.0, %v8256
      %v8258 = vpop.f32.mrb[0].mxu0
      %8259 = vmatprep.mubr.bf16.mxu0 0
      %8260 = vmatmul.mubr.bf16.gmra.mrb[0].mxu0 %v7206
      %v8261 = vpop.f32.mrb[0].mxu0
      %v8262 = vadd.f32 0.0, %v8261
      %v8263 = vpop.f32.mrb[0].mxu0
      %v8264 = vpop.f32.mrb[0].mxu0
      %v8265 = vadd.f32 0.0, %v8264
      %v8266 = vpop.f32.mrb[0].mxu0
      %8267 = vdwg.mxu0
      %v8268 = vadd.f32 %v6114, %v7246
      %v8269 = vadd.f32 %v6117, %v7249
      %v8270 = vadd.f32 %v6122, %v7254
      %v8271 = vadd.f32 %v6125, %v7257
      %v8272 = vadd.f32 %v6130, %v7262
      %v8273 = vadd.f32 %v6133, %v7265
      %v8274 = vadd.f32 %v6138, %v7270
      %v8275 = vadd.f32 %v6141, %v7273
      %v8276 = vadd.f32 %v6146, %v7278
      %v8277 = vadd.f32 %v6149, %v7281
      %v8278 = vadd.f32 %v6154, %v7286
      %v8279 = vadd.f32 %v6157, %v7289
      %v8280 = vadd.f32 %v6162, %v7294
      %v8281 = vadd.f32 %v6165, %v7297
      %v8282 = vadd.f32 %v6170, %v7302
      %v8283 = vadd.f32 %v6173, %v7305
      %v8284 = vadd.f32 %v6178, %v7310
      %v8285 = vadd.f32 %v6181, %v7313
      %v8286 = vadd.f32 %v6186, %v7318
      %v8287 = vadd.f32 %v6189, %v7321
      %v8288 = vadd.f32 %v6194, %v7326
      %v8289 = vadd.f32 %v6197, %v7329
      %v8290 = vadd.f32 %v6202, %v7334
      %v8291 = vadd.f32 %v6205, %v7337
      %v8292 = vadd.f32 %v6210, %v7342
      %v8293 = vadd.f32 %v6213, %v7345
      %v8294 = vadd.f32 %v6218, %v7350
      %v8295 = vadd.f32 %v6221, %v7353
      %v8296 = vadd.f32 %v6226, %v7358
      %v8297 = vadd.f32 %v6229, %v7361
      %v8298 = vadd.f32 %v6234, %v7366
      %v8299 = vadd.f32 %v6237, %v7369
      %v8300 = vadd.f32 %v6242, %v7374
      %v8301 = vadd.f32 %v6245, %v7377
      %v8302 = vadd.f32 %v6250, %v7382
      %v8303 = vadd.f32 %v6253, %v7385
      %v8304 = vadd.f32 %v6258, %v7390
      %v8305 = vadd.f32 %v6261, %v7393
      %v8306 = vadd.f32 %v6266, %v7398
      %v8307 = vadd.f32 %v6269, %v7401
      %v8308 = vadd.f32 %v6274, %v7406
      %v8309 = vadd.f32 %v6277, %v7409
      %v8310 = vadd.f32 %v6282, %v7414
      %v8311 = vadd.f32 %v6285, %v7417
      %v8312 = vadd.f32 %v6290, %v7422
      %v8313 = vadd.f32 %v6293, %v7425
      %v8314 = vadd.f32 %v6298, %v7430
      %v8315 = vadd.f32 %v6301, %v7433
      %v8316 = vadd.f32 %v6306, %v7438
      %v8317 = vadd.f32 %v6309, %v7441
      %v8318 = vadd.f32 %v6314, %v7446
      %v8319 = vadd.f32 %v6317, %v7449
      %v8320 = vadd.f32 %v6322, %v7454
      %v8321 = vadd.f32 %v6325, %v7457
      %v8322 = vadd.f32 %v6330, %v7462
      %v8323 = vadd.f32 %v6333, %v7465
      %v8324 = vadd.f32 %v6338, %v7470
      %v8325 = vadd.f32 %v6341, %v7473
      %v8326 = vadd.f32 %v6346, %v7478
      %v8327 = vadd.f32 %v6349, %v7481
      %v8328 = vadd.f32 %v6354, %v7486
      %v8329 = vadd.f32 %v6357, %v7489
      %v8330 = vadd.f32 %v6362, %v7494
      %v8331 = vadd.f32 %v6365, %v7497
      %v8332 = vadd.f32 %v6370, %v7502
      %v8333 = vadd.f32 %v6373, %v7505
      %v8334 = vadd.f32 %v6378, %v7510
      %v8335 = vadd.f32 %v6381, %v7513
      %v8336 = vadd.f32 %v6386, %v7518
      %v8337 = vadd.f32 %v6389, %v7521
      %v8338 = vadd.f32 %v6394, %v7526
      %v8339 = vadd.f32 %v6397, %v7529
      %v8340 = vadd.f32 %v6402, %v7534
      %v8341 = vadd.f32 %v6405, %v7537
      %v8342 = vadd.f32 %v6410, %v7542
      %v8343 = vadd.f32 %v6413, %v7545
      %v8344 = vadd.f32 %v6418, %v7550
      %v8345 = vadd.f32 %v6421, %v7553
      %v8346 = vadd.f32 %v6426, %v7558
      %v8347 = vadd.f32 %v6429, %v7561
      %v8348 = vadd.f32 %v6434, %v7566
      %v8349 = vadd.f32 %v6437, %v7569
      %v8350 = vadd.f32 %v6442, %v7574
      %v8351 = vadd.f32 %v6445, %v7577
      %v8352 = vadd.f32 %v6450, %v7582
      %v8353 = vadd.f32 %v6453, %v7585
      %v8354 = vadd.f32 %v6458, %v7590
      %v8355 = vadd.f32 %v6461, %v7593
      %v8356 = vadd.f32 %v6466, %v7598
      %v8357 = vadd.f32 %v6469, %v7601
      %v8358 = vadd.f32 %v6474, %v7606
      %v8359 = vadd.f32 %v6477, %v7609
      %v8360 = vadd.f32 %v6482, %v7614
      %v8361 = vadd.f32 %v6485, %v7617
      %v8362 = vadd.f32 %v6490, %v7622
      %v8363 = vadd.f32 %v6493, %v7625
      %v8364 = vadd.f32 %v6498, %v7630
      %v8365 = vadd.f32 %v6501, %v7633
      %v8366 = vadd.f32 %v6506, %v7638
      %v8367 = vadd.f32 %v6509, %v7641
      %v8368 = vadd.f32 %v6514, %v7646
      %v8369 = vadd.f32 %v6517, %v7649
      %v8370 = vadd.f32 %v6522, %v7654
      %v8371 = vadd.f32 %v6525, %v7657
      %v8372 = vadd.f32 %v6530, %v7662
      %v8373 = vadd.f32 %v6533, %v7665
      %v8374 = vadd.f32 %v6538, %v7670
      %v8375 = vadd.f32 %v6541, %v7673
      %v8376 = vadd.f32 %v6546, %v7678
      %v8377 = vadd.f32 %v6549, %v7681
      %v8378 = vadd.f32 %v6554, %v7686
      %v8379 = vadd.f32 %v6557, %v7689
      %v8380 = vadd.f32 %v6562, %v7694
      %v8381 = vadd.f32 %v6565, %v7697
      %v8382 = vadd.f32 %v6570, %v7702
      %v8383 = vadd.f32 %v6573, %v7705
      %v8384 = vadd.f32 %v6578, %v7710
      %v8385 = vadd.f32 %v6581, %v7713
      %v8386 = vadd.f32 %v6586, %v7718
      %v8387 = vadd.f32 %v6589, %v7721
      %v8388 = vadd.f32 %v6594, %v7726
      %v8389 = vadd.f32 %v6597, %v7729
      %v8390 = vadd.f32 %v6602, %v7734
      %v8391 = vadd.f32 %v6605, %v7737
      %v8392 = vadd.f32 %v6610, %v7742
      %v8393 = vadd.f32 %v6613, %v7745
      %v8394 = vadd.f32 %v6618, %v7750
      %v8395 = vadd.f32 %v6621, %v7753
      %v8396 = vadd.f32 %v6626, %v7758
      %v8397 = vadd.f32 %v6629, %v7761
      %v8398 = vadd.f32 %v6634, %v7766
      %v8399 = vadd.f32 %v6637, %v7769
      %v8400 = vadd.f32 %v6642, %v7774
      %v8401 = vadd.f32 %v6645, %v7777
      %v8402 = vadd.f32 %v6650, %v7782
      %v8403 = vadd.f32 %v6653, %v7785
      %v8404 = vadd.f32 %v6658, %v7790
      %v8405 = vadd.f32 %v6661, %v7793
      %v8406 = vadd.f32 %v6666, %v7798
      %v8407 = vadd.f32 %v6669, %v7801
      %v8408 = vadd.f32 %v6674, %v7806
      %v8409 = vadd.f32 %v6677, %v7809
      %v8410 = vadd.f32 %v6682, %v7814
      %v8411 = vadd.f32 %v6685, %v7817
      %v8412 = vadd.f32 %v6690, %v7822
      %v8413 = vadd.f32 %v6693, %v7825
      %v8414 = vadd.f32 %v6698, %v7830
      %v8415 = vadd.f32 %v6701, %v7833
      %v8416 = vadd.f32 %v6706, %v7838
      %v8417 = vadd.f32 %v6709, %v7841
      %v8418 = vadd.f32 %v6714, %v7846
      %v8419 = vadd.f32 %v6717, %v7849
      %v8420 = vadd.f32 %v6722, %v7854
      %v8421 = vadd.f32 %v6725, %v7857
      %v8422 = vadd.f32 %v6730, %v7862
      %v8423 = vadd.f32 %v6733, %v7865
      %v8424 = vadd.f32 %v6738, %v7870
      %v8425 = vadd.f32 %v6741, %v7873
      %v8426 = vadd.f32 %v6746, %v7878
      %v8427 = vadd.f32 %v6749, %v7881
      %v8428 = vadd.f32 %v6754, %v7886
      %v8429 = vadd.f32 %v6757, %v7889
      %v8430 = vadd.f32 %v6762, %v7894
      %v8431 = vadd.f32 %v6765, %v7897
      %v8432 = vadd.f32 %v6770, %v7902
      %v8433 = vadd.f32 %v6773, %v7905
      %v8434 = vadd.f32 %v6778, %v7910
      %v8435 = vadd.f32 %v6781, %v7913
      %v8436 = vadd.f32 %v6786, %v7918
      %v8437 = vadd.f32 %v6789, %v7921
      %v8438 = vadd.f32 %v6794, %v7926
      %v8439 = vadd.f32 %v6797, %v7929
      %v8440 = vadd.f32 %v6802, %v7934
      %v8441 = vadd.f32 %v6805, %v7937
      %v8442 = vadd.f32 %v6810, %v7942
      %v8443 = vadd.f32 %v6813, %v7945
      %v8444 = vadd.f32 %v6818, %v7950
      %v8445 = vadd.f32 %v6821, %v7953
      %v8446 = vadd.f32 %v6826, %v7958
      %v8447 = vadd.f32 %v6829, %v7961
      %v8448 = vadd.f32 %v6834, %v7966
      %v8449 = vadd.f32 %v6837, %v7969
      %v8450 = vadd.f32 %v6842, %v7974
      %v8451 = vadd.f32 %v6845, %v7977
      %v8452 = vadd.f32 %v6850, %v7982
      %v8453 = vadd.f32 %v6853, %v7985
      %v8454 = vadd.f32 %v6858, %v7990
      %v8455 = vadd.f32 %v6861, %v7993
      %v8456 = vadd.f32 %v6866, %v7998
      %v8457 = vadd.f32 %v6869, %v8001
      %v8458 = vadd.f32 %v6874, %v8006
      %v8459 = vadd.f32 %v6877, %v8009
      %v8460 = vadd.f32 %v6882, %v8014
      %v8461 = vadd.f32 %v6885, %v8017
      %v8462 = vadd.f32 %v6890, %v8022
      %v8463 = vadd.f32 %v6893, %v8025
      %v8464 = vadd.f32 %v6898, %v8030
      %v8465 = vadd.f32 %v6901, %v8033
      %v8466 = vadd.f32 %v6906, %v8038
      %v8467 = vadd.f32 %v6909, %v8041
      %v8468 = vadd.f32 %v6914, %v8046
      %v8469 = vadd.f32 %v6917, %v8049
      %v8470 = vadd.f32 %v6922, %v8054
      %v8471 = vadd.f32 %v6925, %v8057
      %v8472 = vadd.f32 %v6930, %v8062
      %v8473 = vadd.f32 %v6933, %v8065
      %v8474 = vadd.f32 %v6938, %v8070
      %v8475 = vadd.f32 %v6941, %v8073
      %v8476 = vadd.f32 %v6946, %v8078
      %v8477 = vadd.f32 %v6949, %v8081
      %v8478 = vadd.f32 %v6954, %v8086
      %v8479 = vadd.f32 %v6957, %v8089
      %v8480 = vadd.f32 %v6962, %v8094
      %v8481 = vadd.f32 %v6965, %v8097
      %v8482 = vadd.f32 %v6970, %v8102
      %v8483 = vadd.f32 %v6973, %v8105
      %v8484 = vadd.f32 %v6978, %v8110
      %v8485 = vadd.f32 %v6981, %v8113
      %v8486 = vadd.f32 %v6986, %v8118
      %v8487 = vadd.f32 %v6989, %v8121
      %v8488 = vadd.f32 %v6994, %v8126
      %v8489 = vadd.f32 %v6997, %v8129
      %v8490 = vadd.f32 %v7002, %v8134
      %v8491 = vadd.f32 %v7005, %v8137
      %v8492 = vadd.f32 %v7010, %v8142
      %v8493 = vadd.f32 %v7013, %v8145
      %v8494 = vadd.f32 %v7018, %v8150
      %v8495 = vadd.f32 %v7021, %v8153
      %v8496 = vadd.f32 %v7026, %v8158
      %v8497 = vadd.f32 %v7029, %v8161
      %v8498 = vadd.f32 %v7034, %v8166
      %v8499 = vadd.f32 %v7037, %v8169
      %v8500 = vadd.f32 %v7042, %v8174
      %v8501 = vadd.f32 %v7045, %v8177
      %v8502 = vadd.f32 %v7050, %v8182
      %v8503 = vadd.f32 %v7053, %v8185
      %v8504 = vadd.f32 %v7058, %v8190
      %v8505 = vadd.f32 %v7061, %v8193
      %v8506 = vadd.f32 %v7066, %v8198
      %v8507 = vadd.f32 %v7069, %v8201
      %v8508 = vadd.f32 %v7074, %v8206
      %v8509 = vadd.f32 %v7077, %v8209
      %v8510 = vadd.f32 %v7082, %v8214
      %v8511 = vadd.f32 %v7085, %v8217
      %v8512 = vadd.f32 %v7090, %v8222
      %v8513 = vadd.f32 %v7093, %v8225
      %v8514 = vadd.f32 %v7098, %v8230
      %v8515 = vadd.f32 %v7101, %v8233
      %v8516 = vadd.f32 %v7106, %v8238
      %v8517 = vadd.f32 %v7109, %v8241
      %v8518 = vadd.f32 %v7114, %v8246
      %v8519 = vadd.f32 %v7117, %v8249
      %v8520 = vadd.f32 %v7122, %v8254
      %v8521 = vadd.f32 %v7125, %v8257
      %v8522 = vadd.f32 %v7130, %v8262
      %v8523 = vadd.f32 %v7133, %v8265
      %v8525 = vshrl.u32 %v563, 16
      %v8527 = vrot.slane %v8525, 4
      %v8528 = vshll.u32 %v563, 16
      %v8530 = vrot.slane %v8528, 5
      %v8531 = vor.u32 %v8527, %v8530
      %v8532 = vrot.slane %v8531, 4
      %v8534 = vshll.u32 %v564, 16
      %v8536 = vrot.slane %v8534, 5
      %v8537 = vsel %vm584, %v8532, %v8536
      %v8538 = vshrl.u32 %v564, 16
      %v8540 = vrot.slane %v8538, 4
      %v8541 = vor.u32 %v8540, %v8536
      %v8542 = vrot.slane %v8541, 4
      %v8544 = vshll.u32 %v565, 16
      %v8546 = vrot.slane %v8544, 5
      %v8547 = vsel %vm584, %v8542, %v8546
      %v8548 = vshrl.u32 %v565, 16
      %v8550 = vrot.slane %v8548, 4
      %v8551 = vor.u32 %v8550, %v8546
      %v8552 = vrot.slane %v8551, 4
      %v8554 = vshll.u32 %v566, 16
      %v8556 = vrot.slane %v8554, 5
      %v8557 = vsel %vm584, %v8552, %v8556
      %v8558 = vshrl.u32 %v566, 16
      %v8560 = vrot.slane %v8558, 4
      %v8561 = vor.u32 %v8560, %v8556
      %v8562 = vrot.slane %v8561, 4
      %v8564 = vshll.u32 %v567, 16
      %v8566 = vrot.slane %v8564, 5
      %v8567 = vsel %vm584, %v8562, %v8566
      %v8568 = vshrl.u32 %v567, 16
      %v8570 = vrot.slane %v8568, 4
      %v8571 = vor.u32 %v8570, %v8566
      %v8572 = vrot.slane %v8571, 4
      %v8574 = vshll.u32 %v568, 16
      %v8576 = vrot.slane %v8574, 5
      %v8577 = vsel %vm584, %v8572, %v8576
      %v8578 = vshrl.u32 %v568, 16
      %v8580 = vrot.slane %v8578, 4
      %v8581 = vor.u32 %v8580, %v8576
      %v8582 = vrot.slane %v8581, 4
      %v8584 = vshll.u32 %v569, 16
      %v8586 = vrot.slane %v8584, 5
      %v8587 = vsel %vm584, %v8582, %v8586
      %v8588 = vshrl.u32 %v569, 16
      %v8590 = vrot.slane %v8588, 4
      %v8591 = vor.u32 %v8590, %v8586
      %v8592 = vrot.slane %v8591, 4
      %v8594 = vshll.u32 %v570, 16
      %v8596 = vrot.slane %v8594, 5
      %v8597 = vsel %vm584, %v8592, %v8596
      %v8598 = vshrl.u32 %v570, 16
      %v8600 = vrot.slane %v8598, 4
      %v8601 = vor.u32 %v8600, %v8596
      %v8602 = vrot.slane %v8601, 4
      %v8604 = vshll.u32 %v571, 16
      %v8606 = vrot.slane %v8604, 5
      %v8607 = vsel %vm584, %v8602, %v8606
      %v8608 = vshrl.u32 %v571, 16
      %v8610 = vrot.slane %v8608, 4
      %v8611 = vor.u32 %v8610, %v8606
      %v8612 = vrot.slane %v8611, 4
      %v8614 = vshll.u32 %v572, 16
      %v8616 = vrot.slane %v8614, 5
      %v8617 = vsel %vm584, %v8612, %v8616
      %v8618 = vshrl.u32 %v572, 16
      %v8620 = vrot.slane %v8618, 4
      %v8621 = vor.u32 %v8620, %v8616
      %v8622 = vrot.slane %v8621, 4
      %v8624 = vshll.u32 %v573, 16
      %v8626 = vrot.slane %v8624, 5
      %v8627 = vsel %vm584, %v8622, %v8626
      %v8628 = vshrl.u32 %v573, 16
      %v8630 = vrot.slane %v8628, 4
      %v8631 = vor.u32 %v8630, %v8626
      %v8632 = vrot.slane %v8631, 4
      %v8634 = vshll.u32 %v574, 16
      %v8636 = vrot.slane %v8634, 5
      %v8637 = vsel %vm584, %v8632, %v8636
      %v8638 = vshrl.u32 %v574, 16
      %v8640 = vrot.slane %v8638, 4
      %v8641 = vor.u32 %v8640, %v8636
      %v8642 = vrot.slane %v8641, 4
      %v8644 = vshll.u32 %v575, 16
      %v8646 = vrot.slane %v8644, 5
      %v8647 = vsel %vm584, %v8642, %v8646
      %v8648 = vshrl.u32 %v575, 16
      %v8650 = vrot.slane %v8648, 4
      %v8651 = vor.u32 %v8650, %v8646
      %v8652 = vrot.slane %v8651, 4
      %v8654 = vshll.u32 %v576, 16
      %v8656 = vrot.slane %v8654, 5
      %v8657 = vsel %vm584, %v8652, %v8656
      %v8658 = vshrl.u32 %v576, 16
      %v8660 = vrot.slane %v8658, 4
      %v8661 = vor.u32 %v8660, %v8656
      %v8662 = vrot.slane %v8661, 4
      %v8664 = vshll.u32 %v577, 16
      %v8666 = vrot.slane %v8664, 5
      %v8667 = vsel %vm584, %v8662, %v8666
      %v8668 = vshrl.u32 %v577, 16
      %v8670 = vrot.slane %v8668, 4
      %v8671 = vor.u32 %v8670, %v8666
      %v8672 = vrot.slane %v8671, 4
      %v8674 = vshll.u32 %v578, 16
      %v8676 = vrot.slane %v8674, 5
      %v8677 = vsel %vm584, %v8672, %v8676
      %v8678 = vshrl.u32 %v578, 16
      %v8680 = vrot.slane %v8678, 4
      %v8681 = vor.u32 %v8680, %v8676
      %v8682 = vrot.slane %v8681, 4
      %v8684 = vshll.u32 %v579, 16
      %v8686 = vrot.slane %v8684, 5
      %v8687 = vsel %vm584, %v8682, %v8686
      %s8688 = scalar_lea.vmem %s2, 24
      %v8689 = vld [vmem:[%s8688] sm:$0xf]
      %v8690 = vld [vmem:[%s8688 + $0x4] sm:$0x3]
      %v8691 = vunpack.c.l.b16 %v8537
      %v8692 = vunpack.c.l.b16 %v8547
      %v8693 = vunpack.c.l.b16 %v8557
      %v8694 = vunpack.c.l.b16 %v8567
      %v8695 = vunpack.c.l.b16 %v8577
      %v8696 = vunpack.c.l.b16 %v8587
      %v8697 = vunpack.c.l.b16 %v8597
      %v8698 = vunpack.c.l.b16 %v8607
      %v8699 = vunpack.c.l.b16 %v8617
      %v8700 = vunpack.c.l.b16 %v8627
      %v8701 = vunpack.c.l.b16 %v8637
      %v8702 = vunpack.c.l.b16 %v8647
      %v8703 = vunpack.c.l.b16 %v8657
      %v8704 = vunpack.c.l.b16 %v8667
      %v8705 = vunpack.c.l.b16 %v8677
      %v8706 = vunpack.c.l.b16 %v8687
      %v8707 = vpack.c.b16 %v8692, %v8691
      %v8708 = vpack.c.b16 %v8694, %v8693
      %v8709 = vpack.c.b16 %v8696, %v8695
      %v8710 = vpack.c.b16 %v8698, %v8697
      %v8711 = vpack.c.b16 %v8700, %v8699
      %v8712 = vpack.c.b16 %v8702, %v8701
      %v8713 = vpack.c.b16 %v8704, %v8703
      %v8714 = vpack.c.b16 %v8706, %v8705
      %v8717 = vunpack.c.l.b16 %v8689
      %v8718 = vunpack.c.l.b16 %v8690
      %v8719 = vpack.c.b16 %v8718, %v8717
      %v8721 = vsel %vm3601, %v8707, 0
      %v8724 = vsel %vm3601, %v8708, 0
      %v8727 = vsel %vm3601, %v8709, 0
      %v8730 = vsel %vm3601, %v8710, 0
      %v8733 = vsel %vm3601, %v8711, 0
      %v8736 = vsel %vm3601, %v8712, 0
      %v8739 = vsel %vm3601, %v8713, 0
      %v8742 = vsel %vm3601, %v8714, 0
      %v8745 = vsel %vm3986, %v8719, 0
      %8747 = vmatprep.subr.bf16.mxu0 0
      %8748 = vmatpush1.bf16.msra.mxu0 %v8745
      %8749 = vmatprep.subr.bf16.mxu0 0
      %8750 = vmatpush1.bf16.msra.mxu0 0
      %8751 = vmatprep.subr.bf16.mxu0 0
      %8752 = vmatpush1.bf16.msra.mxu0 0
      %8753 = vmatprep.subr.bf16.mxu0 0
      %8754 = vmatpush1.bf16.msra.mxu0 0
      %8755 = vmatprep.subr.bf16.mxu0 0
      %8756 = vmatpush1.bf16.msra.mxu0 0
      %8757 = vmatprep.subr.bf16.mxu0 0
      %8758 = vmatpush1.bf16.msra.mxu0 0
      %8759 = vmatprep.subr.bf16.mxu0 0
      %8760 = vmatpush1.bf16.msra.mxu0 0
      %8761 = vmatprep.subr.bf16.mxu0 0
      %8762 = vmatpush1.bf16.msra.mxu0 0
      %8763 = vmatprep.subr.bf16.mxu0 0
      %8764 = vmatpush1.bf16.msra.mxu0 0
      %8765 = vmatprep.subr.bf16.mxu0 0
      %8766 = vmatpush1.bf16.msra.mxu0 0
      %8767 = vmatprep.subr.bf16.mxu0 0
      %8768 = vmatpush1.bf16.msra.mxu0 0
      %8769 = vmatprep.subr.bf16.mxu0 0
      %8770 = vmatpush1.bf16.msra.mxu0 0
      %8771 = vmatprep.subr.bf16.mxu0 0
      %8772 = vmatpush1.bf16.msra.mxu0 0
      %8773 = vmatprep.subr.bf16.mxu0 0
      %8774 = vmatpush1.bf16.msra.mxu0 0
      %8775 = vmatprep.subr.bf16.mxu0 0
      %8776 = vmatpush1.bf16.msra.mxu0 0
      %8777 = vmatprep.subr.bf16.mxu0 0
      %8778 = vmatpush1.bf16.msra.mxu0 0
      %8779 = vmatprep.mubr.bf16.mxu0 0
      %8780 = vmatmul.mubr.bf16.gmra.mrb[0].mxu0 %v3627
      %v8781 = vpop.f32.mrb[0].mxu0
      %v8782 = vadd.f32 0.0, %v8781
      %v8783 = vpop.f32.mrb[0].mxu0
      %v8784 = vpop.f32.mrb[0].mxu0
      %v8785 = vadd.f32 0.0, %v8784
      %v8786 = vpop.f32.mrb[0].mxu0
      %8787 = vmatprep.mubr.bf16.mxu0 0
      %8788 = vmatmul.mubr.bf16.gmra.mrb[0].mxu0 %v3630
      %v8789 = vpop.f32.mrb[0].mxu0
      %v8790 = vadd.f32 0.0, %v8789
      %v8791 = vpop.f32.mrb[0].mxu0
      %v8792 = vpop.f32.mrb[0].mxu0
      %v8793 = vadd.f32 0.0, %v8792
      %v8794 = vpop.f32.mrb[0].mxu0
      %8795 = vmatprep.mubr.bf16.mxu0 0
      %8796 = vmatmul.mubr.bf16.gmra.mrb[0].mxu0 %v3633
      %v8797 = vpop.f32.mrb[0].mxu0
      %v8798 = vadd.f32 0.0, %v8797
      %v8799 = vpop.f32.mrb[0].mxu0
      %v8800 = vpop.f32.mrb[0].mxu0
      %v8801 = vadd.f32 0.0, %v8800
      %v8802 = vpop.f32.mrb[0].mxu0
      %8803 = vmatprep.mubr.bf16.mxu0 0
      %8804 = vmatmul.mubr.bf16.gmra.mrb[0].mxu0 %v3636
      %v8805 = vpop.f32.mrb[0].mxu0
      %v8806 = vadd.f32 0.0, %v8805
      %v8807 = vpop.f32.mrb[0].mxu0
      %v8808 = vpop.f32.mrb[0].mxu0
      %v8809 = vadd.f32 0.0, %v8808
      %v8810 = vpop.f32.mrb[0].mxu0
      %8811 = vmatprep.mubr.bf16.mxu0 0
      %8812 = vmatmul.mubr.bf16.gmra.mrb[0].mxu0 %v3639
      %v8813 = vpop.f32.mrb[0].mxu0
      %v8814 = vadd.f32 0.0, %v8813
      %v8815 = vpop.f32.mrb[0].mxu0
      %v8816 = vpop.f32.mrb[0].mxu0
      %v8817 = vadd.f32 0.0, %v8816
      %v8818 = vpop.f32.mrb[0].mxu0
      %8819 = vmatprep.mubr.bf16.mxu0 0
      %8820 = vmatmul.mubr.bf16.gmra.mrb[0].mxu0 %v3642
      %v8821 = vpop.f32.mrb[0].mxu0
      %v8822 = vadd.f32 0.0, %v8821
      %v8823 = vpop.f32.mrb[0].mxu0
      %v8824 = vpop.f32.mrb[0].mxu0
      %v8825 = vadd.f32 0.0, %v8824
      %v8826 = vpop.f32.mrb[0].mxu0
      %8827 = vmatprep.mubr.bf16.mxu0 0
      %8828 = vmatmul.mubr.bf16.gmra.mrb[0].mxu0 %v3645
      %v8829 = vpop.f32.mrb[0].mxu0
      %v8830 = vadd.f32 0.0, %v8829
      %v8831 = vpop.f32.mrb[0].mxu0
      %v8832 = vpop.f32.mrb[0].mxu0
      %v8833 = vadd.f32 0.0, %v8832
      %v8834 = vpop.f32.mrb[0].mxu0
      %8835 = vmatprep.mubr.bf16.mxu0 0
      %8836 = vmatmul.mubr.bf16.gmra.mrb[0].mxu0 %v3648
      %v8837 = vpop.f32.mrb[0].mxu0
      %v8838 = vadd.f32 0.0, %v8837
      %v8839 = vpop.f32.mrb[0].mxu0
      %v8840 = vpop.f32.mrb[0].mxu0
      %v8841 = vadd.f32 0.0, %v8840
      %v8842 = vpop.f32.mrb[0].mxu0
      %8843 = vmatprep.mubr.bf16.mxu0 0
      %8844 = vmatmul.mubr.bf16.gmra.mrb[0].mxu0 %v3651
      %v8845 = vpop.f32.mrb[0].mxu0
      %v8846 = vadd.f32 0.0, %v8845
      %v8847 = vpop.f32.mrb[0].mxu0
      %v8848 = vpop.f32.mrb[0].mxu0
      %v8849 = vadd.f32 0.0, %v8848
      %v8850 = vpop.f32.mrb[0].mxu0
      %8851 = vmatprep.mubr.bf16.mxu0 0
      %8852 = vmatmul.mubr.bf16.gmra.mrb[0].mxu0 %v3654
      %v8853 = vpop.f32.mrb[0].mxu0
      %v8854 = vadd.f32 0.0, %v8853
      %v8855 = vpop.f32.mrb[0].mxu0
      %v8856 = vpop.f32.mrb[0].mxu0
      %v8857 = vadd.f32 0.0, %v8856
      %v8858 = vpop.f32.mrb[0].mxu0
      %8859 = vmatprep.mubr.bf16.mxu0 0
      %8860 = vmatmul.mubr.bf16.gmra.mrb[0].mxu0 %v3657
      %v8861 = vpop.f32.mrb[0].mxu0
      %v8862 = vadd.f32 0.0, %v8861
      %v8863 = vpop.f32.mrb[0].mxu0
      %v8864 = vpop.f32.mrb[0].mxu0
      %v8865 = vadd.f32 0.0, %v8864
      %v8866 = vpop.f32.mrb[0].mxu0
      %8867 = vmatprep.mubr.bf16.mxu0 0
      %8868 = vmatmul.mubr.bf16.gmra.mrb[0].mxu0 %v3660
      %v8869 = vpop.f32.mrb[0].mxu0
      %v8870 = vadd.f32 0.0, %v8869
      %v8871 = vpop.f32.mrb[0].mxu0
      %v8872 = vpop.f32.mrb[0].mxu0
      %v8873 = vadd.f32 0.0, %v8872
      %v8874 = vpop.f32.mrb[0].mxu0
      %8875 = vmatprep.mubr.bf16.mxu0 0
      %8876 = vmatmul.mubr.bf16.gmra.mrb[0].mxu0 %v3663
      %v8877 = vpop.f32.mrb[0].mxu0
      %v8878 = vadd.f32 0.0, %v8877
      %v8879 = vpop.f32.mrb[0].mxu0
      %v8880 = vpop.f32.mrb[0].mxu0
      %v8881 = vadd.f32 0.0, %v8880
      %v8882 = vpop.f32.mrb[0].mxu0
      %8883 = vmatprep.mubr.bf16.mxu0 0
      %8884 = vmatmul.mubr.bf16.gmra.mrb[0].mxu0 %v3666
      %v8885 = vpop.f32.mrb[0].mxu0
      %v8886 = vadd.f32 0.0, %v8885
      %v8887 = vpop.f32.mrb[0].mxu0
      %v8888 = vpop.f32.mrb[0].mxu0
      %v8889 = vadd.f32 0.0, %v8888
      %v8890 = vpop.f32.mrb[0].mxu0
      %8891 = vmatprep.mubr.bf16.mxu0 0
      %8892 = vmatmul.mubr.bf16.gmra.mrb[0].mxu0 %v3669
      %v8893 = vpop.f32.mrb[0].mxu0
      %v8894 = vadd.f32 0.0, %v8893
      %v8895 = vpop.f32.mrb[0].mxu0
      %v8896 = vpop.f32.mrb[0].mxu0
      %v8897 = vadd.f32 0.0, %v8896
      %v8898 = vpop.f32.mrb[0].mxu0
      %8899 = vmatprep.mubr.bf16.mxu0 0
      %8900 = vmatmul.mubr.bf16.gmra.mrb[0].mxu0 %v3672
      %v8901 = vpop.f32.mrb[0].mxu0
      %v8902 = vadd.f32 0.0, %v8901
      %v8903 = vpop.f32.mrb[0].mxu0
      %v8904 = vpop.f32.mrb[0].mxu0
      %v8905 = vadd.f32 0.0, %v8904
      %v8906 = vpop.f32.mrb[0].mxu0
      %8907 = vmatprep.mubr.bf16.mxu0 0
      %8908 = vmatmul.mubr.bf16.gmra.mrb[0].mxu0 %v3675
      %v8909 = vpop.f32.mrb[0].mxu0
      %v8910 = vadd.f32 0.0, %v8909
      %v8911 = vpop.f32.mrb[0].mxu0
      %v8912 = vpop.f32.mrb[0].mxu0
      %v8913 = vadd.f32 0.0, %v8912
      %v8914 = vpop.f32.mrb[0].mxu0
      %8915 = vmatprep.mubr.bf16.mxu0 0
      %8916 = vmatmul.mubr.bf16.gmra.mrb[0].mxu0 %v3678
      %v8917 = vpop.f32.mrb[0].mxu0
      %v8918 = vadd.f32 0.0, %v8917
      %v8919 = vpop.f32.mrb[0].mxu0
      %v8920 = vpop.f32.mrb[0].mxu0
      %v8921 = vadd.f32 0.0, %v8920
      %v8922 = vpop.f32.mrb[0].mxu0
      %8923 = vmatprep.mubr.bf16.mxu0 0
      %8924 = vmatmul.mubr.bf16.gmra.mrb[0].mxu0 %v3681
      %v8925 = vpop.f32.mrb[0].mxu0
      %v8926 = vadd.f32 0.0, %v8925
      %v8927 = vpop.f32.mrb[0].mxu0
      %v8928 = vpop.f32.mrb[0].mxu0
      %v8929 = vadd.f32 0.0, %v8928
      %v8930 = vpop.f32.mrb[0].mxu0
      %8931 = vmatprep.mubr.bf16.mxu0 0
      %8932 = vmatmul.mubr.bf16.gmra.mrb[0].mxu0 %v3684
      %v8933 = vpop.f32.mrb[0].mxu0
      %v8934 = vadd.f32 0.0, %v8933
      %v8935 = vpop.f32.mrb[0].mxu0
      %v8936 = vpop.f32.mrb[0].mxu0
      %v8937 = vadd.f32 0.0, %v8936
      %v8938 = vpop.f32.mrb[0].mxu0
      %8939 = vmatprep.mubr.bf16.mxu0 0
      %8940 = vmatmul.mubr.bf16.gmra.mrb[0].mxu0 %v3687
      %v8941 = vpop.f32.mrb[0].mxu0
      %v8942 = vadd.f32 0.0, %v8941
      %v8943 = vpop.f32.mrb[0].mxu0
      %v8944 = vpop.f32.mrb[0].mxu0
      %v8945 = vadd.f32 0.0, %v8944
      %v8946 = vpop.f32.mrb[0].mxu0
      %8947 = vmatprep.mubr.bf16.mxu0 0
      %8948 = vmatmul.mubr.bf16.gmra.mrb[0].mxu0 %v3690
      %v8949 = vpop.f32.mrb[0].mxu0
      %v8950 = vadd.f32 0.0, %v8949
      %v8951 = vpop.f32.mrb[0].mxu0
      %v8952 = vpop.f32.mrb[0].mxu0
      %v8953 = vadd.f32 0.0, %v8952
      %v8954 = vpop.f32.mrb[0].mxu0
      %8955 = vmatprep.mubr.bf16.mxu0 0
      %8956 = vmatmul.mubr.bf16.gmra.mrb[0].mxu0 %v3693
      %v8957 = vpop.f32.mrb[0].mxu0
      %v8958 = vadd.f32 0.0, %v8957
      %v8959 = vpop.f32.mrb[0].mxu0
      %v8960 = vpop.f32.mrb[0].mxu0
      %v8961 = vadd.f32 0.0, %v8960
      %v8962 = vpop.f32.mrb[0].mxu0
      %8963 = vmatprep.mubr.bf16.mxu0 0
      %8964 = vmatmul.mubr.bf16.gmra.mrb[0].mxu0 %v3696
      %v8965 = vpop.f32.mrb[0].mxu0
      %v8966 = vadd.f32 0.0, %v8965
      %v8967 = vpop.f32.mrb[0].mxu0
      %v8968 = vpop.f32.mrb[0].mxu0
      %v8969 = vadd.f32 0.0, %v8968
      %v8970 = vpop.f32.mrb[0].mxu0
      %8971 = vmatprep.mubr.bf16.mxu0 0
      %8972 = vmatmul.mubr.bf16.gmra.mrb[0].mxu0 %v3699
      %v8973 = vpop.f32.mrb[0].mxu0
      %v8974 = vadd.f32 0.0, %v8973
      %v8975 = vpop.f32.mrb[0].mxu0
      %v8976 = vpop.f32.mrb[0].mxu0
      %v8977 = vadd.f32 0.0, %v8976
      %v8978 = vpop.f32.mrb[0].mxu0
      %8979 = vmatprep.mubr.bf16.mxu0 0
      %8980 = vmatmul.mubr.bf16.gmra.mrb[0].mxu0 %v3702
      %v8981 = vpop.f32.mrb[0].mxu0
      %v8982 = vadd.f32 0.0, %v8981
      %v8983 = vpop.f32.mrb[0].mxu0
      %v8984 = vpop.f32.mrb[0].mxu0
      %v8985 = vadd.f32 0.0, %v8984
      %v8986 = vpop.f32.mrb[0].mxu0
      %8987 = vmatprep.mubr.bf16.mxu0 0
      %8988 = vmatmul.mubr.bf16.gmra.mrb[0].mxu0 %v3705
      %v8989 = vpop.f32.mrb[0].mxu0
      %v8990 = vadd.f32 0.0, %v8989
      %v8991 = vpop.f32.mrb[0].mxu0
      %v8992 = vpop.f32.mrb[0].mxu0
      %v8993 = vadd.f32 0.0, %v8992
      %v8994 = vpop.f32.mrb[0].mxu0
      %8995 = vmatprep.mubr.bf16.mxu0 0
      %8996 = vmatmul.mubr.bf16.gmra.mrb[0].mxu0 %v3708
      %v8997 = vpop.f32.mrb[0].mxu0
      %v8998 = vadd.f32 0.0, %v8997
      %v8999 = vpop.f32.mrb[0].mxu0
      %v9000 = vpop.f32.mrb[0].mxu0
      %v9001 = vadd.f32 0.0, %v9000
      %v9002 = vpop.f32.mrb[0].mxu0
      %9003 = vmatprep.mubr.bf16.mxu0 0
      %9004 = vmatmul.mubr.bf16.gmra.mrb[0].mxu0 %v3711
      %v9005 = vpop.f32.mrb[0].mxu0
      %v9006 = vadd.f32 0.0, %v9005
      %v9007 = vpop.f32.mrb[0].mxu0
      %v9008 = vpop.f32.mrb[0].mxu0
      %v9009 = vadd.f32 0.0, %v9008
      %v9010 = vpop.f32.mrb[0].mxu0
      %9011 = vmatprep.mubr.bf16.mxu0 0
      %9012 = vmatmul.mubr.bf16.gmra.mrb[0].mxu0 %v3714
      %v9013 = vpop.f32.mrb[0].mxu0
      %v9014 = vadd.f32 0.0, %v9013
      %v9015 = vpop.f32.mrb[0].mxu0
      %v9016 = vpop.f32.mrb[0].mxu0
      %v9017 = vadd.f32 0.0, %v9016
      %v9018 = vpop.f32.mrb[0].mxu0
      %9019 = vmatprep.mubr.bf16.mxu0 0
      %9020 = vmatmul.mubr.bf16.gmra.mrb[0].mxu0 %v3717
      %v9021 = vpop.f32.mrb[0].mxu0
      %v9022 = vadd.f32 0.0, %v9021
      %v9023 = vpop.f32.mrb[0].mxu0
      %v9024 = vpop.f32.mrb[0].mxu0
      %v9025 = vadd.f32 0.0, %v9024
      %v9026 = vpop.f32.mrb[0].mxu0
      %9027 = vmatprep.mubr.bf16.mxu0 0
      %9028 = vmatmul.mubr.bf16.gmra.mrb[0].mxu0 %v3720
      %v9029 = vpop.f32.mrb[0].mxu0
      %v9030 = vadd.f32 0.0, %v9029
      %v9031 = vpop.f32.mrb[0].mxu0
      %v9032 = vpop.f32.mrb[0].mxu0
      %v9033 = vadd.f32 0.0, %v9032
      %v9034 = vpop.f32.mrb[0].mxu0
      %9035 = vmatprep.mubr.bf16.mxu0 0
      %9036 = vmatmul.mubr.bf16.gmra.mrb[0].mxu0 %v3723
      %v9037 = vpop.f32.mrb[0].mxu0
      %v9038 = vadd.f32 0.0, %v9037
      %v9039 = vpop.f32.mrb[0].mxu0
      %v9040 = vpop.f32.mrb[0].mxu0
      %v9041 = vadd.f32 0.0, %v9040
      %v9042 = vpop.f32.mrb[0].mxu0
      %9043 = vmatprep.mubr.bf16.mxu0 0
      %9044 = vmatmul.mubr.bf16.gmra.mrb[0].mxu0 %v3726
      %v9045 = vpop.f32.mrb[0].mxu0
      %v9046 = vadd.f32 0.0, %v9045
      %v9047 = vpop.f32.mrb[0].mxu0
      %v9048 = vpop.f32.mrb[0].mxu0
      %v9049 = vadd.f32 0.0, %v9048
      %v9050 = vpop.f32.mrb[0].mxu0
      %9051 = vmatprep.mubr.bf16.mxu0 0
      %9052 = vmatmul.mubr.bf16.gmra.mrb[0].mxu0 %v3729
      %v9053 = vpop.f32.mrb[0].mxu0
      %v9054 = vadd.f32 0.0, %v9053
      %v9055 = vpop.f32.mrb[0].mxu0
      %v9056 = vpop.f32.mrb[0].mxu0
      %v9057 = vadd.f32 0.0, %v9056
      %v9058 = vpop.f32.mrb[0].mxu0
      %9059 = vmatprep.mubr.bf16.mxu0 0
      %9060 = vmatmul.mubr.bf16.gmra.mrb[0].mxu0 %v3732
      %v9061 = vpop.f32.mrb[0].mxu0
      %v9062 = vadd.f32 0.0, %v9061
      %v9063 = vpop.f32.mrb[0].mxu0
      %v9064 = vpop.f32.mrb[0].mxu0
      %v9065 = vadd.f32 0.0, %v9064
      %v9066 = vpop.f32.mrb[0].mxu0
      %9067 = vmatprep.mubr.bf16.mxu0 0
      %9068 = vmatmul.mubr.bf16.gmra.mrb[0].mxu0 %v3735
      %v9069 = vpop.f32.mrb[0].mxu0
      %v9070 = vadd.f32 0.0, %v9069
      %v9071 = vpop.f32.mrb[0].mxu0
      %v9072 = vpop.f32.mrb[0].mxu0
      %v9073 = vadd.f32 0.0, %v9072
      %v9074 = vpop.f32.mrb[0].mxu0
      %9075 = vmatprep.mubr.bf16.mxu0 0
      %9076 = vmatmul.mubr.bf16.gmra.mrb[0].mxu0 %v3738
      %v9077 = vpop.f32.mrb[0].mxu0
      %v9078 = vadd.f32 0.0, %v9077
      %v9079 = vpop.f32.mrb[0].mxu0
      %v9080 = vpop.f32.mrb[0].mxu0
      %v9081 = vadd.f32 0.0, %v9080
      %v9082 = vpop.f32.mrb[0].mxu0
      %9083 = vmatprep.mubr.bf16.mxu0 0
      %9084 = vmatmul.mubr.bf16.gmra.mrb[0].mxu0 %v3741
      %v9085 = vpop.f32.mrb[0].mxu0
      %v9086 = vadd.f32 0.0, %v9085
      %v9087 = vpop.f32.mrb[0].mxu0
      %v9088 = vpop.f32.mrb[0].mxu0
      %v9089 = vadd.f32 0.0, %v9088
      %v9090 = vpop.f32.mrb[0].mxu0
      %9091 = vmatprep.mubr.bf16.mxu0 0
      %9092 = vmatmul.mubr.bf16.gmra.mrb[0].mxu0 %v3744
      %v9093 = vpop.f32.mrb[0].mxu0
      %v9094 = vadd.f32 0.0, %v9093
      %v9095 = vpop.f32.mrb[0].mxu0
      %v9096 = vpop.f32.mrb[0].mxu0
      %v9097 = vadd.f32 0.0, %v9096
      %v9098 = vpop.f32.mrb[0].mxu0
      %9099 = vmatprep.mubr.bf16.mxu0 0
      %9100 = vmatmul.mubr.bf16.gmra.mrb[0].mxu0 %v3747
      %v9101 = vpop.f32.mrb[0].mxu0
      %v9102 = vadd.f32 0.0, %v9101
      %v9103 = vpop.f32.mrb[0].mxu0
      %v9104 = vpop.f32.mrb[0].mxu0
      %v9105 = vadd.f32 0.0, %v9104
      %v9106 = vpop.f32.mrb[0].mxu0
      %9107 = vmatprep.mubr.bf16.mxu0 0
      %9108 = vmatmul.mubr.bf16.gmra.mrb[0].mxu0 %v3750
      %v9109 = vpop.f32.mrb[0].mxu0
      %v9110 = vadd.f32 0.0, %v9109
      %v9111 = vpop.f32.mrb[0].mxu0
      %v9112 = vpop.f32.mrb[0].mxu0
      %v9113 = vadd.f32 0.0, %v9112
      %v9114 = vpop.f32.mrb[0].mxu0
      %9115 = vmatprep.mubr.bf16.mxu0 0
      %9116 = vmatmul.mubr.bf16.gmra.mrb[0].mxu0 %v3753
      %v9117 = vpop.f32.mrb[0].mxu0
      %v9118 = vadd.f32 0.0, %v9117
      %v9119 = vpop.f32.mrb[0].mxu0
      %v9120 = vpop.f32.mrb[0].mxu0
      %v9121 = vadd.f32 0.0, %v9120
      %v9122 = vpop.f32.mrb[0].mxu0
      %9123 = vmatprep.mubr.bf16.mxu0 0
      %9124 = vmatmul.mubr.bf16.gmra.mrb[0].mxu0 %v3756
      %v9125 = vpop.f32.mrb[0].mxu0
      %v9126 = vadd.f32 0.0, %v9125
      %v9127 = vpop.f32.mrb[0].mxu0
      %v9128 = vpop.f32.mrb[0].mxu0
      %v9129 = vadd.f32 0.0, %v9128
      %v9130 = vpop.f32.mrb[0].mxu0
      %9131 = vmatprep.mubr.bf16.mxu0 0
      %9132 = vmatmul.mubr.bf16.gmra.mrb[0].mxu0 %v3759
      %v9133 = vpop.f32.mrb[0].mxu0
      %v9134 = vadd.f32 0.0, %v9133
      %v9135 = vpop.f32.mrb[0].mxu0
      %v9136 = vpop.f32.mrb[0].mxu0
      %v9137 = vadd.f32 0.0, %v9136
      %v9138 = vpop.f32.mrb[0].mxu0
      %9139 = vmatprep.mubr.bf16.mxu0 0
      %9140 = vmatmul.mubr.bf16.gmra.mrb[0].mxu0 %v3762
      %v9141 = vpop.f32.mrb[0].mxu0
      %v9142 = vadd.f32 0.0, %v9141
      %v9143 = vpop.f32.mrb[0].mxu0
      %v9144 = vpop.f32.mrb[0].mxu0
      %v9145 = vadd.f32 0.0, %v9144
      %v9146 = vpop.f32.mrb[0].mxu0
      %9147 = vmatprep.mubr.bf16.mxu0 0
      %9148 = vmatmul.mubr.bf16.gmra.mrb[0].mxu0 %v3765
      %v9149 = vpop.f32.mrb[0].mxu0
      %v9150 = vadd.f32 0.0, %v9149
      %v9151 = vpop.f32.mrb[0].mxu0
      %v9152 = vpop.f32.mrb[0].mxu0
      %v9153 = vadd.f32 0.0, %v9152
      %v9154 = vpop.f32.mrb[0].mxu0
      %9155 = vmatprep.mubr.bf16.mxu0 0
      %9156 = vmatmul.mubr.bf16.gmra.mrb[0].mxu0 %v3768
      %v9157 = vpop.f32.mrb[0].mxu0
      %v9158 = vadd.f32 0.0, %v9157
      %v9159 = vpop.f32.mrb[0].mxu0
      %v9160 = vpop.f32.mrb[0].mxu0
      %v9161 = vadd.f32 0.0, %v9160
      %v9162 = vpop.f32.mrb[0].mxu0
      %9163 = vmatprep.mubr.bf16.mxu0 0
      %9164 = vmatmul.mubr.bf16.gmra.mrb[0].mxu0 %v3771
      %v9165 = vpop.f32.mrb[0].mxu0
      %v9166 = vadd.f32 0.0, %v9165
      %v9167 = vpop.f32.mrb[0].mxu0
      %v9168 = vpop.f32.mrb[0].mxu0
      %v9169 = vadd.f32 0.0, %v9168
      %v9170 = vpop.f32.mrb[0].mxu0
      %9171 = vmatprep.mubr.bf16.mxu0 0
      %9172 = vmatmul.mubr.bf16.gmra.mrb[0].mxu0 %v3774
      %v9173 = vpop.f32.mrb[0].mxu0
      %v9174 = vadd.f32 0.0, %v9173
      %v9175 = vpop.f32.mrb[0].mxu0
      %v9176 = vpop.f32.mrb[0].mxu0
      %v9177 = vadd.f32 0.0, %v9176
      %v9178 = vpop.f32.mrb[0].mxu0
      %9179 = vmatprep.mubr.bf16.mxu0 0
      %9180 = vmatmul.mubr.bf16.gmra.mrb[0].mxu0 %v3777
      %v9181 = vpop.f32.mrb[0].mxu0
      %v9182 = vadd.f32 0.0, %v9181
      %v9183 = vpop.f32.mrb[0].mxu0
      %v9184 = vpop.f32.mrb[0].mxu0
      %v9185 = vadd.f32 0.0, %v9184
      %v9186 = vpop.f32.mrb[0].mxu0
      %9187 = vmatprep.mubr.bf16.mxu0 0
      %9188 = vmatmul.mubr.bf16.gmra.mrb[0].mxu0 %v3780
      %v9189 = vpop.f32.mrb[0].mxu0
      %v9190 = vadd.f32 0.0, %v9189
      %v9191 = vpop.f32.mrb[0].mxu0
      %v9192 = vpop.f32.mrb[0].mxu0
      %v9193 = vadd.f32 0.0, %v9192
      %v9194 = vpop.f32.mrb[0].mxu0
      %9195 = vmatprep.mubr.bf16.mxu0 0
      %9196 = vmatmul.mubr.bf16.gmra.mrb[0].mxu0 %v3783
      %v9197 = vpop.f32.mrb[0].mxu0
      %v9198 = vadd.f32 0.0, %v9197
      %v9199 = vpop.f32.mrb[0].mxu0
      %v9200 = vpop.f32.mrb[0].mxu0
      %v9201 = vadd.f32 0.0, %v9200
      %v9202 = vpop.f32.mrb[0].mxu0
      %9203 = vmatprep.mubr.bf16.mxu0 0
      %9204 = vmatmul.mubr.bf16.gmra.mrb[0].mxu0 %v3786
      %v9205 = vpop.f32.mrb[0].mxu0
      %v9206 = vadd.f32 0.0, %v9205
      %v9207 = vpop.f32.mrb[0].mxu0
      %v9208 = vpop.f32.mrb[0].mxu0
      %v9209 = vadd.f32 0.0, %v9208
      %v9210 = vpop.f32.mrb[0].mxu0
      %9211 = vmatprep.mubr.bf16.mxu0 0
      %9212 = vmatmul.mubr.bf16.gmra.mrb[0].mxu0 %v3789
      %v9213 = vpop.f32.mrb[0].mxu0
      %v9214 = vadd.f32 0.0, %v9213
      %v9215 = vpop.f32.mrb[0].mxu0
      %v9216 = vpop.f32.mrb[0].mxu0
      %v9217 = vadd.f32 0.0, %v9216
      %v9218 = vpop.f32.mrb[0].mxu0
      %9219 = vmatprep.mubr.bf16.mxu0 0
      %9220 = vmatmul.mubr.bf16.gmra.mrb[0].mxu0 %v3792
      %v9221 = vpop.f32.mrb[0].mxu0
      %v9222 = vadd.f32 0.0, %v9221
      %v9223 = vpop.f32.mrb[0].mxu0
      %v9224 = vpop.f32.mrb[0].mxu0
      %v9225 = vadd.f32 0.0, %v9224
      %v9226 = vpop.f32.mrb[0].mxu0
      %9227 = vmatprep.mubr.bf16.mxu0 0
      %9228 = vmatmul.mubr.bf16.gmra.mrb[0].mxu0 %v3795
      %v9229 = vpop.f32.mrb[0].mxu0
      %v9230 = vadd.f32 0.0, %v9229
      %v9231 = vpop.f32.mrb[0].mxu0
      %v9232 = vpop.f32.mrb[0].mxu0
      %v9233 = vadd.f32 0.0, %v9232
      %v9234 = vpop.f32.mrb[0].mxu0
      %9235 = vmatprep.mubr.bf16.mxu0 0
      %9236 = vmatmul.mubr.bf16.gmra.mrb[0].mxu0 %v3798
      %v9237 = vpop.f32.mrb[0].mxu0
      %v9238 = vadd.f32 0.0, %v9237
      %v9239 = vpop.f32.mrb[0].mxu0
      %v9240 = vpop.f32.mrb[0].mxu0
      %v9241 = vadd.f32 0.0, %v9240
      %v9242 = vpop.f32.mrb[0].mxu0
      %9243 = vmatprep.mubr.bf16.mxu0 0
      %9244 = vmatmul.mubr.bf16.gmra.mrb[0].mxu0 %v3801
      %v9245 = vpop.f32.mrb[0].mxu0
      %v9246 = vadd.f32 0.0, %v9245
      %v9247 = vpop.f32.mrb[0].mxu0
      %v9248 = vpop.f32.mrb[0].mxu0
      %v9249 = vadd.f32 0.0, %v9248
      %v9250 = vpop.f32.mrb[0].mxu0
      %9251 = vmatprep.mubr.bf16.mxu0 0
      %9252 = vmatmul.mubr.bf16.gmra.mrb[0].mxu0 %v3804
      %v9253 = vpop.f32.mrb[0].mxu0
      %v9254 = vadd.f32 0.0, %v9253
      %v9255 = vpop.f32.mrb[0].mxu0
      %v9256 = vpop.f32.mrb[0].mxu0
      %v9257 = vadd.f32 0.0, %v9256
      %v9258 = vpop.f32.mrb[0].mxu0
      %9259 = vmatprep.mubr.bf16.mxu0 0
      %9260 = vmatmul.mubr.bf16.gmra.mrb[0].mxu0 %v3807
      %v9261 = vpop.f32.mrb[0].mxu0
      %v9262 = vadd.f32 0.0, %v9261
      %v9263 = vpop.f32.mrb[0].mxu0
      %v9264 = vpop.f32.mrb[0].mxu0
      %v9265 = vadd.f32 0.0, %v9264
      %v9266 = vpop.f32.mrb[0].mxu0
      %9267 = vmatprep.mubr.bf16.mxu0 0
      %9268 = vmatmul.mubr.bf16.gmra.mrb[0].mxu0 %v3810
      %v9269 = vpop.f32.mrb[0].mxu0
      %v9270 = vadd.f32 0.0, %v9269
      %v9271 = vpop.f32.mrb[0].mxu0
      %v9272 = vpop.f32.mrb[0].mxu0
      %v9273 = vadd.f32 0.0, %v9272
      %v9274 = vpop.f32.mrb[0].mxu0
      %9275 = vmatprep.mubr.bf16.mxu0 0
      %9276 = vmatmul.mubr.bf16.gmra.mrb[0].mxu0 %v3813
      %v9277 = vpop.f32.mrb[0].mxu0
      %v9278 = vadd.f32 0.0, %v9277
      %v9279 = vpop.f32.mrb[0].mxu0
      %v9280 = vpop.f32.mrb[0].mxu0
      %v9281 = vadd.f32 0.0, %v9280
      %v9282 = vpop.f32.mrb[0].mxu0
      %9283 = vmatprep.mubr.bf16.mxu0 0
      %9284 = vmatmul.mubr.bf16.gmra.mrb[0].mxu0 %v3816
      %v9285 = vpop.f32.mrb[0].mxu0
      %v9286 = vadd.f32 0.0, %v9285
      %v9287 = vpop.f32.mrb[0].mxu0
      %v9288 = vpop.f32.mrb[0].mxu0
      %v9289 = vadd.f32 0.0, %v9288
      %v9290 = vpop.f32.mrb[0].mxu0
      %9291 = vmatprep.mubr.bf16.mxu0 0
      %9292 = vmatmul.mubr.bf16.gmra.mrb[0].mxu0 %v3819
      %v9293 = vpop.f32.mrb[0].mxu0
      %v9294 = vadd.f32 0.0, %v9293
      %v9295 = vpop.f32.mrb[0].mxu0
      %v9296 = vpop.f32.mrb[0].mxu0
      %v9297 = vadd.f32 0.0, %v9296
      %v9298 = vpop.f32.mrb[0].mxu0
      %9299 = vmatprep.mubr.bf16.mxu0 0
      %9300 = vmatmul.mubr.bf16.gmra.mrb[0].mxu0 %v3822
      %v9301 = vpop.f32.mrb[0].mxu0
      %v9302 = vadd.f32 0.0, %v9301
      %v9303 = vpop.f32.mrb[0].mxu0
      %v9304 = vpop.f32.mrb[0].mxu0
      %v9305 = vadd.f32 0.0, %v9304
      %v9306 = vpop.f32.mrb[0].mxu0
      %9307 = vmatprep.mubr.bf16.mxu0 0
      %9308 = vmatmul.mubr.bf16.gmra.mrb[0].mxu0 %v3825
      %v9309 = vpop.f32.mrb[0].mxu0
      %v9310 = vadd.f32 0.0, %v9309
      %v9311 = vpop.f32.mrb[0].mxu0
      %v9312 = vpop.f32.mrb[0].mxu0
      %v9313 = vadd.f32 0.0, %v9312
      %v9314 = vpop.f32.mrb[0].mxu0
      %9315 = vmatprep.mubr.bf16.mxu0 0
      %9316 = vmatmul.mubr.bf16.gmra.mrb[0].mxu0 %v3828
      %v9317 = vpop.f32.mrb[0].mxu0
      %v9318 = vadd.f32 0.0, %v9317
      %v9319 = vpop.f32.mrb[0].mxu0
      %v9320 = vpop.f32.mrb[0].mxu0
      %v9321 = vadd.f32 0.0, %v9320
      %v9322 = vpop.f32.mrb[0].mxu0
      %9323 = vmatprep.mubr.bf16.mxu0 0
      %9324 = vmatmul.mubr.bf16.gmra.mrb[0].mxu0 %v3831
      %v9325 = vpop.f32.mrb[0].mxu0
      %v9326 = vadd.f32 0.0, %v9325
      %v9327 = vpop.f32.mrb[0].mxu0
      %v9328 = vpop.f32.mrb[0].mxu0
      %v9329 = vadd.f32 0.0, %v9328
      %v9330 = vpop.f32.mrb[0].mxu0
      %9331 = vmatprep.mubr.bf16.mxu0 0
      %9332 = vmatmul.mubr.bf16.gmra.mrb[0].mxu0 %v3834
      %v9333 = vpop.f32.mrb[0].mxu0
      %v9334 = vadd.f32 0.0, %v9333
      %v9335 = vpop.f32.mrb[0].mxu0
      %v9336 = vpop.f32.mrb[0].mxu0
      %v9337 = vadd.f32 0.0, %v9336
      %v9338 = vpop.f32.mrb[0].mxu0
      %9339 = vmatprep.mubr.bf16.mxu0 0
      %9340 = vmatmul.mubr.bf16.gmra.mrb[0].mxu0 %v3837
      %v9341 = vpop.f32.mrb[0].mxu0
      %v9342 = vadd.f32 0.0, %v9341
      %v9343 = vpop.f32.mrb[0].mxu0
      %v9344 = vpop.f32.mrb[0].mxu0
      %v9345 = vadd.f32 0.0, %v9344
      %v9346 = vpop.f32.mrb[0].mxu0
      %9347 = vmatprep.mubr.bf16.mxu0 0
      %9348 = vmatmul.mubr.bf16.gmra.mrb[0].mxu0 %v3840
      %v9349 = vpop.f32.mrb[0].mxu0
      %v9350 = vadd.f32 0.0, %v9349
      %v9351 = vpop.f32.mrb[0].mxu0
      %v9352 = vpop.f32.mrb[0].mxu0
      %v9353 = vadd.f32 0.0, %v9352
      %v9354 = vpop.f32.mrb[0].mxu0
      %9355 = vmatprep.mubr.bf16.mxu0 0
      %9356 = vmatmul.mubr.bf16.gmra.mrb[0].mxu0 %v3843
      %v9357 = vpop.f32.mrb[0].mxu0
      %v9358 = vadd.f32 0.0, %v9357
      %v9359 = vpop.f32.mrb[0].mxu0
      %v9360 = vpop.f32.mrb[0].mxu0
      %v9361 = vadd.f32 0.0, %v9360
      %v9362 = vpop.f32.mrb[0].mxu0
      %9363 = vmatprep.mubr.bf16.mxu0 0
      %9364 = vmatmul.mubr.bf16.gmra.mrb[0].mxu0 %v3846
      %v9365 = vpop.f32.mrb[0].mxu0
      %v9366 = vadd.f32 0.0, %v9365
      %v9367 = vpop.f32.mrb[0].mxu0
      %v9368 = vpop.f32.mrb[0].mxu0
      %v9369 = vadd.f32 0.0, %v9368
      %v9370 = vpop.f32.mrb[0].mxu0
      %9371 = vmatprep.mubr.bf16.mxu0 0
      %9372 = vmatmul.mubr.bf16.gmra.mrb[0].mxu0 %v3849
      %v9373 = vpop.f32.mrb[0].mxu0
      %v9374 = vadd.f32 0.0, %v9373
      %v9375 = vpop.f32.mrb[0].mxu0
      %v9376 = vpop.f32.mrb[0].mxu0
      %v9377 = vadd.f32 0.0, %v9376
      %v9378 = vpop.f32.mrb[0].mxu0
      %9379 = vmatprep.mubr.bf16.mxu0 0
      %9380 = vmatmul.mubr.bf16.gmra.mrb[0].mxu0 %v3852
      %v9381 = vpop.f32.mrb[0].mxu0
      %v9382 = vadd.f32 0.0, %v9381
      %v9383 = vpop.f32.mrb[0].mxu0
      %v9384 = vpop.f32.mrb[0].mxu0
      %v9385 = vadd.f32 0.0, %v9384
      %v9386 = vpop.f32.mrb[0].mxu0
      %9387 = vmatprep.mubr.bf16.mxu0 0
      %9388 = vmatmul.mubr.bf16.gmra.mrb[0].mxu0 %v3855
      %v9389 = vpop.f32.mrb[0].mxu0
      %v9390 = vadd.f32 0.0, %v9389
      %v9391 = vpop.f32.mrb[0].mxu0
      %v9392 = vpop.f32.mrb[0].mxu0
      %v9393 = vadd.f32 0.0, %v9392
      %v9394 = vpop.f32.mrb[0].mxu0
      %9395 = vmatprep.mubr.bf16.mxu0 0
      %9396 = vmatmul.mubr.bf16.gmra.mrb[0].mxu0 %v3858
      %v9397 = vpop.f32.mrb[0].mxu0
      %v9398 = vadd.f32 0.0, %v9397
      %v9399 = vpop.f32.mrb[0].mxu0
      %v9400 = vpop.f32.mrb[0].mxu0
      %v9401 = vadd.f32 0.0, %v9400
      %v9402 = vpop.f32.mrb[0].mxu0
      %9403 = vmatprep.mubr.bf16.mxu0 0
      %9404 = vmatmul.mubr.bf16.gmra.mrb[0].mxu0 %v3861
      %v9405 = vpop.f32.mrb[0].mxu0
      %v9406 = vadd.f32 0.0, %v9405
      %v9407 = vpop.f32.mrb[0].mxu0
      %v9408 = vpop.f32.mrb[0].mxu0
      %v9409 = vadd.f32 0.0, %v9408
      %v9410 = vpop.f32.mrb[0].mxu0
      %9411 = vmatprep.mubr.bf16.mxu0 0
      %9412 = vmatmul.mubr.bf16.gmra.mrb[0].mxu0 %v3864
      %v9413 = vpop.f32.mrb[0].mxu0
      %v9414 = vadd.f32 0.0, %v9413
      %v9415 = vpop.f32.mrb[0].mxu0
      %v9416 = vpop.f32.mrb[0].mxu0
      %v9417 = vadd.f32 0.0, %v9416
      %v9418 = vpop.f32.mrb[0].mxu0
      %9419 = vmatprep.mubr.bf16.mxu0 0
      %9420 = vmatmul.mubr.bf16.gmra.mrb[0].mxu0 %v3867
      %v9421 = vpop.f32.mrb[0].mxu0
      %v9422 = vadd.f32 0.0, %v9421
      %v9423 = vpop.f32.mrb[0].mxu0
      %v9424 = vpop.f32.mrb[0].mxu0
      %v9425 = vadd.f32 0.0, %v9424
      %v9426 = vpop.f32.mrb[0].mxu0
      %9427 = vmatprep.mubr.bf16.mxu0 0
      %9428 = vmatmul.mubr.bf16.gmra.mrb[0].mxu0 %v3870
      %v9429 = vpop.f32.mrb[0].mxu0
      %v9430 = vadd.f32 0.0, %v9429
      %v9431 = vpop.f32.mrb[0].mxu0
      %v9432 = vpop.f32.mrb[0].mxu0
      %v9433 = vadd.f32 0.0, %v9432
      %v9434 = vpop.f32.mrb[0].mxu0
      %9435 = vmatprep.mubr.bf16.mxu0 0
      %9436 = vmatmul.mubr.bf16.gmra.mrb[0].mxu0 %v3873
      %v9437 = vpop.f32.mrb[0].mxu0
      %v9438 = vadd.f32 0.0, %v9437
      %v9439 = vpop.f32.mrb[0].mxu0
      %v9440 = vpop.f32.mrb[0].mxu0
      %v9441 = vadd.f32 0.0, %v9440
      %v9442 = vpop.f32.mrb[0].mxu0
      %9443 = vmatprep.mubr.bf16.mxu0 0
      %9444 = vmatmul.mubr.bf16.gmra.mrb[0].mxu0 %v3876
      %v9445 = vpop.f32.mrb[0].mxu0
      %v9446 = vadd.f32 0.0, %v9445
      %v9447 = vpop.f32.mrb[0].mxu0
      %v9448 = vpop.f32.mrb[0].mxu0
      %v9449 = vadd.f32 0.0, %v9448
      %v9450 = vpop.f32.mrb[0].mxu0
      %9451 = vmatprep.mubr.bf16.mxu0 0
      %9452 = vmatmul.mubr.bf16.gmra.mrb[0].mxu0 %v3879
      %v9453 = vpop.f32.mrb[0].mxu0
      %v9454 = vadd.f32 0.0, %v9453
      %v9455 = vpop.f32.mrb[0].mxu0
      %v9456 = vpop.f32.mrb[0].mxu0
      %v9457 = vadd.f32 0.0, %v9456
      %v9458 = vpop.f32.mrb[0].mxu0
      %9459 = vmatprep.mubr.bf16.mxu0 0
      %9460 = vmatmul.mubr.bf16.gmra.mrb[0].mxu0 %v3882
      %v9461 = vpop.f32.mrb[0].mxu0
      %v9462 = vadd.f32 0.0, %v9461
      %v9463 = vpop.f32.mrb[0].mxu0
      %v9464 = vpop.f32.mrb[0].mxu0
      %v9465 = vadd.f32 0.0, %v9464
      %v9466 = vpop.f32.mrb[0].mxu0
      %9467 = vmatprep.mubr.bf16.mxu0 0
      %9468 = vmatmul.mubr.bf16.gmra.mrb[0].mxu0 %v3885
      %v9469 = vpop.f32.mrb[0].mxu0
      %v9470 = vadd.f32 0.0, %v9469
      %v9471 = vpop.f32.mrb[0].mxu0
      %v9472 = vpop.f32.mrb[0].mxu0
      %v9473 = vadd.f32 0.0, %v9472
      %v9474 = vpop.f32.mrb[0].mxu0
      %9475 = vmatprep.mubr.bf16.mxu0 0
      %9476 = vmatmul.mubr.bf16.gmra.mrb[0].mxu0 %v3888
      %v9477 = vpop.f32.mrb[0].mxu0
      %v9478 = vadd.f32 0.0, %v9477
      %v9479 = vpop.f32.mrb[0].mxu0
      %v9480 = vpop.f32.mrb[0].mxu0
      %v9481 = vadd.f32 0.0, %v9480
      %v9482 = vpop.f32.mrb[0].mxu0
      %9483 = vmatprep.mubr.bf16.mxu0 0
      %9484 = vmatmul.mubr.bf16.gmra.mrb[0].mxu0 %v3891
      %v9485 = vpop.f32.mrb[0].mxu0
      %v9486 = vadd.f32 0.0, %v9485
      %v9487 = vpop.f32.mrb[0].mxu0
      %v9488 = vpop.f32.mrb[0].mxu0
      %v9489 = vadd.f32 0.0, %v9488
      %v9490 = vpop.f32.mrb[0].mxu0
      %9491 = vmatprep.mubr.bf16.mxu0 0
      %9492 = vmatmul.mubr.bf16.gmra.mrb[0].mxu0 %v3894
      %v9493 = vpop.f32.mrb[0].mxu0
      %v9494 = vadd.f32 0.0, %v9493
      %v9495 = vpop.f32.mrb[0].mxu0
      %v9496 = vpop.f32.mrb[0].mxu0
      %v9497 = vadd.f32 0.0, %v9496
      %v9498 = vpop.f32.mrb[0].mxu0
      %9499 = vmatprep.mubr.bf16.mxu0 0
      %9500 = vmatmul.mubr.bf16.gmra.mrb[0].mxu0 %v3897
      %v9501 = vpop.f32.mrb[0].mxu0
      %v9502 = vadd.f32 0.0, %v9501
      %v9503 = vpop.f32.mrb[0].mxu0
      %v9504 = vpop.f32.mrb[0].mxu0
      %v9505 = vadd.f32 0.0, %v9504
      %v9506 = vpop.f32.mrb[0].mxu0
      %9507 = vmatprep.mubr.bf16.mxu0 0
      %9508 = vmatmul.mubr.bf16.gmra.mrb[0].mxu0 %v3900
      %v9509 = vpop.f32.mrb[0].mxu0
      %v9510 = vadd.f32 0.0, %v9509
      %v9511 = vpop.f32.mrb[0].mxu0
      %v9512 = vpop.f32.mrb[0].mxu0
      %v9513 = vadd.f32 0.0, %v9512
      %v9514 = vpop.f32.mrb[0].mxu0
      %9515 = vmatprep.mubr.bf16.mxu0 0
      %9516 = vmatmul.mubr.bf16.gmra.mrb[0].mxu0 %v3903
      %v9517 = vpop.f32.mrb[0].mxu0
      %v9518 = vadd.f32 0.0, %v9517
      %v9519 = vpop.f32.mrb[0].mxu0
      %v9520 = vpop.f32.mrb[0].mxu0
      %v9521 = vadd.f32 0.0, %v9520
      %v9522 = vpop.f32.mrb[0].mxu0
      %9523 = vmatprep.mubr.bf16.mxu0 0
      %9524 = vmatmul.mubr.bf16.gmra.mrb[0].mxu0 %v3906
      %v9525 = vpop.f32.mrb[0].mxu0
      %v9526 = vadd.f32 0.0, %v9525
      %v9527 = vpop.f32.mrb[0].mxu0
      %v9528 = vpop.f32.mrb[0].mxu0
      %v9529 = vadd.f32 0.0, %v9528
      %v9530 = vpop.f32.mrb[0].mxu0
      %9531 = vmatprep.mubr.bf16.mxu0 0
      %9532 = vmatmul.mubr.bf16.gmra.mrb[0].mxu0 %v3909
      %v9533 = vpop.f32.mrb[0].mxu0
      %v9534 = vadd.f32 0.0, %v9533
      %v9535 = vpop.f32.mrb[0].mxu0
      %v9536 = vpop.f32.mrb[0].mxu0
      %v9537 = vadd.f32 0.0, %v9536
      %v9538 = vpop.f32.mrb[0].mxu0
      %9539 = vmatprep.mubr.bf16.mxu0 0
      %9540 = vmatmul.mubr.bf16.gmra.mrb[0].mxu0 %v3912
      %v9541 = vpop.f32.mrb[0].mxu0
      %v9542 = vadd.f32 0.0, %v9541
      %v9543 = vpop.f32.mrb[0].mxu0
      %v9544 = vpop.f32.mrb[0].mxu0
      %v9545 = vadd.f32 0.0, %v9544
      %v9546 = vpop.f32.mrb[0].mxu0
      %9547 = vmatprep.mubr.bf16.mxu0 0
      %9548 = vmatmul.mubr.bf16.gmra.mrb[0].mxu0 %v3915
      %v9549 = vpop.f32.mrb[0].mxu0
      %v9550 = vadd.f32 0.0, %v9549
      %v9551 = vpop.f32.mrb[0].mxu0
      %v9552 = vpop.f32.mrb[0].mxu0
      %v9553 = vadd.f32 0.0, %v9552
      %v9554 = vpop.f32.mrb[0].mxu0
      %9555 = vmatprep.mubr.bf16.mxu0 0
      %9556 = vmatmul.mubr.bf16.gmra.mrb[0].mxu0 %v3918
      %v9557 = vpop.f32.mrb[0].mxu0
      %v9558 = vadd.f32 0.0, %v9557
      %v9559 = vpop.f32.mrb[0].mxu0
      %v9560 = vpop.f32.mrb[0].mxu0
      %v9561 = vadd.f32 0.0, %v9560
      %v9562 = vpop.f32.mrb[0].mxu0
      %9563 = vmatprep.mubr.bf16.mxu0 0
      %9564 = vmatmul.mubr.bf16.gmra.mrb[0].mxu0 %v3921
      %v9565 = vpop.f32.mrb[0].mxu0
      %v9566 = vadd.f32 0.0, %v9565
      %v9567 = vpop.f32.mrb[0].mxu0
      %v9568 = vpop.f32.mrb[0].mxu0
      %v9569 = vadd.f32 0.0, %v9568
      %v9570 = vpop.f32.mrb[0].mxu0
      %9571 = vmatprep.mubr.bf16.mxu0 0
      %9572 = vmatmul.mubr.bf16.gmra.mrb[0].mxu0 %v3924
      %v9573 = vpop.f32.mrb[0].mxu0
      %v9574 = vadd.f32 0.0, %v9573
      %v9575 = vpop.f32.mrb[0].mxu0
      %v9576 = vpop.f32.mrb[0].mxu0
      %v9577 = vadd.f32 0.0, %v9576
      %v9578 = vpop.f32.mrb[0].mxu0
      %9579 = vmatprep.mubr.bf16.mxu0 0
      %9580 = vmatmul.mubr.bf16.gmra.mrb[0].mxu0 %v3927
      %v9581 = vpop.f32.mrb[0].mxu0
      %v9582 = vadd.f32 0.0, %v9581
      %v9583 = vpop.f32.mrb[0].mxu0
      %v9584 = vpop.f32.mrb[0].mxu0
      %v9585 = vadd.f32 0.0, %v9584
      %v9586 = vpop.f32.mrb[0].mxu0
      %9587 = vmatprep.mubr.bf16.mxu0 0
      %9588 = vmatmul.mubr.bf16.gmra.mrb[0].mxu0 %v3930
      %v9589 = vpop.f32.mrb[0].mxu0
      %v9590 = vadd.f32 0.0, %v9589
      %v9591 = vpop.f32.mrb[0].mxu0
      %v9592 = vpop.f32.mrb[0].mxu0
      %v9593 = vadd.f32 0.0, %v9592
      %v9594 = vpop.f32.mrb[0].mxu0
      %9595 = vmatprep.mubr.bf16.mxu0 0
      %9596 = vmatmul.mubr.bf16.gmra.mrb[0].mxu0 %v3933
      %v9597 = vpop.f32.mrb[0].mxu0
      %v9598 = vadd.f32 0.0, %v9597
      %v9599 = vpop.f32.mrb[0].mxu0
      %v9600 = vpop.f32.mrb[0].mxu0
      %v9601 = vadd.f32 0.0, %v9600
      %v9602 = vpop.f32.mrb[0].mxu0
      %9603 = vmatprep.mubr.bf16.mxu0 0
      %9604 = vmatmul.mubr.bf16.gmra.mrb[0].mxu0 %v3936
      %v9605 = vpop.f32.mrb[0].mxu0
      %v9606 = vadd.f32 0.0, %v9605
      %v9607 = vpop.f32.mrb[0].mxu0
      %v9608 = vpop.f32.mrb[0].mxu0
      %v9609 = vadd.f32 0.0, %v9608
      %v9610 = vpop.f32.mrb[0].mxu0
      %9611 = vmatprep.mubr.bf16.mxu0 0
      %9612 = vmatmul.mubr.bf16.gmra.mrb[0].mxu0 %v3939
      %v9613 = vpop.f32.mrb[0].mxu0
      %v9614 = vadd.f32 0.0, %v9613
      %v9615 = vpop.f32.mrb[0].mxu0
      %v9616 = vpop.f32.mrb[0].mxu0
      %v9617 = vadd.f32 0.0, %v9616
      %v9618 = vpop.f32.mrb[0].mxu0
      %9619 = vmatprep.mubr.bf16.mxu0 0
      %9620 = vmatmul.mubr.bf16.gmra.mrb[0].mxu0 %v3942
      %v9621 = vpop.f32.mrb[0].mxu0
      %v9622 = vadd.f32 0.0, %v9621
      %v9623 = vpop.f32.mrb[0].mxu0
      %v9624 = vpop.f32.mrb[0].mxu0
      %v9625 = vadd.f32 0.0, %v9624
      %v9626 = vpop.f32.mrb[0].mxu0
      %9627 = vmatprep.mubr.bf16.mxu0 0
      %9628 = vmatmul.mubr.bf16.gmra.mrb[0].mxu0 %v3945
      %v9629 = vpop.f32.mrb[0].mxu0
      %v9630 = vadd.f32 0.0, %v9629
      %v9631 = vpop.f32.mrb[0].mxu0
      %v9632 = vpop.f32.mrb[0].mxu0
      %v9633 = vadd.f32 0.0, %v9632
      %v9634 = vpop.f32.mrb[0].mxu0
      %9635 = vmatprep.mubr.bf16.mxu0 0
      %9636 = vmatmul.mubr.bf16.gmra.mrb[0].mxu0 %v3948
      %v9637 = vpop.f32.mrb[0].mxu0
      %v9638 = vadd.f32 0.0, %v9637
      %v9639 = vpop.f32.mrb[0].mxu0
      %v9640 = vpop.f32.mrb[0].mxu0
      %v9641 = vadd.f32 0.0, %v9640
      %v9642 = vpop.f32.mrb[0].mxu0
      %9643 = vmatprep.mubr.bf16.mxu0 0
      %9644 = vmatmul.mubr.bf16.gmra.mrb[0].mxu0 %v3951
      %v9645 = vpop.f32.mrb[0].mxu0
      %v9646 = vadd.f32 0.0, %v9645
      %v9647 = vpop.f32.mrb[0].mxu0
      %v9648 = vpop.f32.mrb[0].mxu0
      %v9649 = vadd.f32 0.0, %v9648
      %v9650 = vpop.f32.mrb[0].mxu0
      %9651 = vmatprep.mubr.bf16.mxu0 0
      %9652 = vmatmul.mubr.bf16.gmra.mrb[0].mxu0 %v3954
      %v9653 = vpop.f32.mrb[0].mxu0
      %v9654 = vadd.f32 0.0, %v9653
      %v9655 = vpop.f32.mrb[0].mxu0
      %v9656 = vpop.f32.mrb[0].mxu0
      %v9657 = vadd.f32 0.0, %v9656
      %v9658 = vpop.f32.mrb[0].mxu0
      %9659 = vmatprep.mubr.bf16.mxu0 0
      %9660 = vmatmul.mubr.bf16.gmra.mrb[0].mxu0 %v3957
      %v9661 = vpop.f32.mrb[0].mxu0
      %v9662 = vadd.f32 0.0, %v9661
      %v9663 = vpop.f32.mrb[0].mxu0
      %v9664 = vpop.f32.mrb[0].mxu0
      %v9665 = vadd.f32 0.0, %v9664
      %v9666 = vpop.f32.mrb[0].mxu0
      %9667 = vmatprep.mubr.bf16.mxu0 0
      %9668 = vmatmul.mubr.bf16.gmra.mrb[0].mxu0 %v3960
      %v9669 = vpop.f32.mrb[0].mxu0
      %v9670 = vadd.f32 0.0, %v9669
      %v9671 = vpop.f32.mrb[0].mxu0
      %v9672 = vpop.f32.mrb[0].mxu0
      %v9673 = vadd.f32 0.0, %v9672
      %v9674 = vpop.f32.mrb[0].mxu0
      %9675 = vmatprep.mubr.bf16.mxu0 0
      %9676 = vmatmul.mubr.bf16.gmra.mrb[0].mxu0 %v3963
      %v9677 = vpop.f32.mrb[0].mxu0
      %v9678 = vadd.f32 0.0, %v9677
      %v9679 = vpop.f32.mrb[0].mxu0
      %v9680 = vpop.f32.mrb[0].mxu0
      %v9681 = vadd.f32 0.0, %v9680
      %v9682 = vpop.f32.mrb[0].mxu0
      %9683 = vmatprep.mubr.bf16.mxu0 0
      %9684 = vmatmul.mubr.bf16.gmra.mrb[0].mxu0 %v3966
      %v9685 = vpop.f32.mrb[0].mxu0
      %v9686 = vadd.f32 0.0, %v9685
      %v9687 = vpop.f32.mrb[0].mxu0
      %v9688 = vpop.f32.mrb[0].mxu0
      %v9689 = vadd.f32 0.0, %v9688
      %v9690 = vpop.f32.mrb[0].mxu0
      %9691 = vmatprep.mubr.bf16.mxu0 0
      %9692 = vmatmul.mubr.bf16.gmra.mrb[0].mxu0 %v3969
      %v9693 = vpop.f32.mrb[0].mxu0
      %v9694 = vadd.f32 0.0, %v9693
      %v9695 = vpop.f32.mrb[0].mxu0
      %v9696 = vpop.f32.mrb[0].mxu0
      %v9697 = vadd.f32 0.0, %v9696
      %v9698 = vpop.f32.mrb[0].mxu0
      %9699 = vmatprep.mubr.bf16.mxu0 0
      %9700 = vmatmul.mubr.bf16.gmra.mrb[0].mxu0 %v3972
      %v9701 = vpop.f32.mrb[0].mxu0
      %v9702 = vadd.f32 0.0, %v9701
      %v9703 = vpop.f32.mrb[0].mxu0
      %v9704 = vpop.f32.mrb[0].mxu0
      %v9705 = vadd.f32 0.0, %v9704
      %v9706 = vpop.f32.mrb[0].mxu0
      %9707 = vmatprep.mubr.bf16.mxu0 0
      %9708 = vmatmul.mubr.bf16.gmra.mrb[0].mxu0 %v3975
      %v9709 = vpop.f32.mrb[0].mxu0
      %v9710 = vadd.f32 0.0, %v9709
      %v9711 = vpop.f32.mrb[0].mxu0
      %v9712 = vpop.f32.mrb[0].mxu0
      %v9713 = vadd.f32 0.0, %v9712
      %v9714 = vpop.f32.mrb[0].mxu0
      %9715 = vmatprep.mubr.bf16.mxu0 0
      %9716 = vmatmul.mubr.bf16.gmra.mrb[0].mxu0 %v3978
      %v9717 = vpop.f32.mrb[0].mxu0
      %v9718 = vadd.f32 0.0, %v9717
      %v9719 = vpop.f32.mrb[0].mxu0
      %v9720 = vpop.f32.mrb[0].mxu0
      %v9721 = vadd.f32 0.0, %v9720
      %v9722 = vpop.f32.mrb[0].mxu0
      %9723 = vmatprep.mubr.bf16.mxu0 0
      %9724 = vmatmul.mubr.bf16.gmra.mrb[0].mxu0 %v3981
      %v9725 = vpop.f32.mrb[0].mxu0
      %v9726 = vadd.f32 0.0, %v9725
      %v9727 = vpop.f32.mrb[0].mxu0
      %v9728 = vpop.f32.mrb[0].mxu0
      %v9729 = vadd.f32 0.0, %v9728
      %v9730 = vpop.f32.mrb[0].mxu0
      %9731 = vmatprep.mubr.bf16.mxu0 0
      %9732 = vmatmul.mubr.bf16.gmra.mrb[0].mxu0 %v3984
      %v9733 = vpop.f32.mrb[0].mxu0
      %v9734 = vadd.f32 0.0, %v9733
      %v9735 = vpop.f32.mrb[0].mxu0
      %v9736 = vpop.f32.mrb[0].mxu0
      %v9737 = vadd.f32 0.0, %v9736
      %v9738 = vpop.f32.mrb[0].mxu0
      %9739 = vmatprep.mubr.bf16.mxu0 0
      %9740 = vmatmul.mubr.bf16.gmra.mrb[0].mxu0 %v8721
      %v9741 = vpop.f32.mrb[0].mxu0
      %v9742 = vadd.f32 0.0, %v9741
      %v9743 = vpop.f32.mrb[0].mxu0
      %v9744 = vpop.f32.mrb[0].mxu0
      %v9745 = vadd.f32 0.0, %v9744
      %v9746 = vpop.f32.mrb[0].mxu0
      %9747 = vmatprep.mubr.bf16.mxu0 0
      %9748 = vmatmul.mubr.bf16.gmra.mrb[0].mxu0 %v8724
      %v9749 = vpop.f32.mrb[0].mxu0
      %v9750 = vadd.f32 0.0, %v9749
      %v9751 = vpop.f32.mrb[0].mxu0
      %v9752 = vpop.f32.mrb[0].mxu0
      %v9753 = vadd.f32 0.0, %v9752
      %v9754 = vpop.f32.mrb[0].mxu0
      %9755 = vmatprep.mubr.bf16.mxu0 0
      %9756 = vmatmul.mubr.bf16.gmra.mrb[0].mxu0 %v8727
      %v9757 = vpop.f32.mrb[0].mxu0
      %v9758 = vadd.f32 0.0, %v9757
      %v9759 = vpop.f32.mrb[0].mxu0
      %v9760 = vpop.f32.mrb[0].mxu0
      %v9761 = vadd.f32 0.0, %v9760
      %v9762 = vpop.f32.mrb[0].mxu0
      %9763 = vmatprep.mubr.bf16.mxu0 0
      %9764 = vmatmul.mubr.bf16.gmra.mrb[0].mxu0 %v8730
      %v9765 = vpop.f32.mrb[0].mxu0
      %v9766 = vadd.f32 0.0, %v9765
      %v9767 = vpop.f32.mrb[0].mxu0
      %v9768 = vpop.f32.mrb[0].mxu0
      %v9769 = vadd.f32 0.0, %v9768
      %v9770 = vpop.f32.mrb[0].mxu0
      %9771 = vmatprep.mubr.bf16.mxu0 0
      %9772 = vmatmul.mubr.bf16.gmra.mrb[0].mxu0 %v8733
      %v9773 = vpop.f32.mrb[0].mxu0
      %v9774 = vadd.f32 0.0, %v9773
      %v9775 = vpop.f32.mrb[0].mxu0
      %v9776 = vpop.f32.mrb[0].mxu0
      %v9777 = vadd.f32 0.0, %v9776
      %v9778 = vpop.f32.mrb[0].mxu0
      %9779 = vmatprep.mubr.bf16.mxu0 0
      %9780 = vmatmul.mubr.bf16.gmra.mrb[0].mxu0 %v8736
      %v9781 = vpop.f32.mrb[0].mxu0
      %v9782 = vadd.f32 0.0, %v9781
      %v9783 = vpop.f32.mrb[0].mxu0
      %v9784 = vpop.f32.mrb[0].mxu0
      %v9785 = vadd.f32 0.0, %v9784
      %v9786 = vpop.f32.mrb[0].mxu0
      %9787 = vmatprep.mubr.bf16.mxu0 0
      %9788 = vmatmul.mubr.bf16.gmra.mrb[0].mxu0 %v8739
      %v9789 = vpop.f32.mrb[0].mxu0
      %v9790 = vadd.f32 0.0, %v9789
      %v9791 = vpop.f32.mrb[0].mxu0
      %v9792 = vpop.f32.mrb[0].mxu0
      %v9793 = vadd.f32 0.0, %v9792
      %v9794 = vpop.f32.mrb[0].mxu0
      %9795 = vmatprep.mubr.bf16.mxu0 0
      %9796 = vmatmul.mubr.bf16.gmra.mrb[0].mxu0 %v8742
      %v9797 = vpop.f32.mrb[0].mxu0
      %v9798 = vadd.f32 0.0, %v9797
      %v9799 = vpop.f32.mrb[0].mxu0
      %v9800 = vpop.f32.mrb[0].mxu0
      %v9801 = vadd.f32 0.0, %v9800
      %v9802 = vpop.f32.mrb[0].mxu0
      %9803 = vdwg.mxu0
      %v9804 = vadd.f32 %v8268, %v8782
      %v9805 = vadd.f32 %v8269, %v8785
      %v9806 = vadd.f32 %v8270, %v8790
      %v9807 = vadd.f32 %v8271, %v8793
      %v9808 = vadd.f32 %v8272, %v8798
      %v9809 = vadd.f32 %v8273, %v8801
      %v9810 = vadd.f32 %v8274, %v8806
      %v9811 = vadd.f32 %v8275, %v8809
      %v9812 = vadd.f32 %v8276, %v8814
      %v9813 = vadd.f32 %v8277, %v8817
      %v9814 = vadd.f32 %v8278, %v8822
      %v9815 = vadd.f32 %v8279, %v8825
      %v9816 = vadd.f32 %v8280, %v8830
      %v9817 = vadd.f32 %v8281, %v8833
      %v9818 = vadd.f32 %v8282, %v8838
      %v9819 = vadd.f32 %v8283, %v8841
      %v9820 = vadd.f32 %v8284, %v8846
      %v9821 = vadd.f32 %v8285, %v8849
      %v9822 = vadd.f32 %v8286, %v8854
      %v9823 = vadd.f32 %v8287, %v8857
      %v9824 = vadd.f32 %v8288, %v8862
      %v9825 = vadd.f32 %v8289, %v8865
      %v9826 = vadd.f32 %v8290, %v8870
      %v9827 = vadd.f32 %v8291, %v8873
      %v9828 = vadd.f32 %v8292, %v8878
      %v9829 = vadd.f32 %v8293, %v8881
      %v9830 = vadd.f32 %v8294, %v8886
      %v9831 = vadd.f32 %v8295, %v8889
      %v9832 = vadd.f32 %v8296, %v8894
      %v9833 = vadd.f32 %v8297, %v8897
      %v9834 = vadd.f32 %v8298, %v8902
      %v9835 = vadd.f32 %v8299, %v8905
      %v9836 = vadd.f32 %v8300, %v8910
      %v9837 = vadd.f32 %v8301, %v8913
      %v9838 = vadd.f32 %v8302, %v8918
      %v9839 = vadd.f32 %v8303, %v8921
      %v9840 = vadd.f32 %v8304, %v8926
      %v9841 = vadd.f32 %v8305, %v8929
      %v9842 = vadd.f32 %v8306, %v8934
      %v9843 = vadd.f32 %v8307, %v8937
      %v9844 = vadd.f32 %v8308, %v8942
      %v9845 = vadd.f32 %v8309, %v8945
      %v9846 = vadd.f32 %v8310, %v8950
      %v9847 = vadd.f32 %v8311, %v8953
      %v9848 = vadd.f32 %v8312, %v8958
      %v9849 = vadd.f32 %v8313, %v8961
      %v9850 = vadd.f32 %v8314, %v8966
      %v9851 = vadd.f32 %v8315, %v8969
      %v9852 = vadd.f32 %v8316, %v8974
      %v9853 = vadd.f32 %v8317, %v8977
      %v9854 = vadd.f32 %v8318, %v8982
      %v9855 = vadd.f32 %v8319, %v8985
      %v9856 = vadd.f32 %v8320, %v8990
      %v9857 = vadd.f32 %v8321, %v8993
      %v9858 = vadd.f32 %v8322, %v8998
      %v9859 = vadd.f32 %v8323, %v9001
      %v9860 = vadd.f32 %v8324, %v9006
      %v9861 = vadd.f32 %v8325, %v9009
      %v9862 = vadd.f32 %v8326, %v9014
      %v9863 = vadd.f32 %v8327, %v9017
      %v9864 = vadd.f32 %v8328, %v9022
      %v9865 = vadd.f32 %v8329, %v9025
      %v9866 = vadd.f32 %v8330, %v9030
      %v9867 = vadd.f32 %v8331, %v9033
      %v9868 = vadd.f32 %v8332, %v9038
      %v9869 = vadd.f32 %v8333, %v9041
      %v9870 = vadd.f32 %v8334, %v9046
      %v9871 = vadd.f32 %v8335, %v9049
      %v9872 = vadd.f32 %v8336, %v9054
      %v9873 = vadd.f32 %v8337, %v9057
      %v9874 = vadd.f32 %v8338, %v9062
      %v9875 = vadd.f32 %v8339, %v9065
      %v9876 = vadd.f32 %v8340, %v9070
      %v9877 = vadd.f32 %v8341, %v9073
      %v9878 = vadd.f32 %v8342, %v9078
      %v9879 = vadd.f32 %v8343, %v9081
      %v9880 = vadd.f32 %v8344, %v9086
      %v9881 = vadd.f32 %v8345, %v9089
      %v9882 = vadd.f32 %v8346, %v9094
      %v9883 = vadd.f32 %v8347, %v9097
      %v9884 = vadd.f32 %v8348, %v9102
      %v9885 = vadd.f32 %v8349, %v9105
      %v9886 = vadd.f32 %v8350, %v9110
      %v9887 = vadd.f32 %v8351, %v9113
      %v9888 = vadd.f32 %v8352, %v9118
      %v9889 = vadd.f32 %v8353, %v9121
      %v9890 = vadd.f32 %v8354, %v9126
      %v9891 = vadd.f32 %v8355, %v9129
      %v9892 = vadd.f32 %v8356, %v9134
      %v9893 = vadd.f32 %v8357, %v9137
      %v9894 = vadd.f32 %v8358, %v9142
      %v9895 = vadd.f32 %v8359, %v9145
      %v9896 = vadd.f32 %v8360, %v9150
      %v9897 = vadd.f32 %v8361, %v9153
      %v9898 = vadd.f32 %v8362, %v9158
      %v9899 = vadd.f32 %v8363, %v9161
      %v9900 = vadd.f32 %v8364, %v9166
      %v9901 = vadd.f32 %v8365, %v9169
      %v9902 = vadd.f32 %v8366, %v9174
      %v9903 = vadd.f32 %v8367, %v9177
      %v9904 = vadd.f32 %v8368, %v9182
      %v9905 = vadd.f32 %v8369, %v9185
      %v9906 = vadd.f32 %v8370, %v9190
      %v9907 = vadd.f32 %v8371, %v9193
      %v9908 = vadd.f32 %v8372, %v9198
      %v9909 = vadd.f32 %v8373, %v9201
      %v9910 = vadd.f32 %v8374, %v9206
      %v9911 = vadd.f32 %v8375, %v9209
      %v9912 = vadd.f32 %v8376, %v9214
      %v9913 = vadd.f32 %v8377, %v9217
      %v9914 = vadd.f32 %v8378, %v9222
      %v9915 = vadd.f32 %v8379, %v9225
      %v9916 = vadd.f32 %v8380, %v9230
      %v9917 = vadd.f32 %v8381, %v9233
      %v9918 = vadd.f32 %v8382, %v9238
      %v9919 = vadd.f32 %v8383, %v9241
      %v9920 = vadd.f32 %v8384, %v9246
      %v9921 = vadd.f32 %v8385, %v9249
      %v9922 = vadd.f32 %v8386, %v9254
      %v9923 = vadd.f32 %v8387, %v9257
      %v9924 = vadd.f32 %v8388, %v9262
      %v9925 = vadd.f32 %v8389, %v9265
      %v9926 = vadd.f32 %v8390, %v9270
      %v9927 = vadd.f32 %v8391, %v9273
      %v9928 = vadd.f32 %v8392, %v9278
      %v9929 = vadd.f32 %v8393, %v9281
      %v9930 = vadd.f32 %v8394, %v9286
      %v9931 = vadd.f32 %v8395, %v9289
      %v9932 = vadd.f32 %v8396, %v9294
      %v9933 = vadd.f32 %v8397, %v9297
      %v9934 = vadd.f32 %v8398, %v9302
      %v9935 = vadd.f32 %v8399, %v9305
      %v9936 = vadd.f32 %v8400, %v9310
      %v9937 = vadd.f32 %v8401, %v9313
      %v9938 = vadd.f32 %v8402, %v9318
      %v9939 = vadd.f32 %v8403, %v9321
      %v9940 = vadd.f32 %v8404, %v9326
      %v9941 = vadd.f32 %v8405, %v9329
      %v9942 = vadd.f32 %v8406, %v9334
      %v9943 = vadd.f32 %v8407, %v9337
      %v9944 = vadd.f32 %v8408, %v9342
      %v9945 = vadd.f32 %v8409, %v9345
      %v9946 = vadd.f32 %v8410, %v9350
      %v9947 = vadd.f32 %v8411, %v9353
      %v9948 = vadd.f32 %v8412, %v9358
      %v9949 = vadd.f32 %v8413, %v9361
      %v9950 = vadd.f32 %v8414, %v9366
      %v9951 = vadd.f32 %v8415, %v9369
      %v9952 = vadd.f32 %v8416, %v9374
      %v9953 = vadd.f32 %v8417, %v9377
      %v9954 = vadd.f32 %v8418, %v9382
      %v9955 = vadd.f32 %v8419, %v9385
      %v9956 = vadd.f32 %v8420, %v9390
      %v9957 = vadd.f32 %v8421, %v9393
      %v9958 = vadd.f32 %v8422, %v9398
      %v9959 = vadd.f32 %v8423, %v9401
      %v9960 = vadd.f32 %v8424, %v9406
      %v9961 = vadd.f32 %v8425, %v9409
      %v9962 = vadd.f32 %v8426, %v9414
      %v9963 = vadd.f32 %v8427, %v9417
      %v9964 = vadd.f32 %v8428, %v9422
      %v9965 = vadd.f32 %v8429, %v9425
      %v9966 = vadd.f32 %v8430, %v9430
      %v9967 = vadd.f32 %v8431, %v9433
      %v9968 = vadd.f32 %v8432, %v9438
      %v9969 = vadd.f32 %v8433, %v9441
      %v9970 = vadd.f32 %v8434, %v9446
      %v9971 = vadd.f32 %v8435, %v9449
      %v9972 = vadd.f32 %v8436, %v9454
      %v9973 = vadd.f32 %v8437, %v9457
      %v9974 = vadd.f32 %v8438, %v9462
      %v9975 = vadd.f32 %v8439, %v9465
      %v9976 = vadd.f32 %v8440, %v9470
      %v9977 = vadd.f32 %v8441, %v9473
      %v9978 = vadd.f32 %v8442, %v9478
      %v9979 = vadd.f32 %v8443, %v9481
      %v9980 = vadd.f32 %v8444, %v9486
      %v9981 = vadd.f32 %v8445, %v9489
      %v9982 = vadd.f32 %v8446, %v9494
      %v9983 = vadd.f32 %v8447, %v9497
      %v9984 = vadd.f32 %v8448, %v9502
      %v9985 = vadd.f32 %v8449, %v9505
      %v9986 = vadd.f32 %v8450, %v9510
      %v9987 = vadd.f32 %v8451, %v9513
      %v9988 = vadd.f32 %v8452, %v9518
      %v9989 = vadd.f32 %v8453, %v9521
      %v9990 = vadd.f32 %v8454, %v9526
      %v9991 = vadd.f32 %v8455, %v9529
      %v9992 = vadd.f32 %v8456, %v9534
      %v9993 = vadd.f32 %v8457, %v9537
      %v9994 = vadd.f32 %v8458, %v9542
      %v9995 = vadd.f32 %v8459, %v9545
      %v9996 = vadd.f32 %v8460, %v9550
      %v9997 = vadd.f32 %v8461, %v9553
      %v9998 = vadd.f32 %v8462, %v9558
      %v9999 = vadd.f32 %v8463, %v9561
      %v10000 = vadd.f32 %v8464, %v9566
      %v10001 = vadd.f32 %v8465, %v9569
      %v10002 = vadd.f32 %v8466, %v9574
      %v10003 = vadd.f32 %v8467, %v9577
      %v10004 = vadd.f32 %v8468, %v9582
      %v10005 = vadd.f32 %v8469, %v9585
      %v10006 = vadd.f32 %v8470, %v9590
      %v10007 = vadd.f32 %v8471, %v9593
      %v10008 = vadd.f32 %v8472, %v9598
      %v10009 = vadd.f32 %v8473, %v9601
      %v10010 = vadd.f32 %v8474, %v9606
      %v10011 = vadd.f32 %v8475, %v9609
      %v10012 = vadd.f32 %v8476, %v9614
      %v10013 = vadd.f32 %v8477, %v9617
      %v10014 = vadd.f32 %v8478, %v9622
      %v10015 = vadd.f32 %v8479, %v9625
      %v10016 = vadd.f32 %v8480, %v9630
      %v10017 = vadd.f32 %v8481, %v9633
      %v10018 = vadd.f32 %v8482, %v9638
      %v10019 = vadd.f32 %v8483, %v9641
      %v10020 = vadd.f32 %v8484, %v9646
      %v10021 = vadd.f32 %v8485, %v9649
      %v10022 = vadd.f32 %v8486, %v9654
      %v10023 = vadd.f32 %v8487, %v9657
      %v10024 = vadd.f32 %v8488, %v9662
      %v10025 = vadd.f32 %v8489, %v9665
      %v10026 = vadd.f32 %v8490, %v9670
      %v10027 = vadd.f32 %v8491, %v9673
      %v10028 = vadd.f32 %v8492, %v9678
      %v10029 = vadd.f32 %v8493, %v9681
      %v10030 = vadd.f32 %v8494, %v9686
      %v10031 = vadd.f32 %v8495, %v9689
      %v10032 = vadd.f32 %v8496, %v9694
      %v10033 = vadd.f32 %v8497, %v9697
      %v10034 = vadd.f32 %v8498, %v9702
      %v10035 = vadd.f32 %v8499, %v9705
      %v10036 = vadd.f32 %v8500, %v9710
      %v10037 = vadd.f32 %v8501, %v9713
      %v10038 = vadd.f32 %v8502, %v9718
      %v10039 = vadd.f32 %v8503, %v9721
      %v10040 = vadd.f32 %v8504, %v9726
      %v10041 = vadd.f32 %v8505, %v9729
      %v10042 = vadd.f32 %v8506, %v9734
      %v10043 = vadd.f32 %v8507, %v9737
      %v10044 = vadd.f32 %v8508, %v9742
      %v10045 = vadd.f32 %v8509, %v9745
      %v10046 = vadd.f32 %v8510, %v9750
      %v10047 = vadd.f32 %v8511, %v9753
      %v10048 = vadd.f32 %v8512, %v9758
      %v10049 = vadd.f32 %v8513, %v9761
      %v10050 = vadd.f32 %v8514, %v9766
      %v10051 = vadd.f32 %v8515, %v9769
      %v10052 = vadd.f32 %v8516, %v9774
      %v10053 = vadd.f32 %v8517, %v9777
      %v10054 = vadd.f32 %v8518, %v9782
      %v10055 = vadd.f32 %v8519, %v9785
      %v10056 = vadd.f32 %v8520, %v9790
      %v10057 = vadd.f32 %v8521, %v9793
      %v10058 = vadd.f32 %v8522, %v9798
      %v10059 = vadd.f32 %v8523, %v9801
      %v10060 = vld [vmem:[%s3] sm:$0x1]
      %v10062 = vlaneseq
      %v10063 = vshrl.u32 %v10062, 7
      %v10064 = vsub.s32 0, %v10063
      %v10065 = vrot.slane %v10060, %v10064
      %v10067 = vadd.f32 %v9804, %v10065
      %v10068 = vadd.f32 %v9805, %v10065
      %v10069 = vadd.f32 %v9806, %v10065
      %v10070 = vadd.f32 %v9807, %v10065
      %v10071 = vadd.f32 %v9808, %v10065
      %v10072 = vadd.f32 %v9809, %v10065
      %v10073 = vadd.f32 %v9810, %v10065
      %v10074 = vadd.f32 %v9811, %v10065
      %v10075 = vadd.f32 %v9812, %v10065
      %v10076 = vadd.f32 %v9813, %v10065
      %v10077 = vadd.f32 %v9814, %v10065
      %v10078 = vadd.f32 %v9815, %v10065
      %v10079 = vadd.f32 %v9816, %v10065
      %v10080 = vadd.f32 %v9817, %v10065
      %v10081 = vadd.f32 %v9818, %v10065
      %v10082 = vadd.f32 %v9819, %v10065
      %v10083 = vadd.f32 %v9820, %v10065
      %v10084 = vadd.f32 %v9821, %v10065
      %v10085 = vadd.f32 %v9822, %v10065
      %v10086 = vadd.f32 %v9823, %v10065
      %v10087 = vadd.f32 %v9824, %v10065
      %v10088 = vadd.f32 %v9825, %v10065
      %v10089 = vadd.f32 %v9826, %v10065
      %v10090 = vadd.f32 %v9827, %v10065
      %v10091 = vadd.f32 %v9828, %v10065
      %v10092 = vadd.f32 %v9829, %v10065
      %v10093 = vadd.f32 %v9830, %v10065
      %v10094 = vadd.f32 %v9831, %v10065
      %v10095 = vadd.f32 %v9832, %v10065
      %v10096 = vadd.f32 %v9833, %v10065
      %v10097 = vadd.f32 %v9834, %v10065
      %v10098 = vadd.f32 %v9835, %v10065
      %v10099 = vadd.f32 %v9836, %v10065
      %v10100 = vadd.f32 %v9837, %v10065
      %v10101 = vadd.f32 %v9838, %v10065
      %v10102 = vadd.f32 %v9839, %v10065
      %v10103 = vadd.f32 %v9840, %v10065
      %v10104 = vadd.f32 %v9841, %v10065
      %v10105 = vadd.f32 %v9842, %v10065
      %v10106 = vadd.f32 %v9843, %v10065
      %v10107 = vadd.f32 %v9844, %v10065
      %v10108 = vadd.f32 %v9845, %v10065
      %v10109 = vadd.f32 %v9846, %v10065
      %v10110 = vadd.f32 %v9847, %v10065
      %v10111 = vadd.f32 %v9848, %v10065
      %v10112 = vadd.f32 %v9849, %v10065
      %v10113 = vadd.f32 %v9850, %v10065
      %v10114 = vadd.f32 %v9851, %v10065
      %v10115 = vadd.f32 %v9852, %v10065
      %v10116 = vadd.f32 %v9853, %v10065
      %v10117 = vadd.f32 %v9854, %v10065
      %v10118 = vadd.f32 %v9855, %v10065
      %v10119 = vadd.f32 %v9856, %v10065
      %v10120 = vadd.f32 %v9857, %v10065
      %v10121 = vadd.f32 %v9858, %v10065
      %v10122 = vadd.f32 %v9859, %v10065
      %v10123 = vadd.f32 %v9860, %v10065
      %v10124 = vadd.f32 %v9861, %v10065
      %v10125 = vadd.f32 %v9862, %v10065
      %v10126 = vadd.f32 %v9863, %v10065
      %v10127 = vadd.f32 %v9864, %v10065
      %v10128 = vadd.f32 %v9865, %v10065
      %v10129 = vadd.f32 %v9866, %v10065
      %v10130 = vadd.f32 %v9867, %v10065
      %v10131 = vadd.f32 %v9868, %v10065
      %v10132 = vadd.f32 %v9869, %v10065
      %v10133 = vadd.f32 %v9870, %v10065
      %v10134 = vadd.f32 %v9871, %v10065
      %v10135 = vadd.f32 %v9872, %v10065
      %v10136 = vadd.f32 %v9873, %v10065
      %v10137 = vadd.f32 %v9874, %v10065
      %v10138 = vadd.f32 %v9875, %v10065
      %v10139 = vadd.f32 %v9876, %v10065
      %v10140 = vadd.f32 %v9877, %v10065
      %v10141 = vadd.f32 %v9878, %v10065
      %v10142 = vadd.f32 %v9879, %v10065
      %v10143 = vadd.f32 %v9880, %v10065
      %v10144 = vadd.f32 %v9881, %v10065
      %v10145 = vadd.f32 %v9882, %v10065
      %v10146 = vadd.f32 %v9883, %v10065
      %v10147 = vadd.f32 %v9884, %v10065
      %v10148 = vadd.f32 %v9885, %v10065
      %v10149 = vadd.f32 %v9886, %v10065
      %v10150 = vadd.f32 %v9887, %v10065
      %v10151 = vadd.f32 %v9888, %v10065
      %v10152 = vadd.f32 %v9889, %v10065
      %v10153 = vadd.f32 %v9890, %v10065
      %v10154 = vadd.f32 %v9891, %v10065
      %v10155 = vadd.f32 %v9892, %v10065
      %v10156 = vadd.f32 %v9893, %v10065
      %v10157 = vadd.f32 %v9894, %v10065
      %v10158 = vadd.f32 %v9895, %v10065
      %v10159 = vadd.f32 %v9896, %v10065
      %v10160 = vadd.f32 %v9897, %v10065
      %v10161 = vadd.f32 %v9898, %v10065
      %v10162 = vadd.f32 %v9899, %v10065
      %v10163 = vadd.f32 %v9900, %v10065
      %v10164 = vadd.f32 %v9901, %v10065
      %v10165 = vadd.f32 %v9902, %v10065
      %v10166 = vadd.f32 %v9903, %v10065
      %v10167 = vadd.f32 %v9904, %v10065
      %v10168 = vadd.f32 %v9905, %v10065
      %v10169 = vadd.f32 %v9906, %v10065
      %v10170 = vadd.f32 %v9907, %v10065
      %v10171 = vadd.f32 %v9908, %v10065
      %v10172 = vadd.f32 %v9909, %v10065
      %v10173 = vadd.f32 %v9910, %v10065
      %v10174 = vadd.f32 %v9911, %v10065
      %v10175 = vadd.f32 %v9912, %v10065
      %v10176 = vadd.f32 %v9913, %v10065
      %v10177 = vadd.f32 %v9914, %v10065
      %v10178 = vadd.f32 %v9915, %v10065
      %v10179 = vadd.f32 %v9916, %v10065
      %v10180 = vadd.f32 %v9917, %v10065
      %v10181 = vadd.f32 %v9918, %v10065
      %v10182 = vadd.f32 %v9919, %v10065
      %v10183 = vadd.f32 %v9920, %v10065
      %v10184 = vadd.f32 %v9921, %v10065
      %v10185 = vadd.f32 %v9922, %v10065
      %v10186 = vadd.f32 %v9923, %v10065
      %v10187 = vadd.f32 %v9924, %v10065
      %v10188 = vadd.f32 %v9925, %v10065
      %v10189 = vadd.f32 %v9926, %v10065
      %v10190 = vadd.f32 %v9927, %v10065
      %v10191 = vadd.f32 %v9928, %v10065
      %v10192 = vadd.f32 %v9929, %v10065
      %v10193 = vadd.f32 %v9930, %v10065
      %v10194 = vadd.f32 %v9931, %v10065
      %v10195 = vadd.f32 %v9932, %v10065
      %v10196 = vadd.f32 %v9933, %v10065
      %v10197 = vadd.f32 %v9934, %v10065
      %v10198 = vadd.f32 %v9935, %v10065
      %v10199 = vadd.f32 %v9936, %v10065
      %v10200 = vadd.f32 %v9937, %v10065
      %v10201 = vadd.f32 %v9938, %v10065
      %v10202 = vadd.f32 %v9939, %v10065
      %v10203 = vadd.f32 %v9940, %v10065
      %v10204 = vadd.f32 %v9941, %v10065
      %v10205 = vadd.f32 %v9942, %v10065
      %v10206 = vadd.f32 %v9943, %v10065
      %v10207 = vadd.f32 %v9944, %v10065
      %v10208 = vadd.f32 %v9945, %v10065
      %v10209 = vadd.f32 %v9946, %v10065
      %v10210 = vadd.f32 %v9947, %v10065
      %v10211 = vadd.f32 %v9948, %v10065
      %v10212 = vadd.f32 %v9949, %v10065
      %v10213 = vadd.f32 %v9950, %v10065
      %v10214 = vadd.f32 %v9951, %v10065
      %v10215 = vadd.f32 %v9952, %v10065
      %v10216 = vadd.f32 %v9953, %v10065
      %v10217 = vadd.f32 %v9954, %v10065
      %v10218 = vadd.f32 %v9955, %v10065
      %v10219 = vadd.f32 %v9956, %v10065
      %v10220 = vadd.f32 %v9957, %v10065
      %v10221 = vadd.f32 %v9958, %v10065
      %v10222 = vadd.f32 %v9959, %v10065
      %v10223 = vadd.f32 %v9960, %v10065
      %v10224 = vadd.f32 %v9961, %v10065
      %v10225 = vadd.f32 %v9962, %v10065
      %v10226 = vadd.f32 %v9963, %v10065
      %v10227 = vadd.f32 %v9964, %v10065
      %v10228 = vadd.f32 %v9965, %v10065
      %v10229 = vadd.f32 %v9966, %v10065
      %v10230 = vadd.f32 %v9967, %v10065
      %v10231 = vadd.f32 %v9968, %v10065
      %v10232 = vadd.f32 %v9969, %v10065
      %v10233 = vadd.f32 %v9970, %v10065
      %v10234 = vadd.f32 %v9971, %v10065
      %v10235 = vadd.f32 %v9972, %v10065
      %v10236 = vadd.f32 %v9973, %v10065
      %v10237 = vadd.f32 %v9974, %v10065
      %v10238 = vadd.f32 %v9975, %v10065
      %v10239 = vadd.f32 %v9976, %v10065
      %v10240 = vadd.f32 %v9977, %v10065
      %v10241 = vadd.f32 %v9978, %v10065
      %v10242 = vadd.f32 %v9979, %v10065
      %v10243 = vadd.f32 %v9980, %v10065
      %v10244 = vadd.f32 %v9981, %v10065
      %v10245 = vadd.f32 %v9982, %v10065
      %v10246 = vadd.f32 %v9983, %v10065
      %v10247 = vadd.f32 %v9984, %v10065
      %v10248 = vadd.f32 %v9985, %v10065
      %v10249 = vadd.f32 %v9986, %v10065
      %v10250 = vadd.f32 %v9987, %v10065
      %v10251 = vadd.f32 %v9988, %v10065
      %v10252 = vadd.f32 %v9989, %v10065
      %v10253 = vadd.f32 %v9990, %v10065
      %v10254 = vadd.f32 %v9991, %v10065
      %v10255 = vadd.f32 %v9992, %v10065
      %v10256 = vadd.f32 %v9993, %v10065
      %v10257 = vadd.f32 %v9994, %v10065
      %v10258 = vadd.f32 %v9995, %v10065
      %v10259 = vadd.f32 %v9996, %v10065
      %v10260 = vadd.f32 %v9997, %v10065
      %v10261 = vadd.f32 %v9998, %v10065
      %v10262 = vadd.f32 %v9999, %v10065
      %v10263 = vadd.f32 %v10000, %v10065
      %v10264 = vadd.f32 %v10001, %v10065
      %v10265 = vadd.f32 %v10002, %v10065
      %v10266 = vadd.f32 %v10003, %v10065
      %v10267 = vadd.f32 %v10004, %v10065
      %v10268 = vadd.f32 %v10005, %v10065
      %v10269 = vadd.f32 %v10006, %v10065
      %v10270 = vadd.f32 %v10007, %v10065
      %v10271 = vadd.f32 %v10008, %v10065
      %v10272 = vadd.f32 %v10009, %v10065
      %v10273 = vadd.f32 %v10010, %v10065
      %v10274 = vadd.f32 %v10011, %v10065
      %v10275 = vadd.f32 %v10012, %v10065
      %v10276 = vadd.f32 %v10013, %v10065
      %v10277 = vadd.f32 %v10014, %v10065
      %v10278 = vadd.f32 %v10015, %v10065
      %v10279 = vadd.f32 %v10016, %v10065
      %v10280 = vadd.f32 %v10017, %v10065
      %v10281 = vadd.f32 %v10018, %v10065
      %v10282 = vadd.f32 %v10019, %v10065
      %v10283 = vadd.f32 %v10020, %v10065
      %v10284 = vadd.f32 %v10021, %v10065
      %v10285 = vadd.f32 %v10022, %v10065
      %v10286 = vadd.f32 %v10023, %v10065
      %v10287 = vadd.f32 %v10024, %v10065
      %v10288 = vadd.f32 %v10025, %v10065
      %v10289 = vadd.f32 %v10026, %v10065
      %v10290 = vadd.f32 %v10027, %v10065
      %v10291 = vadd.f32 %v10028, %v10065
      %v10292 = vadd.f32 %v10029, %v10065
      %v10293 = vadd.f32 %v10030, %v10065
      %v10294 = vadd.f32 %v10031, %v10065
      %v10295 = vadd.f32 %v10032, %v10065
      %v10296 = vadd.f32 %v10033, %v10065
      %v10297 = vadd.f32 %v10034, %v10065
      %v10298 = vadd.f32 %v10035, %v10065
      %v10299 = vadd.f32 %v10036, %v10065
      %v10300 = vadd.f32 %v10037, %v10065
      %v10301 = vadd.f32 %v10038, %v10065
      %v10302 = vadd.f32 %v10039, %v10065
      %v10303 = vadd.f32 %v10040, %v10065
      %v10304 = vadd.f32 %v10041, %v10065
      %v10305 = vadd.f32 %v10042, %v10065
      %v10306 = vadd.f32 %v10043, %v10065
      %v10307 = vadd.f32 %v10044, %v10065
      %v10308 = vadd.f32 %v10045, %v10065
      %v10309 = vadd.f32 %v10046, %v10065
      %v10310 = vadd.f32 %v10047, %v10065
      %v10311 = vadd.f32 %v10048, %v10065
      %v10312 = vadd.f32 %v10049, %v10065
      %v10313 = vadd.f32 %v10050, %v10065
      %v10314 = vadd.f32 %v10051, %v10065
      %v10315 = vadd.f32 %v10052, %v10065
      %v10316 = vadd.f32 %v10053, %v10065
      %v10317 = vadd.f32 %v10054, %v10065
      %v10318 = vadd.f32 %v10055, %v10065
      %v10319 = vadd.f32 %v10056, %v10065
      %v10320 = vadd.f32 %v10057, %v10065
      %v10321 = vadd.f32 %v10058, %v10065
      %v10322 = vadd.f32 %v10059, %v10065
      %vm10323 = vcmp.gt.f32.partialorder %v10067, 0.0
      %vm10324 = vcmp.gt.f32.partialorder %v10068, 0.0
      %vm10325 = vcmp.gt.f32.partialorder %v10069, 0.0
      %vm10326 = vcmp.gt.f32.partialorder %v10070, 0.0
      %vm10327 = vcmp.gt.f32.partialorder %v10071, 0.0
      %vm10328 = vcmp.gt.f32.partialorder %v10072, 0.0
      %vm10329 = vcmp.gt.f32.partialorder %v10073, 0.0
      %vm10330 = vcmp.gt.f32.partialorder %v10074, 0.0
      %vm10331 = vcmp.gt.f32.partialorder %v10075, 0.0
      %vm10332 = vcmp.gt.f32.partialorder %v10076, 0.0
      %vm10333 = vcmp.gt.f32.partialorder %v10077, 0.0
      %vm10334 = vcmp.gt.f32.partialorder %v10078, 0.0
      %vm10335 = vcmp.gt.f32.partialorder %v10079, 0.0
      %vm10336 = vcmp.gt.f32.partialorder %v10080, 0.0
      %vm10337 = vcmp.gt.f32.partialorder %v10081, 0.0
      %vm10338 = vcmp.gt.f32.partialorder %v10082, 0.0
      %vm10339 = vcmp.gt.f32.partialorder %v10083, 0.0
      %vm10340 = vcmp.gt.f32.partialorder %v10084, 0.0
      %vm10341 = vcmp.gt.f32.partialorder %v10085, 0.0
      %vm10342 = vcmp.gt.f32.partialorder %v10086, 0.0
      %vm10343 = vcmp.gt.f32.partialorder %v10087, 0.0
      %vm10344 = vcmp.gt.f32.partialorder %v10088, 0.0
      %vm10345 = vcmp.gt.f32.partialorder %v10089, 0.0
      %vm10346 = vcmp.gt.f32.partialorder %v10090, 0.0
      %vm10347 = vcmp.gt.f32.partialorder %v10091, 0.0
      %vm10348 = vcmp.gt.f32.partialorder %v10092, 0.0
      %vm10349 = vcmp.gt.f32.partialorder %v10093, 0.0
      %vm10350 = vcmp.gt.f32.partialorder %v10094, 0.0
      %vm10351 = vcmp.gt.f32.partialorder %v10095, 0.0
      %vm10352 = vcmp.gt.f32.partialorder %v10096, 0.0
      %vm10353 = vcmp.gt.f32.partialorder %v10097, 0.0
      %vm10354 = vcmp.gt.f32.partialorder %v10098, 0.0
      %vm10355 = vcmp.gt.f32.partialorder %v10099, 0.0
      %vm10356 = vcmp.gt.f32.partialorder %v10100, 0.0
      %vm10357 = vcmp.gt.f32.partialorder %v10101, 0.0
      %vm10358 = vcmp.gt.f32.partialorder %v10102, 0.0
      %vm10359 = vcmp.gt.f32.partialorder %v10103, 0.0
      %vm10360 = vcmp.gt.f32.partialorder %v10104, 0.0
      %vm10361 = vcmp.gt.f32.partialorder %v10105, 0.0
      %vm10362 = vcmp.gt.f32.partialorder %v10106, 0.0
      %vm10363 = vcmp.gt.f32.partialorder %v10107, 0.0
      %vm10364 = vcmp.gt.f32.partialorder %v10108, 0.0
      %vm10365 = vcmp.gt.f32.partialorder %v10109, 0.0
      %vm10366 = vcmp.gt.f32.partialorder %v10110, 0.0
      %vm10367 = vcmp.gt.f32.partialorder %v10111, 0.0
      %vm10368 = vcmp.gt.f32.partialorder %v10112, 0.0
      %vm10369 = vcmp.gt.f32.partialorder %v10113, 0.0
      %vm10370 = vcmp.gt.f32.partialorder %v10114, 0.0
      %vm10371 = vcmp.gt.f32.partialorder %v10115, 0.0
      %vm10372 = vcmp.gt.f32.partialorder %v10116, 0.0
      %vm10373 = vcmp.gt.f32.partialorder %v10117, 0.0
      %vm10374 = vcmp.gt.f32.partialorder %v10118, 0.0
      %vm10375 = vcmp.gt.f32.partialorder %v10119, 0.0
      %vm10376 = vcmp.gt.f32.partialorder %v10120, 0.0
      %vm10377 = vcmp.gt.f32.partialorder %v10121, 0.0
      %vm10378 = vcmp.gt.f32.partialorder %v10122, 0.0
      %vm10379 = vcmp.gt.f32.partialorder %v10123, 0.0
      %vm10380 = vcmp.gt.f32.partialorder %v10124, 0.0
      %vm10381 = vcmp.gt.f32.partialorder %v10125, 0.0
      %vm10382 = vcmp.gt.f32.partialorder %v10126, 0.0
      %vm10383 = vcmp.gt.f32.partialorder %v10127, 0.0
      %vm10384 = vcmp.gt.f32.partialorder %v10128, 0.0
      %vm10385 = vcmp.gt.f32.partialorder %v10129, 0.0
      %vm10386 = vcmp.gt.f32.partialorder %v10130, 0.0
      %vm10387 = vcmp.gt.f32.partialorder %v10131, 0.0
      %vm10388 = vcmp.gt.f32.partialorder %v10132, 0.0
      %vm10389 = vcmp.gt.f32.partialorder %v10133, 0.0
      %vm10390 = vcmp.gt.f32.partialorder %v10134, 0.0
      %vm10391 = vcmp.gt.f32.partialorder %v10135, 0.0
      %vm10392 = vcmp.gt.f32.partialorder %v10136, 0.0
      %vm10393 = vcmp.gt.f32.partialorder %v10137, 0.0
      %vm10394 = vcmp.gt.f32.partialorder %v10138, 0.0
      %vm10395 = vcmp.gt.f32.partialorder %v10139, 0.0
      %vm10396 = vcmp.gt.f32.partialorder %v10140, 0.0
      %vm10397 = vcmp.gt.f32.partialorder %v10141, 0.0
      %vm10398 = vcmp.gt.f32.partialorder %v10142, 0.0
      %vm10399 = vcmp.gt.f32.partialorder %v10143, 0.0
      %vm10400 = vcmp.gt.f32.partialorder %v10144, 0.0
      %vm10401 = vcmp.gt.f32.partialorder %v10145, 0.0
      %vm10402 = vcmp.gt.f32.partialorder %v10146, 0.0
      %vm10403 = vcmp.gt.f32.partialorder %v10147, 0.0
      %vm10404 = vcmp.gt.f32.partialorder %v10148, 0.0
      %vm10405 = vcmp.gt.f32.partialorder %v10149, 0.0
      %vm10406 = vcmp.gt.f32.partialorder %v10150, 0.0
      %vm10407 = vcmp.gt.f32.partialorder %v10151, 0.0
      %vm10408 = vcmp.gt.f32.partialorder %v10152, 0.0
      %vm10409 = vcmp.gt.f32.partialorder %v10153, 0.0
      %vm10410 = vcmp.gt.f32.partialorder %v10154, 0.0
      %vm10411 = vcmp.gt.f32.partialorder %v10155, 0.0
      %vm10412 = vcmp.gt.f32.partialorder %v10156, 0.0
      %vm10413 = vcmp.gt.f32.partialorder %v10157, 0.0
      %vm10414 = vcmp.gt.f32.partialorder %v10158, 0.0
      %vm10415 = vcmp.gt.f32.partialorder %v10159, 0.0
      %vm10416 = vcmp.gt.f32.partialorder %v10160, 0.0
      %vm10417 = vcmp.gt.f32.partialorder %v10161, 0.0
      %vm10418 = vcmp.gt.f32.partialorder %v10162, 0.0
      %vm10419 = vcmp.gt.f32.partialorder %v10163, 0.0
      %vm10420 = vcmp.gt.f32.partialorder %v10164, 0.0
      %vm10421 = vcmp.gt.f32.partialorder %v10165, 0.0
      %vm10422 = vcmp.gt.f32.partialorder %v10166, 0.0
      %vm10423 = vcmp.gt.f32.partialorder %v10167, 0.0
      %vm10424 = vcmp.gt.f32.partialorder %v10168, 0.0
      %vm10425 = vcmp.gt.f32.partialorder %v10169, 0.0
      %vm10426 = vcmp.gt.f32.partialorder %v10170, 0.0
      %vm10427 = vcmp.gt.f32.partialorder %v10171, 0.0
      %vm10428 = vcmp.gt.f32.partialorder %v10172, 0.0
      %vm10429 = vcmp.gt.f32.partialorder %v10173, 0.0
      %vm10430 = vcmp.gt.f32.partialorder %v10174, 0.0
      %vm10431 = vcmp.gt.f32.partialorder %v10175, 0.0
      %vm10432 = vcmp.gt.f32.partialorder %v10176, 0.0
      %vm10433 = vcmp.gt.f32.partialorder %v10177, 0.0
      %vm10434 = vcmp.gt.f32.partialorder %v10178, 0.0
      %vm10435 = vcmp.gt.f32.partialorder %v10179, 0.0
      %vm10436 = vcmp.gt.f32.partialorder %v10180, 0.0
      %vm10437 = vcmp.gt.f32.partialorder %v10181, 0.0
      %vm10438 = vcmp.gt.f32.partialorder %v10182, 0.0
      %vm10439 = vcmp.gt.f32.partialorder %v10183, 0.0
      %vm10440 = vcmp.gt.f32.partialorder %v10184, 0.0
      %vm10441 = vcmp.gt.f32.partialorder %v10185, 0.0
      %vm10442 = vcmp.gt.f32.partialorder %v10186, 0.0
      %vm10443 = vcmp.gt.f32.partialorder %v10187, 0.0
      %vm10444 = vcmp.gt.f32.partialorder %v10188, 0.0
      %vm10445 = vcmp.gt.f32.partialorder %v10189, 0.0
      %vm10446 = vcmp.gt.f32.partialorder %v10190, 0.0
      %vm10447 = vcmp.gt.f32.partialorder %v10191, 0.0
      %vm10448 = vcmp.gt.f32.partialorder %v10192, 0.0
      %vm10449 = vcmp.gt.f32.partialorder %v10193, 0.0
      %vm10450 = vcmp.gt.f32.partialorder %v10194, 0.0
      %vm10451 = vcmp.gt.f32.partialorder %v10195, 0.0
      %vm10452 = vcmp.gt.f32.partialorder %v10196, 0.0
      %vm10453 = vcmp.gt.f32.partialorder %v10197, 0.0
      %vm10454 = vcmp.gt.f32.partialorder %v10198, 0.0
      %vm10455 = vcmp.gt.f32.partialorder %v10199, 0.0
      %vm10456 = vcmp.gt.f32.partialorder %v10200, 0.0
      %vm10457 = vcmp.gt.f32.partialorder %v10201, 0.0
      %vm10458 = vcmp.gt.f32.partialorder %v10202, 0.0
      %vm10459 = vcmp.gt.f32.partialorder %v10203, 0.0
      %vm10460 = vcmp.gt.f32.partialorder %v10204, 0.0
      %vm10461 = vcmp.gt.f32.partialorder %v10205, 0.0
      %vm10462 = vcmp.gt.f32.partialorder %v10206, 0.0
      %vm10463 = vcmp.gt.f32.partialorder %v10207, 0.0
      %vm10464 = vcmp.gt.f32.partialorder %v10208, 0.0
      %vm10465 = vcmp.gt.f32.partialorder %v10209, 0.0
      %vm10466 = vcmp.gt.f32.partialorder %v10210, 0.0
      %vm10467 = vcmp.gt.f32.partialorder %v10211, 0.0
      %vm10468 = vcmp.gt.f32.partialorder %v10212, 0.0
      %vm10469 = vcmp.gt.f32.partialorder %v10213, 0.0
      %vm10470 = vcmp.gt.f32.partialorder %v10214, 0.0
      %vm10471 = vcmp.gt.f32.partialorder %v10215, 0.0
      %vm10472 = vcmp.gt.f32.partialorder %v10216, 0.0
      %vm10473 = vcmp.gt.f32.partialorder %v10217, 0.0
      %vm10474 = vcmp.gt.f32.partialorder %v10218, 0.0
      %vm10475 = vcmp.gt.f32.partialorder %v10219, 0.0
      %vm10476 = vcmp.gt.f32.partialorder %v10220, 0.0
      %vm10477 = vcmp.gt.f32.partialorder %v10221, 0.0
      %vm10478 = vcmp.gt.f32.partialorder %v10222, 0.0
      %vm10479 = vcmp.gt.f32.partialorder %v10223, 0.0
      %vm10480 = vcmp.gt.f32.partialorder %v10224, 0.0
      %vm10481 = vcmp.gt.f32.partialorder %v10225, 0.0
      %vm10482 = vcmp.gt.f32.partialorder %v10226, 0.0
      %vm10483 = vcmp.gt.f32.partialorder %v10227, 0.0
      %vm10484 = vcmp.gt.f32.partialorder %v10228, 0.0
      %vm10485 = vcmp.gt.f32.partialorder %v10229, 0.0
      %vm10486 = vcmp.gt.f32.partialorder %v10230, 0.0
      %vm10487 = vcmp.gt.f32.partialorder %v10231, 0.0
      %vm10488 = vcmp.gt.f32.partialorder %v10232, 0.0
      %vm10489 = vcmp.gt.f32.partialorder %v10233, 0.0
      %vm10490 = vcmp.gt.f32.partialorder %v10234, 0.0
      %vm10491 = vcmp.gt.f32.partialorder %v10235, 0.0
      %vm10492 = vcmp.gt.f32.partialorder %v10236, 0.0
      %vm10493 = vcmp.gt.f32.partialorder %v10237, 0.0
      %vm10494 = vcmp.gt.f32.partialorder %v10238, 0.0
      %vm10495 = vcmp.gt.f32.partialorder %v10239, 0.0
      %vm10496 = vcmp.gt.f32.partialorder %v10240, 0.0
      %vm10497 = vcmp.gt.f32.partialorder %v10241, 0.0
      %vm10498 = vcmp.gt.f32.partialorder %v10242, 0.0
      %vm10499 = vcmp.gt.f32.partialorder %v10243, 0.0
      %vm10500 = vcmp.gt.f32.partialorder %v10244, 0.0
      %vm10501 = vcmp.gt.f32.partialorder %v10245, 0.0
      %vm10502 = vcmp.gt.f32.partialorder %v10246, 0.0
      %vm10503 = vcmp.gt.f32.partialorder %v10247, 0.0
      %vm10504 = vcmp.gt.f32.partialorder %v10248, 0.0
      %vm10505 = vcmp.gt.f32.partialorder %v10249, 0.0
      %vm10506 = vcmp.gt.f32.partialorder %v10250, 0.0
      %vm10507 = vcmp.gt.f32.partialorder %v10251, 0.0
      %vm10508 = vcmp.gt.f32.partialorder %v10252, 0.0
      %vm10509 = vcmp.gt.f32.partialorder %v10253, 0.0
      %vm10510 = vcmp.gt.f32.partialorder %v10254, 0.0
      %vm10511 = vcmp.gt.f32.partialorder %v10255, 0.0
      %vm10512 = vcmp.gt.f32.partialorder %v10256, 0.0
      %vm10513 = vcmp.gt.f32.partialorder %v10257, 0.0
      %vm10514 = vcmp.gt.f32.partialorder %v10258, 0.0
      %vm10515 = vcmp.gt.f32.partialorder %v10259, 0.0
      %vm10516 = vcmp.gt.f32.partialorder %v10260, 0.0
      %vm10517 = vcmp.gt.f32.partialorder %v10261, 0.0
      %vm10518 = vcmp.gt.f32.partialorder %v10262, 0.0
      %vm10519 = vcmp.gt.f32.partialorder %v10263, 0.0
      %vm10520 = vcmp.gt.f32.partialorder %v10264, 0.0
      %vm10521 = vcmp.gt.f32.partialorder %v10265, 0.0
      %vm10522 = vcmp.gt.f32.partialorder %v10266, 0.0
      %vm10523 = vcmp.gt.f32.partialorder %v10267, 0.0
      %vm10524 = vcmp.gt.f32.partialorder %v10268, 0.0
      %vm10525 = vcmp.gt.f32.partialorder %v10269, 0.0
      %vm10526 = vcmp.gt.f32.partialorder %v10270, 0.0
      %vm10527 = vcmp.gt.f32.partialorder %v10271, 0.0
      %vm10528 = vcmp.gt.f32.partialorder %v10272, 0.0
      %vm10529 = vcmp.gt.f32.partialorder %v10273, 0.0
      %vm10530 = vcmp.gt.f32.partialorder %v10274, 0.0
      %vm10531 = vcmp.gt.f32.partialorder %v10275, 0.0
      %vm10532 = vcmp.gt.f32.partialorder %v10276, 0.0
      %vm10533 = vcmp.gt.f32.partialorder %v10277, 0.0
      %vm10534 = vcmp.gt.f32.partialorder %v10278, 0.0
      %vm10535 = vcmp.gt.f32.partialorder %v10279, 0.0
      %vm10536 = vcmp.gt.f32.partialorder %v10280, 0.0
      %vm10537 = vcmp.gt.f32.partialorder %v10281, 0.0
      %vm10538 = vcmp.gt.f32.partialorder %v10282, 0.0
      %vm10539 = vcmp.gt.f32.partialorder %v10283, 0.0
      %vm10540 = vcmp.gt.f32.partialorder %v10284, 0.0
      %vm10541 = vcmp.gt.f32.partialorder %v10285, 0.0
      %vm10542 = vcmp.gt.f32.partialorder %v10286, 0.0
      %vm10543 = vcmp.gt.f32.partialorder %v10287, 0.0
      %vm10544 = vcmp.gt.f32.partialorder %v10288, 0.0
      %vm10545 = vcmp.gt.f32.partialorder %v10289, 0.0
      %vm10546 = vcmp.gt.f32.partialorder %v10290, 0.0
      %vm10547 = vcmp.gt.f32.partialorder %v10291, 0.0
      %vm10548 = vcmp.gt.f32.partialorder %v10292, 0.0
      %vm10549 = vcmp.gt.f32.partialorder %v10293, 0.0
      %vm10550 = vcmp.gt.f32.partialorder %v10294, 0.0
      %vm10551 = vcmp.gt.f32.partialorder %v10295, 0.0
      %vm10552 = vcmp.gt.f32.partialorder %v10296, 0.0
      %vm10553 = vcmp.gt.f32.partialorder %v10297, 0.0
      %vm10554 = vcmp.gt.f32.partialorder %v10298, 0.0
      %vm10555 = vcmp.gt.f32.partialorder %v10299, 0.0
      %vm10556 = vcmp.gt.f32.partialorder %v10300, 0.0
      %vm10557 = vcmp.gt.f32.partialorder %v10301, 0.0
      %vm10558 = vcmp.gt.f32.partialorder %v10302, 0.0
      %vm10559 = vcmp.gt.f32.partialorder %v10303, 0.0
      %vm10560 = vcmp.gt.f32.partialorder %v10304, 0.0
      %vm10561 = vcmp.gt.f32.partialorder %v10305, 0.0
      %vm10562 = vcmp.gt.f32.partialorder %v10306, 0.0
      %vm10563 = vcmp.gt.f32.partialorder %v10307, 0.0
      %vm10564 = vcmp.gt.f32.partialorder %v10308, 0.0
      %vm10565 = vcmp.gt.f32.partialorder %v10309, 0.0
      %vm10566 = vcmp.gt.f32.partialorder %v10310, 0.0
      %vm10567 = vcmp.gt.f32.partialorder %v10311, 0.0
      %vm10568 = vcmp.gt.f32.partialorder %v10312, 0.0
      %vm10569 = vcmp.gt.f32.partialorder %v10313, 0.0
      %vm10570 = vcmp.gt.f32.partialorder %v10314, 0.0
      %vm10571 = vcmp.gt.f32.partialorder %v10315, 0.0
      %vm10572 = vcmp.gt.f32.partialorder %v10316, 0.0
      %vm10573 = vcmp.gt.f32.partialorder %v10317, 0.0
      %vm10574 = vcmp.gt.f32.partialorder %v10318, 0.0
      %vm10575 = vcmp.gt.f32.partialorder %v10319, 0.0
      %vm10576 = vcmp.gt.f32.partialorder %v10320, 0.0
      %vm10577 = vcmp.gt.f32.partialorder %v10321, 0.0
      %vm10578 = vcmp.gt.f32.partialorder %v10322, 0.0
      %v10579 = vmul.f32 %v10067, 0.2
      %v10580 = vmul.f32 %v10068, 0.2
      %v10581 = vmul.f32 %v10069, 0.2
      %v10582 = vmul.f32 %v10070, 0.2
      %v10583 = vmul.f32 %v10071, 0.2
      %v10584 = vmul.f32 %v10072, 0.2
      %v10585 = vmul.f32 %v10073, 0.2
      %v10586 = vmul.f32 %v10074, 0.2
      %v10587 = vmul.f32 %v10075, 0.2
      %v10588 = vmul.f32 %v10076, 0.2
      %v10589 = vmul.f32 %v10077, 0.2
      %v10590 = vmul.f32 %v10078, 0.2
      %v10591 = vmul.f32 %v10079, 0.2
      %v10592 = vmul.f32 %v10080, 0.2
      %v10593 = vmul.f32 %v10081, 0.2
      %v10594 = vmul.f32 %v10082, 0.2
      %v10595 = vmul.f32 %v10083, 0.2
      %v10596 = vmul.f32 %v10084, 0.2
      %v10597 = vmul.f32 %v10085, 0.2
      %v10598 = vmul.f32 %v10086, 0.2
      %v10599 = vmul.f32 %v10087, 0.2
      %v10600 = vmul.f32 %v10088, 0.2
      %v10601 = vmul.f32 %v10089, 0.2
      %v10602 = vmul.f32 %v10090, 0.2
      %v10603 = vmul.f32 %v10091, 0.2
      %v10604 = vmul.f32 %v10092, 0.2
      %v10605 = vmul.f32 %v10093, 0.2
      %v10606 = vmul.f32 %v10094, 0.2
      %v10607 = vmul.f32 %v10095, 0.2
      %v10608 = vmul.f32 %v10096, 0.2
      %v10609 = vmul.f32 %v10097, 0.2
      %v10610 = vmul.f32 %v10098, 0.2
      %v10611 = vmul.f32 %v10099, 0.2
      %v10612 = vmul.f32 %v10100, 0.2
      %v10613 = vmul.f32 %v10101, 0.2
      %v10614 = vmul.f32 %v10102, 0.2
      %v10615 = vmul.f32 %v10103, 0.2
      %v10616 = vmul.f32 %v10104, 0.2
      %v10617 = vmul.f32 %v10105, 0.2
      %v10618 = vmul.f32 %v10106, 0.2
      %v10619 = vmul.f32 %v10107, 0.2
      %v10620 = vmul.f32 %v10108, 0.2
      %v10621 = vmul.f32 %v10109, 0.2
      %v10622 = vmul.f32 %v10110, 0.2
      %v10623 = vmul.f32 %v10111, 0.2
      %v10624 = vmul.f32 %v10112, 0.2
      %v10625 = vmul.f32 %v10113, 0.2
      %v10626 = vmul.f32 %v10114, 0.2
      %v10627 = vmul.f32 %v10115, 0.2
      %v10628 = vmul.f32 %v10116, 0.2
      %v10629 = vmul.f32 %v10117, 0.2
      %v10630 = vmul.f32 %v10118, 0.2
      %v10631 = vmul.f32 %v10119, 0.2
      %v10632 = vmul.f32 %v10120, 0.2
      %v10633 = vmul.f32 %v10121, 0.2
      %v10634 = vmul.f32 %v10122, 0.2
      %v10635 = vmul.f32 %v10123, 0.2
      %v10636 = vmul.f32 %v10124, 0.2
      %v10637 = vmul.f32 %v10125, 0.2
      %v10638 = vmul.f32 %v10126, 0.2
      %v10639 = vmul.f32 %v10127, 0.2
      %v10640 = vmul.f32 %v10128, 0.2
      %v10641 = vmul.f32 %v10129, 0.2
      %v10642 = vmul.f32 %v10130, 0.2
      %v10643 = vmul.f32 %v10131, 0.2
      %v10644 = vmul.f32 %v10132, 0.2
      %v10645 = vmul.f32 %v10133, 0.2
      %v10646 = vmul.f32 %v10134, 0.2
      %v10647 = vmul.f32 %v10135, 0.2
      %v10648 = vmul.f32 %v10136, 0.2
      %v10649 = vmul.f32 %v10137, 0.2
      %v10650 = vmul.f32 %v10138, 0.2
      %v10651 = vmul.f32 %v10139, 0.2
      %v10652 = vmul.f32 %v10140, 0.2
      %v10653 = vmul.f32 %v10141, 0.2
      %v10654 = vmul.f32 %v10142, 0.2
      %v10655 = vmul.f32 %v10143, 0.2
      %v10656 = vmul.f32 %v10144, 0.2
      %v10657 = vmul.f32 %v10145, 0.2
      %v10658 = vmul.f32 %v10146, 0.2
      %v10659 = vmul.f32 %v10147, 0.2
      %v10660 = vmul.f32 %v10148, 0.2
      %v10661 = vmul.f32 %v10149, 0.2
      %v10662 = vmul.f32 %v10150, 0.2
      %v10663 = vmul.f32 %v10151, 0.2
      %v10664 = vmul.f32 %v10152, 0.2
      %v10665 = vmul.f32 %v10153, 0.2
      %v10666 = vmul.f32 %v10154, 0.2
      %v10667 = vmul.f32 %v10155, 0.2
      %v10668 = vmul.f32 %v10156, 0.2
      %v10669 = vmul.f32 %v10157, 0.2
      %v10670 = vmul.f32 %v10158, 0.2
      %v10671 = vmul.f32 %v10159, 0.2
      %v10672 = vmul.f32 %v10160, 0.2
      %v10673 = vmul.f32 %v10161, 0.2
      %v10674 = vmul.f32 %v10162, 0.2
      %v10675 = vmul.f32 %v10163, 0.2
      %v10676 = vmul.f32 %v10164, 0.2
      %v10677 = vmul.f32 %v10165, 0.2
      %v10678 = vmul.f32 %v10166, 0.2
      %v10679 = vmul.f32 %v10167, 0.2
      %v10680 = vmul.f32 %v10168, 0.2
      %v10681 = vmul.f32 %v10169, 0.2
      %v10682 = vmul.f32 %v10170, 0.2
      %v10683 = vmul.f32 %v10171, 0.2
      %v10684 = vmul.f32 %v10172, 0.2
      %v10685 = vmul.f32 %v10173, 0.2
      %v10686 = vmul.f32 %v10174, 0.2
      %v10687 = vmul.f32 %v10175, 0.2
      %v10688 = vmul.f32 %v10176, 0.2
      %v10689 = vmul.f32 %v10177, 0.2
      %v10690 = vmul.f32 %v10178, 0.2
      %v10691 = vmul.f32 %v10179, 0.2
      %v10692 = vmul.f32 %v10180, 0.2
      %v10693 = vmul.f32 %v10181, 0.2
      %v10694 = vmul.f32 %v10182, 0.2
      %v10695 = vmul.f32 %v10183, 0.2
      %v10696 = vmul.f32 %v10184, 0.2
      %v10697 = vmul.f32 %v10185, 0.2
      %v10698 = vmul.f32 %v10186, 0.2
      %v10699 = vmul.f32 %v10187, 0.2
      %v10700 = vmul.f32 %v10188, 0.2
      %v10701 = vmul.f32 %v10189, 0.2
      %v10702 = vmul.f32 %v10190, 0.2
      %v10703 = vmul.f32 %v10191, 0.2
      %v10704 = vmul.f32 %v10192, 0.2
      %v10705 = vmul.f32 %v10193, 0.2
      %v10706 = vmul.f32 %v10194, 0.2
      %v10707 = vmul.f32 %v10195, 0.2
      %v10708 = vmul.f32 %v10196, 0.2
      %v10709 = vmul.f32 %v10197, 0.2
      %v10710 = vmul.f32 %v10198, 0.2
      %v10711 = vmul.f32 %v10199, 0.2
      %v10712 = vmul.f32 %v10200, 0.2
      %v10713 = vmul.f32 %v10201, 0.2
      %v10714 = vmul.f32 %v10202, 0.2
      %v10715 = vmul.f32 %v10203, 0.2
      %v10716 = vmul.f32 %v10204, 0.2
      %v10717 = vmul.f32 %v10205, 0.2
      %v10718 = vmul.f32 %v10206, 0.2
      %v10719 = vmul.f32 %v10207, 0.2
      %v10720 = vmul.f32 %v10208, 0.2
      %v10721 = vmul.f32 %v10209, 0.2
      %v10722 = vmul.f32 %v10210, 0.2
      %v10723 = vmul.f32 %v10211, 0.2
      %v10724 = vmul.f32 %v10212, 0.2
      %v10725 = vmul.f32 %v10213, 0.2
      %v10726 = vmul.f32 %v10214, 0.2
      %v10727 = vmul.f32 %v10215, 0.2
      %v10728 = vmul.f32 %v10216, 0.2
      %v10729 = vmul.f32 %v10217, 0.2
      %v10730 = vmul.f32 %v10218, 0.2
      %v10731 = vmul.f32 %v10219, 0.2
      %v10732 = vmul.f32 %v10220, 0.2
      %v10733 = vmul.f32 %v10221, 0.2
      %v10734 = vmul.f32 %v10222, 0.2
      %v10735 = vmul.f32 %v10223, 0.2
      %v10736 = vmul.f32 %v10224, 0.2
      %v10737 = vmul.f32 %v10225, 0.2
      %v10738 = vmul.f32 %v10226, 0.2
      %v10739 = vmul.f32 %v10227, 0.2
      %v10740 = vmul.f32 %v10228, 0.2
      %v10741 = vmul.f32 %v10229, 0.2
      %v10742 = vmul.f32 %v10230, 0.2
      %v10743 = vmul.f32 %v10231, 0.2
      %v10744 = vmul.f32 %v10232, 0.2
      %v10745 = vmul.f32 %v10233, 0.2
      %v10746 = vmul.f32 %v10234, 0.2
      %v10747 = vmul.f32 %v10235, 0.2
      %v10748 = vmul.f32 %v10236, 0.2
      %v10749 = vmul.f32 %v10237, 0.2
      %v10750 = vmul.f32 %v10238, 0.2
      %v10751 = vmul.f32 %v10239, 0.2
      %v10752 = vmul.f32 %v10240, 0.2
      %v10753 = vmul.f32 %v10241, 0.2
      %v10754 = vmul.f32 %v10242, 0.2
      %v10755 = vmul.f32 %v10243, 0.2
      %v10756 = vmul.f32 %v10244, 0.2
      %v10757 = vmul.f32 %v10245, 0.2
      %v10758 = vmul.f32 %v10246, 0.2
      %v10759 = vmul.f32 %v10247, 0.2
      %v10760 = vmul.f32 %v10248, 0.2
      %v10761 = vmul.f32 %v10249, 0.2
      %v10762 = vmul.f32 %v10250, 0.2
      %v10763 = vmul.f32 %v10251, 0.2
      %v10764 = vmul.f32 %v10252, 0.2
      %v10765 = vmul.f32 %v10253, 0.2
      %v10766 = vmul.f32 %v10254, 0.2
      %v10767 = vmul.f32 %v10255, 0.2
      %v10768 = vmul.f32 %v10256, 0.2
      %v10769 = vmul.f32 %v10257, 0.2
      %v10770 = vmul.f32 %v10258, 0.2
      %v10771 = vmul.f32 %v10259, 0.2
      %v10772 = vmul.f32 %v10260, 0.2
      %v10773 = vmul.f32 %v10261, 0.2
      %v10774 = vmul.f32 %v10262, 0.2
      %v10775 = vmul.f32 %v10263, 0.2
      %v10776 = vmul.f32 %v10264, 0.2
      %v10777 = vmul.f32 %v10265, 0.2
      %v10778 = vmul.f32 %v10266, 0.2
      %v10779 = vmul.f32 %v10267, 0.2
      %v10780 = vmul.f32 %v10268, 0.2
      %v10781 = vmul.f32 %v10269, 0.2
      %v10782 = vmul.f32 %v10270, 0.2
      %v10783 = vmul.f32 %v10271, 0.2
      %v10784 = vmul.f32 %v10272, 0.2
      %v10785 = vmul.f32 %v10273, 0.2
      %v10786 = vmul.f32 %v10274, 0.2
      %v10787 = vmul.f32 %v10275, 0.2
      %v10788 = vmul.f32 %v10276, 0.2
      %v10789 = vmul.f32 %v10277, 0.2
      %v10790 = vmul.f32 %v10278, 0.2
      %v10791 = vmul.f32 %v10279, 0.2
      %v10792 = vmul.f32 %v10280, 0.2
      %v10793 = vmul.f32 %v10281, 0.2
      %v10794 = vmul.f32 %v10282, 0.2
      %v10795 = vmul.f32 %v10283, 0.2
      %v10796 = vmul.f32 %v10284, 0.2
      %v10797 = vmul.f32 %v10285, 0.2
      %v10798 = vmul.f32 %v10286, 0.2
      %v10799 = vmul.f32 %v10287, 0.2
      %v10800 = vmul.f32 %v10288, 0.2
      %v10801 = vmul.f32 %v10289, 0.2
      %v10802 = vmul.f32 %v10290, 0.2
      %v10803 = vmul.f32 %v10291, 0.2
      %v10804 = vmul.f32 %v10292, 0.2
      %v10805 = vmul.f32 %v10293, 0.2
      %v10806 = vmul.f32 %v10294, 0.2
      %v10807 = vmul.f32 %v10295, 0.2
      %v10808 = vmul.f32 %v10296, 0.2
      %v10809 = vmul.f32 %v10297, 0.2
      %v10810 = vmul.f32 %v10298, 0.2
      %v10811 = vmul.f32 %v10299, 0.2
      %v10812 = vmul.f32 %v10300, 0.2
      %v10813 = vmul.f32 %v10301, 0.2
      %v10814 = vmul.f32 %v10302, 0.2
      %v10815 = vmul.f32 %v10303, 0.2
      %v10816 = vmul.f32 %v10304, 0.2
      %v10817 = vmul.f32 %v10305, 0.2
      %v10818 = vmul.f32 %v10306, 0.2
      %v10819 = vmul.f32 %v10307, 0.2
      %v10820 = vmul.f32 %v10308, 0.2
      %v10821 = vmul.f32 %v10309, 0.2
      %v10822 = vmul.f32 %v10310, 0.2
      %v10823 = vmul.f32 %v10311, 0.2
      %v10824 = vmul.f32 %v10312, 0.2
      %v10825 = vmul.f32 %v10313, 0.2
      %v10826 = vmul.f32 %v10314, 0.2
      %v10827 = vmul.f32 %v10315, 0.2
      %v10828 = vmul.f32 %v10316, 0.2
      %v10829 = vmul.f32 %v10317, 0.2
      %v10830 = vmul.f32 %v10318, 0.2
      %v10831 = vmul.f32 %v10319, 0.2
      %v10832 = vmul.f32 %v10320, 0.2
      %v10833 = vmul.f32 %v10321, 0.2
      %v10834 = vmul.f32 %v10322, 0.2
      %v10835 = vsel %vm10323, %v10067, %v10579
      %v10836 = vsel %vm10324, %v10068, %v10580
      %v10837 = vsel %vm10325, %v10069, %v10581
      %v10838 = vsel %vm10326, %v10070, %v10582
      %v10839 = vsel %vm10327, %v10071, %v10583
      %v10840 = vsel %vm10328, %v10072, %v10584
      %v10841 = vsel %vm10329, %v10073, %v10585
      %v10842 = vsel %vm10330, %v10074, %v10586
      %v10843 = vsel %vm10331, %v10075, %v10587
      %v10844 = vsel %vm10332, %v10076, %v10588
      %v10845 = vsel %vm10333, %v10077, %v10589
      %v10846 = vsel %vm10334, %v10078, %v10590
      %v10847 = vsel %vm10335, %v10079, %v10591
      %v10848 = vsel %vm10336, %v10080, %v10592
      %v10849 = vsel %vm10337, %v10081, %v10593
      %v10850 = vsel %vm10338, %v10082, %v10594
      %v10851 = vsel %vm10339, %v10083, %v10595
      %v10852 = vsel %vm10340, %v10084, %v10596
      %v10853 = vsel %vm10341, %v10085, %v10597
      %v10854 = vsel %vm10342, %v10086, %v10598
      %v10855 = vsel %vm10343, %v10087, %v10599
      %v10856 = vsel %vm10344, %v10088, %v10600
      %v10857 = vsel %vm10345, %v10089, %v10601
      %v10858 = vsel %vm10346, %v10090, %v10602
      %v10859 = vsel %vm10347, %v10091, %v10603
      %v10860 = vsel %vm10348, %v10092, %v10604
      %v10861 = vsel %vm10349, %v10093, %v10605
      %v10862 = vsel %vm10350, %v10094, %v10606
      %v10863 = vsel %vm10351, %v10095, %v10607
      %v10864 = vsel %vm10352, %v10096, %v10608
      %v10865 = vsel %vm10353, %v10097, %v10609
      %v10866 = vsel %vm10354, %v10098, %v10610
      %v10867 = vsel %vm10355, %v10099, %v10611
      %v10868 = vsel %vm10356, %v10100, %v10612
      %v10869 = vsel %vm10357, %v10101, %v10613
      %v10870 = vsel %vm10358, %v10102, %v10614
      %v10871 = vsel %vm10359, %v10103, %v10615
      %v10872 = vsel %vm10360, %v10104, %v10616
      %v10873 = vsel %vm10361, %v10105, %v10617
      %v10874 = vsel %vm10362, %v10106, %v10618
      %v10875 = vsel %vm10363, %v10107, %v10619
      %v10876 = vsel %vm10364, %v10108, %v10620
      %v10877 = vsel %vm10365, %v10109, %v10621
      %v10878 = vsel %vm10366, %v10110, %v10622
      %v10879 = vsel %vm10367, %v10111, %v10623
      %v10880 = vsel %vm10368, %v10112, %v10624
      %v10881 = vsel %vm10369, %v10113, %v10625
      %v10882 = vsel %vm10370, %v10114, %v10626
      %v10883 = vsel %vm10371, %v10115, %v10627
      %v10884 = vsel %vm10372, %v10116, %v10628
      %v10885 = vsel %vm10373, %v10117, %v10629
      %v10886 = vsel %vm10374, %v10118, %v10630
      %v10887 = vsel %vm10375, %v10119, %v10631
      %v10888 = vsel %vm10376, %v10120, %v10632
      %v10889 = vsel %vm10377, %v10121, %v10633
      %v10890 = vsel %vm10378, %v10122, %v10634
      %v10891 = vsel %vm10379, %v10123, %v10635
      %v10892 = vsel %vm10380, %v10124, %v10636
      %v10893 = vsel %vm10381, %v10125, %v10637
      %v10894 = vsel %vm10382, %v10126, %v10638
      %v10895 = vsel %vm10383, %v10127, %v10639
      %v10896 = vsel %vm10384, %v10128, %v10640
      %v10897 = vsel %vm10385, %v10129, %v10641
      %v10898 = vsel %vm10386, %v10130, %v10642
      %v10899 = vsel %vm10387, %v10131, %v10643
      %v10900 = vsel %vm10388, %v10132, %v10644
      %v10901 = vsel %vm10389, %v10133, %v10645
      %v10902 = vsel %vm10390, %v10134, %v10646
      %v10903 = vsel %vm10391, %v10135, %v10647
      %v10904 = vsel %vm10392, %v10136, %v10648
      %v10905 = vsel %vm10393, %v10137, %v10649
      %v10906 = vsel %vm10394, %v10138, %v10650
      %v10907 = vsel %vm10395, %v10139, %v10651
      %v10908 = vsel %vm10396, %v10140, %v10652
      %v10909 = vsel %vm10397, %v10141, %v10653
      %v10910 = vsel %vm10398, %v10142, %v10654
      %v10911 = vsel %vm10399, %v10143, %v10655
      %v10912 = vsel %vm10400, %v10144, %v10656
      %v10913 = vsel %vm10401, %v10145, %v10657
      %v10914 = vsel %vm10402, %v10146, %v10658
      %v10915 = vsel %vm10403, %v10147, %v10659
      %v10916 = vsel %vm10404, %v10148, %v10660
      %v10917 = vsel %vm10405, %v10149, %v10661
      %v10918 = vsel %vm10406, %v10150, %v10662
      %v10919 = vsel %vm10407, %v10151, %v10663
      %v10920 = vsel %vm10408, %v10152, %v10664
      %v10921 = vsel %vm10409, %v10153, %v10665
      %v10922 = vsel %vm10410, %v10154, %v10666
      %v10923 = vsel %vm10411, %v10155, %v10667
      %v10924 = vsel %vm10412, %v10156, %v10668
      %v10925 = vsel %vm10413, %v10157, %v10669
      %v10926 = vsel %vm10414, %v10158, %v10670
      %v10927 = vsel %vm10415, %v10159, %v10671
      %v10928 = vsel %vm10416, %v10160, %v10672
      %v10929 = vsel %vm10417, %v10161, %v10673
      %v10930 = vsel %vm10418, %v10162, %v10674
      %v10931 = vsel %vm10419, %v10163, %v10675
      %v10932 = vsel %vm10420, %v10164, %v10676
      %v10933 = vsel %vm10421, %v10165, %v10677
      %v10934 = vsel %vm10422, %v10166, %v10678
      %v10935 = vsel %vm10423, %v10167, %v10679
      %v10936 = vsel %vm10424, %v10168, %v10680
      %v10937 = vsel %vm10425, %v10169, %v10681
      %v10938 = vsel %vm10426, %v10170, %v10682
      %v10939 = vsel %vm10427, %v10171, %v10683
      %v10940 = vsel %vm10428, %v10172, %v10684
      %v10941 = vsel %vm10429, %v10173, %v10685
      %v10942 = vsel %vm10430, %v10174, %v10686
      %v10943 = vsel %vm10431, %v10175, %v10687
      %v10944 = vsel %vm10432, %v10176, %v10688
      %v10945 = vsel %vm10433, %v10177, %v10689
      %v10946 = vsel %vm10434, %v10178, %v10690
      %v10947 = vsel %vm10435, %v10179, %v10691
      %v10948 = vsel %vm10436, %v10180, %v10692
      %v10949 = vsel %vm10437, %v10181, %v10693
      %v10950 = vsel %vm10438, %v10182, %v10694
      %v10951 = vsel %vm10439, %v10183, %v10695
      %v10952 = vsel %vm10440, %v10184, %v10696
      %v10953 = vsel %vm10441, %v10185, %v10697
      %v10954 = vsel %vm10442, %v10186, %v10698
      %v10955 = vsel %vm10443, %v10187, %v10699
      %v10956 = vsel %vm10444, %v10188, %v10700
      %v10957 = vsel %vm10445, %v10189, %v10701
      %v10958 = vsel %vm10446, %v10190, %v10702
      %v10959 = vsel %vm10447, %v10191, %v10703
      %v10960 = vsel %vm10448, %v10192, %v10704
      %v10961 = vsel %vm10449, %v10193, %v10705
      %v10962 = vsel %vm10450, %v10194, %v10706
      %v10963 = vsel %vm10451, %v10195, %v10707
      %v10964 = vsel %vm10452, %v10196, %v10708
      %v10965 = vsel %vm10453, %v10197, %v10709
      %v10966 = vsel %vm10454, %v10198, %v10710
      %v10967 = vsel %vm10455, %v10199, %v10711
      %v10968 = vsel %vm10456, %v10200, %v10712
      %v10969 = vsel %vm10457, %v10201, %v10713
      %v10970 = vsel %vm10458, %v10202, %v10714
      %v10971 = vsel %vm10459, %v10203, %v10715
      %v10972 = vsel %vm10460, %v10204, %v10716
      %v10973 = vsel %vm10461, %v10205, %v10717
      %v10974 = vsel %vm10462, %v10206, %v10718
      %v10975 = vsel %vm10463, %v10207, %v10719
      %v10976 = vsel %vm10464, %v10208, %v10720
      %v10977 = vsel %vm10465, %v10209, %v10721
      %v10978 = vsel %vm10466, %v10210, %v10722
      %v10979 = vsel %vm10467, %v10211, %v10723
      %v10980 = vsel %vm10468, %v10212, %v10724
      %v10981 = vsel %vm10469, %v10213, %v10725
      %v10982 = vsel %vm10470, %v10214, %v10726
      %v10983 = vsel %vm10471, %v10215, %v10727
      %v10984 = vsel %vm10472, %v10216, %v10728
      %v10985 = vsel %vm10473, %v10217, %v10729
      %v10986 = vsel %vm10474, %v10218, %v10730
      %v10987 = vsel %vm10475, %v10219, %v10731
      %v10988 = vsel %vm10476, %v10220, %v10732
      %v10989 = vsel %vm10477, %v10221, %v10733
      %v10990 = vsel %vm10478, %v10222, %v10734
      %v10991 = vsel %vm10479, %v10223, %v10735
      %v10992 = vsel %vm10480, %v10224, %v10736
      %v10993 = vsel %vm10481, %v10225, %v10737
      %v10994 = vsel %vm10482, %v10226, %v10738
      %v10995 = vsel %vm10483, %v10227, %v10739
      %v10996 = vsel %vm10484, %v10228, %v10740
      %v10997 = vsel %vm10485, %v10229, %v10741
      %v10998 = vsel %vm10486, %v10230, %v10742
      %v10999 = vsel %vm10487, %v10231, %v10743
      %v11000 = vsel %vm10488, %v10232, %v10744
      %v11001 = vsel %vm10489, %v10233, %v10745
      %v11002 = vsel %vm10490, %v10234, %v10746
      %v11003 = vsel %vm10491, %v10235, %v10747
      %v11004 = vsel %vm10492, %v10236, %v10748
      %v11005 = vsel %vm10493, %v10237, %v10749
      %v11006 = vsel %vm10494, %v10238, %v10750
      %v11007 = vsel %vm10495, %v10239, %v10751
      %v11008 = vsel %vm10496, %v10240, %v10752
      %v11009 = vsel %vm10497, %v10241, %v10753
      %v11010 = vsel %vm10498, %v10242, %v10754
      %v11011 = vsel %vm10499, %v10243, %v10755
      %v11012 = vsel %vm10500, %v10244, %v10756
      %v11013 = vsel %vm10501, %v10245, %v10757
      %v11014 = vsel %vm10502, %v10246, %v10758
      %v11015 = vsel %vm10503, %v10247, %v10759
      %v11016 = vsel %vm10504, %v10248, %v10760
      %v11017 = vsel %vm10505, %v10249, %v10761
      %v11018 = vsel %vm10506, %v10250, %v10762
      %v11019 = vsel %vm10507, %v10251, %v10763
      %v11020 = vsel %vm10508, %v10252, %v10764
      %v11021 = vsel %vm10509, %v10253, %v10765
      %v11022 = vsel %vm10510, %v10254, %v10766
      %v11023 = vsel %vm10511, %v10255, %v10767
      %v11024 = vsel %vm10512, %v10256, %v10768
      %v11025 = vsel %vm10513, %v10257, %v10769
      %v11026 = vsel %vm10514, %v10258, %v10770
      %v11027 = vsel %vm10515, %v10259, %v10771
      %v11028 = vsel %vm10516, %v10260, %v10772
      %v11029 = vsel %vm10517, %v10261, %v10773
      %v11030 = vsel %vm10518, %v10262, %v10774
      %v11031 = vsel %vm10519, %v10263, %v10775
      %v11032 = vsel %vm10520, %v10264, %v10776
      %v11033 = vsel %vm10521, %v10265, %v10777
      %v11034 = vsel %vm10522, %v10266, %v10778
      %v11035 = vsel %vm10523, %v10267, %v10779
      %v11036 = vsel %vm10524, %v10268, %v10780
      %v11037 = vsel %vm10525, %v10269, %v10781
      %v11038 = vsel %vm10526, %v10270, %v10782
      %v11039 = vsel %vm10527, %v10271, %v10783
      %v11040 = vsel %vm10528, %v10272, %v10784
      %v11041 = vsel %vm10529, %v10273, %v10785
      %v11042 = vsel %vm10530, %v10274, %v10786
      %v11043 = vsel %vm10531, %v10275, %v10787
      %v11044 = vsel %vm10532, %v10276, %v10788
      %v11045 = vsel %vm10533, %v10277, %v10789
      %v11046 = vsel %vm10534, %v10278, %v10790
      %v11047 = vsel %vm10535, %v10279, %v10791
      %v11048 = vsel %vm10536, %v10280, %v10792
      %v11049 = vsel %vm10537, %v10281, %v10793
      %v11050 = vsel %vm10538, %v10282, %v10794
      %v11051 = vsel %vm10539, %v10283, %v10795
      %v11052 = vsel %vm10540, %v10284, %v10796
      %v11053 = vsel %vm10541, %v10285, %v10797
      %v11054 = vsel %vm10542, %v10286, %v10798
      %v11055 = vsel %vm10543, %v10287, %v10799
      %v11056 = vsel %vm10544, %v10288, %v10800
      %v11057 = vsel %vm10545, %v10289, %v10801
      %v11058 = vsel %vm10546, %v10290, %v10802
      %v11059 = vsel %vm10547, %v10291, %v10803
      %v11060 = vsel %vm10548, %v10292, %v10804
      %v11061 = vsel %vm10549, %v10293, %v10805
      %v11062 = vsel %vm10550, %v10294, %v10806
      %v11063 = vsel %vm10551, %v10295, %v10807
      %v11064 = vsel %vm10552, %v10296, %v10808
      %v11065 = vsel %vm10553, %v10297, %v10809
      %v11066 = vsel %vm10554, %v10298, %v10810
      %v11067 = vsel %vm10555, %v10299, %v10811
      %v11068 = vsel %vm10556, %v10300, %v10812
      %v11069 = vsel %vm10557, %v10301, %v10813
      %v11070 = vsel %vm10558, %v10302, %v10814
      %v11071 = vsel %vm10559, %v10303, %v10815
      %v11072 = vsel %vm10560, %v10304, %v10816
      %v11073 = vsel %vm10561, %v10305, %v10817
      %v11074 = vsel %vm10562, %v10306, %v10818
      %v11075 = vsel %vm10563, %v10307, %v10819
      %v11076 = vsel %vm10564, %v10308, %v10820
      %v11077 = vsel %vm10565, %v10309, %v10821
      %v11078 = vsel %vm10566, %v10310, %v10822
      %v11079 = vsel %vm10567, %v10311, %v10823
      %v11080 = vsel %vm10568, %v10312, %v10824
      %v11081 = vsel %vm10569, %v10313, %v10825
      %v11082 = vsel %vm10570, %v10314, %v10826
      %v11083 = vsel %vm10571, %v10315, %v10827
      %v11084 = vsel %vm10572, %v10316, %v10828
      %v11085 = vsel %vm10573, %v10317, %v10829
      %v11086 = vsel %vm10574, %v10318, %v10830
      %v11087 = vsel %vm10575, %v10319, %v10831
      %v11088 = vsel %vm10576, %v10320, %v10832
      %v11089 = vsel %vm10577, %v10321, %v10833
      %v11090 = vsel %vm10578, %v10322, %v10834
      %v11091 = vpack.c.bf16 %v10836, %v10835
      %v11092 = vpack.c.bf16 %v10838, %v10837
      %v11093 = vpack.c.bf16 %v10840, %v10839
      %v11094 = vpack.c.bf16 %v10842, %v10841
      %v11095 = vpack.c.bf16 %v10844, %v10843
      %v11096 = vpack.c.bf16 %v10846, %v10845
      %v11097 = vpack.c.bf16 %v10848, %v10847
      %v11098 = vpack.c.bf16 %v10850, %v10849
      %v11099 = vpack.c.bf16 %v10852, %v10851
      %v11100 = vpack.c.bf16 %v10854, %v10853
      %v11101 = vpack.c.bf16 %v10856, %v10855
      %v11102 = vpack.c.bf16 %v10858, %v10857
      %v11103 = vpack.c.bf16 %v10860, %v10859
      %v11104 = vpack.c.bf16 %v10862, %v10861
      %v11105 = vpack.c.bf16 %v10864, %v10863
      %v11106 = vpack.c.bf16 %v10866, %v10865
      %v11107 = vpack.c.bf16 %v10868, %v10867
      %v11108 = vpack.c.bf16 %v10870, %v10869
      %v11109 = vpack.c.bf16 %v10872, %v10871
      %v11110 = vpack.c.bf16 %v10874, %v10873
      %v11111 = vpack.c.bf16 %v10876, %v10875
      %v11112 = vpack.c.bf16 %v10878, %v10877
      %v11113 = vpack.c.bf16 %v10880, %v10879
      %v11114 = vpack.c.bf16 %v10882, %v10881
      %v11115 = vpack.c.bf16 %v10884, %v10883
      %v11116 = vpack.c.bf16 %v10886, %v10885
      %v11117 = vpack.c.bf16 %v10888, %v10887
      %v11118 = vpack.c.bf16 %v10890, %v10889
      %v11119 = vpack.c.bf16 %v10892, %v10891
      %v11120 = vpack.c.bf16 %v10894, %v10893
      %v11121 = vpack.c.bf16 %v10896, %v10895
      %v11122 = vpack.c.bf16 %v10898, %v10897
      %v11123 = vpack.c.bf16 %v10900, %v10899
      %v11124 = vpack.c.bf16 %v10902, %v10901
      %v11125 = vpack.c.bf16 %v10904, %v10903
      %v11126 = vpack.c.bf16 %v10906, %v10905
      %v11127 = vpack.c.bf16 %v10908, %v10907
      %v11128 = vpack.c.bf16 %v10910, %v10909
      %v11129 = vpack.c.bf16 %v10912, %v10911
      %v11130 = vpack.c.bf16 %v10914, %v10913
      %v11131 = vpack.c.bf16 %v10916, %v10915
      %v11132 = vpack.c.bf16 %v10918, %v10917
      %v11133 = vpack.c.bf16 %v10920, %v10919
      %v11134 = vpack.c.bf16 %v10922, %v10921
      %v11135 = vpack.c.bf16 %v10924, %v10923
      %v11136 = vpack.c.bf16 %v10926, %v10925
      %v11137 = vpack.c.bf16 %v10928, %v10927
      %v11138 = vpack.c.bf16 %v10930, %v10929
      %v11139 = vpack.c.bf16 %v10932, %v10931
      %v11140 = vpack.c.bf16 %v10934, %v10933
      %v11141 = vpack.c.bf16 %v10936, %v10935
      %v11142 = vpack.c.bf16 %v10938, %v10937
      %v11143 = vpack.c.bf16 %v10940, %v10939
      %v11144 = vpack.c.bf16 %v10942, %v10941
      %v11145 = vpack.c.bf16 %v10944, %v10943
      %v11146 = vpack.c.bf16 %v10946, %v10945
      %v11147 = vpack.c.bf16 %v10948, %v10947
      %v11148 = vpack.c.bf16 %v10950, %v10949
      %v11149 = vpack.c.bf16 %v10952, %v10951
      %v11150 = vpack.c.bf16 %v10954, %v10953
      %v11151 = vpack.c.bf16 %v10956, %v10955
      %v11152 = vpack.c.bf16 %v10958, %v10957
      %v11153 = vpack.c.bf16 %v10960, %v10959
      %v11154 = vpack.c.bf16 %v10962, %v10961
      %v11155 = vpack.c.bf16 %v10964, %v10963
      %v11156 = vpack.c.bf16 %v10966, %v10965
      %v11157 = vpack.c.bf16 %v10968, %v10967
      %v11158 = vpack.c.bf16 %v10970, %v10969
      %v11159 = vpack.c.bf16 %v10972, %v10971
      %v11160 = vpack.c.bf16 %v10974, %v10973
      %v11161 = vpack.c.bf16 %v10976, %v10975
      %v11162 = vpack.c.bf16 %v10978, %v10977
      %v11163 = vpack.c.bf16 %v10980, %v10979
      %v11164 = vpack.c.bf16 %v10982, %v10981
      %v11165 = vpack.c.bf16 %v10984, %v10983
      %v11166 = vpack.c.bf16 %v10986, %v10985
      %v11167 = vpack.c.bf16 %v10988, %v10987
      %v11168 = vpack.c.bf16 %v10990, %v10989
      %v11169 = vpack.c.bf16 %v10992, %v10991
      %v11170 = vpack.c.bf16 %v10994, %v10993
      %v11171 = vpack.c.bf16 %v10996, %v10995
      %v11172 = vpack.c.bf16 %v10998, %v10997
      %v11173 = vpack.c.bf16 %v11000, %v10999
      %v11174 = vpack.c.bf16 %v11002, %v11001
      %v11175 = vpack.c.bf16 %v11004, %v11003
      %v11176 = vpack.c.bf16 %v11006, %v11005
      %v11177 = vpack.c.bf16 %v11008, %v11007
      %v11178 = vpack.c.bf16 %v11010, %v11009
      %v11179 = vpack.c.bf16 %v11012, %v11011
      %v11180 = vpack.c.bf16 %v11014, %v11013
      %v11181 = vpack.c.bf16 %v11016, %v11015
      %v11182 = vpack.c.bf16 %v11018, %v11017
      %v11183 = vpack.c.bf16 %v11020, %v11019
      %v11184 = vpack.c.bf16 %v11022, %v11021
      %v11185 = vpack.c.bf16 %v11024, %v11023
      %v11186 = vpack.c.bf16 %v11026, %v11025
      %v11187 = vpack.c.bf16 %v11028, %v11027
      %v11188 = vpack.c.bf16 %v11030, %v11029
      %v11189 = vpack.c.bf16 %v11032, %v11031
      %v11190 = vpack.c.bf16 %v11034, %v11033
      %v11191 = vpack.c.bf16 %v11036, %v11035
      %v11192 = vpack.c.bf16 %v11038, %v11037
      %v11193 = vpack.c.bf16 %v11040, %v11039
      %v11194 = vpack.c.bf16 %v11042, %v11041
      %v11195 = vpack.c.bf16 %v11044, %v11043
      %v11196 = vpack.c.bf16 %v11046, %v11045
      %v11197 = vpack.c.bf16 %v11048, %v11047
      %v11198 = vpack.c.bf16 %v11050, %v11049
      %v11199 = vpack.c.bf16 %v11052, %v11051
      %v11200 = vpack.c.bf16 %v11054, %v11053
      %v11201 = vpack.c.bf16 %v11056, %v11055
      %v11202 = vpack.c.bf16 %v11058, %v11057
      %v11203 = vpack.c.bf16 %v11060, %v11059
      %v11204 = vpack.c.bf16 %v11062, %v11061
      %v11205 = vpack.c.bf16 %v11064, %v11063
      %v11206 = vpack.c.bf16 %v11066, %v11065
      %v11207 = vpack.c.bf16 %v11068, %v11067
      %v11208 = vpack.c.bf16 %v11070, %v11069
      %v11209 = vpack.c.bf16 %v11072, %v11071
      %v11210 = vpack.c.bf16 %v11074, %v11073
      %v11211 = vpack.c.bf16 %v11076, %v11075
      %v11212 = vpack.c.bf16 %v11078, %v11077
      %v11213 = vpack.c.bf16 %v11080, %v11079
      %v11214 = vpack.c.bf16 %v11082, %v11081
      %v11215 = vpack.c.bf16 %v11084, %v11083
      %v11216 = vpack.c.bf16 %v11086, %v11085
      %v11217 = vpack.c.bf16 %v11088, %v11087
      %v11218 = vpack.c.bf16 %v11090, %v11089
      %v11347 = vunpack.c.l.b16 %v11091
      %v11348 = vunpack.c.h.b16 %v11091
      %v11349 = vunpack.c.l.b16 %v11092
      %v11350 = vunpack.c.h.b16 %v11092
      %v11351 = vunpack.c.l.b16 %v11093
      %v11352 = vunpack.c.h.b16 %v11093
      %v11353 = vunpack.c.l.b16 %v11094
      %v11354 = vunpack.c.h.b16 %v11094
      %v11355 = vunpack.c.l.b16 %v11095
      %v11356 = vunpack.c.h.b16 %v11095
      %v11357 = vunpack.c.l.b16 %v11096
      %v11358 = vunpack.c.h.b16 %v11096
      %v11359 = vunpack.c.l.b16 %v11097
      %v11360 = vunpack.c.h.b16 %v11097
      %v11361 = vunpack.c.l.b16 %v11098
      %v11362 = vunpack.c.h.b16 %v11098
      %v11363 = vunpack.c.l.b16 %v11099
      %v11364 = vunpack.c.h.b16 %v11099
      %v11365 = vunpack.c.l.b16 %v11100
      %v11366 = vunpack.c.h.b16 %v11100
      %v11367 = vunpack.c.l.b16 %v11101
      %v11368 = vunpack.c.h.b16 %v11101
      %v11369 = vunpack.c.l.b16 %v11102
      %v11370 = vunpack.c.h.b16 %v11102
      %v11371 = vunpack.c.l.b16 %v11103
      %v11372 = vunpack.c.h.b16 %v11103
      %v11373 = vunpack.c.l.b16 %v11104
      %v11374 = vunpack.c.h.b16 %v11104
      %v11375 = vunpack.c.l.b16 %v11105
      %v11376 = vunpack.c.h.b16 %v11105
      %v11377 = vunpack.c.l.b16 %v11106
      %v11378 = vunpack.c.h.b16 %v11106
      %v11379 = vunpack.c.l.b16 %v11107
      %v11380 = vunpack.c.h.b16 %v11107
      %v11381 = vunpack.c.l.b16 %v11108
      %v11382 = vunpack.c.h.b16 %v11108
      %v11383 = vunpack.c.l.b16 %v11109
      %v11384 = vunpack.c.h.b16 %v11109
      %v11385 = vunpack.c.l.b16 %v11110
      %v11386 = vunpack.c.h.b16 %v11110
      %v11387 = vunpack.c.l.b16 %v11111
      %v11388 = vunpack.c.h.b16 %v11111
      %v11389 = vunpack.c.l.b16 %v11112
      %v11390 = vunpack.c.h.b16 %v11112
      %v11391 = vunpack.c.l.b16 %v11113
      %v11392 = vunpack.c.h.b16 %v11113
      %v11393 = vunpack.c.l.b16 %v11114
      %v11394 = vunpack.c.h.b16 %v11114
      %v11395 = vunpack.c.l.b16 %v11115
      %v11396 = vunpack.c.h.b16 %v11115
      %v11397 = vunpack.c.l.b16 %v11116
      %v11398 = vunpack.c.h.b16 %v11116
      %v11399 = vunpack.c.l.b16 %v11117
      %v11400 = vunpack.c.h.b16 %v11117
      %v11401 = vunpack.c.l.b16 %v11118
      %v11402 = vunpack.c.h.b16 %v11118
      %v11403 = vunpack.c.l.b16 %v11119
      %v11404 = vunpack.c.h.b16 %v11119
      %v11405 = vunpack.c.l.b16 %v11120
      %v11406 = vunpack.c.h.b16 %v11120
      %v11407 = vunpack.c.l.b16 %v11121
      %v11408 = vunpack.c.h.b16 %v11121
      %v11409 = vunpack.c.l.b16 %v11122
      %v11410 = vunpack.c.h.b16 %v11122
      %v11411 = vunpack.c.l.b16 %v11123
      %v11412 = vunpack.c.h.b16 %v11123
      %v11413 = vunpack.c.l.b16 %v11124
      %v11414 = vunpack.c.h.b16 %v11124
      %v11415 = vunpack.c.l.b16 %v11125
      %v11416 = vunpack.c.h.b16 %v11125
      %v11417 = vunpack.c.l.b16 %v11126
      %v11418 = vunpack.c.h.b16 %v11126
      %v11419 = vunpack.c.l.b16 %v11127
      %v11420 = vunpack.c.h.b16 %v11127
      %v11421 = vunpack.c.l.b16 %v11128
      %v11422 = vunpack.c.h.b16 %v11128
      %v11423 = vunpack.c.l.b16 %v11129
      %v11424 = vunpack.c.h.b16 %v11129
      %v11425 = vunpack.c.l.b16 %v11130
      %v11426 = vunpack.c.h.b16 %v11130
      %v11427 = vunpack.c.l.b16 %v11131
      %v11428 = vunpack.c.h.b16 %v11131
      %v11429 = vunpack.c.l.b16 %v11132
      %v11430 = vunpack.c.h.b16 %v11132
      %v11431 = vunpack.c.l.b16 %v11133
      %v11432 = vunpack.c.h.b16 %v11133
      %v11433 = vunpack.c.l.b16 %v11134
      %v11434 = vunpack.c.h.b16 %v11134
      %v11435 = vunpack.c.l.b16 %v11135
      %v11436 = vunpack.c.h.b16 %v11135
      %v11437 = vunpack.c.l.b16 %v11136
      %v11438 = vunpack.c.h.b16 %v11136
      %v11439 = vunpack.c.l.b16 %v11137
      %v11440 = vunpack.c.h.b16 %v11137
      %v11441 = vunpack.c.l.b16 %v11138
      %v11442 = vunpack.c.h.b16 %v11138
      %v11443 = vunpack.c.l.b16 %v11139
      %v11444 = vunpack.c.h.b16 %v11139
      %v11445 = vunpack.c.l.b16 %v11140
      %v11446 = vunpack.c.h.b16 %v11140
      %v11447 = vunpack.c.l.b16 %v11141
      %v11448 = vunpack.c.h.b16 %v11141
      %v11449 = vunpack.c.l.b16 %v11142
      %v11450 = vunpack.c.h.b16 %v11142
      %v11451 = vunpack.c.l.b16 %v11143
      %v11452 = vunpack.c.h.b16 %v11143
      %v11453 = vunpack.c.l.b16 %v11144
      %v11454 = vunpack.c.h.b16 %v11144
      %v11455 = vunpack.c.l.b16 %v11145
      %v11456 = vunpack.c.h.b16 %v11145
      %v11457 = vunpack.c.l.b16 %v11146
      %v11458 = vunpack.c.h.b16 %v11146
      %v11459 = vunpack.c.l.b16 %v11147
      %v11460 = vunpack.c.h.b16 %v11147
      %v11461 = vunpack.c.l.b16 %v11148
      %v11462 = vunpack.c.h.b16 %v11148
      %v11463 = vunpack.c.l.b16 %v11149
      %v11464 = vunpack.c.h.b16 %v11149
      %v11465 = vunpack.c.l.b16 %v11150
      %v11466 = vunpack.c.h.b16 %v11150
      %v11467 = vunpack.c.l.b16 %v11151
      %v11468 = vunpack.c.h.b16 %v11151
      %v11469 = vunpack.c.l.b16 %v11152
      %v11470 = vunpack.c.h.b16 %v11152
      %v11471 = vunpack.c.l.b16 %v11153
      %v11472 = vunpack.c.h.b16 %v11153
      %v11473 = vunpack.c.l.b16 %v11154
      %v11474 = vunpack.c.h.b16 %v11154
      %v11475 = vunpack.c.l.b16 %v11155
      %v11476 = vunpack.c.h.b16 %v11155
      %v11477 = vunpack.c.l.b16 %v11156
      %v11478 = vunpack.c.h.b16 %v11156
      %v11479 = vunpack.c.l.b16 %v11157
      %v11480 = vunpack.c.h.b16 %v11157
      %v11481 = vunpack.c.l.b16 %v11158
      %v11482 = vunpack.c.h.b16 %v11158
      %v11483 = vunpack.c.l.b16 %v11159
      %v11484 = vunpack.c.h.b16 %v11159
      %v11485 = vunpack.c.l.b16 %v11160
      %v11486 = vunpack.c.h.b16 %v11160
      %v11487 = vunpack.c.l.b16 %v11161
      %v11488 = vunpack.c.h.b16 %v11161
      %v11489 = vunpack.c.l.b16 %v11162
      %v11490 = vunpack.c.h.b16 %v11162
      %v11491 = vunpack.c.l.b16 %v11163
      %v11492 = vunpack.c.h.b16 %v11163
      %v11493 = vunpack.c.l.b16 %v11164
      %v11494 = vunpack.c.h.b16 %v11164
      %v11495 = vunpack.c.l.b16 %v11165
      %v11496 = vunpack.c.h.b16 %v11165
      %v11497 = vunpack.c.l.b16 %v11166
      %v11498 = vunpack.c.h.b16 %v11166
      %v11499 = vunpack.c.l.b16 %v11167
      %v11500 = vunpack.c.h.b16 %v11167
      %v11501 = vunpack.c.l.b16 %v11168
      %v11502 = vunpack.c.h.b16 %v11168
      %v11503 = vunpack.c.l.b16 %v11169
      %v11504 = vunpack.c.h.b16 %v11169
      %v11505 = vunpack.c.l.b16 %v11170
      %v11506 = vunpack.c.h.b16 %v11170
      %v11507 = vunpack.c.l.b16 %v11171
      %v11508 = vunpack.c.h.b16 %v11171
      %v11509 = vunpack.c.l.b16 %v11172
      %v11510 = vunpack.c.h.b16 %v11172
      %v11511 = vunpack.c.l.b16 %v11173
      %v11512 = vunpack.c.h.b16 %v11173
      %v11513 = vunpack.c.l.b16 %v11174
      %v11514 = vunpack.c.h.b16 %v11174
      %v11515 = vunpack.c.l.b16 %v11175
      %v11516 = vunpack.c.h.b16 %v11175
      %v11517 = vunpack.c.l.b16 %v11176
      %v11518 = vunpack.c.h.b16 %v11176
      %v11519 = vunpack.c.l.b16 %v11177
      %v11520 = vunpack.c.h.b16 %v11177
      %v11521 = vunpack.c.l.b16 %v11178
      %v11522 = vunpack.c.h.b16 %v11178
      %v11523 = vunpack.c.l.b16 %v11179
      %v11524 = vunpack.c.h.b16 %v11179
      %v11525 = vunpack.c.l.b16 %v11180
      %v11526 = vunpack.c.h.b16 %v11180
      %v11527 = vunpack.c.l.b16 %v11181
      %v11528 = vunpack.c.h.b16 %v11181
      %v11529 = vunpack.c.l.b16 %v11182
      %v11530 = vunpack.c.h.b16 %v11182
      %v11531 = vunpack.c.l.b16 %v11183
      %v11532 = vunpack.c.h.b16 %v11183
      %v11533 = vunpack.c.l.b16 %v11184
      %v11534 = vunpack.c.h.b16 %v11184
      %v11535 = vunpack.c.l.b16 %v11185
      %v11536 = vunpack.c.h.b16 %v11185
      %v11537 = vunpack.c.l.b16 %v11186
      %v11538 = vunpack.c.h.b16 %v11186
      %v11539 = vunpack.c.l.b16 %v11187
      %v11540 = vunpack.c.h.b16 %v11187
      %v11541 = vunpack.c.l.b16 %v11188
      %v11542 = vunpack.c.h.b16 %v11188
      %v11543 = vunpack.c.l.b16 %v11189
      %v11544 = vunpack.c.h.b16 %v11189
      %v11545 = vunpack.c.l.b16 %v11190
      %v11546 = vunpack.c.h.b16 %v11190
      %v11547 = vunpack.c.l.b16 %v11191
      %v11548 = vunpack.c.h.b16 %v11191
      %v11549 = vunpack.c.l.b16 %v11192
      %v11550 = vunpack.c.h.b16 %v11192
      %v11551 = vunpack.c.l.b16 %v11193
      %v11552 = vunpack.c.h.b16 %v11193
      %v11553 = vunpack.c.l.b16 %v11194
      %v11554 = vunpack.c.h.b16 %v11194
      %v11555 = vunpack.c.l.b16 %v11195
      %v11556 = vunpack.c.h.b16 %v11195
      %v11557 = vunpack.c.l.b16 %v11196
      %v11558 = vunpack.c.h.b16 %v11196
      %v11559 = vunpack.c.l.b16 %v11197
      %v11560 = vunpack.c.h.b16 %v11197
      %v11561 = vunpack.c.l.b16 %v11198
      %v11562 = vunpack.c.h.b16 %v11198
      %v11563 = vunpack.c.l.b16 %v11199
      %v11564 = vunpack.c.h.b16 %v11199
      %v11565 = vunpack.c.l.b16 %v11200
      %v11566 = vunpack.c.h.b16 %v11200
      %v11567 = vunpack.c.l.b16 %v11201
      %v11568 = vunpack.c.h.b16 %v11201
      %v11569 = vunpack.c.l.b16 %v11202
      %v11570 = vunpack.c.h.b16 %v11202
      %v11571 = vunpack.c.l.b16 %v11203
      %v11572 = vunpack.c.h.b16 %v11203
      %v11573 = vunpack.c.l.b16 %v11204
      %v11574 = vunpack.c.h.b16 %v11204
      %v11575 = vunpack.c.l.b16 %v11205
      %v11576 = vunpack.c.h.b16 %v11205
      %v11577 = vunpack.c.l.b16 %v11206
      %v11578 = vunpack.c.h.b16 %v11206
      %v11579 = vunpack.c.l.b16 %v11207
      %v11580 = vunpack.c.h.b16 %v11207
      %v11581 = vunpack.c.l.b16 %v11208
      %v11582 = vunpack.c.h.b16 %v11208
      %v11583 = vunpack.c.l.b16 %v11209
      %v11584 = vunpack.c.h.b16 %v11209
      %v11585 = vunpack.c.l.b16 %v11210
      %v11586 = vunpack.c.h.b16 %v11210
      %v11587 = vunpack.c.l.b16 %v11211
      %v11588 = vunpack.c.h.b16 %v11211
      %v11589 = vunpack.c.l.b16 %v11212
      %v11590 = vunpack.c.h.b16 %v11212
      %v11591 = vunpack.c.l.b16 %v11213
      %v11592 = vunpack.c.h.b16 %v11213
      %v11593 = vunpack.c.l.b16 %v11214
      %v11594 = vunpack.c.h.b16 %v11214
      %v11595 = vunpack.c.l.b16 %v11215
      %v11596 = vunpack.c.h.b16 %v11215
      %v11597 = vunpack.c.l.b16 %v11216
      %v11598 = vunpack.c.h.b16 %v11216
      %v11599 = vunpack.c.l.b16 %v11217
      %v11600 = vunpack.c.h.b16 %v11217
      %v11601 = vunpack.c.l.b16 %v11218
      %v11602 = vunpack.c.h.b16 %v11218
      %v11603 = vpack.c.b16 %v11347, %v11347
      %v11604 = vpack.c.b16 %v11348, %v11348
      %v11605 = vpack.c.b16 %v11349, %v11349
      %v11606 = vpack.c.b16 %v11350, %v11350
      %v11607 = vpack.c.b16 %v11351, %v11351
      %v11608 = vpack.c.b16 %v11352, %v11352
      %v11609 = vpack.c.b16 %v11353, %v11353
      %v11610 = vpack.c.b16 %v11354, %v11354
      %v11611 = vpack.c.b16 %v11355, %v11355
      %v11612 = vpack.c.b16 %v11356, %v11356
      %v11613 = vpack.c.b16 %v11357, %v11357
      %v11614 = vpack.c.b16 %v11358, %v11358
      %v11615 = vpack.c.b16 %v11359, %v11359
      %v11616 = vpack.c.b16 %v11360, %v11360
      %v11617 = vpack.c.b16 %v11361, %v11361
      %v11618 = vpack.c.b16 %v11362, %v11362
      %v11619 = vpack.c.b16 %v11363, %v11363
      %v11620 = vpack.c.b16 %v11364, %v11364
      %v11621 = vpack.c.b16 %v11365, %v11365
      %v11622 = vpack.c.b16 %v11366, %v11366
      %v11623 = vpack.c.b16 %v11367, %v11367
      %v11624 = vpack.c.b16 %v11368, %v11368
      %v11625 = vpack.c.b16 %v11369, %v11369
      %v11626 = vpack.c.b16 %v11370, %v11370
      %v11627 = vpack.c.b16 %v11371, %v11371
      %v11628 = vpack.c.b16 %v11372, %v11372
      %v11629 = vpack.c.b16 %v11373, %v11373
      %v11630 = vpack.c.b16 %v11374, %v11374
      %v11631 = vpack.c.b16 %v11375, %v11375
      %v11632 = vpack.c.b16 %v11376, %v11376
      %v11633 = vpack.c.b16 %v11377, %v11377
      %v11634 = vpack.c.b16 %v11378, %v11378
      %v11635 = vpack.c.b16 %v11379, %v11379
      %v11636 = vpack.c.b16 %v11380, %v11380
      %v11637 = vpack.c.b16 %v11381, %v11381
      %v11638 = vpack.c.b16 %v11382, %v11382
      %v11639 = vpack.c.b16 %v11383, %v11383
      %v11640 = vpack.c.b16 %v11384, %v11384
      %v11641 = vpack.c.b16 %v11385, %v11385
      %v11642 = vpack.c.b16 %v11386, %v11386
      %v11643 = vpack.c.b16 %v11387, %v11387
      %v11644 = vpack.c.b16 %v11388, %v11388
      %v11645 = vpack.c.b16 %v11389, %v11389
      %v11646 = vpack.c.b16 %v11390, %v11390
      %v11647 = vpack.c.b16 %v11391, %v11391
      %v11648 = vpack.c.b16 %v11392, %v11392
      %v11649 = vpack.c.b16 %v11393, %v11393
      %v11650 = vpack.c.b16 %v11394, %v11394
      %v11651 = vpack.c.b16 %v11395, %v11395
      %v11652 = vpack.c.b16 %v11396, %v11396
      %v11653 = vpack.c.b16 %v11397, %v11397
      %v11654 = vpack.c.b16 %v11398, %v11398
      %v11655 = vpack.c.b16 %v11399, %v11399
      %v11656 = vpack.c.b16 %v11400, %v11400
      %v11657 = vpack.c.b16 %v11401, %v11401
      %v11658 = vpack.c.b16 %v11402, %v11402
      %v11659 = vpack.c.b16 %v11403, %v11403
      %v11660 = vpack.c.b16 %v11404, %v11404
      %v11661 = vpack.c.b16 %v11405, %v11405
      %v11662 = vpack.c.b16 %v11406, %v11406
      %v11663 = vpack.c.b16 %v11407, %v11407
      %v11664 = vpack.c.b16 %v11408, %v11408
      %v11665 = vpack.c.b16 %v11409, %v11409
      %v11666 = vpack.c.b16 %v11410, %v11410
      %v11667 = vpack.c.b16 %v11411, %v11411
      %v11668 = vpack.c.b16 %v11412, %v11412
      %v11669 = vpack.c.b16 %v11413, %v11413
      %v11670 = vpack.c.b16 %v11414, %v11414
      %v11671 = vpack.c.b16 %v11415, %v11415
      %v11672 = vpack.c.b16 %v11416, %v11416
      %v11673 = vpack.c.b16 %v11417, %v11417
      %v11674 = vpack.c.b16 %v11418, %v11418
      %v11675 = vpack.c.b16 %v11419, %v11419
      %v11676 = vpack.c.b16 %v11420, %v11420
      %v11677 = vpack.c.b16 %v11421, %v11421
      %v11678 = vpack.c.b16 %v11422, %v11422
      %v11679 = vpack.c.b16 %v11423, %v11423
      %v11680 = vpack.c.b16 %v11424, %v11424
      %v11681 = vpack.c.b16 %v11425, %v11425
      %v11682 = vpack.c.b16 %v11426, %v11426
      %v11683 = vpack.c.b16 %v11427, %v11427
      %v11684 = vpack.c.b16 %v11428, %v11428
      %v11685 = vpack.c.b16 %v11429, %v11429
      %v11686 = vpack.c.b16 %v11430, %v11430
      %v11687 = vpack.c.b16 %v11431, %v11431
      %v11688 = vpack.c.b16 %v11432, %v11432
      %v11689 = vpack.c.b16 %v11433, %v11433
      %v11690 = vpack.c.b16 %v11434, %v11434
      %v11691 = vpack.c.b16 %v11435, %v11435
      %v11692 = vpack.c.b16 %v11436, %v11436
      %v11693 = vpack.c.b16 %v11437, %v11437
      %v11694 = vpack.c.b16 %v11438, %v11438
      %v11695 = vpack.c.b16 %v11439, %v11439
      %v11696 = vpack.c.b16 %v11440, %v11440
      %v11697 = vpack.c.b16 %v11441, %v11441
      %v11698 = vpack.c.b16 %v11442, %v11442
      %v11699 = vpack.c.b16 %v11443, %v11443
      %v11700 = vpack.c.b16 %v11444, %v11444
      %v11701 = vpack.c.b16 %v11445, %v11445
      %v11702 = vpack.c.b16 %v11446, %v11446
      %v11703 = vpack.c.b16 %v11447, %v11447
      %v11704 = vpack.c.b16 %v11448, %v11448
      %v11705 = vpack.c.b16 %v11449, %v11449
      %v11706 = vpack.c.b16 %v11450, %v11450
      %v11707 = vpack.c.b16 %v11451, %v11451
      %v11708 = vpack.c.b16 %v11452, %v11452
      %v11709 = vpack.c.b16 %v11453, %v11453
      %v11710 = vpack.c.b16 %v11454, %v11454
      %v11711 = vpack.c.b16 %v11455, %v11455
      %v11712 = vpack.c.b16 %v11456, %v11456
      %v11713 = vpack.c.b16 %v11457, %v11457
      %v11714 = vpack.c.b16 %v11458, %v11458
      %v11715 = vpack.c.b16 %v11459, %v11459
      %v11716 = vpack.c.b16 %v11460, %v11460
      %v11717 = vpack.c.b16 %v11461, %v11461
      %v11718 = vpack.c.b16 %v11462, %v11462
      %v11719 = vpack.c.b16 %v11463, %v11463
      %v11720 = vpack.c.b16 %v11464, %v11464
      %v11721 = vpack.c.b16 %v11465, %v11465
      %v11722 = vpack.c.b16 %v11466, %v11466
      %v11723 = vpack.c.b16 %v11467, %v11467
      %v11724 = vpack.c.b16 %v11468, %v11468
      %v11725 = vpack.c.b16 %v11469, %v11469
      %v11726 = vpack.c.b16 %v11470, %v11470
      %v11727 = vpack.c.b16 %v11471, %v11471
      %v11728 = vpack.c.b16 %v11472, %v11472
      %v11729 = vpack.c.b16 %v11473, %v11473
      %v11730 = vpack.c.b16 %v11474, %v11474
      %v11731 = vpack.c.b16 %v11475, %v11475
      %v11732 = vpack.c.b16 %v11476, %v11476
      %v11733 = vpack.c.b16 %v11477, %v11477
      %v11734 = vpack.c.b16 %v11478, %v11478
      %v11735 = vpack.c.b16 %v11479, %v11479
      %v11736 = vpack.c.b16 %v11480, %v11480
      %v11737 = vpack.c.b16 %v11481, %v11481
      %v11738 = vpack.c.b16 %v11482, %v11482
      %v11739 = vpack.c.b16 %v11483, %v11483
      %v11740 = vpack.c.b16 %v11484, %v11484
      %v11741 = vpack.c.b16 %v11485, %v11485
      %v11742 = vpack.c.b16 %v11486, %v11486
      %v11743 = vpack.c.b16 %v11487, %v11487
      %v11744 = vpack.c.b16 %v11488, %v11488
      %v11745 = vpack.c.b16 %v11489, %v11489
      %v11746 = vpack.c.b16 %v11490, %v11490
      %v11747 = vpack.c.b16 %v11491, %v11491
      %v11748 = vpack.c.b16 %v11492, %v11492
      %v11749 = vpack.c.b16 %v11493, %v11493
      %v11750 = vpack.c.b16 %v11494, %v11494
      %v11751 = vpack.c.b16 %v11495, %v11495
      %v11752 = vpack.c.b16 %v11496, %v11496
      %v11753 = vpack.c.b16 %v11497, %v11497
      %v11754 = vpack.c.b16 %v11498, %v11498
      %v11755 = vpack.c.b16 %v11499, %v11499
      %v11756 = vpack.c.b16 %v11500, %v11500
      %v11757 = vpack.c.b16 %v11501, %v11501
      %v11758 = vpack.c.b16 %v11502, %v11502
      %v11759 = vpack.c.b16 %v11503, %v11503
      %v11760 = vpack.c.b16 %v11504, %v11504
      %v11761 = vpack.c.b16 %v11505, %v11505
      %v11762 = vpack.c.b16 %v11506, %v11506
      %v11763 = vpack.c.b16 %v11507, %v11507
      %v11764 = vpack.c.b16 %v11508, %v11508
      %v11765 = vpack.c.b16 %v11509, %v11509
      %v11766 = vpack.c.b16 %v11510, %v11510
      %v11767 = vpack.c.b16 %v11511, %v11511
      %v11768 = vpack.c.b16 %v11512, %v11512
      %v11769 = vpack.c.b16 %v11513, %v11513
      %v11770 = vpack.c.b16 %v11514, %v11514
      %v11771 = vpack.c.b16 %v11515, %v11515
      %v11772 = vpack.c.b16 %v11516, %v11516
      %v11773 = vpack.c.b16 %v11517, %v11517
      %v11774 = vpack.c.b16 %v11518, %v11518
      %v11775 = vpack.c.b16 %v11519, %v11519
      %v11776 = vpack.c.b16 %v11520, %v11520
      %v11777 = vpack.c.b16 %v11521, %v11521
      %v11778 = vpack.c.b16 %v11522, %v11522
      %v11779 = vpack.c.b16 %v11523, %v11523
      %v11780 = vpack.c.b16 %v11524, %v11524
      %v11781 = vpack.c.b16 %v11525, %v11525
      %v11782 = vpack.c.b16 %v11526, %v11526
      %v11783 = vpack.c.b16 %v11527, %v11527
      %v11784 = vpack.c.b16 %v11528, %v11528
      %v11785 = vpack.c.b16 %v11529, %v11529
      %v11786 = vpack.c.b16 %v11530, %v11530
      %v11787 = vpack.c.b16 %v11531, %v11531
      %v11788 = vpack.c.b16 %v11532, %v11532
      %v11789 = vpack.c.b16 %v11533, %v11533
      %v11790 = vpack.c.b16 %v11534, %v11534
      %v11791 = vpack.c.b16 %v11535, %v11535
      %v11792 = vpack.c.b16 %v11536, %v11536
      %v11793 = vpack.c.b16 %v11537, %v11537
      %v11794 = vpack.c.b16 %v11538, %v11538
      %v11795 = vpack.c.b16 %v11539, %v11539
      %v11796 = vpack.c.b16 %v11540, %v11540
      %v11797 = vpack.c.b16 %v11541, %v11541
      %v11798 = vpack.c.b16 %v11542, %v11542
      %v11799 = vpack.c.b16 %v11543, %v11543
      %v11800 = vpack.c.b16 %v11544, %v11544
      %v11801 = vpack.c.b16 %v11545, %v11545
      %v11802 = vpack.c.b16 %v11546, %v11546
      %v11803 = vpack.c.b16 %v11547, %v11547
      %v11804 = vpack.c.b16 %v11548, %v11548
      %v11805 = vpack.c.b16 %v11549, %v11549
      %v11806 = vpack.c.b16 %v11550, %v11550
      %v11807 = vpack.c.b16 %v11551, %v11551
      %v11808 = vpack.c.b16 %v11552, %v11552
      %v11809 = vpack.c.b16 %v11553, %v11553
      %v11810 = vpack.c.b16 %v11554, %v11554
      %v11811 = vpack.c.b16 %v11555, %v11555
      %v11812 = vpack.c.b16 %v11556, %v11556
      %v11813 = vpack.c.b16 %v11557, %v11557
      %v11814 = vpack.c.b16 %v11558, %v11558
      %v11815 = vpack.c.b16 %v11559, %v11559
      %v11816 = vpack.c.b16 %v11560, %v11560
      %v11817 = vpack.c.b16 %v11561, %v11561
      %v11818 = vpack.c.b16 %v11562, %v11562
      %v11819 = vpack.c.b16 %v11563, %v11563
      %v11820 = vpack.c.b16 %v11564, %v11564
      %v11821 = vpack.c.b16 %v11565, %v11565
      %v11822 = vpack.c.b16 %v11566, %v11566
      %v11823 = vpack.c.b16 %v11567, %v11567
      %v11824 = vpack.c.b16 %v11568, %v11568
      %v11825 = vpack.c.b16 %v11569, %v11569
      %v11826 = vpack.c.b16 %v11570, %v11570
      %v11827 = vpack.c.b16 %v11571, %v11571
      %v11828 = vpack.c.b16 %v11572, %v11572
      %v11829 = vpack.c.b16 %v11573, %v11573
      %v11830 = vpack.c.b16 %v11574, %v11574
      %v11831 = vpack.c.b16 %v11575, %v11575
      %v11832 = vpack.c.b16 %v11576, %v11576
      %v11833 = vpack.c.b16 %v11577, %v11577
      %v11834 = vpack.c.b16 %v11578, %v11578
      %v11835 = vpack.c.b16 %v11579, %v11579
      %v11836 = vpack.c.b16 %v11580, %v11580
      %v11837 = vpack.c.b16 %v11581, %v11581
      %v11838 = vpack.c.b16 %v11582, %v11582
      %v11839 = vpack.c.b16 %v11583, %v11583
      %v11840 = vpack.c.b16 %v11584, %v11584
      %v11841 = vpack.c.b16 %v11585, %v11585
      %v11842 = vpack.c.b16 %v11586, %v11586
      %v11843 = vpack.c.b16 %v11587, %v11587
      %v11844 = vpack.c.b16 %v11588, %v11588
      %v11845 = vpack.c.b16 %v11589, %v11589
      %v11846 = vpack.c.b16 %v11590, %v11590
      %v11847 = vpack.c.b16 %v11591, %v11591
      %v11848 = vpack.c.b16 %v11592, %v11592
      %v11849 = vpack.c.b16 %v11593, %v11593
      %v11850 = vpack.c.b16 %v11594, %v11594
      %v11851 = vpack.c.b16 %v11595, %v11595
      %v11852 = vpack.c.b16 %v11596, %v11596
      %v11853 = vpack.c.b16 %v11597, %v11597
      %v11854 = vpack.c.b16 %v11598, %v11598
      %v11855 = vpack.c.b16 %v11599, %v11599
      %v11856 = vpack.c.b16 %v11600, %v11600
      %v11857 = vpack.c.b16 %v11601, %v11601
      %v11858 = vpack.c.b16 %v11602, %v11602
      %vm12115 = vcmask 60416
      %12116 = vst.msk [vmem:[%s288] sm:$0xf] %vm12115, %v11603
      %12117 = vst.msk [vmem:[%s288 + $0x4] sm:$0xf] %vm12115, %v11604
      %12118 = vst.msk [vmem:[%s288 + $0x8] sm:$0xf] %vm12115, %v11605
      %12119 = vst.msk [vmem:[%s288 + $0xc] sm:$0xf] %vm12115, %v11606
      %12120 = vst.msk [vmem:[%s288 + $0x10] sm:$0xf] %vm12115, %v11607
      %12121 = vst.msk [vmem:[%s288 + $0x14] sm:$0xf] %vm12115, %v11608
      %12122 = vst.msk [vmem:[%s288 + $0x18] sm:$0xf] %vm12115, %v11609
      %12123 = vst.msk [vmem:[%s288 + $0x1c] sm:$0xf] %vm12115, %v11610
      %12124 = vst.msk [vmem:[%s288 + $0x20] sm:$0xf] %vm12115, %v11611
      %12125 = vst.msk [vmem:[%s288 + $0x24] sm:$0xf] %vm12115, %v11612
      %12126 = vst.msk [vmem:[%s288 + $0x28] sm:$0xf] %vm12115, %v11613
      %12127 = vst.msk [vmem:[%s288 + $0x2c] sm:$0xf] %vm12115, %v11614
      %12128 = vst.msk [vmem:[%s288 + $0x30] sm:$0xf] %vm12115, %v11615
      %12129 = vst.msk [vmem:[%s288 + $0x34] sm:$0xf] %vm12115, %v11616
      %12130 = vst.msk [vmem:[%s288 + $0x38] sm:$0xf] %vm12115, %v11617
      %12131 = vst.msk [vmem:[%s288 + $0x3c] sm:$0xf] %vm12115, %v11618
      %12132 = vst.msk [vmem:[%s288 + $0x40] sm:$0xf] %vm12115, %v11619
      %12133 = vst.msk [vmem:[%s288 + $0x44] sm:$0xf] %vm12115, %v11620
      %12134 = vst.msk [vmem:[%s288 + $0x48] sm:$0xf] %vm12115, %v11621
      %12135 = vst.msk [vmem:[%s288 + $0x4c] sm:$0xf] %vm12115, %v11622
      %12136 = vst.msk [vmem:[%s288 + $0x50] sm:$0xf] %vm12115, %v11623
      %12137 = vst.msk [vmem:[%s288 + $0x54] sm:$0xf] %vm12115, %v11624
      %12138 = vst.msk [vmem:[%s288 + $0x58] sm:$0xf] %vm12115, %v11625
      %12139 = vst.msk [vmem:[%s288 + $0x5c] sm:$0xf] %vm12115, %v11626
      %12140 = vst.msk [vmem:[%s288 + $0x60] sm:$0xf] %vm12115, %v11627
      %12141 = vst.msk [vmem:[%s288 + $0x64] sm:$0xf] %vm12115, %v11628
      %12142 = vst.msk [vmem:[%s288 + $0x68] sm:$0xf] %vm12115, %v11629
      %12143 = vst.msk [vmem:[%s288 + $0x6c] sm:$0xf] %vm12115, %v11630
      %12144 = vst.msk [vmem:[%s288 + $0x70] sm:$0xf] %vm12115, %v11631
      %12145 = vst.msk [vmem:[%s288 + $0x74] sm:$0xf] %vm12115, %v11632
      %12146 = vst.msk [vmem:[%s288 + $0x78] sm:$0xf] %vm12115, %v11633
      %12147 = vst.msk [vmem:[%s288 + $0x7c] sm:$0xf] %vm12115, %v11634
      %12148 = vst.msk [vmem:[%s288 + $0x80] sm:$0xf] %vm12115, %v11635
      %12149 = vst.msk [vmem:[%s288 + $0x84] sm:$0xf] %vm12115, %v11636
      %12150 = vst.msk [vmem:[%s288 + $0x88] sm:$0xf] %vm12115, %v11637
      %12151 = vst.msk [vmem:[%s288 + $0x8c] sm:$0xf] %vm12115, %v11638
      %12152 = vst.msk [vmem:[%s288 + $0x90] sm:$0xf] %vm12115, %v11639
      %12153 = vst.msk [vmem:[%s288 + $0x94] sm:$0xf] %vm12115, %v11640
      %12154 = vst.msk [vmem:[%s288 + $0x98] sm:$0xf] %vm12115, %v11641
      %12155 = vst.msk [vmem:[%s288 + $0x9c] sm:$0xf] %vm12115, %v11642
      %12156 = vst.msk [vmem:[%s288 + $0xa0] sm:$0xf] %vm12115, %v11643
      %12157 = vst.msk [vmem:[%s288 + $0xa4] sm:$0xf] %vm12115, %v11644
      %12158 = vst.msk [vmem:[%s288 + $0xa8] sm:$0xf] %vm12115, %v11645
      %12159 = vst.msk [vmem:[%s288 + $0xac] sm:$0xf] %vm12115, %v11646
      %12160 = vst.msk [vmem:[%s288 + $0xb0] sm:$0xf] %vm12115, %v11647
      %12161 = vst.msk [vmem:[%s288 + $0xb4] sm:$0xf] %vm12115, %v11648
      %12162 = vst.msk [vmem:[%s288 + $0xb8] sm:$0xf] %vm12115, %v11649
      %12163 = vst.msk [vmem:[%s288 + $0xbc] sm:$0xf] %vm12115, %v11650
      %12164 = vst.msk [vmem:[%s288 + $0xc0] sm:$0xf] %vm12115, %v11651
      %12165 = vst.msk [vmem:[%s288 + $0xc4] sm:$0xf] %vm12115, %v11652
      %12166 = vst.msk [vmem:[%s288 + $0xc8] sm:$0xf] %vm12115, %v11653
      %12167 = vst.msk [vmem:[%s288 + $0xcc] sm:$0xf] %vm12115, %v11654
      %12168 = vst.msk [vmem:[%s288 + $0xd0] sm:$0xf] %vm12115, %v11655
      %12169 = vst.msk [vmem:[%s288 + $0xd4] sm:$0xf] %vm12115, %v11656
      %12170 = vst.msk [vmem:[%s288 + $0xd8] sm:$0xf] %vm12115, %v11657
      %12171 = vst.msk [vmem:[%s288 + $0xdc] sm:$0xf] %vm12115, %v11658
      %12172 = vst.msk [vmem:[%s288 + $0xe0] sm:$0xf] %vm12115, %v11659
      %12173 = vst.msk [vmem:[%s288 + $0xe4] sm:$0xf] %vm12115, %v11660
      %12174 = vst.msk [vmem:[%s288 + $0xe8] sm:$0xf] %vm12115, %v11661
      %12175 = vst.msk [vmem:[%s288 + $0xec] sm:$0xf] %vm12115, %v11662
      %12176 = vst.msk [vmem:[%s288 + $0xf0] sm:$0xf] %vm12115, %v11663
      %12177 = vst.msk [vmem:[%s288 + $0xf4] sm:$0xf] %vm12115, %v11664
      %12178 = vst.msk [vmem:[%s288 + $0xf8] sm:$0xf] %vm12115, %v11665
      %12179 = vst.msk [vmem:[%s288 + $0xfc] sm:$0xf] %vm12115, %v11666
      %12180 = vst.msk [vmem:[%s288 + $0x100] sm:$0xf] %vm12115, %v11667
      %12181 = vst.msk [vmem:[%s288 + $0x104] sm:$0xf] %vm12115, %v11668
      %12182 = vst.msk [vmem:[%s288 + $0x108] sm:$0xf] %vm12115, %v11669
      %12183 = vst.msk [vmem:[%s288 + $0x10c] sm:$0xf] %vm12115, %v11670
      %12184 = vst.msk [vmem:[%s288 + $0x110] sm:$0xf] %vm12115, %v11671
      %12185 = vst.msk [vmem:[%s288 + $0x114] sm:$0xf] %vm12115, %v11672
      %12186 = vst.msk [vmem:[%s288 + $0x118] sm:$0xf] %vm12115, %v11673
      %12187 = vst.msk [vmem:[%s288 + $0x11c] sm:$0xf] %vm12115, %v11674
      %12188 = vst.msk [vmem:[%s288 + $0x120] sm:$0xf] %vm12115, %v11675
      %12189 = vst.msk [vmem:[%s288 + $0x124] sm:$0xf] %vm12115, %v11676
      %12190 = vst.msk [vmem:[%s288 + $0x128] sm:$0xf] %vm12115, %v11677
      %12191 = vst.msk [vmem:[%s288 + $0x12c] sm:$0xf] %vm12115, %v11678
      %12192 = vst.msk [vmem:[%s288 + $0x130] sm:$0xf] %vm12115, %v11679
      %12193 = vst.msk [vmem:[%s288 + $0x134] sm:$0xf] %vm12115, %v11680
      %12194 = vst.msk [vmem:[%s288 + $0x138] sm:$0xf] %vm12115, %v11681
      %12195 = vst.msk [vmem:[%s288 + $0x13c] sm:$0xf] %vm12115, %v11682
      %12196 = vst.msk [vmem:[%s288 + $0x140] sm:$0xf] %vm12115, %v11683
      %12197 = vst.msk [vmem:[%s288 + $0x144] sm:$0xf] %vm12115, %v11684
      %12198 = vst.msk [vmem:[%s288 + $0x148] sm:$0xf] %vm12115, %v11685
      %12199 = vst.msk [vmem:[%s288 + $0x14c] sm:$0xf] %vm12115, %v11686
      %12200 = vst.msk [vmem:[%s288 + $0x150] sm:$0xf] %vm12115, %v11687
      %12201 = vst.msk [vmem:[%s288 + $0x154] sm:$0xf] %vm12115, %v11688
      %12202 = vst.msk [vmem:[%s288 + $0x158] sm:$0xf] %vm12115, %v11689
      %12203 = vst.msk [vmem:[%s288 + $0x15c] sm:$0xf] %vm12115, %v11690
      %12204 = vst.msk [vmem:[%s288 + $0x160] sm:$0xf] %vm12115, %v11691
      %12205 = vst.msk [vmem:[%s288 + $0x164] sm:$0xf] %vm12115, %v11692
      %12206 = vst.msk [vmem:[%s288 + $0x168] sm:$0xf] %vm12115, %v11693
      %12207 = vst.msk [vmem:[%s288 + $0x16c] sm:$0xf] %vm12115, %v11694
      %12208 = vst.msk [vmem:[%s288 + $0x170] sm:$0xf] %vm12115, %v11695
      %12209 = vst.msk [vmem:[%s288 + $0x174] sm:$0xf] %vm12115, %v11696
      %12210 = vst.msk [vmem:[%s288 + $0x178] sm:$0xf] %vm12115, %v11697
      %12211 = vst.msk [vmem:[%s288 + $0x17c] sm:$0xf] %vm12115, %v11698
      %12212 = vst.msk [vmem:[%s288 + $0x180] sm:$0xf] %vm12115, %v11699
      %12213 = vst.msk [vmem:[%s288 + $0x184] sm:$0xf] %vm12115, %v11700
      %12214 = vst.msk [vmem:[%s288 + $0x188] sm:$0xf] %vm12115, %v11701
      %12215 = vst.msk [vmem:[%s288 + $0x18c] sm:$0xf] %vm12115, %v11702
      %12216 = vst.msk [vmem:[%s288 + $0x190] sm:$0xf] %vm12115, %v11703
      %12217 = vst.msk [vmem:[%s288 + $0x194] sm:$0xf] %vm12115, %v11704
      %12218 = vst.msk [vmem:[%s288 + $0x198] sm:$0xf] %vm12115, %v11705
      %12219 = vst.msk [vmem:[%s288 + $0x19c] sm:$0xf] %vm12115, %v11706
      %12220 = vst.msk [vmem:[%s288 + $0x1a0] sm:$0xf] %vm12115, %v11707
      %12221 = vst.msk [vmem:[%s288 + $0x1a4] sm:$0xf] %vm12115, %v11708
      %12222 = vst.msk [vmem:[%s288 + $0x1a8] sm:$0xf] %vm12115, %v11709
      %12223 = vst.msk [vmem:[%s288 + $0x1ac] sm:$0xf] %vm12115, %v11710
      %12224 = vst.msk [vmem:[%s288 + $0x1b0] sm:$0xf] %vm12115, %v11711
      %12225 = vst.msk [vmem:[%s288 + $0x1b4] sm:$0xf] %vm12115, %v11712
      %12226 = vst.msk [vmem:[%s288 + $0x1b8] sm:$0xf] %vm12115, %v11713
      %12227 = vst.msk [vmem:[%s288 + $0x1bc] sm:$0xf] %vm12115, %v11714
      %12228 = vst.msk [vmem:[%s288 + $0x1c0] sm:$0xf] %vm12115, %v11715
      %12229 = vst.msk [vmem:[%s288 + $0x1c4] sm:$0xf] %vm12115, %v11716
      %12230 = vst.msk [vmem:[%s288 + $0x1c8] sm:$0xf] %vm12115, %v11717
      %12231 = vst.msk [vmem:[%s288 + $0x1cc] sm:$0xf] %vm12115, %v11718
      %12232 = vst.msk [vmem:[%s288 + $0x1d0] sm:$0xf] %vm12115, %v11719
      %12233 = vst.msk [vmem:[%s288 + $0x1d4] sm:$0xf] %vm12115, %v11720
      %12234 = vst.msk [vmem:[%s288 + $0x1d8] sm:$0xf] %vm12115, %v11721
      %12235 = vst.msk [vmem:[%s288 + $0x1dc] sm:$0xf] %vm12115, %v11722
      %12236 = vst.msk [vmem:[%s288 + $0x1e0] sm:$0xf] %vm12115, %v11723
      %12237 = vst.msk [vmem:[%s288 + $0x1e4] sm:$0xf] %vm12115, %v11724
      %12238 = vst.msk [vmem:[%s288 + $0x1e8] sm:$0xf] %vm12115, %v11725
      %12239 = vst.msk [vmem:[%s288 + $0x1ec] sm:$0xf] %vm12115, %v11726
      %12240 = vst.msk [vmem:[%s288 + $0x1f0] sm:$0xf] %vm12115, %v11727
      %12241 = vst.msk [vmem:[%s288 + $0x1f4] sm:$0xf] %vm12115, %v11728
      %12242 = vst.msk [vmem:[%s288 + $0x1f8] sm:$0xf] %vm12115, %v11729
      %12243 = vst.msk [vmem:[%s288 + $0x1fc] sm:$0xf] %vm12115, %v11730
      %12244 = vst.msk [vmem:[%s288 + $0x200] sm:$0xf] %vm12115, %v11731
      %12245 = vst.msk [vmem:[%s288 + $0x204] sm:$0xf] %vm12115, %v11732
      %12246 = vst.msk [vmem:[%s288 + $0x208] sm:$0xf] %vm12115, %v11733
      %12247 = vst.msk [vmem:[%s288 + $0x20c] sm:$0xf] %vm12115, %v11734
      %12248 = vst.msk [vmem:[%s288 + $0x210] sm:$0xf] %vm12115, %v11735
      %12249 = vst.msk [vmem:[%s288 + $0x214] sm:$0xf] %vm12115, %v11736
      %12250 = vst.msk [vmem:[%s288 + $0x218] sm:$0xf] %vm12115, %v11737
      %12251 = vst.msk [vmem:[%s288 + $0x21c] sm:$0xf] %vm12115, %v11738
      %12252 = vst.msk [vmem:[%s288 + $0x220] sm:$0xf] %vm12115, %v11739
      %12253 = vst.msk [vmem:[%s288 + $0x224] sm:$0xf] %vm12115, %v11740
      %12254 = vst.msk [vmem:[%s288 + $0x228] sm:$0xf] %vm12115, %v11741
      %12255 = vst.msk [vmem:[%s288 + $0x22c] sm:$0xf] %vm12115, %v11742
      %12256 = vst.msk [vmem:[%s288 + $0x230] sm:$0xf] %vm12115, %v11743
      %12257 = vst.msk [vmem:[%s288 + $0x234] sm:$0xf] %vm12115, %v11744
      %12258 = vst.msk [vmem:[%s288 + $0x238] sm:$0xf] %vm12115, %v11745
      %12259 = vst.msk [vmem:[%s288 + $0x23c] sm:$0xf] %vm12115, %v11746
      %12260 = vst.msk [vmem:[%s288 + $0x240] sm:$0xf] %vm12115, %v11747
      %12261 = vst.msk [vmem:[%s288 + $0x244] sm:$0xf] %vm12115, %v11748
      %12262 = vst.msk [vmem:[%s288 + $0x248] sm:$0xf] %vm12115, %v11749
      %12263 = vst.msk [vmem:[%s288 + $0x24c] sm:$0xf] %vm12115, %v11750
      %12264 = vst.msk [vmem:[%s288 + $0x250] sm:$0xf] %vm12115, %v11751
      %12265 = vst.msk [vmem:[%s288 + $0x254] sm:$0xf] %vm12115, %v11752
      %12266 = vst.msk [vmem:[%s288 + $0x258] sm:$0xf] %vm12115, %v11753
      %12267 = vst.msk [vmem:[%s288 + $0x25c] sm:$0xf] %vm12115, %v11754
      %12268 = vst.msk [vmem:[%s288 + $0x260] sm:$0xf] %vm12115, %v11755
      %12269 = vst.msk [vmem:[%s288 + $0x264] sm:$0xf] %vm12115, %v11756
      %12270 = vst.msk [vmem:[%s288 + $0x268] sm:$0xf] %vm12115, %v11757
      %12271 = vst.msk [vmem:[%s288 + $0x26c] sm:$0xf] %vm12115, %v11758
      %12272 = vst.msk [vmem:[%s288 + $0x270] sm:$0xf] %vm12115, %v11759
      %12273 = vst.msk [vmem:[%s288 + $0x274] sm:$0xf] %vm12115, %v11760
      %12274 = vst.msk [vmem:[%s288 + $0x278] sm:$0xf] %vm12115, %v11761
      %12275 = vst.msk [vmem:[%s288 + $0x27c] sm:$0xf] %vm12115, %v11762
      %12276 = vst.msk [vmem:[%s288 + $0x280] sm:$0xf] %vm12115, %v11763
      %12277 = vst.msk [vmem:[%s288 + $0x284] sm:$0xf] %vm12115, %v11764
      %12278 = vst.msk [vmem:[%s288 + $0x288] sm:$0xf] %vm12115, %v11765
      %12279 = vst.msk [vmem:[%s288 + $0x28c] sm:$0xf] %vm12115, %v11766
      %12280 = vst.msk [vmem:[%s288 + $0x290] sm:$0xf] %vm12115, %v11767
      %12281 = vst.msk [vmem:[%s288 + $0x294] sm:$0xf] %vm12115, %v11768
      %12282 = vst.msk [vmem:[%s288 + $0x298] sm:$0xf] %vm12115, %v11769
      %12283 = vst.msk [vmem:[%s288 + $0x29c] sm:$0xf] %vm12115, %v11770
      %12284 = vst.msk [vmem:[%s288 + $0x2a0] sm:$0xf] %vm12115, %v11771
      %12285 = vst.msk [vmem:[%s288 + $0x2a4] sm:$0xf] %vm12115, %v11772
      %12286 = vst.msk [vmem:[%s288 + $0x2a8] sm:$0xf] %vm12115, %v11773
      %12287 = vst.msk [vmem:[%s288 + $0x2ac] sm:$0xf] %vm12115, %v11774
      %12288 = vst.msk [vmem:[%s288 + $0x2b0] sm:$0xf] %vm12115, %v11775
      %12289 = vst.msk [vmem:[%s288 + $0x2b4] sm:$0xf] %vm12115, %v11776
      %12290 = vst.msk [vmem:[%s288 + $0x2b8] sm:$0xf] %vm12115, %v11777
      %12291 = vst.msk [vmem:[%s288 + $0x2bc] sm:$0xf] %vm12115, %v11778
      %12292 = vst.msk [vmem:[%s288 + $0x2c0] sm:$0xf] %vm12115, %v11779
      %12293 = vst.msk [vmem:[%s288 + $0x2c4] sm:$0xf] %vm12115, %v11780
      %12294 = vst.msk [vmem:[%s288 + $0x2c8] sm:$0xf] %vm12115, %v11781
      %12295 = vst.msk [vmem:[%s288 + $0x2cc] sm:$0xf] %vm12115, %v11782
      %12296 = vst.msk [vmem:[%s288 + $0x2d0] sm:$0xf] %vm12115, %v11783
      %12297 = vst.msk [vmem:[%s288 + $0x2d4] sm:$0xf] %vm12115, %v11784
      %12298 = vst.msk [vmem:[%s288 + $0x2d8] sm:$0xf] %vm12115, %v11785
      %12299 = vst.msk [vmem:[%s288 + $0x2dc] sm:$0xf] %vm12115, %v11786
      %12300 = vst.msk [vmem:[%s288 + $0x2e0] sm:$0xf] %vm12115, %v11787
      %12301 = vst.msk [vmem:[%s288 + $0x2e4] sm:$0xf] %vm12115, %v11788
      %12302 = vst.msk [vmem:[%s288 + $0x2e8] sm:$0xf] %vm12115, %v11789
      %12303 = vst.msk [vmem:[%s288 + $0x2ec] sm:$0xf] %vm12115, %v11790
      %12304 = vst.msk [vmem:[%s288 + $0x2f0] sm:$0xf] %vm12115, %v11791
      %12305 = vst.msk [vmem:[%s288 + $0x2f4] sm:$0xf] %vm12115, %v11792
      %12306 = vst.msk [vmem:[%s288 + $0x2f8] sm:$0xf] %vm12115, %v11793
      %12307 = vst.msk [vmem:[%s288 + $0x2fc] sm:$0xf] %vm12115, %v11794
      %12308 = vst.msk [vmem:[%s288 + $0x300] sm:$0xf] %vm12115, %v11795
      %12309 = vst.msk [vmem:[%s288 + $0x304] sm:$0xf] %vm12115, %v11796
      %12310 = vst.msk [vmem:[%s288 + $0x308] sm:$0xf] %vm12115, %v11797
      %12311 = vst.msk [vmem:[%s288 + $0x30c] sm:$0xf] %vm12115, %v11798
      %12312 = vst.msk [vmem:[%s288 + $0x310] sm:$0xf] %vm12115, %v11799
      %12313 = vst.msk [vmem:[%s288 + $0x314] sm:$0xf] %vm12115, %v11800
      %12314 = vst.msk [vmem:[%s288 + $0x318] sm:$0xf] %vm12115, %v11801
      %12315 = vst.msk [vmem:[%s288 + $0x31c] sm:$0xf] %vm12115, %v11802
      %12316 = vst.msk [vmem:[%s288 + $0x320] sm:$0xf] %vm12115, %v11803
      %12317 = vst.msk [vmem:[%s288 + $0x324] sm:$0xf] %vm12115, %v11804
      %12318 = vst.msk [vmem:[%s288 + $0x328] sm:$0xf] %vm12115, %v11805
      %12319 = vst.msk [vmem:[%s288 + $0x32c] sm:$0xf] %vm12115, %v11806
      %12320 = vst.msk [vmem:[%s288 + $0x330] sm:$0xf] %vm12115, %v11807
      %12321 = vst.msk [vmem:[%s288 + $0x334] sm:$0xf] %vm12115, %v11808
      %12322 = vst.msk [vmem:[%s288 + $0x338] sm:$0xf] %vm12115, %v11809
      %12323 = vst.msk [vmem:[%s288 + $0x33c] sm:$0xf] %vm12115, %v11810
      %12324 = vst.msk [vmem:[%s288 + $0x340] sm:$0xf] %vm12115, %v11811
      %12325 = vst.msk [vmem:[%s288 + $0x344] sm:$0xf] %vm12115, %v11812
      %12326 = vst.msk [vmem:[%s288 + $0x348] sm:$0xf] %vm12115, %v11813
      %12327 = vst.msk [vmem:[%s288 + $0x34c] sm:$0xf] %vm12115, %v11814
      %12328 = vst.msk [vmem:[%s288 + $0x350] sm:$0xf] %vm12115, %v11815
      %12329 = vst.msk [vmem:[%s288 + $0x354] sm:$0xf] %vm12115, %v11816
      %12330 = vst.msk [vmem:[%s288 + $0x358] sm:$0xf] %vm12115, %v11817
      %12331 = vst.msk [vmem:[%s288 + $0x35c] sm:$0xf] %vm12115, %v11818
      %12332 = vst.msk [vmem:[%s288 + $0x360] sm:$0xf] %vm12115, %v11819
      %12333 = vst.msk [vmem:[%s288 + $0x364] sm:$0xf] %vm12115, %v11820
      %12334 = vst.msk [vmem:[%s288 + $0x368] sm:$0xf] %vm12115, %v11821
      %12335 = vst.msk [vmem:[%s288 + $0x36c] sm:$0xf] %vm12115, %v11822
      %12336 = vst.msk [vmem:[%s288 + $0x370] sm:$0xf] %vm12115, %v11823
      %12337 = vst.msk [vmem:[%s288 + $0x374] sm:$0xf] %vm12115, %v11824
      %12338 = vst.msk [vmem:[%s288 + $0x378] sm:$0xf] %vm12115, %v11825
      %12339 = vst.msk [vmem:[%s288 + $0x37c] sm:$0xf] %vm12115, %v11826
      %12340 = vst.msk [vmem:[%s288 + $0x380] sm:$0xf] %vm12115, %v11827
      %12341 = vst.msk [vmem:[%s288 + $0x384] sm:$0xf] %vm12115, %v11828
      %12342 = vst.msk [vmem:[%s288 + $0x388] sm:$0xf] %vm12115, %v11829
      %12343 = vst.msk [vmem:[%s288 + $0x38c] sm:$0xf] %vm12115, %v11830
      %12344 = vst.msk [vmem:[%s288 + $0x390] sm:$0xf] %vm12115, %v11831
      %12345 = vst.msk [vmem:[%s288 + $0x394] sm:$0xf] %vm12115, %v11832
      %12346 = vst.msk [vmem:[%s288 + $0x398] sm:$0xf] %vm12115, %v11833
      %12347 = vst.msk [vmem:[%s288 + $0x39c] sm:$0xf] %vm12115, %v11834
      %12348 = vst.msk [vmem:[%s288 + $0x3a0] sm:$0xf] %vm12115, %v11835
      %12349 = vst.msk [vmem:[%s288 + $0x3a4] sm:$0xf] %vm12115, %v11836
      %12350 = vst.msk [vmem:[%s288 + $0x3a8] sm:$0xf] %vm12115, %v11837
      %12351 = vst.msk [vmem:[%s288 + $0x3ac] sm:$0xf] %vm12115, %v11838
      %12352 = vst.msk [vmem:[%s288 + $0x3b0] sm:$0xf] %vm12115, %v11839
      %12353 = vst.msk [vmem:[%s288 + $0x3b4] sm:$0xf] %vm12115, %v11840
      %12354 = vst.msk [vmem:[%s288 + $0x3b8] sm:$0xf] %vm12115, %v11841
      %12355 = vst.msk [vmem:[%s288 + $0x3bc] sm:$0xf] %vm12115, %v11842
      %12356 = vst.msk [vmem:[%s288 + $0x3c0] sm:$0xf] %vm12115, %v11843
      %12357 = vst.msk [vmem:[%s288 + $0x3c4] sm:$0xf] %vm12115, %v11844
      %12358 = vst.msk [vmem:[%s288 + $0x3c8] sm:$0xf] %vm12115, %v11845
      %12359 = vst.msk [vmem:[%s288 + $0x3cc] sm:$0xf] %vm12115, %v11846
      %12360 = vst.msk [vmem:[%s288 + $0x3d0] sm:$0xf] %vm12115, %v11847
      %12361 = vst.msk [vmem:[%s288 + $0x3d4] sm:$0xf] %vm12115, %v11848
      %12362 = vst.msk [vmem:[%s288 + $0x3d8] sm:$0xf] %vm12115, %v11849
      %12363 = vst.msk [vmem:[%s288 + $0x3dc] sm:$0xf] %vm12115, %v11850
      %12364 = vst.msk [vmem:[%s288 + $0x3e0] sm:$0xf] %vm12115, %v11851
      %12365 = vst.msk [vmem:[%s288 + $0x3e4] sm:$0xf] %vm12115, %v11852
      %12366 = vst.msk [vmem:[%s288 + $0x3e8] sm:$0xf] %vm12115, %v11853
      %12367 = vst.msk [vmem:[%s288 + $0x3ec] sm:$0xf] %vm12115, %v11854
      %12368 = vst.msk [vmem:[%s288 + $0x3f0] sm:$0xf] %vm12115, %v11855
      %12369 = vst.msk [vmem:[%s288 + $0x3f4] sm:$0xf] %vm12115, %v11856
      %12370 = vst.msk [vmem:[%s288 + $0x3f8] sm:$0xf] %vm12115, %v11857
      %12371 = vst.msk [vmem:[%s288 + $0x3fc] sm:$0xf] %vm12115, %v11858
      %s12372 = smul.u32 16, %s20
      %p12373 = scmp.lt.s32.totalorder %s19, 0
      %s12374 = scalar_select %p12373, %s19, 0
      %p12375 = scmp.lt.s32.totalorder %s12372, 127
      %s12376 = scalar_select %p12375, %s12372, 127
      %s12377 = smul.addr %s12376, 16
      %s12378 = smul.addr %s12374, 2048
      %s12379 = sadd.s32 %s12377, %s12378
      %s12380 = smul.addr %s12379, 4
      %s12381 = scalar_lea.vmem %s4, %s12380
      // Predicated region
      $region37: #{tpu_custom_call.1} parent=35 // pred_check
        %p12382 = pneg %p149
      $region38: #{tpu_custom_call.1} parent=35 // pred_check_branch
        %12384 = sbr.rel (%p12382) target = $region40
      $region39: #{tpu_custom_call.1} parent=35 // pred_region
        %s12385 = smul.u32 16, %s20
      $region40: #{tpu_custom_call.1} parent=35 // pred_fallthru
        _
    $region36: #{tpu_custom_call.1} parent=5 // pred_fallthru
      _
    %p12386 = scmp.le.s32.totalorder 2, %s10
    // Predicated region
    $region41: #{tpu_custom_call.1} parent=5 // pred_check
      %p12387 = pneg %p12386
    $region42: #{tpu_custom_call.1} parent=5 // pred_check_branch
      %12389 = sbr.rel (%p12387) target = $region44
    $region43: #{tpu_custom_call.1} parent=5 // pred_region
      %s12390 = ssub.s32 %s10, 2
      // Predicated region
      $region45: #{tpu_custom_call.1} parent=43 // pred_check
        %p12391 = pneg %p155
      $region46: #{tpu_custom_call.1} parent=43 // pred_check_branch
        %12393 = sbr.rel (%p12391) target = $region48
      $region47: #{tpu_custom_call.1} parent=43 // pred_region
        %s12394 = smul.u32 16, %s22
        %p12395 = scmp.lt.s32.totalorder %s21, 0
        %s12396 = scalar_select %p12395, %s21, 0
        %p12397 = scmp.lt.s32.totalorder %s12394, 127
        %s12398 = scalar_select %p12397, %s12394, 127
        %s12399 = smul.addr %s12398, 16
        %s12400 = smul.addr %s12396, 2048
        %s12401 = sadd.s32 %s12399, %s12400
        %s12402 = smul.addr %s12401, 4
        %s12403 = scalar_lea.vmem %s4, %s12402
      $region48: #{tpu_custom_call.1} parent=43 // pred_fallthru
        _
    $region44: #{tpu_custom_call.1} parent=5 // pred_fallthru
      _
  $region6: #{tpu_custom_call.1} parent=0 // loop_footer
    %s14 = sadd.s32 1, %s10
  $region7: #{tpu_custom_call.1} parent=0 // loop_footer_branch
    %9 = sbr.rel target = $region3
  $region8: #{tpu_custom_call.1} parent=0 // loop_exit
    _

</llo_original>
